<compile_context>
chip_gen: v6e
topology: v6e:2x2x1
jax: 0.10.0
libtpu: 0.0.40
codegen_flags: <defaults>
</compile_context>

<pallas_src>
import functools

import jax
import jax.numpy as jnp
import numpy as np
from jax.experimental import pallas as pl
from jax.experimental.pallas import tpu as pltpu

VMEM_LIMIT = 32 * 1024 * 1024


def _cparams(n_axes):
    return pltpu.CompilerParams(
        dimension_semantics=("parallel",) * n_axes,
        vmem_limit_bytes=VMEM_LIMIT)


def _pick_row_tile(n, cap=512):
    if n <= cap:
        return n
    t = (cap // 8) * 8
    while t > 8 and n % t:
        t -= 8
    return t if n % t == 0 else n


def _layernorm(x, g, b, eps=1e-5):
    mu = jnp.mean(x, axis=-1, keepdims=True)
    var = jnp.mean(jnp.square(x - mu), axis=-1, keepdims=True)
    return (x - mu) * jax.lax.rsqrt(var + eps) * g + b


# ------------------------------ Pallas kernels ------------------------------

def conv3d_bn_relu_pos_kernel(x_ref, scale_ref, shift_ref, p_ref, w_ref,
                              posb_ref, o_ref, *, D):
    """Fused eval-BN + ReLU + Conv3d(k=3,s=1,p=1) + bias + positional encoding.

    Grid = (B, D): one (H*W, E) output plane per step.  The 27 taps are
    accumulated from the three neighbour z-planes; the in-plane (dy, dx) shift
    with zero-padding is applied by a constant 0/1 permutation matmul so no
    27x im2col tensor ever touches HBM.
    """
    b = pl.program_id(0)
    z = pl.program_id(1)
    HW = o_ref.shape[2]
    E = o_ref.shape[3]
    scale = scale_ref[...]                                  # (1, C) f32
    shift = shift_ref[...]

    acc = jnp.zeros((HW, E), jnp.float32)
    t = 0
    for dz in (-1, 0, 1):
        pz = z + dz
        # zero-pad mask for out-of-volume z planes (scalar 0/1 multiply)
        z_in = jnp.logical_and(pz >= 0, pz <= D - 1).astype(jnp.float32)
        pz_c = jnp.clip(pz, 0, D - 1)
        plane = x_ref[b * D + pz_c]                         # (HW, C) f32
        act = jnp.maximum(plane * scale + shift, 0.0) * z_in   # BN + ReLU + pad
        act = act.astype(jnp.bfloat16)
        for s in range(9):                                  # (dy, dx) taps
            shifted = jnp.dot(p_ref[s], act,
                              preferred_element_type=jnp.float32)
            acc = acc + jnp.dot(shifted.astype(jnp.bfloat16), w_ref[t],
                                preferred_element_type=jnp.float32)
            t += 1
    o_ref[0, 0] = acc + posb_ref[0]                         # conv bias + pos emb


def ln_qkv_kernel(x_ref, g_ref, b_ref, w_ref, o_ref):
    # PreNormDrop LayerNorm + qkv projection (bias-free Linear), row-tiled.
    h = _layernorm(x_ref[...], g_ref[...], b_ref[...]).astype(jnp.bfloat16)
    o_ref[...] = jnp.dot(h, w_ref[...],
                         preferred_element_type=jnp.float32).astype(o_ref.dtype)


def attn_core_kernel(q_ref, k_ref, v_ref, o_ref, *, scale):
    # One (batch, head) pair per grid step: softmax(q k^T * scale) v.
    q = q_ref[0]                                            # (N, hd) bf16
    k = k_ref[0]
    v = v_ref[0]
    s = jax.lax.dot_general(q, k, (((1,), (1,)), ((), ())),
                            preferred_element_type=jnp.float32) * scale
    s = s - jnp.max(s, axis=-1, keepdims=True)
    p = jnp.exp(s)
    p = p * pl.reciprocal(jnp.sum(p, axis=-1, keepdims=True), approx=True)
    o_ref[0] = jnp.dot(p.astype(jnp.bfloat16), v,
                       preferred_element_type=jnp.float32).astype(o_ref.dtype)


def attn_out_ff_kernel(x_ref, ctx_ref, wp_ref, bp_ref, g_ref, b_ref,
                       w1_ref, b1_ref, w2_ref, b2_ref, xa_ref, xf_ref):
    # Fused: attention out-proj + residual + LayerNorm + FeedForward + residual.
    xa = (x_ref[...]
          + jnp.dot(ctx_ref[...], wp_ref[...],
                    preferred_element_type=jnp.float32)
          + bp_ref[...])
    xa_ref[...] = xa
    h = _layernorm(xa, g_ref[...], b_ref[...]).astype(jnp.bfloat16)
    h = jnp.dot(h, w1_ref[...], preferred_element_type=jnp.float32) + b1_ref[...]
    # TODO(synk): nn.GELU() is the exact erf GELU; tanh approximation used here
    # for a guaranteed Mosaic lowering (difference ~1e-3).
    h = jax.nn.gelu(h, approximate=True).astype(jnp.bfloat16)
    xf_ref[...] = xa + jnp.dot(h, w2_ref[...],
                               preferred_element_type=jnp.float32) + b2_ref[...]


def layernorm_kernel(x_ref, g_ref, b_ref, o_ref):
    # pre_head_ln
    o_ref[...] = _layernorm(x_ref[...], g_ref[...], b_ref[...])


# -------------------------------- wrapper -----------------------------------

def transformer_bts_encode(x4, prm, *, num_heads):
    """x4: Unet bottleneck features, NCDHW (B, 128, D, H, W), D=H=W=img_dim/8."""
    B, C, D, H, W = x4.shape
    HW = H * W
    E = prm['posb'].shape[-1]
    N = D * HW
    R = B * N
    nh = num_heads
    hd = E // nh
    hid = prm['layers'][0]['w1'].shape[1]

    # channels-last planes (B*D, H*W, C)
    x_cl = jnp.transpose(x4, (0, 2, 3, 4, 1)).reshape(B * D, HW, C)

    # ---- fused BN + ReLU + conv_x + bias + positional encoding ----
    conv_out = pl.pallas_call(
        functools.partial(conv3d_bn_relu_pos_kernel, D=D),
        out_shape=jax.ShapeDtypeStruct((B, D, HW, E), jnp.float32),
        grid=(B, D),
        in_specs=[
            pl.BlockSpec((B * D, HW, C), lambda b, z: (0, 0, 0)),  # resident
            pl.BlockSpec((1, C), lambda b, z: (0, 0)),
            pl.BlockSpec((1, C), lambda b, z: (0, 0)),
            pl.BlockSpec((9, HW, HW), lambda b, z: (0, 0, 0)),
            pl.BlockSpec((27, C, E), lambda b, z: (0, 0, 0)),
            pl.BlockSpec((1, HW, E), lambda b, z: (z, 0, 0)),
        ],
        out_specs=pl.BlockSpec((1, 1, HW, E), lambda b, z: (b, z, 0, 0)),
        compiler_params=_cparams(2),
    )(x_cl, prm['bn_scale'], prm['bn_shift'], prm['shift_mats'],
      prm['w27'], prm['posb'])

    x2d = conv_out.reshape(R, E)            # residual stream, f32, (B*N, E)

    # ---- row-tiled transformer kernels (built once, reused per layer) ----
    tm = _pick_row_tile(R)
    grid_rows = (R // tm,)
    row = lambda i: (i, 0)
    fix = lambda i: (0, 0)

    ln_qkv_call = pl.pallas_call(
        ln_qkv_kernel,
        out_shape=jax.ShapeDtypeStruct((R, 3 * E), jnp.bfloat16),
        grid=grid_rows,
        in_specs=[pl.BlockSpec((tm, E), row),
                  pl.BlockSpec((1, E), fix),
                  pl.BlockSpec((1, E), fix),
                  pl.BlockSpec((E, 3 * E), fix)],
        out_specs=pl.BlockSpec((tm, 3 * E), row),
        compiler_params=_cparams(1))

    attn_core_call = pl.pallas_call(
        functools.partial(attn_core_kernel, scale=float(hd) ** -0.5),
        out_shape=jax.ShapeDtypeStruct((B * nh, N, hd), jnp.bfloat16),
        grid=(B * nh,),
        in_specs=[pl.BlockSpec((1, N, hd), lambda i: (i, 0, 0))] * 3,
        out_specs=pl.BlockSpec((1, N, hd), lambda i: (i, 0, 0)),
        compiler_params=_cparams(1))

    attn_out_ff_call = pl.pallas_call(
        attn_out_ff_kernel,
        out_shape=(jax.ShapeDtypeStruct((R, E), jnp.float32),
                   jax.ShapeDtypeStruct((R, E), jnp.float32)),
        grid=grid_rows,
        in_specs=[pl.BlockSpec((tm, E), row),       # residual stream
                  pl.BlockSpec((tm, E), row),       # attention context
                  pl.BlockSpec((E, E), fix),        # w_proj
                  pl.BlockSpec((1, E), fix),        # b_proj
                  pl.BlockSpec((1, E), fix),        # ln2_g
                  pl.BlockSpec((1, E), fix),        # ln2_b
                  pl.BlockSpec((E, hid), fix),      # w1
                  pl.BlockSpec((1, hid), fix),      # b1
                  pl.BlockSpec((hid, E), fix),      # w2
                  pl.BlockSpec((1, E), fix)],       # b2
        out_specs=(pl.BlockSpec((tm, E), row),
                   pl.BlockSpec((tm, E), row)),
        compiler_params=_cparams(1))

    final_ln_call = pl.pallas_call(
        layernorm_kernel,
        out_shape=jax.ShapeDtypeStruct((R, E), jnp.float32),
        grid=grid_rows,
        in_specs=[pl.BlockSpec((tm, E), row),
                  pl.BlockSpec((1, E), fix),
                  pl.BlockSpec((1, E), fix)],
        out_specs=pl.BlockSpec((tm, E), row),
        compiler_params=_cparams(1))

    intmd = {}
    for j, lyr in enumerate(prm['layers']):
        qkv = ln_qkv_call(x2d, lyr['ln1_g'], lyr['ln1_b'], lyr['w_qkv'])

        # head-major layout for the attention core (cheap XLA glue)
        qkv_h = qkv.reshape(B, N, 3, nh, hd).transpose(2, 0, 3, 1, 4)
        q = qkv_h[0].reshape(B * nh, N, hd)
        k = qkv_h[1].reshape(B * nh, N, hd)
        v = qkv_h[2].reshape(B * nh, N, hd)

        ctx = attn_core_call(q, k, v)
        ctx2d = ctx.reshape(B, nh, N, hd).transpose(0, 2, 1, 3).reshape(R, E)

        xa2d, xf2d = attn_out_ff_call(
            x2d, ctx2d, lyr['w_proj'], lyr['b_proj'], lyr['ln2_g'],
            lyr['ln2_b'], lyr['w1'], lyr['b1'], lyr['w2'], lyr['b2'])

        intmd[str(2 * j)] = xa2d.reshape(B, N, E)
        intmd[str(2 * j + 1)] = xf2d.reshape(B, N, E)
        x2d = xf2d

    out2d = final_ln_call(x2d, prm['ln_f_g'], prm['ln_f_b'])
    return out2d.reshape(B, N, E), intmd


# --------------------------- parameter handling -----------------------------

def init_params(key, *, C=128, E=32, depth=4, hidden=64, seq_len=8):
    ks = iter(jax.random.split(key, 64))

    def nrm(shape, s=0.02):
        return s * jax.random.normal(next(ks), shape, jnp.float32)

    p = {
        'bn_gamma': 1.0 + nrm((C,)),
        'bn_beta': nrm((C,)),
        'bn_mean': nrm((C,), 0.1),
        'bn_var': 1.0 + 0.1 * jax.random.uniform(next(ks), (C,), jnp.float32),
        'conv_x_w': nrm((E, C, 3, 3, 3)),         # Conv3d(128, E, 3, 1, 1)
        'conv_x_b': nrm((E,)),
        'pos_emb': nrm((1, seq_len, E)),          # LearnedPositionalEncoding
        'ln_f_g': jnp.ones((1, E), jnp.float32),  # pre_head_ln
        'ln_f_b': jnp.zeros((1, E), jnp.float32),
        'layers': [],
    }
    for _ in range(depth):
        p['layers'].append({
            'ln1_g': jnp.ones((1, E), jnp.float32),
            'ln1_b': jnp.zeros((1, E), jnp.float32),
            'w_qkv': nrm((E, 3 * E)),             # nn.Linear(E, 3E, bias=False)
            'w_proj': nrm((E, E)),
            'b_proj': nrm((1, E)),
            'ln2_g': jnp.ones((1, E), jnp.float32),
            'ln2_b': jnp.zeros((1, E), jnp.float32),
            'w1': nrm((E, hidden)),
            'b1': nrm((1, hidden)),
            'w2': nrm((hidden, E)),
            'b2': nrm((1, E)),
        })
    return p


def _make_shift_mats(H, W):
    """9 constant (H*W, H*W) 0/1 matrices: in-plane (dy,dx) shift + zero pad."""
    HW = H * W
    mats = np.zeros((9, HW, HW), np.float32)
    s = 0
    for dy in (-1, 0, 1):
        for dx in (-1, 0, 1):
            for y in range(H):
                for x in range(W):
                    yy, xx = y + dy, x + dx
                    if 0 <= yy < H and 0 <= xx < W:
                        mats[s, y * W + x, yy * W + xx] = 1.0
            s += 1
    return jnp.asarray(mats, dtype=jnp.bfloat16)


def prepare_params(p, *, D, H, W):
    """One-time folding/casting (hoisted out of the forward pass)."""
    C = p['bn_gamma'].shape[0]
    E = p['conv_x_b'].shape[0]
    scale = p['bn_gamma'] / jnp.sqrt(p['bn_var'] + 1e-5)
    shift = p['bn_beta'] - p['bn_mean'] * scale
    # (E, C, kD, kH, kW) -> (27 taps, C, E), tap order = (kd, kh, kw) row-major
    w27 = jnp.transpose(p['conv_x_w'], (2, 3, 4, 1, 0)).reshape(27, C, E)
    posb = (p['pos_emb'][0] + p['conv_x_b'][None, :]).reshape(D, H * W, E)
    layers = []
    for lyr in p['layers']:
        layers.append(dict(
            ln1_g=lyr['ln1_g'], ln1_b=lyr['ln1_b'],
            w_qkv=lyr['w_qkv'].astype(jnp.bfloat16),
            w_proj=lyr['w_proj'].astype(jnp.bfloat16), b_proj=lyr['b_proj'],
            ln2_g=lyr['ln2_g'], ln2_b=lyr['ln2_b'],
            w1=lyr['w1'].astype(jnp.bfloat16), b1=lyr['b1'],
            w2=lyr['w2'].astype(jnp.bfloat16), b2=lyr['b2']))
    return dict(
        bn_scale=scale.reshape(1, C).astype(jnp.float32),
        bn_shift=shift.reshape(1, C).astype(jnp.float32),
        w27=w27.astype(jnp.bfloat16),
        posb=posb.astype(jnp.float32),
        shift_mats=_make_shift_mats(H, W),
        ln_f_g=p['ln_f_g'], ln_f_b=p['ln_f_b'],
        layers=layers)


# ----------------------- pure-JAX reference (f32) ---------------------------

def encode_reference(x4, p, *, num_heads):
    B, C, D, H, W = x4.shape
    E = p['conv_x_b'].shape[0]
    scale = p['bn_gamma'] / jnp.sqrt(p['bn_var'] + 1e-5)
    shift = p['bn_beta'] - p['bn_mean'] * scale
    x = jnp.maximum(x4 * scale[None, :, None, None, None]
                    + shift[None, :, None, None, None], 0.0)
    y = jax.lax.conv_general_dilated(
        x, p['conv_x_w'], window_strides=(1, 1, 1),
        padding=((1, 1), (1, 1), (1, 1)),
        dimension_numbers=('NCDHW', 'OIDHW', 'NCDHW'))
    y = y + p['conv_x_b'][None, :, None, None, None]
    seq = jnp.transpose(y, (0, 2, 3, 4, 1)).reshape(B, D * H * W, E)
    seq = seq + p['pos_emb']

    nh = num_heads
    hd = E // nh

    def ln(u, g, b):
        mu = u.mean(-1, keepdims=True)
        var = ((u - mu) ** 2).mean(-1, keepdims=True)
        return (u - mu) / jnp.sqrt(var + 1e-5) * g + b

    intmd = {}
    for j, lyr in enumerate(p['layers']):
        h = ln(seq, lyr['ln1_g'], lyr['ln1_b'])
        qkv = h @ lyr['w_qkv']
        qkv = qkv.reshape(B, -1, 3, nh, hd).transpose(2, 0, 3, 1, 4)
        q, k, v = qkv[0], qkv[1], qkv[2]
        s = jnp.einsum('bhqd,bhkd->bhqk', q, k) * (float(hd) ** -0.5)
        att = jax.nn.softmax(s, axis=-1)
        ctx = jnp.einsum('bhqk,bhkd->bhqd', att, v)
        ctx = ctx.transpose(0, 2, 1, 3).reshape(B, -1, E)
        xa = seq + ctx @ lyr['w_proj'] + lyr['b_proj']
        h2 = ln(xa, lyr['ln2_g'], lyr['ln2_b'])
        h2 = jax.nn.gelu(h2 @ lyr['w1'] + lyr['b1'], approximate=True)
        xf = xa + h2 @ lyr['w2'] + lyr['b2']
        intmd[str(2 * j)] = xa
        intmd[str(2 * j + 1)] = xf
        seq = xf
    return ln(seq, p['ln_f_g'], p['ln_f_b']), intmd


if __name__ == "__main__":
    # Module hyperparameters (small, consistent with the reference module):
    img_dim, patch_dim, num_channels = 16, 8, 4
    embedding_dim, num_heads, num_layers, hidden_dim = 32, 4, 4, 64
    B = 2
    ds = img_dim // 8                 # Unet downsamples 8x -> spatial 2
    seq_len = ds ** 3                 # == (img_dim // patch_dim) ** 3

    key = jax.random.PRNGKey(0)
    kx, kp = jax.random.split(key)

    # TODO(synk): Unet(in_channels=4, base_channels=16, num_classes=4) is an
    # external submodule whose definition is not provided; the kernels consume
    # its 128-channel, 1/8-resolution bottleneck output directly (the skip
    # features x1_1/x2_1/x3_1 are only used by decode(), which raises
    # NotImplementedError in this base class).
    x4 = jax.random.normal(kx, (B, 128, ds, ds, ds), jnp.float32)   # NCDHW

    raw = init_params(kp, C=128, E=embedding_dim, depth=num_layers,
                      hidden=hidden_dim, seq_len=seq_len)
    prm = prepare_params(raw, D=ds, H=ds, W=ds)

    encode = jax.jit(functools.partial(transformer_bts_encode,
                                       num_heads=num_heads))
    out, intmd = encode(x4, prm)
    out = jax.block_until_ready(out)
    for v in intmd.values():
        jax.block_until_ready(v)

    # numerical check against a pure-JAX f32 reference of the same encode path
    ref_out, ref_intmd = encode_reference(x4, raw, num_heads=num_heads)
    err_out = float(jnp.max(jnp.abs(out - ref_out)))
    err_int = float(jnp.max(jnp.abs(intmd['7'] - ref_intmd['7'])))

    assert out.shape == (B, seq_len, embedding_dim)
    assert set(intmd.keys()) == {str(i) for i in range(2 * num_layers)}
    # bf16 MXU matmuls vs f32 reference -> allow loose tolerance
    assert err_out < 1e-1 and err_int < 1e-1, (err_out, err_int)
    # forward() would use intmd['1'], intmd['3'], intmd['5'], intmd['7'] as Z1..Z4.
    print("KERNEL_OK")
</pallas_src>

<mosaic_0001>
module attributes {stable_mosaic.version = 11 : i64} {
  func.func @ln_qkv_kernel(%arg0: i32, %arg1: memref<16x32xf32, #tpu.memory_space<vmem>>, %arg2: memref<1x32xf32, #tpu.memory_space<vmem>>, %arg3: memref<1x32xf32, #tpu.memory_space<vmem>>, %arg4: memref<32x96xbf16, #tpu.memory_space<vmem>>, %arg5: memref<16x96xbf16, #tpu.memory_space<vmem>>) attributes {dimension_semantics = [#tpu.dimension_semantics<parallel>], iteration_bounds = array<i64: 1>, scalar_prefetch = 0 : i64, scratch_operands = 0 : i64, tpu.core_type = #tpu.core_type<tc>, window_params = [{transform_indices = @transform_0, window_bounds = array<i64: 16, 32>}, {pipeline_mode = #tpu.pipeline_mode<synchronous>, transform_indices = @transform_1, window_bounds = array<i64: 1, 32>}, {pipeline_mode = #tpu.pipeline_mode<synchronous>, transform_indices = @transform_2, window_bounds = array<i64: 1, 32>}, {pipeline_mode = #tpu.pipeline_mode<synchronous>, transform_indices = @transform_3, window_bounds = array<i64: 32, 96>}, {transform_indices = @transform_4, window_bounds = array<i64: 16, 96>}]} {
    %c0 = arith.constant 0 : index
    %c0_0 = arith.constant 0 : index
    %0 = vector.load %arg1[%c0, %c0_0] : memref<16x32xf32, #tpu.memory_space<vmem>>, vector<16x32xf32>
    %c0_1 = arith.constant 0 : index
    %c0_2 = arith.constant 0 : index
    %1 = vector.load %arg2[%c0_1, %c0_2] : memref<1x32xf32, #tpu.memory_space<vmem>>, vector<1x32xf32>
    %c0_3 = arith.constant 0 : index
    %c0_4 = arith.constant 0 : index
    %2 = vector.load %arg3[%c0_3, %c0_4] : memref<1x32xf32, #tpu.memory_space<vmem>>, vector<1x32xf32>
    %cst = arith.constant dense<0.000000e+00> : vector<16xf32>
    %3 = vector.multi_reduction <add>, %0, %cst [1] : vector<16x32xf32> to vector<16xf32>
    %4 = vector.shape_cast %3 : vector<16xf32> to vector<16x1xf32>
    %cst_5 = arith.constant 3.200000e+01 : f32
    %5 = vector.broadcast %cst_5 : f32 to vector<16x1xf32>
    %6 = arith.divf %4, %5 : vector<16x1xf32>
    %7 = vector.broadcast %6 : vector<16x1xf32> to vector<16x32xf32>
    %8 = arith.subf %0, %7 : vector<16x32xf32>
    %9 = arith.mulf %8, %8 : vector<16x32xf32>
    %cst_6 = arith.constant dense<0.000000e+00> : vector<16xf32>
    %10 = vector.multi_reduction <add>, %9, %cst_6 [1] : vector<16x32xf32> to vector<16xf32>
    %11 = vector.shape_cast %10 : vector<16xf32> to vector<16x1xf32>
    %cst_7 = arith.constant 3.200000e+01 : f32
    %12 = vector.broadcast %cst_7 : f32 to vector<16x1xf32>
    %13 = arith.divf %11, %12 : vector<16x1xf32>
    %14 = vector.broadcast %6 : vector<16x1xf32> to vector<16x32xf32>
    %15 = arith.subf %0, %14 : vector<16x32xf32>
    %cst_8 = arith.constant 9.99999974E-6 : f32
    %16 = vector.broadcast %cst_8 : f32 to vector<16x1xf32>
    %17 = arith.addf %13, %16 : vector<16x1xf32>
    %18 = math.rsqrt %17 : vector<16x1xf32>
    %19 = vector.broadcast %18 : vector<16x1xf32> to vector<16x32xf32>
    %20 = arith.mulf %15, %19 : vector<16x32xf32>
    %21 = vector.broadcast %1 : vector<1x32xf32> to vector<16x32xf32>
    %22 = arith.mulf %20, %21 : vector<16x32xf32>
    %23 = vector.broadcast %2 : vector<1x32xf32> to vector<16x32xf32>
    %24 = arith.addf %22, %23 : vector<16x32xf32>
    %25 = arith.truncf %24 : vector<16x32xf32> to vector<16x32xbf16>
    %c0_9 = arith.constant 0 : index
    %c0_10 = arith.constant 0 : index
    %26 = vector.load %arg4[%c0_9, %c0_10] : memref<32x96xbf16, #tpu.memory_space<vmem>>, vector<32x96xbf16>
    %cst_11 = arith.constant dense<0.000000e+00> : vector<16x96xf32>
    %27 = tpu.matmul %25, %26, %cst_11 {dimension_numbers = #tpu.dot_dimension_numbers<[1], [0], [0], [1], [0, 0, 1, 1], [], []>} : vector<16x32xbf16>, vector<32x96xbf16>, vector<16x96xf32> -> vector<16x96xf32>
    %28 = arith.truncf %27 : vector<16x96xf32> to vector<16x96xbf16>
    %c0_12 = arith.constant 0 : index
    %c0_13 = arith.constant 0 : index
    %29 = vector.load %arg5[%c0_12, %c0_13] : memref<16x96xbf16, #tpu.memory_space<vmem>>, vector<16x96xbf16>
    tpu.vector_store %arg5[%c0_12, %c0_13], %28 {strides = array<i32>} : memref<16x96xbf16, #tpu.memory_space<vmem>>, vector<16x96xbf16>,
    return
  }
  func.func @transform_0(%arg0: i32) -> (i32, i32) {
    %c0_i32 = arith.constant 0 : i32
    %c0_i32_0 = arith.constant 0 : i32
    return %arg0, %c0_i32 : i32, i32
  }
  func.func @transform_1(%arg0: i32) -> (i32, i32) {
    %c0_i32 = arith.constant 0 : i32
    %c0_i32_0 = arith.constant 0 : i32
    %c0_i32_1 = arith.constant 0 : i32
    return %c0_i32, %c0_i32_0 : i32, i32
  }
  func.func @transform_2(%arg0: i32) -> (i32, i32) {
    %c0_i32 = arith.constant 0 : i32
    %c0_i32_0 = arith.constant 0 : i32
    %c0_i32_1 = arith.constant 0 : i32
    return %c0_i32, %c0_i32_0 : i32, i32
  }
  func.func @transform_3(%arg0: i32) -> (i32, i32) {
    %c0_i32 = arith.constant 0 : i32
    %c0_i32_0 = arith.constant 0 : i32
    %c0_i32_1 = arith.constant 0 : i32
    return %c0_i32, %c0_i32_0 : i32, i32
  }
  func.func @transform_4(%arg0: i32) -> (i32, i32) {
    %c0_i32 = arith.constant 0 : i32
    %c0_i32_0 = arith.constant 0 : i32
    return %arg0, %c0_i32 : i32, i32
  }
}

module attributes {stable_mosaic.version = 11 : i64} {
  func.func @conv3d_bn_relu_pos_kernel(%arg0: i32, %arg1: i32, %arg2: memref<4x4x128xf32, #tpu.memory_space<vmem>>, %arg3: memref<1x128xf32, #tpu.memory_space<vmem>>, %arg4: memref<1x128xf32, #tpu.memory_space<vmem>>, %arg5: memref<9x4x4xbf16, #tpu.memory_space<vmem>>, %arg6: memref<27x128x32xbf16, #tpu.memory_space<vmem>>, %arg7: memref<1x4x32xf32, #tpu.memory_space<vmem>>, %arg8: memref<1x1x4x32xf32, #tpu.memory_space<vmem>>) attributes {dimension_semantics = [#tpu.dimension_semantics<parallel>, #tpu.dimension_semantics<parallel>], iteration_bounds = array<i64: 2, 2>, scalar_prefetch = 0 : i64, scratch_operands = 0 : i64, tpu.core_type = #tpu.core_type<tc>, window_params = [{pipeline_mode = #tpu.pipeline_mode<synchronous>, transform_indices = @transform_0, window_bounds = array<i64: 4, 4, 128>}, {pipeline_mode = #tpu.pipeline_mode<synchronous>, transform_indices = @transform_1, window_bounds = array<i64: 1, 128>}, {pipeline_mode = #tpu.pipeline_mode<synchronous>, transform_indices = @transform_2, window_bounds = array<i64: 1, 128>}, {pipeline_mode = #tpu.pipeline_mode<synchronous>, transform_indices = @transform_3, window_bounds = array<i64: 9, 4, 4>}, {pipeline_mode = #tpu.pipeline_mode<synchronous>, transform_indices = @transform_4, window_bounds = array<i64: 27, 128, 32>}, {transform_indices = @transform_5, window_bounds = array<i64: 1, 4, 32>}, {transform_indices = @transform_6, window_bounds = array<i64: 1, 1, 4, 32>}]} {
    %c0 = arith.constant 0 : index
    %c0_0 = arith.constant 0 : index
    %0 = vector.load %arg3[%c0, %c0_0] : memref<1x128xf32, #tpu.memory_space<vmem>>, vector<1x128xf32>
    %c0_1 = arith.constant 0 : index
    %c0_2 = arith.constant 0 : index
    %1 = vector.load %arg4[%c0_1, %c0_2] : memref<1x128xf32, #tpu.memory_space<vmem>>, vector<1x128xf32>
    %cst = arith.constant 0.000000e+00 : f32
    %2 = vector.broadcast %cst : f32 to vector<4x32xf32>
    %c-1_i32 = arith.constant -1 : i32
    %3 = arith.addi %arg1, %c-1_i32 : i32
    %c0_i32 = arith.constant 0 : i32
    %4 = arith.cmpi sge, %3, %c0_i32 : i32
    %c1_i32 = arith.constant 1 : i32
    %5 = arith.cmpi sle, %3, %c1_i32 : i32
    %6 = arith.andi %4, %5 : i1
    %7 = arith.extui %6 : i1 to i32
    %8 = arith.sitofp %7 : i32 to f32
    %c0_i32_3 = arith.constant 0 : i32
    %c1_i32_4 = arith.constant 1 : i32
    %9 = arith.maxsi %c0_i32_3, %3 : i32
    %10 = arith.minsi %c1_i32_4, %9 : i32
    %c2_i32 = arith.constant 2 : i32
    %11 = arith.muli %arg0, %c2_i32 : i32
    %12 = arith.addi %11, %10 : i32
    %13 = arith.index_cast %12 : i32 to index
    %c0_5 = arith.constant 0 : index
    %c0_6 = arith.constant 0 : index
    %14 = vector.load %arg2[%13, %c0_5, %c0_6] : memref<4x4x128xf32, #tpu.memory_space<vmem>>, vector<1x4x128xf32>
    %15 = vector.shape_cast %14 : vector<1x4x128xf32> to vector<4x128xf32>
    %16 = vector.broadcast %0 : vector<1x128xf32> to vector<4x128xf32>
    %17 = arith.mulf %15, %16 : vector<4x128xf32>
    %18 = vector.broadcast %1 : vector<1x128xf32> to vector<4x128xf32>
    %19 = arith.addf %17, %18 : vector<4x128xf32>
    %cst_7 = arith.constant 0.000000e+00 : f32
    %20 = vector.broadcast %cst_7 : f32 to vector<4x128xf32>
    %21 = arith.maximumf %19, %20 : vector<4x128xf32>
    %22 = vector.broadcast %8 : f32 to vector<4x128xf32>
    %23 = arith.mulf %21, %22 : vector<4x128xf32>
    %24 = arith.truncf %23 : vector<4x128xf32> to vector<4x128xbf16>
    %c0_8 = arith.constant 0 : index
    %c0_9 = arith.constant 0 : index
    %c0_10 = arith.constant 0 : index
    %25 = vector.load %arg5[%c0_8, %c0_9, %c0_10] : memref<9x4x4xbf16, #tpu.memory_space<vmem>>, vector<1x4x4xbf16>
    %26 = vector.shape_cast %25 : vector<1x4x4xbf16> to vector<4x4xbf16>
    %cst_11 = arith.constant dense<0.000000e+00> : vector<4x128xf32>
    %27 = tpu.matmul %26, %24, %cst_11 {dimension_numbers = #tpu.dot_dimension_numbers<[1], [0], [0], [1], [0, 0, 1, 1], [], []>} : vector<4x4xbf16>, vector<4x128xbf16>, vector<4x128xf32> -> vector<4x128xf32>
    %28 = arith.truncf %27 : vector<4x128xf32> to vector<4x128xbf16>
    %c0_12 = arith.constant 0 : index
    %c0_13 = arith.constant 0 : index
    %c0_14 = arith.constant 0 : index
    %29 = vector.load %arg6[%c0_12, %c0_13, %c0_14] : memref<27x128x32xbf16, #tpu.memory_space<vmem>>, vector<1x128x32xbf16>
    %30 = vector.shape_cast %29 : vector<1x128x32xbf16> to vector<128x32xbf16>
    %cst_15 = arith.constant dense<0.000000e+00> : vector<4x32xf32>
    %31 = tpu.matmul %28, %30, %cst_15 {dimension_numbers = #tpu.dot_dimension_numbers<[1], [0], [0], [1], [0, 0, 1, 1], [], []>} : vector<4x128xbf16>, vector<128x32xbf16>, vector<4x32xf32> -> vector<4x32xf32>
    %32 = arith.addf %2, %31 : vector<4x32xf32>
    %c1 = arith.constant 1 : index
    %c0_16 = arith.constant 0 : index
    %c0_17 = arith.constant 0 : index
    %33 = vector.load %arg5[%c1, %c0_16, %c0_17] : memref<9x4x4xbf16, #tpu.memory_space<vmem>>, vector<1x4x4xbf16>
    %34 = vector.shape_cast %33 : vector<1x4x4xbf16> to vector<4x4xbf16>
    %cst_18 = arith.constant dense<0.000000e+00> : vector<4x128xf32>
    %35 = tpu.matmul %34, %24, %cst_18 {dimension_numbers = #tpu.dot_dimension_numbers<[1], [0], [0], [1], [0, 0, 1, 1], [], []>} : vector<4x4xbf16>, vector<4x128xbf16>, vector<4x128xf32> -> vector<4x128xf32>
    %36 = arith.truncf %35 : vector<4x128xf32> to vector<4x128xbf16>
    %c1_19 = arith.constant 1 : index
    %c0_20 = arith.constant 0 : index
    %c0_21 = arith.constant 0 : index
    %37 = vector.load %arg6[%c1_19, %c0_20, %c0_21] : memref<27x128x32xbf16, #tpu.memory_space<vmem>>, vector<1x128x32xbf16>
    %38 = vector.shape_cast %37 : vector<1x128x32xbf16> to vector<128x32xbf16>
    %cst_22 = arith.constant dense<0.000000e+00> : vector<4x32xf32>
    %39 = tpu.matmul %36, %38, %cst_22 {dimension_numbers = #tpu.dot_dimension_numbers<[1], [0], [0], [1], [0, 0, 1, 1], [], []>} : vector<4x128xbf16>, vector<128x32xbf16>, vector<4x32xf32> -> vector<4x32xf32>
    %40 = arith.addf %32, %39 : vector<4x32xf32>
    %c2 = arith.constant 2 : index
    %c0_23 = arith.constant 0 : index
    %c0_24 = arith.constant 0 : index
    %41 = vector.load %arg5[%c2, %c0_23, %c0_24] : memref<9x4x4xbf16, #tpu.memory_space<vmem>>, vector<1x4x4xbf16>
    %42 = vector.shape_cast %41 : vector<1x4x4xbf16> to vector<4x4xbf16>
    %cst_25 = arith.constant dense<0.000000e+00> : vector<4x128xf32>
    %43 = tpu.matmul %42, %24, %cst_25 {dimension_numbers = #tpu.dot_dimension_numbers<[1], [0], [0], [1], [0, 0, 1, 1], [], []>} : vector<4x4xbf16>, vector<4x128xbf16>, vector<4x128xf32> -> vector<4x128xf32>
    %44 = arith.truncf %43 : vector<4x128xf32> to vector<4x128xbf16>
    %c2_26 = arith.constant 2 : index
    %c0_27 = arith.constant 0 : index
    %c0_28 = arith.constant 0 : index
    %45 = vector.load %arg6[%c2_26, %c0_27, %c0_28] : memref<27x128x32xbf16, #tpu.memory_space<vmem>>, vector<1x128x32xbf16>
    %46 = vector.shape_cast %45 : vector<1x128x32xbf16> to vector<128x32xbf16>
    %cst_29 = arith.constant dense<0.000000e+00> : vector<4x32xf32>
    %47 = tpu.matmul %44, %46, %cst_29 {dimension_numbers = #tpu.dot_dimension_numbers<[1], [0], [0], [1], [0, 0, 1, 1], [], []>} : vector<4x128xbf16>, vector<128x32xbf16>, vector<4x32xf32> -> vector<4x32xf32>
    %48 = arith.addf %40, %47 : vector<4x32xf32>
    %c3 = arith.constant 3 : index
    %c0_30 = arith.constant 0 : index
    %c0_31 = arith.constant 0 : index
    %49 = vector.load %arg5[%c3, %c0_30, %c0_31] : memref<9x4x4xbf16, #tpu.memory_space<vmem>>, vector<1x4x4xbf16>
    %50 = vector.shape_cast %49 : vector<1x4x4xbf16> to vector<4x4xbf16>
    %cst_32 = arith.constant dense<0.000000e+00> : vector<4x128xf32>
    %51 = tpu.matmul %50, %24, %cst_32 {dimension_numbers = #tpu.dot_dimension_numbers<[1], [0], [0], [1], [0, 0, 1, 1], [], []>} : vector<4x4xbf16>, vector<4x128xbf16>, vector<4x128xf32> -> vector<4x128xf32>
    %52 = arith.truncf %51 : vector<4x128xf32> to vector<4x128xbf16>
    %c3_33 = arith.constant 3 : index
    %c0_34 = arith.constant 0 : index
    %c0_35 = arith.constant 0 : index
    %53 = vector.load %arg6[%c3_33, %c0_34, %c0_35] : memref<27x128x32xbf16, #tpu.memory_space<vmem>>, vector<1x128x32xbf16>
    %54 = vector.shape_cast %53 : vector<1x128x32xbf16> to vector<128x32xbf16>
    %cst_36 = arith.constant dense<0.000000e+00> : vector<4x32xf32>
    %55 = tpu.matmul %52, %54, %cst_36 {dimension_numbers = #tpu.dot_dimension_numbers<[1], [0], [0], [1], [0, 0, 1, 1], [], []>} : vector<4x128xbf16>, vector<128x32xbf16>, vector<4x32xf32> -> vector<4x32xf32>
    %56 = arith.addf %48, %55 : vector<4x32xf32>
    %c4 = arith.constant 4 : index
    %c0_37 = arith.constant 0 : index
    %c0_38 = arith.constant 0 : index
    %57 = vector.load %arg5[%c4, %c0_37, %c0_38] : memref<9x4x4xbf16, #tpu.memory_space<vmem>>, vector<1x4x4xbf16>
    %58 = vector.shape_cast %57 : vector<1x4x4xbf16> to vector<4x4xbf16>
    %cst_39 = arith.constant dense<0.000000e+00> : vector<4x128xf32>
    %59 = tpu.matmul %58, %24, %cst_39 {dimension_numbers = #tpu.dot_dimension_numbers<[1], [0], [0], [1], [0, 0, 1, 1], [], []>} : vector<4x4xbf16>, vector<4x128xbf16>, vector<4x128xf32> -> vector<4x128xf32>
    %60 = arith.truncf %59 : vector<4x128xf32> to vector<4x128xbf16>
    %c4_40 = arith.constant 4 : index
    %c0_41 = arith.constant 0 : index
    %c0_42 = arith.constant 0 : index
    %61 = vector.load %arg6[%c4_40, %c0_41, %c0_42] : memref<27x128x32xbf16, #tpu.memory_space<vmem>>, vector<1x128x32xbf16>
    %62 = vector.shape_cast %61 : vector<1x128x32xbf16> to vector<128x32xbf16>
    %cst_43 = arith.constant dense<0.000000e+00> : vector<4x32xf32>
    %63 = tpu.matmul %60, %62, %cst_43 {dimension_numbers = #tpu.dot_dimension_numbers<[1], [0], [0], [1], [0, 0, 1, 1], [], []>} : vector<4x128xbf16>, vector<128x32xbf16>, vector<4x32xf32> -> vector<4x32xf32>
    %64 = arith.addf %56, %63 : vector<4x32xf32>
    %c5 = arith.constant 5 : index
    %c0_44 = arith.constant 0 : index
    %c0_45 = arith.constant 0 : index
    %65 = vector.load %arg5[%c5, %c0_44, %c0_45] : memref<9x4x4xbf16, #tpu.memory_space<vmem>>, vector<1x4x4xbf16>
    %66 = vector.shape_cast %65 : vector<1x4x4xbf16> to vector<4x4xbf16>
    %cst_46 = arith.constant dense<0.000000e+00> : vector<4x128xf32>
    %67 = tpu.matmul %66, %24, %cst_46 {dimension_numbers = #tpu.dot_dimension_numbers<[1], [0], [0], [1], [0, 0, 1, 1], [], []>} : vector<4x4xbf16>, vector<4x128xbf16>, vector<4x128xf32> -> vector<4x128xf32>
    %68 = arith.truncf %67 : vector<4x128xf32> to vector<4x128xbf16>
    %c5_47 = arith.constant 5 : index
    %c0_48 = arith.constant 0 : index
    %c0_49 = arith.constant 0 : index
    %69 = vector.load %arg6[%c5_47, %c0_48, %c0_49] : memref<27x128x32xbf16, #tpu.memory_space<vmem>>, vector<1x128x32xbf16>
    %70 = vector.shape_cast %69 : vector<1x128x32xbf16> to vector<128x32xbf16>
    %cst_50 = arith.constant dense<0.000000e+00> : vector<4x32xf32>
    %71 = tpu.matmul %68, %70, %cst_50 {dimension_numbers = #tpu.dot_dimension_numbers<[1], [0], [0], [1], [0, 0, 1, 1], [], []>} : vector<4x128xbf16>, vector<128x32xbf16>, vector<4x32xf32> -> vector<4x32xf32>
    %72 = arith.addf %64, %71 : vector<4x32xf32>
    %c6 = arith.constant 6 : index
    %c0_51 = arith.constant 0 : index
    %c0_52 = arith.constant 0 : index
    %73 = vector.load %arg5[%c6, %c0_51, %c0_52] : memref<9x4x4xbf16, #tpu.memory_space<vmem>>, vector<1x4x4xbf16>
    %74 = vector.shape_cast %73 : vector<1x4x4xbf16> to vector<4x4xbf16>
    %cst_53 = arith.constant dense<0.000000e+00> : vector<4x128xf32>
    %75 = tpu.matmul %74, %24, %cst_53 {dimension_numbers = #tpu.dot_dimension_numbers<[1], [0], [0], [1], [0, 0, 1, 1], [], []>} : vector<4x4xbf16>, vector<4x128xbf16>, vector<4x128xf32> -> vector<4x128xf32>
    %76 = arith.truncf %75 : vector<4x128xf32> to vector<4x128xbf16>
    %c6_54 = arith.constant 6 : index
    %c0_55 = arith.constant 0 : index
    %c0_56 = arith.constant 0 : index
    %77 = vector.load %arg6[%c6_54, %c0_55, %c0_56] : memref<27x128x32xbf16, #tpu.memory_space<vmem>>, vector<1x128x32xbf16>
    %78 = vector.shape_cast %77 : vector<1x128x32xbf16> to vector<128x32xbf16>
    %cst_57 = arith.constant dense<0.000000e+00> : vector<4x32xf32>
    %79 = tpu.matmul %76, %78, %cst_57 {dimension_numbers = #tpu.dot_dimension_numbers<[1], [0], [0], [1], [0, 0, 1, 1], [], []>} : vector<4x128xbf16>, vector<128x32xbf16>, vector<4x32xf32> -> vector<4x32xf32>
    %80 = arith.addf %72, %79 : vector<4x32xf32>
    %c7 = arith.constant 7 : index
    %c0_58 = arith.constant 0 : index
    %c0_59 = arith.constant 0 : index
    %81 = vector.load %arg5[%c7, %c0_58, %c0_59] : memref<9x4x4xbf16, #tpu.memory_space<vmem>>, vector<1x4x4xbf16>
    %82 = vector.shape_cast %81 : vector<1x4x4xbf16> to vector<4x4xbf16>
    %cst_60 = arith.constant dense<0.000000e+00> : vector<4x128xf32>
    %83 = tpu.matmul %82, %24, %cst_60 {dimension_numbers = #tpu.dot_dimension_numbers<[1], [0], [0], [1], [0, 0, 1, 1], [], []>} : vector<4x4xbf16>, vector<4x128xbf16>, vector<4x128xf32> -> vector<4x128xf32>
    %84 = arith.truncf %83 : vector<4x128xf32> to vector<4x128xbf16>
    %c7_61 = arith.constant 7 : index
    %c0_62 = arith.constant 0 : index
    %c0_63 = arith.constant 0 : index
    %85 = vector.load %arg6[%c7_61, %c0_62, %c0_63] : memref<27x128x32xbf16, #tpu.memory_space<vmem>>, vector<1x128x32xbf16>
    %86 = vector.shape_cast %85 : vector<1x128x32xbf16> to vector<128x32xbf16>
    %cst_64 = arith.constant dense<0.000000e+00> : vector<4x32xf32>
    %87 = tpu.matmul %84, %86, %cst_64 {dimension_numbers = #tpu.dot_dimension_numbers<[1], [0], [0], [1], [0, 0, 1, 1], [], []>} : vector<4x128xbf16>, vector<128x32xbf16>, vector<4x32xf32> -> vector<4x32xf32>
    %88 = arith.addf %80, %87 : vector<4x32xf32>
    %c8 = arith.constant 8 : index
    %c0_65 = arith.constant 0 : index
    %c0_66 = arith.constant 0 : index
    %89 = vector.load %arg5[%c8, %c0_65, %c0_66] : memref<9x4x4xbf16, #tpu.memory_space<vmem>>, vector<1x4x4xbf16>
    %90 = vector.shape_cast %89 : vector<1x4x4xbf16> to vector<4x4xbf16>
    %cst_67 = arith.constant dense<0.000000e+00> : vector<4x128xf32>
    %91 = tpu.matmul %90, %24, %cst_67 {dimension_numbers = #tpu.dot_dimension_numbers<[1], [0], [0], [1], [0, 0, 1, 1], [], []>} : vector<4x4xbf16>, vector<4x128xbf16>, vector<4x128xf32> -> vector<4x128xf32>
    %92 = arith.truncf %91 : vector<4x128xf32> to vector<4x128xbf16>
    %c8_68 = arith.constant 8 : index
    %c0_69 = arith.constant 0 : index
    %c0_70 = arith.constant 0 : index
    %93 = vector.load %arg6[%c8_68, %c0_69, %c0_70] : memref<27x128x32xbf16, #tpu.memory_space<vmem>>, vector<1x128x32xbf16>
    %94 = vector.shape_cast %93 : vector<1x128x32xbf16> to vector<128x32xbf16>
    %cst_71 = arith.constant dense<0.000000e+00> : vector<4x32xf32>
    %95 = tpu.matmul %92, %94, %cst_71 {dimension_numbers = #tpu.dot_dimension_numbers<[1], [0], [0], [1], [0, 0, 1, 1], [], []>} : vector<4x128xbf16>, vector<128x32xbf16>, vector<4x32xf32> -> vector<4x32xf32>
    %96 = arith.addf %88, %95 : vector<4x32xf32>
    %c0_i32_72 = arith.constant 0 : i32
    %97 = arith.addi %arg1, %c0_i32_72 : i32
    %c0_i32_73 = arith.constant 0 : i32
    %98 = arith.cmpi sge, %97, %c0_i32_73 : i32
    %c1_i32_74 = arith.constant 1 : i32
    %99 = arith.cmpi sle, %97, %c1_i32_74 : i32
    %100 = arith.andi %98, %99 : i1
    %101 = arith.extui %100 : i1 to i32
    %102 = arith.sitofp %101 : i32 to f32
    %c0_i32_75 = arith.constant 0 : i32
    %c1_i32_76 = arith.constant 1 : i32
    %103 = arith.maxsi %c0_i32_75, %97 : i32
    %104 = arith.minsi %c1_i32_76, %103 : i32
    %c2_i32_77 = arith.constant 2 : i32
    %105 = arith.muli %arg0, %c2_i32_77 : i32
    %106 = arith.addi %105, %104 : i32
    %107 = arith.index_cast %106 : i32 to index
    %c0_78 = arith.constant 0 : index
    %c0_79 = arith.constant 0 : index
    %108 = vector.load %arg2[%107, %c0_78, %c0_79] : memref<4x4x128xf32, #tpu.memory_space<vmem>>, vector<1x4x128xf32>
    %109 = vector.shape_cast %108 : vector<1x4x128xf32> to vector<4x128xf32>
    %110 = vector.broadcast %0 : vector<1x128xf32> to vector<4x128xf32>
    %111 = arith.mulf %109, %110 : vector<4x128xf32>
    %112 = vector.broadcast %1 : vector<1x128xf32> to vector<4x128xf32>
    %113 = arith.addf %111, %112 : vector<4x128xf32>
    %cst_80 = arith.constant 0.000000e+00 : f32
    %114 = vector.broadcast %cst_80 : f32 to vector<4x128xf32>
    %115 = arith.maximumf %113, %114 : vector<4x128xf32>
    %116 = vector.broadcast %102 : f32 to vector<4x128xf32>
    %117 = arith.mulf %115, %116 : vector<4x128xf32>
    %118 = arith.truncf %117 : vector<4x128xf32> to vector<4x128xbf16>
    %c0_81 = arith.constant 0 : index
    %c0_82 = arith.constant 0 : index
    %c0_83 = arith.constant 0 : index
    %119 = vector.load %arg5[%c0_81, %c0_82, %c0_83] : memref<9x4x4xbf16, #tpu.memory_space<vmem>>, vector<1x4x4xbf16>
    %120 = vector.shape_cast %119 : vector<1x4x4xbf16> to vector<4x4xbf16>
    %cst_84 = arith.constant dense<0.000000e+00> : vector<4x128xf32>
    %121 = tpu.matmul %120, %118, %cst_84 {dimension_numbers = #tpu.dot_dimension_numbers<[1], [0], [0], [1], [0, 0, 1, 1], [], []>} : vector<4x4xbf16>, vector<4x128xbf16>, vector<4x128xf32> -> vector<4x128xf32>
    %122 = arith.truncf %121 : vector<4x128xf32> to vector<4x128xbf16>
    %c9 = arith.constant 9 : index
    %c0_85 = arith.constant 0 : index
    %c0_86 = arith.constant 0 : index
    %123 = vector.load %arg6[%c9, %c0_85, %c0_86] : memref<27x128x32xbf16, #tpu.memory_space<vmem>>, vector<1x128x32xbf16>
    %124 = vector.shape_cast %123 : vector<1x128x32xbf16> to vector<128x32xbf16>
    %cst_87 = arith.constant dense<0.000000e+00> : vector<4x32xf32>
    %125 = tpu.matmul %122, %124, %cst_87 {dimension_numbers = #tpu.dot_dimension_numbers<[1], [0], [0], [1], [0, 0, 1, 1], [], []>} : vector<4x128xbf16>, vector<128x32xbf16>, vector<4x32xf32> -> vector<4x32xf32>
    %126 = arith.addf %96, %125 : vector<4x32xf32>
    %c1_88 = arith.constant 1 : index
    %c0_89 = arith.constant 0 : index
    %c0_90 = arith.constant 0 : index
    %127 = vector.load %arg5[%c1_88, %c0_89, %c0_90] : memref<9x4x4xbf16, #tpu.memory_space<vmem>>, vector<1x4x4xbf16>
    %128 = vector.shape_cast %127 : vector<1x4x4xbf16> to vector<4x4xbf16>
    %cst_91 = arith.constant dense<0.000000e+00> : vector<4x128xf32>
    %129 = tpu.matmul %128, %118, %cst_91 {dimension_numbers = #tpu.dot_dimension_numbers<[1], [0], [0], [1], [0, 0, 1, 1], [], []>} : vector<4x4xbf16>, vector<4x128xbf16>, vector<4x128xf32> -> vector<4x128xf32>
    %130 = arith.truncf %129 : vector<4x128xf32> to vector<4x128xbf16>
    %c10 = arith.constant 10 : index
    %c0_92 = arith.constant 0 : index
    %c0_93 = arith.constant 0 : index
    %131 = vector.load %arg6[%c10, %c0_92, %c0_93] : memref<27x128x32xbf16, #tpu.memory_space<vmem>>, vector<1x128x32xbf16>
    %132 = vector.shape_cast %131 : vector<1x128x32xbf16> to vector<128x32xbf16>
    %cst_94 = arith.constant dense<0.000000e+00> : vector<4x32xf32>
    %133 = tpu.matmul %130, %132, %cst_94 {dimension_numbers = #tpu.dot_dimension_numbers<[1], [0], [0], [1], [0, 0, 1, 1], [], []>} : vector<4x128xbf16>, vector<128x32xbf16>, vector<4x32xf32> -> vector<4x32xf32>
    %134 = arith.addf %126, %133 : vector<4x32xf32>
    %c2_95 = arith.constant 2 : index
    %c0_96 = arith.constant 0 : index
    %c0_97 = arith.constant 0 : index
    %135 = vector.load %arg5[%c2_95, %c0_96, %c0_97] : memref<9x4x4xbf16, #tpu.memory_space<vmem>>, vector<1x4x4xbf16>
    %136 = vector.shape_cast %135 : vector<1x4x4xbf16> to vector<4x4xbf16>
    %cst_98 = arith.constant dense<0.000000e+00> : vector<4x128xf32>
    %137 = tpu.matmul %136, %118, %cst_98 {dimension_numbers = #tpu.dot_dimension_numbers<[1], [0], [0], [1], [0, 0, 1, 1], [], []>} : vector<4x4xbf16>, vector<4x128xbf16>, vector<4x128xf32> -> vector<4x128xf32>
    %138 = arith.truncf %137 : vector<4x128xf32> to vector<4x128xbf16>
    %c11 = arith.constant 11 : index
    %c0_99 = arith.constant 0 : index
    %c0_100 = arith.constant 0 : index
    %139 = vector.load %arg6[%c11, %c0_99, %c0_100] : memref<27x128x32xbf16, #tpu.memory_space<vmem>>, vector<1x128x32xbf16>
    %140 = vector.shape_cast %139 : vector<1x128x32xbf16> to vector<128x32xbf16>
    %cst_101 = arith.constant dense<0.000000e+00> : vector<4x32xf32>
    %141 = tpu.matmul %138, %140, %cst_101 {dimension_numbers = #tpu.dot_dimension_numbers<[1], [0], [0], [1], [0, 0, 1, 1], [], []>} : vector<4x128xbf16>, vector<128x32xbf16>, vector<4x32xf32> -> vector<4x32xf32>
    %142 = arith.addf %134, %141 : vector<4x32xf32>
    %c3_102 = arith.constant 3 : index
    %c0_103 = arith.constant 0 : index
    %c0_104 = arith.constant 0 : index
    %143 = vector.load %arg5[%c3_102, %c0_103, %c0_104] : memref<9x4x4xbf16, #tpu.memory_space<vmem>>, vector<1x4x4xbf16>
    %144 = vector.shape_cast %143 : vector<1x4x4xbf16> to vector<4x4xbf16>
    %cst_105 = arith.constant dense<0.000000e+00> : vector<4x128xf32>
    %145 = tpu.matmul %144, %118, %cst_105 {dimension_numbers = #tpu.dot_dimension_numbers<[1], [0], [0], [1], [0, 0, 1, 1], [], []>} : vector<4x4xbf16>, vector<4x128xbf16>, vector<4x128xf32> -> vector<4x128xf32>
    %146 = arith.truncf %145 : vector<4x128xf32> to vector<4x128xbf16>
    %c12 = arith.constant 12 : index
    %c0_106 = arith.constant 0 : index
    %c0_107 = arith.constant 0 : index
    %147 = vector.load %arg6[%c12, %c0_106, %c0_107] : memref<27x128x32xbf16, #tpu.memory_space<vmem>>, vector<1x128x32xbf16>
    %148 = vector.shape_cast %147 : vector<1x128x32xbf16> to vector<128x32xbf16>
    %cst_108 = arith.constant dense<0.000000e+00> : vector<4x32xf32>
    %149 = tpu.matmul %146, %148, %cst_108 {dimension_numbers = #tpu.dot_dimension_numbers<[1], [0], [0], [1], [0, 0, 1, 1], [], []>} : vector<4x128xbf16>, vector<128x32xbf16>, vector<4x32xf32> -> vector<4x32xf32>
    %150 = arith.addf %142, %149 : vector<4x32xf32>
    %c4_109 = arith.constant 4 : index
    %c0_110 = arith.constant 0 : index
    %c0_111 = arith.constant 0 : index
    %151 = vector.load %arg5[%c4_109, %c0_110, %c0_111] : memref<9x4x4xbf16, #tpu.memory_space<vmem>>, vector<1x4x4xbf16>
    %152 = vector.shape_cast %151 : vector<1x4x4xbf16> to vector<4x4xbf16>
    %cst_112 = arith.constant dense<0.000000e+00> : vector<4x128xf32>
    %153 = tpu.matmul %152, %118, %cst_112 {dimension_numbers = #tpu.dot_dimension_numbers<[1], [0], [0], [1], [0, 0, 1, 1], [], []>} : vector<4x4xbf16>, vector<4x128xbf16>, vector<4x128xf32> -> vector<4x128xf32>
    %154 = arith.truncf %153 : vector<4x128xf32> to vector<4x128xbf16>
    %c13 = arith.constant 13 : index
    %c0_113 = arith.constant 0 : index
    %c0_114 = arith.constant 0 : index
    %155 = vector.load %arg6[%c13, %c0_113, %c0_114] : memref<27x128x32xbf16, #tpu.memory_space<vmem>>, vector<1x128x32xbf16>
    %156 = vector.shape_cast %155 : vector<1x128x32xbf16> to vector<128x32xbf16>
    %cst_115 = arith.constant dense<0.000000e+00> : vector<4x32xf32>
    %157 = tpu.matmul %154, %156, %cst_115 {dimension_numbers = #tpu.dot_dimension_numbers<[1], [0], [0], [1], [0, 0, 1, 1], [], []>} : vector<4x128xbf16>, vector<128x32xbf16>, vector<4x32xf32> -> vector<4x32xf32>
    %158 = arith.addf %150, %157 : vector<4x32xf32>
    %c5_116 = arith.constant 5 : index
    %c0_117 = arith.constant 0 : index
    %c0_118 = arith.constant 0 : index
    %159 = vector.load %arg5[%c5_116, %c0_117, %c0_118] : memref<9x4x4xbf16, #tpu.memory_space<vmem>>, vector<1x4x4xbf16>
    %160 = vector.shape_cast %159 : vector<1x4x4xbf16> to vector<4x4xbf16>
    %cst_119 = arith.constant dense<0.000000e+00> : vector<4x128xf32>
    %161 = tpu.matmul %160, %118, %cst_119 {dimension_numbers = #tpu.dot_dimension_numbers<[1], [0], [0], [1], [0, 0, 1, 1], [], []>} : vector<4x4xbf16>, vector<4x128xbf16>, vector<4x128xf32> -> vector<4x128xf32>
    %162 = arith.truncf %161 : vector<4x128xf32> to vector<4x128xbf16>
    %c14 = arith.constant 14 : index
    %c0_120 = arith.constant 0 : index
    %c0_121 = arith.constant 0 : index
    %163 = vector.load %arg6[%c14, %c0_120, %c0_121] : memref<27x128x32xbf16, #tpu.memory_space<vmem>>, vector<1x128x32xbf16>
    %164 = vector.shape_cast %163 : vector<1x128x32xbf16> to vector<128x32xbf16>
    %cst_122 = arith.constant dense<0.000000e+00> : vector<4x32xf32>
    %165 = tpu.matmul %162, %164, %cst_122 {dimension_numbers = #tpu.dot_dimension_numbers<[1], [0], [0], [1], [0, 0, 1, 1], [], []>} : vector<4x128xbf16>, vector<128x32xbf16>, vector<4x32xf32> -> vector<4x32xf32>
    %166 = arith.addf %158, %165 : vector<4x32xf32>
    %c6_123 = arith.constant 6 : index
    %c0_124 = arith.constant 0 : index
    %c0_125 = arith.constant 0 : index
    %167 = vector.load %arg5[%c6_123, %c0_124, %c0_125] : memref<9x4x4xbf16, #tpu.memory_space<vmem>>, vector<1x4x4xbf16>
    %168 = vector.shape_cast %167 : vector<1x4x4xbf16> to vector<4x4xbf16>
    %cst_126 = arith.constant dense<0.000000e+00> : vector<4x128xf32>
    %169 = tpu.matmul %168, %118, %cst_126 {dimension_numbers = #tpu.dot_dimension_numbers<[1], [0], [0], [1], [0, 0, 1, 1], [], []>} : vector<4x4xbf16>, vector<4x128xbf16>, vector<4x128xf32> -> vector<4x128xf32>
    %170 = arith.truncf %169 : vector<4x128xf32> to vector<4x128xbf16>
    %c15 = arith.constant 15 : index
    %c0_127 = arith.constant 0 : index
    %c0_128 = arith.constant 0 : index
    %171 = vector.load %arg6[%c15, %c0_127, %c0_128] : memref<27x128x32xbf16, #tpu.memory_space<vmem>>, vector<1x128x32xbf16>
    %172 = vector.shape_cast %171 : vector<1x128x32xbf16> to vector<128x32xbf16>
    %cst_129 = arith.constant dense<0.000000e+00> : vector<4x32xf32>
    %173 = tpu.matmul %170, %172, %cst_129 {dimension_numbers = #tpu.dot_dimension_numbers<[1], [0], [0], [1], [0, 0, 1, 1], [], []>} : vector<4x128xbf16>, vector<128x32xbf16>, vector<4x32xf32> -> vector<4x32xf32>
    %174 = arith.addf %166, %173 : vector<4x32xf32>
    %c7_130 = arith.constant 7 : index
    %c0_131 = arith.constant 0 : index
    %c0_132 = arith.constant 0 : index
    %175 = vector.load %arg5[%c7_130, %c0_131, %c0_132] : memref<9x4x4xbf16, #tpu.memory_space<vmem>>, vector<1x4x4xbf16>
    %176 = vector.shape_cast %175 : vector<1x4x4xbf16> to vector<4x4xbf16>
    %cst_133 = arith.constant dense<0.000000e+00> : vector<4x128xf32>
    %177 = tpu.matmul %176, %118, %cst_133 {dimension_numbers = #tpu.dot_dimension_numbers<[1], [0], [0], [1], [0, 0, 1, 1], [], []>} : vector<4x4xbf16>, vector<4x128xbf16>, vector<4x128xf32> -> vector<4x128xf32>
    %178 = arith.truncf %177 : vector<4x128xf32> to vector<4x128xbf16>
    %c16 = arith.constant 16 : index
    %c0_134 = arith.constant 0 : index
    %c0_135 = arith.constant 0 : index
    %179 = vector.load %arg6[%c16, %c0_134, %c0_135] : memref<27x128x32xbf16, #tpu.memory_space<vmem>>, vector<1x128x32xbf16>
    %180 = vector.shape_cast %179 : vector<1x128x32xbf16> to vector<128x32xbf16>
    %cst_136 = arith.constant dense<0.000000e+00> : vector<4x32xf32>
    %181 = tpu.matmul %178, %180, %cst_136 {dimension_numbers = #tpu.dot_dimension_numbers<[1], [0], [0], [1], [0, 0, 1, 1], [], []>} : vector<4x128xbf16>, vector<128x32xbf16>, vector<4x32xf32> -> vector<4x32xf32>
    %182 = arith.addf %174, %181 : vector<4x32xf32>
    %c8_137 = arith.constant 8 : index
    %c0_138 = arith.constant 0 : index
    %c0_139 = arith.constant 0 : index
    %183 = vector.load %arg5[%c8_137, %c0_138, %c0_139] : memref<9x4x4xbf16, #tpu.memory_space<vmem>>, vector<1x4x4xbf16>
    %184 = vector.shape_cast %183 : vector<1x4x4xbf16> to vector<4x4xbf16>
    %cst_140 = arith.constant dense<0.000000e+00> : vector<4x128xf32>
    %185 = tpu.matmul %184, %118, %cst_140 {dimension_numbers = #tpu.dot_dimension_numbers<[1], [0], [0], [1], [0, 0, 1, 1], [], []>} : vector<4x4xbf16>, vector<4x128xbf16>, vector<4x128xf32> -> vector<4x128xf32>
    %186 = arith.truncf %185 : vector<4x128xf32> to vector<4x128xbf16>
    %c17 = arith.constant 17 : index
    %c0_141 = arith.constant 0 : index
    %c0_142 = arith.constant 0 : index
    %187 = vector.load %arg6[%c17, %c0_141, %c0_142] : memref<27x128x32xbf16, #tpu.memory_space<vmem>>, vector<1x128x32xbf16>
    %188 = vector.shape_cast %187 : vector<1x128x32xbf16> to vector<128x32xbf16>
    %cst_143 = arith.constant dense<0.000000e+00> : vector<4x32xf32>
    %189 = tpu.matmul %186, %188, %cst_143 {dimension_numbers = #tpu.dot_dimension_numbers<[1], [0], [0], [1], [0, 0, 1, 1], [], []>} : vector<4x128xbf16>, vector<128x32xbf16>, vector<4x32xf32> -> vector<4x32xf32>
    %190 = arith.addf %182, %189 : vector<4x32xf32>
    %c1_i32_144 = arith.constant 1 : i32
    %191 = arith.addi %arg1, %c1_i32_144 : i32
    %c0_i32_145 = arith.constant 0 : i32
    %192 = arith.cmpi sge, %191, %c0_i32_145 : i32
    %c1_i32_146 = arith.constant 1 : i32
    %193 = arith.cmpi sle, %191, %c1_i32_146 : i32
    %194 = arith.andi %192, %193 : i1
    %195 = arith.extui %194 : i1 to i32
    %196 = arith.sitofp %195 : i32 to f32
    %c0_i32_147 = arith.constant 0 : i32
    %c1_i32_148 = arith.constant 1 : i32
    %197 = arith.maxsi %c0_i32_147, %191 : i32
    %198 = arith.minsi %c1_i32_148, %197 : i32
    %c2_i32_149 = arith.constant 2 : i32
    %199 = arith.muli %arg0, %c2_i32_149 : i32
    %200 = arith.addi %199, %198 : i32
    %201 = arith.index_cast %200 : i32 to index
    %c0_150 = arith.constant 0 : index
    %c0_151 = arith.constant 0 : index
    %202 = vector.load %arg2[%201, %c0_150, %c0_151] : memref<4x4x128xf32, #tpu.memory_space<vmem>>, vector<1x4x128xf32>
    %203 = vector.shape_cast %202 : vector<1x4x128xf32> to vector<4x128xf32>
    %204 = vector.broadcast %0 : vector<1x128xf32> to vector<4x128xf32>
    %205 = arith.mulf %203, %204 : vector<4x128xf32>
    %206 = vector.broadcast %1 : vector<1x128xf32> to vector<4x128xf32>
    %207 = arith.addf %205, %206 : vector<4x128xf32>
    %cst_152 = arith.constant 0.000000e+00 : f32
    %208 = vector.broadcast %cst_152 : f32 to vector<4x128xf32>
    %209 = arith.maximumf %207, %208 : vector<4x128xf32>
    %210 = vector.broadcast %196 : f32 to vector<4x128xf32>
    %211 = arith.mulf %209, %210 : vector<4x128xf32>
    %212 = arith.truncf %211 : vector<4x128xf32> to vector<4x128xbf16>
    %c0_153 = arith.constant 0 : index
    %c0_154 = arith.constant 0 : index
    %c0_155 = arith.constant 0 : index
    %213 = vector.load %arg5[%c0_153, %c0_154, %c0_155] : memref<9x4x4xbf16, #tpu.memory_space<vmem>>, vector<1x4x4xbf16>
    %214 = vector.shape_cast %213 : vector<1x4x4xbf16> to vector<4x4xbf16>
    %cst_156 = arith.constant dense<0.000000e+00> : vector<4x128xf32>
    %215 = tpu.matmul %214, %212, %cst_156 {dimension_numbers = #tpu.dot_dimension_numbers<[1], [0], [0], [1], [0, 0, 1, 1], [], []>} : vector<4x4xbf16>, vector<4x128xbf16>, vector<4x128xf32> -> vector<4x128xf32>
    %216 = arith.truncf %215 : vector<4x128xf32> to vector<4x128xbf16>
    %c18 = arith.constant 18 : index
    %c0_157 = arith.constant 0 : index
    %c0_158 = arith.constant 0 : index
    %217 = vector.load %arg6[%c18, %c0_157, %c0_158] : memref<27x128x32xbf16, #tpu.memory_space<vmem>>, vector<1x128x32xbf16>
    %218 = vector.shape_cast %217 : vector<1x128x32xbf16> to vector<128x32xbf16>
    %cst_159 = arith.constant dense<0.000000e+00> : vector<4x32xf32>
    %219 = tpu.matmul %216, %218, %cst_159 {dimension_numbers = #tpu.dot_dimension_numbers<[1], [0], [0], [1], [0, 0, 1, 1], [], []>} : vector<4x128xbf16>, vector<128x32xbf16>, vector<4x32xf32> -> vector<4x32xf32>
    %220 = arith.addf %190, %219 : vector<4x32xf32>
    %c1_160 = arith.constant 1 : index
    %c0_161 = arith.constant 0 : index
    %c0_162 = arith.constant 0 : index
    %221 = vector.load %arg5[%c1_160, %c0_161, %c0_162] : memref<9x4x4xbf16, #tpu.memory_space<vmem>>, vector<1x4x4xbf16>
    %222 = vector.shape_cast %221 : vector<1x4x4xbf16> to vector<4x4xbf16>
    %cst_163 = arith.constant dense<0.000000e+00> : vector<4x128xf32>
    %223 = tpu.matmul %222, %212, %cst_163 {dimension_numbers = #tpu.dot_dimension_numbers<[1], [0], [0], [1], [0, 0, 1, 1], [], []>} : vector<4x4xbf16>, vector<4x128xbf16>, vector<4x128xf32> -> vector<4x128xf32>
    %224 = arith.truncf %223 : vector<4x128xf32> to vector<4x128xbf16>
    %c19 = arith.constant 19 : index
    %c0_164 = arith.constant 0 : index
    %c0_165 = arith.constant 0 : index
    %225 = vector.load %arg6[%c19, %c0_164, %c0_165] : memref<27x128x32xbf16, #tpu.memory_space<vmem>>, vector<1x128x32xbf16>
    %226 = vector.shape_cast %225 : vector<1x128x32xbf16> to vector<128x32xbf16>
    %cst_166 = arith.constant dense<0.000000e+00> : vector<4x32xf32>
    %227 = tpu.matmul %224, %226, %cst_166 {dimension_numbers = #tpu.dot_dimension_numbers<[1], [0], [0], [1], [0, 0, 1, 1], [], []>} : vector<4x128xbf16>, vector<128x32xbf16>, vector<4x32xf32> -> vector<4x32xf32>
    %228 = arith.addf %220, %227 : vector<4x32xf32>
    %c2_167 = arith.constant 2 : index
    %c0_168 = arith.constant 0 : index
    %c0_169 = arith.constant 0 : index
    %229 = vector.load %arg5[%c2_167, %c0_168, %c0_169] : memref<9x4x4xbf16, #tpu.memory_space<vmem>>, vector<1x4x4xbf16>
    %230 = vector.shape_cast %229 : vector<1x4x4xbf16> to vector<4x4xbf16>
    %cst_170 = arith.constant dense<0.000000e+00> : vector<4x128xf32>
    %231 = tpu.matmul %230, %212, %cst_170 {dimension_numbers = #tpu.dot_dimension_numbers<[1], [0], [0], [1], [0, 0, 1, 1], [], []>} : vector<4x4xbf16>, vector<4x128xbf16>, vector<4x128xf32> -> vector<4x128xf32>
    %232 = arith.truncf %231 : vector<4x128xf32> to vector<4x128xbf16>
    %c20 = arith.constant 20 : index
    %c0_171 = arith.constant 0 : index
    %c0_172 = arith.constant 0 : index
    %233 = vector.load %arg6[%c20, %c0_171, %c0_172] : memref<27x128x32xbf16, #tpu.memory_space<vmem>>, vector<1x128x32xbf16>
    %234 = vector.shape_cast %233 : vector<1x128x32xbf16> to vector<128x32xbf16>
    %cst_173 = arith.constant dense<0.000000e+00> : vector<4x32xf32>
    %235 = tpu.matmul %232, %234, %cst_173 {dimension_numbers = #tpu.dot_dimension_numbers<[1], [0], [0], [1], [0, 0, 1, 1], [], []>} : vector<4x128xbf16>, vector<128x32xbf16>, vector<4x32xf32> -> vector<4x32xf32>
    %236 = arith.addf %228, %235 : vector<4x32xf32>
    %c3_174 = arith.constant 3 : index
    %c0_175 = arith.constant 0 : index
    %c0_176 = arith.constant 0 : index
    %237 = vector.load %arg5[%c3_174, %c0_175, %c0_176] : memref<9x4x4xbf16, #tpu.memory_space<vmem>>, vector<1x4x4xbf16>
    %238 = vector.shape_cast %237 : vector<1x4x4xbf16> to vector<4x4xbf16>
    %cst_177 = arith.constant dense<0.000000e+00> : vector<4x128xf32>
    %239 = tpu.matmul %238, %212, %cst_177 {dimension_numbers = #tpu.dot_dimension_numbers<[1], [0], [0], [1], [0, 0, 1, 1], [], []>} : vector<4x4xbf16>, vector<4x128xbf16>, vector<4x128xf32> -> vector<4x128xf32>
    %240 = arith.truncf %239 : vector<4x128xf32> to vector<4x128xbf16>
    %c21 = arith.constant 21 : index
    %c0_178 = arith.constant 0 : index
    %c0_179 = arith.constant 0 : index
    %241 = vector.load %arg6[%c21, %c0_178, %c0_179] : memref<27x128x32xbf16, #tpu.memory_space<vmem>>, vector<1x128x32xbf16>
    %242 = vector.shape_cast %241 : vector<1x128x32xbf16> to vector<128x32xbf16>
    %cst_180 = arith.constant dense<0.000000e+00> : vector<4x32xf32>
    %243 = tpu.matmul %240, %242, %cst_180 {dimension_numbers = #tpu.dot_dimension_numbers<[1], [0], [0], [1], [0, 0, 1, 1], [], []>} : vector<4x128xbf16>, vector<128x32xbf16>, vector<4x32xf32> -> vector<4x32xf32>
    %244 = arith.addf %236, %243 : vector<4x32xf32>
    %c4_181 = arith.constant 4 : index
    %c0_182 = arith.constant 0 : index
    %c0_183 = arith.constant 0 : index
    %245 = vector.load %arg5[%c4_181, %c0_182, %c0_183] : memref<9x4x4xbf16, #tpu.memory_space<vmem>>, vector<1x4x4xbf16>
    %246 = vector.shape_cast %245 : vector<1x4x4xbf16> to vector<4x4xbf16>
    %cst_184 = arith.constant dense<0.000000e+00> : vector<4x128xf32>
    %247 = tpu.matmul %246, %212, %cst_184 {dimension_numbers = #tpu.dot_dimension_numbers<[1], [0], [0], [1], [0, 0, 1, 1], [], []>} : vector<4x4xbf16>, vector<4x128xbf16>, vector<4x128xf32> -> vector<4x128xf32>
    %248 = arith.truncf %247 : vector<4x128xf32> to vector<4x128xbf16>
    %c22 = arith.constant 22 : index
    %c0_185 = arith.constant 0 : index
    %c0_186 = arith.constant 0 : index
    %249 = vector.load %arg6[%c22, %c0_185, %c0_186] : memref<27x128x32xbf16, #tpu.memory_space<vmem>>, vector<1x128x32xbf16>
    %250 = vector.shape_cast %249 : vector<1x128x32xbf16> to vector<128x32xbf16>
    %cst_187 = arith.constant dense<0.000000e+00> : vector<4x32xf32>
    %251 = tpu.matmul %248, %250, %cst_187 {dimension_numbers = #tpu.dot_dimension_numbers<[1], [0], [0], [1], [0, 0, 1, 1], [], []>} : vector<4x128xbf16>, vector<128x32xbf16>, vector<4x32xf32> -> vector<4x32xf32>
    %252 = arith.addf %244, %251 : vector<4x32xf32>
    %c5_188 = arith.constant 5 : index
    %c0_189 = arith.constant 0 : index
    %c0_190 = arith.constant 0 : index
    %253 = vector.load %arg5[%c5_188, %c0_189, %c0_190] : memref<9x4x4xbf16, #tpu.memory_space<vmem>>, vector<1x4x4xbf16>
    %254 = vector.shape_cast %253 : vector<1x4x4xbf16> to vector<4x4xbf16>
    %cst_191 = arith.constant dense<0.000000e+00> : vector<4x128xf32>
    %255 = tpu.matmul %254, %212, %cst_191 {dimension_numbers = #tpu.dot_dimension_numbers<[1], [0], [0], [1], [0, 0, 1, 1], [], []>} : vector<4x4xbf16>, vector<4x128xbf16>, vector<4x128xf32> -> vector<4x128xf32>
    %256 = arith.truncf %255 : vector<4x128xf32> to vector<4x128xbf16>
    %c23 = arith.constant 23 : index
    %c0_192 = arith.constant 0 : index
    %c0_193 = arith.constant 0 : index
    %257 = vector.load %arg6[%c23, %c0_192, %c0_193] : memref<27x128x32xbf16, #tpu.memory_space<vmem>>, vector<1x128x32xbf16>
    %258 = vector.shape_cast %257 : vector<1x128x32xbf16> to vector<128x32xbf16>
    %cst_194 = arith.constant dense<0.000000e+00> : vector<4x32xf32>
    %259 = tpu.matmul %256, %258, %cst_194 {dimension_numbers = #tpu.dot_dimension_numbers<[1], [0], [0], [1], [0, 0, 1, 1], [], []>} : vector<4x128xbf16>, vector<128x32xbf16>, vector<4x32xf32> -> vector<4x32xf32>
    %260 = arith.addf %252, %259 : vector<4x32xf32>
    %c6_195 = arith.constant 6 : index
    %c0_196 = arith.constant 0 : index
    %c0_197 = arith.constant 0 : index
    %261 = vector.load %arg5[%c6_195, %c0_196, %c0_197] : memref<9x4x4xbf16, #tpu.memory_space<vmem>>, vector<1x4x4xbf16>
    %262 = vector.shape_cast %261 : vector<1x4x4xbf16> to vector<4x4xbf16>
    %cst_198 = arith.constant dense<0.000000e+00> : vector<4x128xf32>
    %263 = tpu.matmul %262, %212, %cst_198 {dimension_numbers = #tpu.dot_dimension_numbers<[1], [0], [0], [1], [0, 0, 1, 1], [], []>} : vector<4x4xbf16>, vector<4x128xbf16>, vector<4x128xf32> -> vector<4x128xf32>
    %264 = arith.truncf %263 : vector<4x128xf32> to vector<4x128xbf16>
    %c24 = arith.constant 24 : index
    %c0_199 = arith.constant 0 : index
    %c0_200 = arith.constant 0 : index
    %265 = vector.load %arg6[%c24, %c0_199, %c0_200] : memref<27x128x32xbf16, #tpu.memory_space<vmem>>, vector<1x128x32xbf16>
    %266 = vector.shape_cast %265 : vector<1x128x32xbf16> to vector<128x32xbf16>
    %cst_201 = arith.constant dense<0.000000e+00> : vector<4x32xf32>
    %267 = tpu.matmul %264, %266, %cst_201 {dimension_numbers = #tpu.dot_dimension_numbers<[1], [0], [0], [1], [0, 0, 1, 1], [], []>} : vector<4x128xbf16>, vector<128x32xbf16>, vector<4x32xf32> -> vector<4x32xf32>
    %268 = arith.addf %260, %267 : vector<4x32xf32>
    %c7_202 = arith.constant 7 : index
    %c0_203 = arith.constant 0 : index
    %c0_204 = arith.constant 0 : index
    %269 = vector.load %arg5[%c7_202, %c0_203, %c0_204] : memref<9x4x4xbf16, #tpu.memory_space<vmem>>, vector<1x4x4xbf16>
    %270 = vector.shape_cast %269 : vector<1x4x4xbf16> to vector<4x4xbf16>
    %cst_205 = arith.constant dense<0.000000e+00> : vector<4x128xf32>
    %271 = tpu.matmul %270, %212, %cst_205 {dimension_numbers = #tpu.dot_dimension_numbers<[1], [0], [0], [1], [0, 0, 1, 1], [], []>} : vector<4x4xbf16>, vector<4x128xbf16>, vector<4x128xf32> -> vector<4x128xf32>
    %272 = arith.truncf %271 : vector<4x128xf32> to vector<4x128xbf16>
    %c25 = arith.constant 25 : index
    %c0_206 = arith.constant 0 : index
    %c0_207 = arith.constant 0 : index
    %273 = vector.load %arg6[%c25, %c0_206, %c0_207] : memref<27x128x32xbf16, #tpu.memory_space<vmem>>, vector<1x128x32xbf16>
    %274 = vector.shape_cast %273 : vector<1x128x32xbf16> to vector<128x32xbf16>
    %cst_208 = arith.constant dense<0.000000e+00> : vector<4x32xf32>
    %275 = tpu.matmul %272, %274, %cst_208 {dimension_numbers = #tpu.dot_dimension_numbers<[1], [0], [0], [1], [0, 0, 1, 1], [], []>} : vector<4x128xbf16>, vector<128x32xbf16>, vector<4x32xf32> -> vector<4x32xf32>
    %276 = arith.addf %268, %275 : vector<4x32xf32>
    %c8_209 = arith.constant 8 : index
    %c0_210 = arith.constant 0 : index
    %c0_211 = arith.constant 0 : index
    %277 = vector.load %arg5[%c8_209, %c0_210, %c0_211] : memref<9x4x4xbf16, #tpu.memory_space<vmem>>, vector<1x4x4xbf16>
    %278 = vector.shape_cast %277 : vector<1x4x4xbf16> to vector<4x4xbf16>
    %cst_212 = arith.constant dense<0.000000e+00> : vector<4x128xf32>
    %279 = tpu.matmul %278, %212, %cst_212 {dimension_numbers = #tpu.dot_dimension_numbers<[1], [0], [0], [1], [0, 0, 1, 1], [], []>} : vector<4x4xbf16>, vector<4x128xbf16>, vector<4x128xf32> -> vector<4x128xf32>
    %280 = arith.truncf %279 : vector<4x128xf32> to vector<4x128xbf16>
    %c26 = arith.constant 26 : index
    %c0_213 = arith.constant 0 : index
    %c0_214 = arith.constant 0 : index
    %281 = vector.load %arg6[%c26, %c0_213, %c0_214] : memref<27x128x32xbf16, #tpu.memory_space<vmem>>, vector<1x128x32xbf16>
    %282 = vector.shape_cast %281 : vector<1x128x32xbf16> to vector<128x32xbf16>
    %cst_215 = arith.constant dense<0.000000e+00> : vector<4x32xf32>
    %283 = tpu.matmul %280, %282, %cst_215 {dimension_numbers = #tpu.dot_dimension_numbers<[1], [0], [0], [1], [0, 0, 1, 1], [], []>} : vector<4x128xbf16>, vector<128x32xbf16>, vector<4x32xf32> -> vector<4x32xf32>
    %284 = arith.addf %276, %283 : vector<4x32xf32>
    %c0_216 = arith.constant 0 : index
    %c0_217 = arith.constant 0 : index
    %c0_218 = arith.constant 0 : index
    %285 = vector.load %arg7[%c0_216, %c0_217, %c0_218] : memref<1x4x32xf32, #tpu.memory_space<vmem>>, vector<1x4x32xf32>
    %286 = vector.shape_cast %285 : vector<1x4x32xf32> to vector<4x32xf32>
    %287 = arith.addf %284, %286 : vector<4x32xf32>
    %c0_219 = arith.constant 0 : index
    %c0_220 = arith.constant 0 : index
    %c0_221 = arith.constant 0 : index
    %c0_222 = arith.constant 0 : index
    %288 = vector.load %arg8[%c0_219, %c0_220, %c0_221, %c0_222] : memref<1x1x4x32xf32, #tpu.memory_space<vmem>>, vector<1x1x4x32xf32>
    %289 = vector.shape_cast %288 : vector<1x1x4x32xf32> to vector<4x32xf32>
    %290 = vector.shape_cast %287 : vector<4x32xf32> to vector<1x1x4x32xf32>
    tpu.vector_store %arg8[%c0_219, %c0_220, %c0_221, %c0_222], %290 {strides = array<i32>} : memref<1x1x4x32xf32, #tpu.memory_space<vmem>>, vector<1x1x4x32xf32>,
    return
  }
  func.func @transform_0(%arg0: i32, %arg1: i32) -> (i32, i32, i32) {
    %c0_i32 = arith.constant 0 : i32
    %c0_i32_0 = arith.constant 0 : i32
    %c0_i32_1 = arith.constant 0 : i32
    %c0_i32_2 = arith.constant 0 : i32
    return %c0_i32, %c0_i32_0, %c0_i32_1 : i32, i32, i32
  }
  func.func @transform_1(%arg0: i32, %arg1: i32) -> (i32, i32) {
    %c0_i32 = arith.constant 0 : i32
    %c0_i32_0 = arith.constant 0 : i32
    %c0_i32_1 = arith.constant 0 : i32
    return %c0_i32, %c0_i32_0 : i32, i32
  }
  func.func @transform_2(%arg0: i32, %arg1: i32) -> (i32, i32) {
    %c0_i32 = arith.constant 0 : i32
    %c0_i32_0 = arith.constant 0 : i32
    %c0_i32_1 = arith.constant 0 : i32
    return %c0_i32, %c0_i32_0 : i32, i32
  }
  func.func @transform_3(%arg0: i32, %arg1: i32) -> (i32, i32, i32) {
    %c0_i32 = arith.constant 0 : i32
    %c0_i32_0 = arith.constant 0 : i32
    %c0_i32_1 = arith.constant 0 : i32
    %c0_i32_2 = arith.constant 0 : i32
    return %c0_i32, %c0_i32_0, %c0_i32_1 : i32, i32, i32
  }
  func.func @transform_4(%arg0: i32, %arg1: i32) -> (i32, i32, i32) {
    %c0_i32 = arith.constant 0 : i32
    %c0_i32_0 = arith.constant 0 : i32
    %c0_i32_1 = arith.constant 0 : i32
    %c0_i32_2 = arith.constant 0 : i32
    return %c0_i32, %c0_i32_0, %c0_i32_1 : i32, i32, i32
  }
  func.func @transform_5(%arg0: i32, %arg1: i32) -> (i32, i32, i32) {
    %c0_i32 = arith.constant 0 : i32
    %c0_i32_0 = arith.constant 0 : i32
    %c0_i32_1 = arith.constant 0 : i32
    return %arg1, %c0_i32, %c0_i32_0 : i32, i32, i32
  }
  func.func @transform_6(%arg0: i32, %arg1: i32) -> (i32, i32, i32, i32) {
    %c0_i32 = arith.constant 0 : i32
    %c0_i32_0 = arith.constant 0 : i32
    %c0_i32_1 = arith.constant 0 : i32
    return %arg0, %arg1, %c0_i32, %c0_i32_0 : i32, i32, i32, i32
  }
}

module attributes {stable_mosaic.version = 11 : i64} {
  func.func @attn_core_kernel(%arg0: i32, %arg1: memref<1x8x8xbf16, #tpu.memory_space<vmem>>, %arg2: memref<1x8x8xbf16, #tpu.memory_space<vmem>>, %arg3: memref<1x8x8xbf16, #tpu.memory_space<vmem>>, %arg4: memref<1x8x8xbf16, #tpu.memory_space<vmem>>) attributes {dimension_semantics = [#tpu.dimension_semantics<parallel>], iteration_bounds = array<i64: 8>, scalar_prefetch = 0 : i64, scratch_operands = 0 : i64, tpu.core_type = #tpu.core_type<tc>, window_params = [{transform_indices = @transform_0, window_bounds = array<i64: 1, 8, 8>}, {transform_indices = @transform_1, window_bounds = array<i64: 1, 8, 8>}, {transform_indices = @transform_2, window_bounds = array<i64: 1, 8, 8>}, {transform_indices = @transform_3, window_bounds = array<i64: 1, 8, 8>}]} {
    %c0 = arith.constant 0 : index
    %c0_0 = arith.constant 0 : index
    %c0_1 = arith.constant 0 : index
    %0 = vector.load %arg1[%c0, %c0_0, %c0_1] : memref<1x8x8xbf16, #tpu.memory_space<vmem>>, vector<1x8x8xbf16>
    %1 = vector.shape_cast %0 : vector<1x8x8xbf16> to vector<8x8xbf16>
    %c0_2 = arith.constant 0 : index
    %c0_3 = arith.constant 0 : index
    %c0_4 = arith.constant 0 : index
    %2 = vector.load %arg2[%c0_2, %c0_3, %c0_4] : memref<1x8x8xbf16, #tpu.memory_space<vmem>>, vector<1x8x8xbf16>
    %3 = vector.shape_cast %2 : vector<1x8x8xbf16> to vector<8x8xbf16>
    %c0_5 = arith.constant 0 : index
    %c0_6 = arith.constant 0 : index
    %c0_7 = arith.constant 0 : index
    %4 = vector.load %arg3[%c0_5, %c0_6, %c0_7] : memref<1x8x8xbf16, #tpu.memory_space<vmem>>, vector<1x8x8xbf16>
    %5 = vector.shape_cast %4 : vector<1x8x8xbf16> to vector<8x8xbf16>
    %cst = arith.constant dense<0.000000e+00> : vector<8x8xf32>
    %6 = tpu.matmul %1, %3, %cst {dimension_numbers = #tpu.dot_dimension_numbers<[1], [1], [0], [0], [0, 0, 1, 0], [], []>} : vector<8x8xbf16>, vector<8x8xbf16>, vector<8x8xf32> -> vector<8x8xf32>
    %cst_8 = arith.constant 0.353553385 : f32
    %7 = vector.broadcast %cst_8 : f32 to vector<8x8xf32>
    %8 = arith.mulf %6, %7 : vector<8x8xf32>
    %cst_9 = arith.constant dense<0xFF800000> : vector<8xf32>
    %9 = vector.multi_reduction <maximumf>, %8, %cst_9 [1] : vector<8x8xf32> to vector<8xf32>
    %10 = vector.shape_cast %9 : vector<8xf32> to vector<8x1xf32>
    %11 = vector.broadcast %10 : vector<8x1xf32> to vector<8x8xf32>
    %12 = arith.subf %8, %11 : vector<8x8xf32>
    %13 = math.exp %12 : vector<8x8xf32>
    %cst_10 = arith.constant dense<0.000000e+00> : vector<8xf32>
    %14 = vector.multi_reduction <add>, %13, %cst_10 [1] : vector<8x8xf32> to vector<8xf32>
    %15 = vector.shape_cast %14 : vector<8xf32> to vector<8x1xf32>
    %16 = tpu.reciprocal %15 {approx = true} : vector<8x1xf32> -> vector<8x1xf32>
    %17 = vector.broadcast %16 : vector<8x1xf32> to vector<8x8xf32>
    %18 = arith.mulf %13, %17 : vector<8x8xf32>
    %19 = arith.truncf %18 : vector<8x8xf32> to vector<8x8xbf16>
    %cst_11 = arith.constant dense<0.000000e+00> : vector<8x8xf32>
    %20 = tpu.matmul %19, %5, %cst_11 {dimension_numbers = #tpu.dot_dimension_numbers<[1], [0], [0], [1], [0, 0, 1, 1], [], []>} : vector<8x8xbf16>, vector<8x8xbf16>, vector<8x8xf32> -> vector<8x8xf32>
    %21 = arith.truncf %20 : vector<8x8xf32> to vector<8x8xbf16>
    %c0_12 = arith.constant 0 : index
    %c0_13 = arith.constant 0 : index
    %c0_14 = arith.constant 0 : index
    %22 = vector.load %arg4[%c0_12, %c0_13, %c0_14] : memref<1x8x8xbf16, #tpu.memory_space<vmem>>, vector<1x8x8xbf16>
    %23 = vector.shape_cast %22 : vector<1x8x8xbf16> to vector<8x8xbf16>
    %24 = vector.shape_cast %21 : vector<8x8xbf16> to vector<1x8x8xbf16>
    tpu.vector_store %arg4[%c0_12, %c0_13, %c0_14], %24 {strides = array<i32>} : memref<1x8x8xbf16, #tpu.memory_space<vmem>>, vector<1x8x8xbf16>,
    return
  }
  func.func @transform_0(%arg0: i32) -> (i32, i32, i32) {
    %c0_i32 = arith.constant 0 : i32
    %c0_i32_0 = arith.constant 0 : i32
    %c0_i32_1 = arith.constant 0 : i32
    return %arg0, %c0_i32, %c0_i32_0 : i32, i32, i32
  }
  func.func @transform_1(%arg0: i32) -> (i32, i32, i32) {
    %c0_i32 = arith.constant 0 : i32
    %c0_i32_0 = arith.constant 0 : i32
    %c0_i32_1 = arith.constant 0 : i32
    return %arg0, %c0_i32, %c0_i32_0 : i32, i32, i32
  }
  func.func @transform_2(%arg0: i32) -> (i32, i32, i32) {
    %c0_i32 = arith.constant 0 : i32
    %c0_i32_0 = arith.constant 0 : i32
    %c0_i32_1 = arith.constant 0 : i32
    return %arg0, %c0_i32, %c0_i32_0 : i32, i32, i32
  }
  func.func @transform_3(%arg0: i32) -> (i32, i32, i32) {
    %c0_i32 = arith.constant 0 : i32
    %c0_i32_0 = arith.constant 0 : i32
    %c0_i32_1 = arith.constant 0 : i32
    return %arg0, %c0_i32, %c0_i32_0 : i32, i32, i32
  }
}

module attributes {stable_mosaic.version = 11 : i64} {
  func.func @layernorm_kernel(%arg0: i32, %arg1: memref<16x32xf32, #tpu.memory_space<vmem>>, %arg2: memref<1x32xf32, #tpu.memory_space<vmem>>, %arg3: memref<1x32xf32, #tpu.memory_space<vmem>>, %arg4: memref<16x32xf32, #tpu.memory_space<vmem>>) attributes {dimension_semantics = [#tpu.dimension_semantics<parallel>], iteration_bounds = array<i64: 1>, scalar_prefetch = 0 : i64, scratch_operands = 0 : i64, tpu.core_type = #tpu.core_type<tc>, window_params = [{transform_indices = @transform_0, window_bounds = array<i64: 16, 32>}, {pipeline_mode = #tpu.pipeline_mode<synchronous>, transform_indices = @transform_1, window_bounds = array<i64: 1, 32>}, {pipeline_mode = #tpu.pipeline_mode<synchronous>, transform_indices = @transform_2, window_bounds = array<i64: 1, 32>}, {transform_indices = @transform_3, window_bounds = array<i64: 16, 32>}]} {
    %c0 = arith.constant 0 : index
    %c0_0 = arith.constant 0 : index
    %0 = vector.load %arg1[%c0, %c0_0] : memref<16x32xf32, #tpu.memory_space<vmem>>, vector<16x32xf32>
    %c0_1 = arith.constant 0 : index
    %c0_2 = arith.constant 0 : index
    %1 = vector.load %arg2[%c0_1, %c0_2] : memref<1x32xf32, #tpu.memory_space<vmem>>, vector<1x32xf32>
    %c0_3 = arith.constant 0 : index
    %c0_4 = arith.constant 0 : index
    %2 = vector.load %arg3[%c0_3, %c0_4] : memref<1x32xf32, #tpu.memory_space<vmem>>, vector<1x32xf32>
    %cst = arith.constant dense<0.000000e+00> : vector<16xf32>
    %3 = vector.multi_reduction <add>, %0, %cst [1] : vector<16x32xf32> to vector<16xf32>
    %4 = vector.shape_cast %3 : vector<16xf32> to vector<16x1xf32>
    %cst_5 = arith.constant 3.200000e+01 : f32
    %5 = vector.broadcast %cst_5 : f32 to vector<16x1xf32>
    %6 = arith.divf %4, %5 : vector<16x1xf32>
    %7 = vector.broadcast %6 : vector<16x1xf32> to vector<16x32xf32>
    %8 = arith.subf %0, %7 : vector<16x32xf32>
    %9 = arith.mulf %8, %8 : vector<16x32xf32>
    %cst_6 = arith.constant dense<0.000000e+00> : vector<16xf32>
    %10 = vector.multi_reduction <add>, %9, %cst_6 [1] : vector<16x32xf32> to vector<16xf32>
    %11 = vector.shape_cast %10 : vector<16xf32> to vector<16x1xf32>
    %cst_7 = arith.constant 3.200000e+01 : f32
    %12 = vector.broadcast %cst_7 : f32 to vector<16x1xf32>
    %13 = arith.divf %11, %12 : vector<16x1xf32>
    %14 = vector.broadcast %6 : vector<16x1xf32> to vector<16x32xf32>
    %15 = arith.subf %0, %14 : vector<16x32xf32>
    %cst_8 = arith.constant 9.99999974E-6 : f32
    %16 = vector.broadcast %cst_8 : f32 to vector<16x1xf32>
    %17 = arith.addf %13, %16 : vector<16x1xf32>
    %18 = math.rsqrt %17 : vector<16x1xf32>
    %19 = vector.broadcast %18 : vector<16x1xf32> to vector<16x32xf32>
    %20 = arith.mulf %15, %19 : vector<16x32xf32>
    %21 = vector.broadcast %1 : vector<1x32xf32> to vector<16x32xf32>
    %22 = arith.mulf %20, %21 : vector<16x32xf32>
    %23 = vector.broadcast %2 : vector<1x32xf32> to vector<16x32xf32>
    %24 = arith.addf %22, %23 : vector<16x32xf32>
    %c0_9 = arith.constant 0 : index
    %c0_10 = arith.constant 0 : index
    %25 = vector.load %arg4[%c0_9, %c0_10] : memref<16x32xf32, #tpu.memory_space<vmem>>, vector<16x32xf32>
    tpu.vector_store %arg4[%c0_9, %c0_10], %24 {strides = array<i32>} : memref<16x32xf32, #tpu.memory_space<vmem>>, vector<16x32xf32>,
    return
  }
  func.func @transform_0(%arg0: i32) -> (i32, i32) {
    %c0_i32 = arith.constant 0 : i32
    %c0_i32_0 = arith.constant 0 : i32
    return %arg0, %c0_i32 : i32, i32
  }
  func.func @transform_1(%arg0: i32) -> (i32, i32) {
    %c0_i32 = arith.constant 0 : i32
    %c0_i32_0 = arith.constant 0 : i32
    %c0_i32_1 = arith.constant 0 : i32
    return %c0_i32, %c0_i32_0 : i32, i32
  }
  func.func @transform_2(%arg0: i32) -> (i32, i32) {
    %c0_i32 = arith.constant 0 : i32
    %c0_i32_0 = arith.constant 0 : i32
    %c0_i32_1 = arith.constant 0 : i32
    return %c0_i32, %c0_i32_0 : i32, i32
  }
  func.func @transform_3(%arg0: i32) -> (i32, i32) {
    %c0_i32 = arith.constant 0 : i32
    %c0_i32_0 = arith.constant 0 : i32
    return %arg0, %c0_i32 : i32, i32
  }
}

module attributes {stable_mosaic.version = 11 : i64} {
  func.func @attn_out_ff_kernel(%arg0: i32, %arg1: memref<16x32xf32, #tpu.memory_space<vmem>>, %arg2: memref<16x32xbf16, #tpu.memory_space<vmem>>, %arg3: memref<32x32xbf16, #tpu.memory_space<vmem>>, %arg4: memref<1x32xf32, #tpu.memory_space<vmem>>, %arg5: memref<1x32xf32, #tpu.memory_space<vmem>>, %arg6: memref<1x32xf32, #tpu.memory_space<vmem>>, %arg7: memref<32x64xbf16, #tpu.memory_space<vmem>>, %arg8: memref<1x64xf32, #tpu.memory_space<vmem>>, %arg9: memref<64x32xbf16, #tpu.memory_space<vmem>>, %arg10: memref<1x32xf32, #tpu.memory_space<vmem>>, %arg11: memref<16x32xf32, #tpu.memory_space<vmem>>, %arg12: memref<16x32xf32, #tpu.memory_space<vmem>>) attributes {dimension_semantics = [#tpu.dimension_semantics<parallel>], iteration_bounds = array<i64: 1>, scalar_prefetch = 0 : i64, scratch_operands = 0 : i64, tpu.core_type = #tpu.core_type<tc>, window_params = [{transform_indices = @transform_0, window_bounds = array<i64: 16, 32>}, {transform_indices = @transform_1, window_bounds = array<i64: 16, 32>}, {pipeline_mode = #tpu.pipeline_mode<synchronous>, transform_indices = @transform_2, window_bounds = array<i64: 32, 32>}, {pipeline_mode = #tpu.pipeline_mode<synchronous>, transform_indices = @transform_3, window_bounds = array<i64: 1, 32>}, {pipeline_mode = #tpu.pipeline_mode<synchronous>, transform_indices = @transform_4, window_bounds = array<i64: 1, 32>}, {pipeline_mode = #tpu.pipeline_mode<synchronous>, transform_indices = @transform_5, window_bounds = array<i64: 1, 32>}, {pipeline_mode = #tpu.pipeline_mode<synchronous>, transform_indices = @transform_6, window_bounds = array<i64: 32, 64>}, {pipeline_mode = #tpu.pipeline_mode<synchronous>, transform_indices = @transform_7, window_bounds = array<i64: 1, 64>}, {pipeline_mode = #tpu.pipeline_mode<synchronous>, transform_indices = @transform_8, window_bounds = array<i64: 64, 32>}, {pipeline_mode = #tpu.pipeline_mode<synchronous>, transform_indices = @transform_9, window_bounds = array<i64: 1, 32>}, {transform_indices = @transform_10, window_bounds = array<i64: 16, 32>}, {transform_indices = @transform_11, window_bounds = array<i64: 16, 32>}]} {
    %c0 = arith.constant 0 : index
    %c0_0 = arith.constant 0 : index
    %0 = vector.load %arg1[%c0, %c0_0] : memref<16x32xf32, #tpu.memory_space<vmem>>, vector<16x32xf32>
    %c0_1 = arith.constant 0 : index
    %c0_2 = arith.constant 0 : index
    %1 = vector.load %arg2[%c0_1, %c0_2] : memref<16x32xbf16, #tpu.memory_space<vmem>>, vector<16x32xbf16>
    %c0_3 = arith.constant 0 : index
    %c0_4 = arith.constant 0 : index
    %2 = vector.load %arg3[%c0_3, %c0_4] : memref<32x32xbf16, #tpu.memory_space<vmem>>, vector<32x32xbf16>
    %cst = arith.constant dense<0.000000e+00> : vector<16x32xf32>
    %3 = tpu.matmul %1, %2, %cst {dimension_numbers = #tpu.dot_dimension_numbers<[1], [0], [0], [1], [0, 0, 1, 1], [], []>} : vector<16x32xbf16>, vector<32x32xbf16>, vector<16x32xf32> -> vector<16x32xf32>
    %4 = arith.addf %0, %3 : vector<16x32xf32>
    %c0_5 = arith.constant 0 : index
    %c0_6 = arith.constant 0 : index
    %5 = vector.load %arg4[%c0_5, %c0_6] : memref<1x32xf32, #tpu.memory_space<vmem>>, vector<1x32xf32>
    %6 = vector.broadcast %5 : vector<1x32xf32> to vector<16x32xf32>
    %7 = arith.addf %4, %6 : vector<16x32xf32>
    %c0_7 = arith.constant 0 : index
    %c0_8 = arith.constant 0 : index
    %8 = vector.load %arg11[%c0_7, %c0_8] : memref<16x32xf32, #tpu.memory_space<vmem>>, vector<16x32xf32>
    tpu.vector_store %arg11[%c0_7, %c0_8], %7 {strides = array<i32>} : memref<16x32xf32, #tpu.memory_space<vmem>>, vector<16x32xf32>,
    %c0_9 = arith.constant 0 : index
    %c0_10 = arith.constant 0 : index
    %9 = vector.load %arg5[%c0_9, %c0_10] : memref<1x32xf32, #tpu.memory_space<vmem>>, vector<1x32xf32>
    %c0_11 = arith.constant 0 : index
    %c0_12 = arith.constant 0 : index
    %10 = vector.load %arg6[%c0_11, %c0_12] : memref<1x32xf32, #tpu.memory_space<vmem>>, vector<1x32xf32>
    %cst_13 = arith.constant dense<0.000000e+00> : vector<16xf32>
    %11 = vector.multi_reduction <add>, %7, %cst_13 [1] : vector<16x32xf32> to vector<16xf32>
    %12 = vector.shape_cast %11 : vector<16xf32> to vector<16x1xf32>
    %cst_14 = arith.constant 3.200000e+01 : f32
    %13 = vector.broadcast %cst_14 : f32 to vector<16x1xf32>
    %14 = arith.divf %12, %13 : vector<16x1xf32>
    %15 = vector.broadcast %14 : vector<16x1xf32> to vector<16x32xf32>
    %16 = arith.subf %7, %15 : vector<16x32xf32>
    %17 = arith.mulf %16, %16 : vector<16x32xf32>
    %cst_15 = arith.constant dense<0.000000e+00> : vector<16xf32>
    %18 = vector.multi_reduction <add>, %17, %cst_15 [1] : vector<16x32xf32> to vector<16xf32>
    %19 = vector.shape_cast %18 : vector<16xf32> to vector<16x1xf32>
    %cst_16 = arith.constant 3.200000e+01 : f32
    %20 = vector.broadcast %cst_16 : f32 to vector<16x1xf32>
    %21 = arith.divf %19, %20 : vector<16x1xf32>
    %22 = vector.broadcast %14 : vector<16x1xf32> to vector<16x32xf32>
    %23 = arith.subf %7, %22 : vector<16x32xf32>
    %cst_17 = arith.constant 9.99999974E-6 : f32
    %24 = vector.broadcast %cst_17 : f32 to vector<16x1xf32>
    %25 = arith.addf %21, %24 : vector<16x1xf32>
    %26 = math.rsqrt %25 : vector<16x1xf32>
    %27 = vector.broadcast %26 : vector<16x1xf32> to vector<16x32xf32>
    %28 = arith.mulf %23, %27 : vector<16x32xf32>
    %29 = vector.broadcast %9 : vector<1x32xf32> to vector<16x32xf32>
    %30 = arith.mulf %28, %29 : vector<16x32xf32>
    %31 = vector.broadcast %10 : vector<1x32xf32> to vector<16x32xf32>
    %32 = arith.addf %30, %31 : vector<16x32xf32>
    %33 = arith.truncf %32 : vector<16x32xf32> to vector<16x32xbf16>
    %c0_18 = arith.constant 0 : index
    %c0_19 = arith.constant 0 : index
    %34 = vector.load %arg7[%c0_18, %c0_19] : memref<32x64xbf16, #tpu.memory_space<vmem>>, vector<32x64xbf16>
    %cst_20 = arith.constant dense<0.000000e+00> : vector<16x64xf32>
    %35 = tpu.matmul %33, %34, %cst_20 {dimension_numbers = #tpu.dot_dimension_numbers<[1], [0], [0], [1], [0, 0, 1, 1], [], []>} : vector<16x32xbf16>, vector<32x64xbf16>, vector<16x64xf32> -> vector<16x64xf32>
    %c0_21 = arith.constant 0 : index
    %c0_22 = arith.constant 0 : index
    %36 = vector.load %arg8[%c0_21, %c0_22] : memref<1x64xf32, #tpu.memory_space<vmem>>, vector<1x64xf32>
    %37 = vector.broadcast %36 : vector<1x64xf32> to vector<16x64xf32>
    %38 = arith.addf %35, %37 : vector<16x64xf32>
    %39 = arith.mulf %38, %38 : vector<16x64xf32>
    %40 = arith.mulf %38, %39 : vector<16x64xf32>
    %cst_23 = arith.constant 4.471500e-02 : f32
    %41 = vector.broadcast %cst_23 : f32 to vector<16x64xf32>
    %42 = arith.mulf %41, %40 : vector<16x64xf32>
    %43 = arith.addf %38, %42 : vector<16x64xf32>
    %cst_24 = arith.constant 0.797884583 : f32
    %44 = vector.broadcast %cst_24 : f32 to vector<16x64xf32>
    %45 = arith.mulf %44, %43 : vector<16x64xf32>
    %46 = math.tanh %45 : vector<16x64xf32>
    %cst_25 = arith.constant 1.000000e+00 : f32
    %47 = vector.broadcast %cst_25 : f32 to vector<16x64xf32>
    %48 = arith.addf %47, %46 : vector<16x64xf32>
    %cst_26 = arith.constant 5.000000e-01 : f32
    %49 = vector.broadcast %cst_26 : f32 to vector<16x64xf32>
    %50 = arith.mulf %49, %48 : vector<16x64xf32>
    %51 = arith.mulf %38, %50 : vector<16x64xf32>
    %52 = arith.truncf %51 : vector<16x64xf32> to vector<16x64xbf16>
    %c0_27 = arith.constant 0 : index
    %c0_28 = arith.constant 0 : index
    %53 = vector.load %arg9[%c0_27, %c0_28] : memref<64x32xbf16, #tpu.memory_space<vmem>>, vector<64x32xbf16>
    %cst_29 = arith.constant dense<0.000000e+00> : vector<16x32xf32>
    %54 = tpu.matmul %52, %53, %cst_29 {dimension_numbers = #tpu.dot_dimension_numbers<[1], [0], [0], [1], [0, 0, 1, 1], [], []>} : vector<16x64xbf16>, vector<64x32xbf16>, vector<16x32xf32> -> vector<16x32xf32>
    %55 = arith.addf %7, %54 : vector<16x32xf32>
    %c0_30 = arith.constant 0 : index
    %c0_31 = arith.constant 0 : index
    %56 = vector.load %arg10[%c0_30, %c0_31] : memref<1x32xf32, #tpu.memory_space<vmem>>, vector<1x32xf32>
    %57 = vector.broadcast %56 : vector<1x32xf32> to vector<16x32xf32>
    %58 = arith.addf %55, %57 : vector<16x32xf32>
    %c0_32 = arith.constant 0 : index
    %c0_33 = arith.constant 0 : index
    %59 = vector.load %arg12[%c0_32, %c0_33] : memref<16x32xf32, #tpu.memory_space<vmem>>, vector<16x32xf32>
    tpu.vector_store %arg12[%c0_32, %c0_33], %58 {strides = array<i32>} : memref<16x32xf32, #tpu.memory_space<vmem>>, vector<16x32xf32>,
    return
  }
  func.func @transform_0(%arg0: i32) -> (i32, i32) {
    %c0_i32 = arith.constant 0 : i32
    %c0_i32_0 = arith.constant 0 : i32
    return %arg0, %c0_i32 : i32, i32
  }
  func.func @transform_1(%arg0: i32) -> (i32, i32) {
    %c0_i32 = arith.constant 0 : i32
    %c0_i32_0 = arith.constant 0 : i32
    return %arg0, %c0_i32 : i32, i32
  }
  func.func @transform_2(%arg0: i32) -> (i32, i32) {
    %c0_i32 = arith.constant 0 : i32
    %c0_i32_0 = arith.constant 0 : i32
    %c0_i32_1 = arith.constant 0 : i32
    return %c0_i32, %c0_i32_0 : i32, i32
  }
  func.func @transform_3(%arg0: i32) -> (i32, i32) {
    %c0_i32 = arith.constant 0 : i32
    %c0_i32_0 = arith.constant 0 : i32
    %c0_i32_1 = arith.constant 0 : i32
    return %c0_i32, %c0_i32_0 : i32, i32
  }
  func.func @transform_4(%arg0: i32) -> (i32, i32) {
    %c0_i32 = arith.constant 0 : i32
    %c0_i32_0 = arith.constant 0 : i32
    %c0_i32_1 = arith.constant 0 : i32
    return %c0_i32, %c0_i32_0 : i32, i32
  }
  func.func @transform_5(%arg0: i32) -> (i32, i32) {
    %c0_i32 = arith.constant 0 : i32
    %c0_i32_0 = arith.constant 0 : i32
    %c0_i32_1 = arith.constant 0 : i32
    return %c0_i32, %c0_i32_0 : i32, i32
  }
  func.func @transform_6(%arg0: i32) -> (i32, i32) {
    %c0_i32 = arith.constant 0 : i32
    %c0_i32_0 = arith.constant 0 : i32
    %c0_i32_1 = arith.constant 0 : i32
    return %c0_i32, %c0_i32_0 : i32, i32
  }
  func.func @transform_7(%arg0: i32) -> (i32, i32) {
    %c0_i32 = arith.constant 0 : i32
    %c0_i32_0 = arith.constant 0 : i32
    %c0_i32_1 = arith.constant 0 : i32
    return %c0_i32, %c0_i32_0 : i32, i32
  }
  func.func @transform_8(%arg0: i32) -> (i32, i32) {
    %c0_i32 = arith.constant 0 : i32
    %c0_i32_0 = arith.constant 0 : i32
    %c0_i32_1 = arith.constant 0 : i32
    return %c0_i32, %c0_i32_0 : i32, i32
  }
  func.func @transform_9(%arg0: i32) -> (i32, i32) {
    %c0_i32 = arith.constant 0 : i32
    %c0_i32_0 = arith.constant 0 : i32
    %c0_i32_1 = arith.constant 0 : i32
    return %c0_i32, %c0_i32_0 : i32, i32
  }
  func.func @transform_10(%arg0: i32) -> (i32, i32) {
    %c0_i32 = arith.constant 0 : i32
    %c0_i32_0 = arith.constant 0 : i32
    return %arg0, %c0_i32 : i32, i32
  }
  func.func @transform_11(%arg0: i32) -> (i32, i32) {
    %c0_i32 = arith.constant 0 : i32
    %c0_i32_0 = arith.constant 0 : i32
    return %arg0, %c0_i32 : i32, i32
  }
}

</mosaic_0001>

<llo_original>
// kernel: transformer_bts_encode.15
$region0: #{transformer_bts_encode.15}
  #allocation0 [shape = 'u32[]', space=smem, size = 0x4, offset = 0x4, fixed_abs, tag = 'smem constant byte address 0x4 - core index']
  #allocation1 [shape = 'u32[144,128]{1,0:T(1,128)}', space=vmem, size = 0x12000, scoped, tag = 'internal scratch']
  %s0 = inlined_call_operand.vmem [shape: f32[16,32], index: 0, kind: input, shape index: {}]
  %s1 = inlined_call_operand.vmem [shape: f32[1,32], index: 1, kind: input, shape index: {}]
  %s2 = inlined_call_operand.vmem [shape: f32[1,32], index: 2, kind: input, shape index: {}]
  %s3 = inlined_call_operand.vmem [shape: bf16[32,96], index: 3, kind: input, shape index: {}]
  %s4 = inlined_call_operand.vmem [shape: bf16[16,96], index: 4, kind: output, shape index: {}]
  %s5 = sld [smem:[#allocation0]]
  $region26: #{transformer_bts_encode.15} parent=0
    _
  %s7 = ssub.s32 1, %s5
  %s8 = scalar_select 0, %s7, %s5
  // Predicated region
  $region2: #{transformer_bts_encode.15} parent=0 // pred_check
    _
  $region3: #{transformer_bts_encode.15} parent=0 // pred_check_branch
    %10 = sbr.rel (0) target = $region5
  $region4: #{transformer_bts_encode.15} parent=0 // pred_region
    _
  $region5: #{transformer_bts_encode.15} parent=0 // pred_fallthru
    _
  // Predicated region
  $region6: #{transformer_bts_encode.15} parent=0 // pred_check
    _
  $region7: #{transformer_bts_encode.15} parent=0 // pred_check_branch
    %12 = sbr.rel (0) target = $region9
  $region8: #{transformer_bts_encode.15} parent=0 // pred_region
    _
  $region9: #{transformer_bts_encode.15} parent=0 // pred_fallthru
    _
  // Predicated region
  $region10: #{transformer_bts_encode.15} parent=0 // pred_check
    _
  $region11: #{transformer_bts_encode.15} parent=0 // pred_check_branch
    %14 = sbr.rel (0) target = $region13
  $region12: #{transformer_bts_encode.15} parent=0 // pred_region
    _
  $region13: #{transformer_bts_encode.15} parent=0 // pred_fallthru
    _
  // Predicated region
  $region14: #{transformer_bts_encode.15} parent=0 // pred_check
    _
  $region15: #{transformer_bts_encode.15} parent=0 // pred_check_branch
    %16 = sbr.rel (0) target = $region17
  $region16: #{transformer_bts_encode.15} parent=0 // pred_region
    _
  $region17: #{transformer_bts_encode.15} parent=0 // pred_fallthru
    _
  %v18 = vld [vmem:[%s0] sm:$0xff]
  %v19 = vld [vmem:[%s0 + $0x8] sm:$0xff]
  %v20 = vld [vmem:[%s1] sm:$0x1]
  %v21 = vld [vmem:[%s2] sm:$0x1]
  %vm22 = vcmask 261120
  %v23 = vsel %vm22, %v18, 0.0
  %24 = vadd.xlane.f32.xlu0 %v23
  %v25 = vpop.xlane.xlu0 %24
  %v26 = vsel %vm22, %v19, 0.0
  %27 = vadd.xlane.f32.xlu0 %v26
  %v28 = vpop.xlane.xlu0 %27
  %v29 = vrcp.pop 32.0
  %v30 = vmul.f32 %v25, %v29
  %v31 = vmul.f32 %v28, %v29
  %v32 = vsub.f32 %v18, %v30
  %v33 = vsub.f32 %v19, %v31
  %v34 = vmul.f32 %v32, %v32
  %v35 = vmul.f32 %v33, %v33
  %v36 = vsel %vm22, %v34, 0.0
  %37 = vadd.xlane.f32.xlu0 %v36
  %v38 = vpop.xlane.xlu0 %37
  %v39 = vsel %vm22, %v35, 0.0
  %40 = vadd.xlane.f32.xlu0 %v39
  %v41 = vpop.xlane.xlu0 %40
  %v42 = vmul.f32 %v38, %v29
  %v43 = vmul.f32 %v41, %v29
  %v44 = vadd.f32 %v42, 1e-05
  %v45 = vadd.f32 %v43, 1e-05
  %v46 = vrsqrt.pop %v44
  %v47 = vrsqrt.pop %v45
  %v48 = vmul.f32 %v32, %v46
  %v49 = vmul.f32 %v33, %v47
  %v51 = vlaneseq
  %v52 = vshrl.u32 %v51, 7
  %v53 = vsub.s32 0, %v52
  %v54 = vrot.slane %v20, %v53
  %v56 = vmul.f32 %v48, %v54
  %v57 = vmul.f32 %v49, %v54
  %v59 = vlaneseq
  %v60 = vshrl.u32 %v59, 7
  %v61 = vsub.s32 0, %v60
  %v62 = vrot.slane %v21, %v61
  %v64 = vadd.f32 %v56, %v62
  %v65 = vadd.f32 %v57, %v62
  %v66 = vpack.c.bf16 %v65, %v64
  %v67 = vld [vmem:[%s3] sm:$0xf]
  %v68 = vld [vmem:[%s3 + $0x4] sm:$0xf]
  %v69 = vld [vmem:[%s3 + $0x8] sm:$0xf]
  %v70 = vld [vmem:[%s3 + $0xc] sm:$0xf]
  %v75 = vunpack.c.l.b16 %v67
  %v76 = vunpack.c.l.b16 %v68
  %v77 = vunpack.c.l.b16 %v69
  %v78 = vunpack.c.l.b16 %v70
  %v79 = vpack.c.b16 %v76, %v75
  %v80 = vpack.c.b16 %v78, %v77
  %v84 = vsel %vm22, %v66, 0
  %86 = vmatprep.subr.bf16.mxu0 0
  %87 = vmatpush1.bf16.msra.mxu0 0
  %88 = vmatprep.subr.bf16.mxu0 0
  %89 = vmatpush1.bf16.msra.mxu0 0
  %90 = vmatprep.subr.bf16.mxu0 0
  %91 = vmatpush1.bf16.msra.mxu0 0
  %92 = vmatprep.subr.bf16.mxu0 0
  %93 = vmatpush1.bf16.msra.mxu0 0
  %94 = vmatprep.subr.bf16.mxu0 0
  %95 = vmatpush1.bf16.msra.mxu0 0
  %96 = vmatprep.subr.bf16.mxu0 0
  %97 = vmatpush1.bf16.msra.mxu0 0
  %98 = vmatprep.subr.bf16.mxu0 0
  %99 = vmatpush1.bf16.msra.mxu0 %v80
  %100 = vmatprep.subr.bf16.mxu0 0
  %101 = vmatpush1.bf16.msra.mxu0 %v79
  %102 = vmatprep.subr.bf16.mxu0 0
  %103 = vmatpush2.bf16.msra.mxu0 0
  %104 = vmatprep.subr.bf16.mxu0 0
  %105 = vmatpush2.bf16.msra.mxu0 0
  %106 = vmatprep.subr.bf16.mxu0 0
  %107 = vmatpush2.bf16.msra.mxu0 0
  %108 = vmatprep.subr.bf16.mxu0 0
  %109 = vmatpush2.bf16.msra.mxu0 0
  %110 = vmatprep.subr.bf16.mxu0 0
  %111 = vmatpush2.bf16.msra.mxu0 0
  %112 = vmatprep.subr.bf16.mxu0 0
  %113 = vmatpush2.bf16.msra.mxu0 0
  %114 = vmatprep.subr.bf16.mxu0 0
  %115 = vmatpush2.bf16.msra.mxu0 0
  %116 = vmatprep.subr.bf16.mxu0 0
  %117 = vmatpush2.bf16.msra.mxu0 0
  %118 = vmatprep.mubr.bf16.mxu0 0
  %119 = vmatmul.mubr.bf16.gmra.mxu0 %v84
  %v120 = vpop.f32.mrf.mxu0
  %v121 = vadd.f32 0.0, %v120
  %v122 = vpop.f32.mrf.mxu0
  %v123 = vpop.f32.mrf.mxu0
  %v124 = vadd.f32 0.0, %v123
  %v125 = vpop.f32.mrf.mxu0
  %126 = vdwg.mxu0
  %v127 = vpack.c.bf16 %v124, %v121
  %v129 = vunpack.c.l.b16 %v127
  %v130 = vunpack.c.h.b16 %v127
  %v131 = vpack.c.b16 %v129, %v129
  %v132 = vpack.c.b16 %v130, %v130
  %vm135 = vcmask 781312
  %136 = vst.msk [vmem:[%s4] sm:$0xf] %vm135, %v131
  %137 = vst.msk [vmem:[%s4 + $0x4] sm:$0xf] %vm135, %v132
  // Predicated region
  $region18: #{transformer_bts_encode.15} parent=0 // pred_check
    _
  $region19: #{transformer_bts_encode.15} parent=0 // pred_check_branch
    %139 = sbr.rel (0) target = $region21
  $region20: #{transformer_bts_encode.15} parent=0 // pred_region
    _
  $region21: #{transformer_bts_encode.15} parent=0 // pred_fallthru
    _
  // Predicated region
  $region22: #{transformer_bts_encode.15} parent=0 // pred_check
    _
  $region23: #{transformer_bts_encode.15} parent=0 // pred_check_branch
    %141 = sbr.rel (0) target = $region25
  $region24: #{transformer_bts_encode.15} parent=0 // pred_region
    _
  $region25: #{transformer_bts_encode.15} parent=0 // pred_fallthru
    _

// kernel: transformer_bts_encode.16
$region0: #{transformer_bts_encode.16}
  #allocation0 [shape = 'u32[]', space=smem, size = 0x4, offset = 0x4, fixed_abs, tag = 'smem constant byte address 0x4 - core index']
  #allocation1 [shape = 'u32[144,128]{1,0:T(1,128)}', space=vmem, size = 0x12000, scoped, tag = 'internal scratch']
  %s0 = inlined_call_operand.vmem [shape: bf16[8,8,8], index: 0, kind: input, shape index: {}]
  %s1 = inlined_call_operand.vmem [shape: bf16[8,8,8], index: 1, kind: input, shape index: {}]
  %s2 = inlined_call_operand.vmem [shape: bf16[8,8,8], index: 2, kind: input, shape index: {}]
  %s3 = inlined_call_operand.vmem [shape: bf16[8,8,8], index: 3, kind: output, shape index: {}]
  %s4 = sld [smem:[#allocation0]]
  $region45: #{transformer_bts_encode.16} parent=0
    _
  %s6 = ssub.s32 1, %s4
  %s7 = scalar_select 0, %s6, %s4
  loop: start=0, step=1, limit=10
  $region2: #{transformer_bts_encode.16} parent=0 // loop_pre_header
    _
  $region3: #{transformer_bts_encode.16} parent=0 // loop_header
    %s9 = sphi 0, %s13
    %p10 = scmp.ge.s32.totalorder %s9, 10
    %s19 = sphi 0, %s21
    %s22 = sphi 0, %s19
    %s23 = sphi 0, %s22
    %s39 = sphi 0, %s23
    %s45 = sphi 0, %s47
    %s48 = sphi 0, %s45
    %s49 = sphi 0, %s48
    %s65 = sphi 0, %s49
    %s71 = sphi 0, %s73
    %s74 = sphi 0, %s71
    %s75 = sphi 0, %s74
    %s91 = sphi 0, %s75
    %s97 = sphi 0, %s99
    %s100 = sphi 0, %s97
    %s101 = sphi 0, %s100
    %s117 = sphi 0, %s101
  $region4: #{transformer_bts_encode.16} parent=0 // loop_header_branch
    %12 = sbr.rel (%p10) target = $region8
  $region5: #{transformer_bts_encode.16} parent=0 // loop_body
    %s14 = ssub.s32 %s9, 1
    %s15 = ssub.s32 %s9, 2
    %s16 = sadd.s32 %s9, 1
    %s17 = ssub.s32 %s9, %s16
    %p18 = scmp.eq.s32.totalorder %s17, 0
    %s20 = sadd.s32 %s19, 1
    %s21 = scalar_select %p18, %s19, %s20
    %p24 = pneg %p18
    %p25 = scmp.eq.s32.totalorder %s9, 7
    %p26 = por %p24, %p25
    %p27 = scmp.ne.s32.totalorder %s19, %s22
    %p28 = scmp.eq.s32.totalorder %s9, 0
    %p29 = por %p27, %p28
    %p30 = scmp.ne.s32.totalorder %s19, %s22
    %p31 = scmp.eq.s32.totalorder %s14, 7
    %p32 = por %p30, %p31
    %p33 = scmp.ne.s32.totalorder %s22, %s23
    %p34 = scmp.eq.s32.totalorder %s14, 0
    %p35 = por %p33, %p34
    %p36 = scmp.ne.s32.totalorder %s22, %s23
    %p37 = scmp.eq.s32.totalorder %s15, 7
    %p38 = por %p36, %p37
    %p40 = scmp.ne.s32.totalorder %s23, %s39
    %p41 = scmp.eq.s32.totalorder %s15, 0
    %p42 = por %p40, %p41
    %s43 = ssub.s32 %s9, %s16
    %p44 = scmp.eq.s32.totalorder %s43, 0
    %s46 = sadd.s32 %s45, 1
    %s47 = scalar_select %p44, %s45, %s46
    %p50 = pneg %p44
    %p51 = scmp.eq.s32.totalorder %s9, 7
    %p52 = por %p50, %p51
    %p53 = scmp.ne.s32.totalorder %s45, %s48
    %p54 = scmp.eq.s32.totalorder %s9, 0
    %p55 = por %p53, %p54
    %p56 = scmp.ne.s32.totalorder %s45, %s48
    %p57 = scmp.eq.s32.totalorder %s14, 7
    %p58 = por %p56, %p57
    %p59 = scmp.ne.s32.totalorder %s48, %s49
    %p60 = scmp.eq.s32.totalorder %s14, 0
    %p61 = por %p59, %p60
    %p62 = scmp.ne.s32.totalorder %s48, %s49
    %p63 = scmp.eq.s32.totalorder %s15, 7
    %p64 = por %p62, %p63
    %p66 = scmp.ne.s32.totalorder %s49, %s65
    %p67 = scmp.eq.s32.totalorder %s15, 0
    %p68 = por %p66, %p67
    %s69 = ssub.s32 %s9, %s16
    %p70 = scmp.eq.s32.totalorder %s69, 0
    %s72 = sadd.s32 %s71, 1
    %s73 = scalar_select %p70, %s71, %s72
    %p76 = pneg %p70
    %p77 = scmp.eq.s32.totalorder %s9, 7
    %p78 = por %p76, %p77
    %p79 = scmp.ne.s32.totalorder %s71, %s74
    %p80 = scmp.eq.s32.totalorder %s9, 0
    %p81 = por %p79, %p80
    %p82 = scmp.ne.s32.totalorder %s71, %s74
    %p83 = scmp.eq.s32.totalorder %s14, 7
    %p84 = por %p82, %p83
    %p85 = scmp.ne.s32.totalorder %s74, %s75
    %p86 = scmp.eq.s32.totalorder %s14, 0
    %p87 = por %p85, %p86
    %p88 = scmp.ne.s32.totalorder %s74, %s75
    %p89 = scmp.eq.s32.totalorder %s15, 7
    %p90 = por %p88, %p89
    %p92 = scmp.ne.s32.totalorder %s75, %s91
    %p93 = scmp.eq.s32.totalorder %s15, 0
    %p94 = por %p92, %p93
    %s95 = ssub.s32 %s9, %s16
    %p96 = scmp.eq.s32.totalorder %s95, 0
    %s98 = sadd.s32 %s97, 1
    %s99 = scalar_select %p96, %s97, %s98
    %p102 = pneg %p96
    %p103 = scmp.eq.s32.totalorder %s9, 7
    %p104 = por %p102, %p103
    %p105 = scmp.ne.s32.totalorder %s97, %s100
    %p106 = scmp.eq.s32.totalorder %s9, 0
    %p107 = por %p105, %p106
    %p108 = scmp.ne.s32.totalorder %s97, %s100
    %p109 = scmp.eq.s32.totalorder %s14, 7
    %p110 = por %p108, %p109
    %p111 = scmp.ne.s32.totalorder %s100, %s101
    %p112 = scmp.eq.s32.totalorder %s14, 0
    %p113 = por %p111, %p112
    %p114 = scmp.ne.s32.totalorder %s100, %s101
    %p115 = scmp.eq.s32.totalorder %s15, 7
    %p116 = por %p114, %p115
    %p118 = scmp.ne.s32.totalorder %s101, %s117
    %p119 = scmp.eq.s32.totalorder %s15, 0
    %p120 = por %p118, %p119
    %p121 = scmp.le.s32.totalorder 1, %s9
    %p122 = scmp.lt.s32.totalorder %s9, 9
    %p123 = pnand %p121, %p122
    %p124 = pneg %p123
    // Predicated region
    $region9: #{transformer_bts_encode.16} parent=5 // pred_check
      _
    $region10: #{transformer_bts_encode.16} parent=5 // pred_check_branch
      %126 = sbr.rel (%p123) target = $region12
    $region11: #{transformer_bts_encode.16} parent=5 // pred_region
      %s127 = ssub.s32 %s9, 1
    $region12: #{transformer_bts_encode.16} parent=5 // pred_fallthru
      _
    %p128 = scmp.lt.s32.totalorder %s9, 8
    // Predicated region
    $region13: #{transformer_bts_encode.16} parent=5 // pred_check
      %p129 = pneg %p128
    $region14: #{transformer_bts_encode.16} parent=5 // pred_check_branch
      %131 = sbr.rel (%p129) target = $region16
    $region15: #{transformer_bts_encode.16} parent=5 // pred_region
      // Predicated region
      $region17: #{transformer_bts_encode.16} parent=15 // pred_check
        %p132 = pneg %p29
      $region18: #{transformer_bts_encode.16} parent=15 // pred_check_branch
        %134 = sbr.rel (%p132) target = $region20
      $region19: #{transformer_bts_encode.16} parent=15 // pred_region
        %p135 = scmp.lt.s32.totalorder %s9, 7
        %s136 = scalar_select %p135, %s9, 7
        %s137 = smul.addr %s136, 4
        %s138 = scalar_lea.vmem %s0, %s137
      $region20: #{transformer_bts_encode.16} parent=15 // pred_fallthru
        _
      // Predicated region
      $region21: #{transformer_bts_encode.16} parent=15 // pred_check
        %p139 = pneg %p55
      $region22: #{transformer_bts_encode.16} parent=15 // pred_check_branch
        %141 = sbr.rel (%p139) target = $region24
      $region23: #{transformer_bts_encode.16} parent=15 // pred_region
        %p142 = scmp.lt.s32.totalorder %s9, 7
        %s143 = scalar_select %p142, %s9, 7
        %s144 = smul.addr %s143, 4
        %s145 = scalar_lea.vmem %s1, %s144
      $region24: #{transformer_bts_encode.16} parent=15 // pred_fallthru
        _
      // Predicated region
      $region25: #{transformer_bts_encode.16} parent=15 // pred_check
        %p146 = pneg %p81
      $region26: #{transformer_bts_encode.16} parent=15 // pred_check_branch
        %148 = sbr.rel (%p146) target = $region28
      $region27: #{transformer_bts_encode.16} parent=15 // pred_region
        %p149 = scmp.lt.s32.totalorder %s9, 7
        %s150 = scalar_select %p149, %s9, 7
        %s151 = smul.addr %s150, 4
        %s152 = scalar_lea.vmem %s2, %s151
      $region28: #{transformer_bts_encode.16} parent=15 // pred_fallthru
        _
    $region16: #{transformer_bts_encode.16} parent=5 // pred_fallthru
      _
    %p153 = scmp.le.s32.totalorder 1, %s9
    %p154 = scmp.lt.s32.totalorder %s9, 9
    %p155 = pnand %p153, %p154
    %p156 = pneg %p155
    // Predicated region
    $region29: #{transformer_bts_encode.16} parent=5 // pred_check
      _
    $region30: #{transformer_bts_encode.16} parent=5 // pred_check_branch
      %158 = sbr.rel (%p155) target = $region32
    $region31: #{transformer_bts_encode.16} parent=5 // pred_region
      %s159 = ssub.s32 %s9, 1
      %p160 = scmp.lt.s32.totalorder %s14, 7
      %s161 = scalar_select %p160, %s14, 7
      %s162 = smul.addr %s161, 4
      %s163 = scalar_lea.vmem %s0, %s162
      %p164 = pneg %p35
      %p165 = pneg %p32
      %p166 = scmp.lt.s32.totalorder %s14, 7
      %s167 = scalar_select %p166, %s14, 7
      %s168 = smul.addr %s167, 4
      %s169 = scalar_lea.vmem %s1, %s168
      %p170 = pneg %p61
      %p171 = pneg %p58
      %p172 = scmp.lt.s32.totalorder %s14, 7
      %s173 = scalar_select %p172, %s14, 7
      %s174 = smul.addr %s173, 4
      %s175 = scalar_lea.vmem %s2, %s174
      %p176 = pneg %p87
      %p177 = pneg %p84
      %p178 = pneg %p113
      %p179 = pneg %p110
      %p180 = scmp.lt.s32.totalorder %s14, 7
      %s181 = scalar_select %p180, %s14, 7
      %s182 = smul.addr %s181, 4
      %s183 = scalar_lea.vmem %s3, %s182
      %p184 = scmp.lt.s32.totalorder %s14, 7
      %s185 = scalar_select %p184, %s14, 7
      %s186 = smul.addr %s185, 4
      %s187 = scalar_lea.vmem %s0, %s186
      %p188 = scmp.lt.s32.totalorder %s14, 7
      %s189 = scalar_select %p188, %s14, 7
      %s190 = smul.addr %s189, 4
      %s191 = scalar_lea.vmem %s1, %s190
      %p192 = scmp.lt.s32.totalorder %s14, 7
      %s193 = scalar_select %p192, %s14, 7
      %s194 = smul.addr %s193, 4
      %s195 = scalar_lea.vmem %s2, %s194
      %p196 = scmp.lt.s32.totalorder %s14, 7
      %s197 = scalar_select %p196, %s14, 7
      %s198 = smul.addr %s197, 4
      %s199 = scalar_lea.vmem %s3, %s198
      %v201 = vld [vmem:[%s187] sm:$0xf]
      %v202 = vld [vmem:[%s191] sm:$0xf]
      %v203 = vld [vmem:[%s195] sm:$0xf]
      %vm204 = vcmask 64512
      %v206 = vsel %vm204, %v201, 0
      %v209 = vsel %vm204, %v202, 0
      %211 = vmatprep.subr.bf16.mxu0 0
      %212 = vmatpush1.bf16.xpose.msra.mxu0 0
      %213 = vmatprep.subr.bf16.mxu0 0
      %214 = vmatpush1.bf16.xpose.msra.mxu0 0
      %215 = vmatprep.subr.bf16.mxu0 0
      %216 = vmatpush1.bf16.xpose.msra.mxu0 0
      %217 = vmatprep.subr.bf16.mxu0 0
      %218 = vmatpush1.bf16.xpose.msra.mxu0 0
      %219 = vmatprep.subr.bf16.mxu0 0
      %220 = vmatpush1.bf16.xpose.msra.mxu0 0
      %221 = vmatprep.subr.bf16.mxu0 0
      %222 = vmatpush1.bf16.xpose.msra.mxu0 0
      %223 = vmatprep.subr.bf16.mxu0 0
      %224 = vmatpush1.bf16.xpose.msra.mxu0 0
      %225 = vmatprep.subr.bf16.mxu0 0
      %226 = vmatpush1.bf16.xpose.msra.mxu0 %v209
      %227 = vmatprep.subr.bf16.mxu0 0
      %228 = vmatpush2.bf16.xpose.msra.mxu0 0
      %229 = vmatprep.subr.bf16.mxu0 0
      %230 = vmatpush2.bf16.xpose.msra.mxu0 0
      %231 = vmatprep.subr.bf16.mxu0 0
      %232 = vmatpush2.bf16.xpose.msra.mxu0 0
      %233 = vmatprep.subr.bf16.mxu0 0
      %234 = vmatpush2.bf16.xpose.msra.mxu0 0
      %235 = vmatprep.subr.bf16.mxu0 0
      %236 = vmatpush2.bf16.xpose.msra.mxu0 0
      %237 = vmatprep.subr.bf16.mxu0 0
      %238 = vmatpush2.bf16.xpose.msra.mxu0 0
      %239 = vmatprep.subr.bf16.mxu0 0
      %240 = vmatpush2.bf16.xpose.msra.mxu0 0
      %241 = vmatprep.subr.bf16.mxu0 0
      %242 = vmatpush2.bf16.xpose.msra.mxu0 0
      %243 = vmatprep.mubr.bf16.mxu0 0
      %244 = vmatmul.mubr.bf16.gmra.mxu0 %v206
      %v245 = vpop.f32.mrf.mxu0
      %v246 = vadd.f32 0.0, %v245
      %v247 = vpop.f32.mrf.mxu0
      %v248 = vpop.f32.mrf.mxu0
      %v249 = vpop.f32.mrf.mxu0
      %250 = vdwg.mxu0
      %v251 = vmul.f32 %v246, 0.35355338
      %v252 = vsel %vm204, %v251, -inf
      %253 = vmax.xlane.f32.xlu0 %v252
      %v254 = vpop.xlane.xlu0 %253
      %v255 = vsub.f32 %v251, %v254
      %v256 = vmul.f32 %v255, 1.442695
      %v257 = vpow.pop %v256
      %v258 = vsel %vm204, %v257, 0.0
      %259 = vadd.xlane.f32.xlu0 %v258
      %v260 = vpop.xlane.xlu0 %259
      %v261 = vrcp.pop %v260
      %v262 = vmul.f32 %v257, %v261
      %v263 = vpack.c.bf16 %v262, %v262
      %v265 = vsel %vm204, %v263, 0
      %vm267 = vcmask 1043456
      %v269 = vsel %vm267, %v203, 0
      %271 = vmatprep.subr.bf16.mxu0 0
      %272 = vmatpush1.bf16.msra.mxu0 0
      %273 = vmatprep.subr.bf16.mxu0 0
      %274 = vmatpush1.bf16.msra.mxu0 0
      %275 = vmatprep.subr.bf16.mxu0 0
      %276 = vmatpush1.bf16.msra.mxu0 0
      %277 = vmatprep.subr.bf16.mxu0 0
      %278 = vmatpush1.bf16.msra.mxu0 0
      %279 = vmatprep.subr.bf16.mxu0 0
      %280 = vmatpush1.bf16.msra.mxu0 0
      %281 = vmatprep.subr.bf16.mxu0 0
      %282 = vmatpush1.bf16.msra.mxu0 0
      %283 = vmatprep.subr.bf16.mxu0 0
      %284 = vmatpush1.bf16.msra.mxu0 0
      %285 = vmatprep.subr.bf16.mxu0 0
      %286 = vmatpush1.bf16.msra.mxu0 %v269
      %287 = vmatprep.subr.bf16.mxu0 0
      %288 = vmatpush2.bf16.msra.mxu0 0
      %289 = vmatprep.subr.bf16.mxu0 0
      %290 = vmatpush2.bf16.msra.mxu0 0
      %291 = vmatprep.subr.bf16.mxu0 0
      %292 = vmatpush2.bf16.msra.mxu0 0
      %293 = vmatprep.subr.bf16.mxu0 0
      %294 = vmatpush2.bf16.msra.mxu0 0
      %295 = vmatprep.subr.bf16.mxu0 0
      %296 = vmatpush2.bf16.msra.mxu0 0
      %297 = vmatprep.subr.bf16.mxu0 0
      %298 = vmatpush2.bf16.msra.mxu0 0
      %299 = vmatprep.subr.bf16.mxu0 0
      %300 = vmatpush2.bf16.msra.mxu0 0
      %301 = vmatprep.subr.bf16.mxu0 0
      %302 = vmatpush2.bf16.msra.mxu0 0
      %303 = vmatprep.mubr.bf16.mxu0 0
      %304 = vmatmul.mubr.bf16.gmra.mxu0 %v265
      %v305 = vpop.f32.mrf.mxu0
      %v306 = vadd.f32 0.0, %v305
      %v307 = vpop.f32.mrf.mxu0
      %v308 = vpop.f32.mrf.mxu0
      %v309 = vpop.f32.mrf.mxu0
      %310 = vdwg.mxu0
      %v311 = vpack.c.bf16 %v306, %v306
      %vm312 = vcmask 60416
      %313 = vst.msk [vmem:[%s199] sm:$0xf] %vm312, %v311
      %p314 = scmp.lt.s32.totalorder %s14, 7
      %s315 = scalar_select %p314, %s14, 7
      %s316 = smul.addr %s315, 4
      %s317 = scalar_lea.vmem %s3, %s316
      // Predicated region
      $region33: #{transformer_bts_encode.16} parent=31 // pred_check
        %p318 = pneg %p110
      $region34: #{transformer_bts_encode.16} parent=31 // pred_check_branch
        %320 = sbr.rel (%p318) target = $region36
      $region35: #{transformer_bts_encode.16} parent=31 // pred_region
        _
      $region36: #{transformer_bts_encode.16} parent=31 // pred_fallthru
        _
    $region32: #{transformer_bts_encode.16} parent=5 // pred_fallthru
      _
    %p321 = scmp.le.s32.totalorder 2, %s9
    // Predicated region
    $region37: #{transformer_bts_encode.16} parent=5 // pred_check
      %p322 = pneg %p321
    $region38: #{transformer_bts_encode.16} parent=5 // pred_check_branch
      %324 = sbr.rel (%p322) target = $region40
    $region39: #{transformer_bts_encode.16} parent=5 // pred_region
      %s325 = ssub.s32 %s9, 2
      // Predicated region
      $region41: #{transformer_bts_encode.16} parent=39 // pred_check
        %p326 = pneg %p116
      $region42: #{transformer_bts_encode.16} parent=39 // pred_check_branch
        %328 = sbr.rel (%p326) target = $region44
      $region43: #{transformer_bts_encode.16} parent=39 // pred_region
        %p329 = scmp.lt.s32.totalorder %s15, 7
        %s330 = scalar_select %p329, %s15, 7
        %s331 = smul.addr %s330, 4
        %s332 = scalar_lea.vmem %s3, %s331
      $region44: #{transformer_bts_encode.16} parent=39 // pred_fallthru
        _
    $region40: #{transformer_bts_encode.16} parent=5 // pred_fallthru
      _
  $region6: #{transformer_bts_encode.16} parent=0 // loop_footer
    %s13 = sadd.s32 1, %s9
  $region7: #{transformer_bts_encode.16} parent=0 // loop_footer_branch
    %8 = sbr.rel target = $region3
  $region8: #{transformer_bts_encode.16} parent=0 // loop_exit
    _

// kernel: transformer_bts_encode.27
$region0: #{transformer_bts_encode.27}
  #allocation0 [shape = 'u32[]', space=smem, size = 0x4, offset = 0x4, fixed_abs, tag = 'smem constant byte address 0x4 - core index']
  #allocation1 [shape = 'u32[144,128]{1,0:T(1,128)}', space=vmem, size = 0x12000, scoped, tag = 'internal scratch']
  %s0 = inlined_call_operand.vmem [shape: f32[16,32], index: 0, kind: input, shape index: {}]
  %s1 = inlined_call_operand.vmem [shape: f32[1,32], index: 1, kind: input, shape index: {}]
  %s2 = inlined_call_operand.vmem [shape: f32[1,32], index: 2, kind: input, shape index: {}]
  %s3 = inlined_call_operand.hbm [shape: f32[16,32], index: 3, kind: output, shape index: {}]
  %s4 = sld [smem:[#allocation0]]
  $region22: #{transformer_bts_encode.27} parent=0
    _
  %s6 = ssub.s32 1, %s4
  %s7 = scalar_select 0, %s6, %s4
  $region1: #{transformer_bts_encode.27} parent=0
    #allocation2 [shape = 'u8[8192]{0}', space=vmem, size = 0x2000, scoped, tag = 'output window, operand 0, single buffered']
    #allocation3 [shape = 's32[1]{0}', space=sflag, size = 0x4, scoped, tag = 'scoped memory for transformer_bts_encode.27']
    %8 = vsyncpa [#allocation3], 0
    // Predicated region
    $region2: #{transformer_bts_encode.27} parent=1 // pred_check
      _
    $region3: #{transformer_bts_encode.27} parent=1 // pred_check_branch
      %10 = sbr.rel (0) target = $region5
    $region4: #{transformer_bts_encode.27} parent=1 // pred_region
      _
    $region5: #{transformer_bts_encode.27} parent=1 // pred_fallthru
      _
    // Predicated region
    $region6: #{transformer_bts_encode.27} parent=1 // pred_check
      _
    $region7: #{transformer_bts_encode.27} parent=1 // pred_check_branch
      %12 = sbr.rel (0) target = $region9
    $region8: #{transformer_bts_encode.27} parent=1 // pred_region
      _
    $region9: #{transformer_bts_encode.27} parent=1 // pred_fallthru
      _
    // Predicated region
    $region10: #{transformer_bts_encode.27} parent=1 // pred_check
      _
    $region11: #{transformer_bts_encode.27} parent=1 // pred_check_branch
      %14 = sbr.rel (0) target = $region13
    $region12: #{transformer_bts_encode.27} parent=1 // pred_region
      _
    $region13: #{transformer_bts_encode.27} parent=1 // pred_fallthru
      _
    %v15 = vld [vmem:[%s0] sm:$0xff]
    %v16 = vld [vmem:[%s0 + $0x8] sm:$0xff]
    %v17 = vld [vmem:[%s1] sm:$0x1]
    %v18 = vld [vmem:[%s2] sm:$0x1]
    %vm19 = vcmask 261120
    %v20 = vsel %vm19, %v15, 0.0
    %21 = vadd.xlane.f32.xlu0 %v20
    %v22 = vpop.xlane.xlu0 %21
    %v23 = vsel %vm19, %v16, 0.0
    %24 = vadd.xlane.f32.xlu0 %v23
    %v25 = vpop.xlane.xlu0 %24
    %v26 = vrcp.pop 32.0
    %v27 = vmul.f32 %v22, %v26
    %v28 = vmul.f32 %v25, %v26
    %v29 = vsub.f32 %v15, %v27
    %v30 = vsub.f32 %v16, %v28
    %v31 = vmul.f32 %v29, %v29
    %v32 = vmul.f32 %v30, %v30
    %v33 = vsel %vm19, %v31, 0.0
    %34 = vadd.xlane.f32.xlu0 %v33
    %v35 = vpop.xlane.xlu0 %34
    %v36 = vsel %vm19, %v32, 0.0
    %37 = vadd.xlane.f32.xlu0 %v36
    %v38 = vpop.xlane.xlu0 %37
    %v39 = vmul.f32 %v35, %v26
    %v40 = vmul.f32 %v38, %v26
    %v41 = vadd.f32 %v39, 1e-05
    %v42 = vadd.f32 %v40, 1e-05
    %v43 = vrsqrt.pop %v41
    %v44 = vrsqrt.pop %v42
    %v45 = vmul.f32 %v29, %v43
    %v46 = vmul.f32 %v30, %v44
    %v48 = vlaneseq
    %v49 = vshrl.u32 %v48, 7
    %v50 = vsub.s32 0, %v49
    %v51 = vrot.slane %v17, %v50
    %v53 = vmul.f32 %v45, %v51
    %v54 = vmul.f32 %v46, %v51
    %v56 = vlaneseq
    %v57 = vshrl.u32 %v56, 7
    %v58 = vsub.s32 0, %v57
    %v59 = vrot.slane %v18, %v58
    %v61 = vadd.f32 %v53, %v59
    %v62 = vadd.f32 %v54, %v59
    %63 = vst.msk [vmem:[#allocation2] sm:$0xff] %vm19, %v61
    %64 = vst.msk [vmem:[#allocation2 + $0x8] sm:$0xff] %vm19, %v62
    // Predicated region
    $region14: #{transformer_bts_encode.27} parent=1 // pred_check
      _
    $region15: #{transformer_bts_encode.27} parent=1 // pred_check_branch
      %66 = sbr.rel (0) target = $region17
    $region16: #{transformer_bts_encode.27} parent=1 // pred_region
      %s68 = ssub.s32 256, 256
      %69 = vsyncadd [#allocation3], %s68
      %s70 = sshll.u32 [#allocation2], 4
      %s71 = int_to_ptr.vmem [resolvable:$true] %s70
      %76 = dma.vmem_to_hbm [thread:$0]  %s71, 256, %s3, [#allocation3], 128, 128, 8
    $region17: #{transformer_bts_encode.27} parent=1 // pred_fallthru
      _
    // Predicated region
    $region18: #{transformer_bts_encode.27} parent=1 // pred_check
      _
    $region19: #{transformer_bts_encode.27} parent=1 // pred_check_branch
      %78 = sbr.rel (0) target = $region21
    $region20: #{transformer_bts_encode.27} parent=1 // pred_region
      %79 = dma.done [#allocation3], 256
    $region21: #{transformer_bts_encode.27} parent=1 // pred_fallthru
      _
    %80 = vsyncpa [#allocation3], 1

// kernel: transformer_bts_encode.17
$region0: #{transformer_bts_encode.17}
  #allocation0 [shape = 'u32[]', space=smem, size = 0x4, offset = 0x4, fixed_abs, tag = 'smem constant byte address 0x4 - core index']
  #allocation1 [shape = 'u32[144,128]{1,0:T(1,128)}', space=vmem, size = 0x12000, scoped, tag = 'internal scratch']
  %s0 = inlined_call_operand.vmem [shape: f32[16,32], index: 0, kind: input, shape index: {}]
  %s1 = inlined_call_operand.vmem [shape: bf16[16,32], index: 1, kind: input, shape index: {}]
  %s2 = inlined_call_operand.vmem [shape: bf16[32,32], index: 2, kind: input, shape index: {}]
  %s3 = inlined_call_operand.vmem [shape: f32[1,32], index: 3, kind: input, shape index: {}]
  %s4 = inlined_call_operand.vmem [shape: f32[1,32], index: 4, kind: input, shape index: {}]
  %s5 = inlined_call_operand.vmem [shape: f32[1,32], index: 5, kind: input, shape index: {}]
  %s6 = inlined_call_operand.vmem [shape: bf16[32,64], index: 6, kind: input, shape index: {}]
  %s7 = inlined_call_operand.vmem [shape: f32[1,64], index: 7, kind: input, shape index: {}]
  %s8 = inlined_call_operand.vmem [shape: bf16[64,32], index: 8, kind: input, shape index: {}]
  %s9 = inlined_call_operand.vmem [shape: f32[1,32], index: 9, kind: input, shape index: {}]
  %s10 = inlined_call_operand.hbm [shape: f32[16,32], index: 10, kind: output, shape index: {0}]
  %s11 = inlined_call_operand.vmem [shape: f32[16,32], index: 11, kind: output, shape index: {1}]
  %12 = xla_tuple %s10, %s11
  %s13 = sld [smem:[#allocation0]]
  $region58: #{transformer_bts_encode.17} parent=0
    _
  %s15 = ssub.s32 1, %s13
  %s16 = scalar_select 0, %s15, %s13
  $region1: #{transformer_bts_encode.17} parent=0
    #allocation2 [shape = 'u8[8192]{0}', space=vmem, size = 0x2000, scoped, tag = 'output window, operand 0, single buffered']
    #allocation3 [shape = 's32[1]{0}', space=sflag, size = 0x4, scoped, tag = 'scoped memory for transformer_bts_encode.17']
    %17 = vsyncpa [#allocation3], 0
    // Predicated region
    $region2: #{transformer_bts_encode.17} parent=1 // pred_check
      _
    $region3: #{transformer_bts_encode.17} parent=1 // pred_check_branch
      %19 = sbr.rel (0) target = $region5
    $region4: #{transformer_bts_encode.17} parent=1 // pred_region
      _
    $region5: #{transformer_bts_encode.17} parent=1 // pred_fallthru
      _
    // Predicated region
    $region6: #{transformer_bts_encode.17} parent=1 // pred_check
      _
    $region7: #{transformer_bts_encode.17} parent=1 // pred_check_branch
      %21 = sbr.rel (0) target = $region9
    $region8: #{transformer_bts_encode.17} parent=1 // pred_region
      _
    $region9: #{transformer_bts_encode.17} parent=1 // pred_fallthru
      _
    // Predicated region
    $region10: #{transformer_bts_encode.17} parent=1 // pred_check
      _
    $region11: #{transformer_bts_encode.17} parent=1 // pred_check_branch
      %23 = sbr.rel (0) target = $region13
    $region12: #{transformer_bts_encode.17} parent=1 // pred_region
      _
    $region13: #{transformer_bts_encode.17} parent=1 // pred_fallthru
      _
    // Predicated region
    $region14: #{transformer_bts_encode.17} parent=1 // pred_check
      _
    $region15: #{transformer_bts_encode.17} parent=1 // pred_check_branch
      %25 = sbr.rel (0) target = $region17
    $region16: #{transformer_bts_encode.17} parent=1 // pred_region
      _
    $region17: #{transformer_bts_encode.17} parent=1 // pred_fallthru
      _
    // Predicated region
    $region18: #{transformer_bts_encode.17} parent=1 // pred_check
      _
    $region19: #{transformer_bts_encode.17} parent=1 // pred_check_branch
      %27 = sbr.rel (0) target = $region21
    $region20: #{transformer_bts_encode.17} parent=1 // pred_region
      _
    $region21: #{transformer_bts_encode.17} parent=1 // pred_fallthru
      _
    // Predicated region
    $region22: #{transformer_bts_encode.17} parent=1 // pred_check
      _
    $region23: #{transformer_bts_encode.17} parent=1 // pred_check_branch
      %29 = sbr.rel (0) target = $region25
    $region24: #{transformer_bts_encode.17} parent=1 // pred_region
      _
    $region25: #{transformer_bts_encode.17} parent=1 // pred_fallthru
      _
    // Predicated region
    $region26: #{transformer_bts_encode.17} parent=1 // pred_check
      _
    $region27: #{transformer_bts_encode.17} parent=1 // pred_check_branch
      %31 = sbr.rel (0) target = $region29
    $region28: #{transformer_bts_encode.17} parent=1 // pred_region
      _
    $region29: #{transformer_bts_encode.17} parent=1 // pred_fallthru
      _
    // Predicated region
    $region30: #{transformer_bts_encode.17} parent=1 // pred_check
      _
    $region31: #{transformer_bts_encode.17} parent=1 // pred_check_branch
      %33 = sbr.rel (0) target = $region33
    $region32: #{transformer_bts_encode.17} parent=1 // pred_region
      _
    $region33: #{transformer_bts_encode.17} parent=1 // pred_fallthru
      _
    // Predicated region
    $region34: #{transformer_bts_encode.17} parent=1 // pred_check
      _
    $region35: #{transformer_bts_encode.17} parent=1 // pred_check_branch
      %35 = sbr.rel (0) target = $region37
    $region36: #{transformer_bts_encode.17} parent=1 // pred_region
      _
    $region37: #{transformer_bts_encode.17} parent=1 // pred_fallthru
      _
    // Predicated region
    $region38: #{transformer_bts_encode.17} parent=1 // pred_check
      _
    $region39: #{transformer_bts_encode.17} parent=1 // pred_check_branch
      %37 = sbr.rel (0) target = $region41
    $region40: #{transformer_bts_encode.17} parent=1 // pred_region
      _
    $region41: #{transformer_bts_encode.17} parent=1 // pred_fallthru
      _
    %v39 = vld [vmem:[%s0] sm:$0xff]
    %v40 = vld [vmem:[%s0 + $0x8] sm:$0xff]
    %v41 = vld [vmem:[%s1] sm:$0xf]
    %v42 = vld [vmem:[%s1 + $0x4] sm:$0xf]
    %v43 = vld [vmem:[%s2] sm:$0xf]
    %v44 = vld [vmem:[%s2 + $0x4] sm:$0xf]
    %v45 = vld [vmem:[%s2 + $0x8] sm:$0xf]
    %v46 = vld [vmem:[%s2 + $0xc] sm:$0xf]
    %v49 = vunpack.c.l.b16 %v41
    %v50 = vunpack.c.l.b16 %v42
    %v51 = vpack.c.b16 %v50, %v49
    %v56 = vunpack.c.l.b16 %v43
    %v57 = vunpack.c.l.b16 %v44
    %v58 = vunpack.c.l.b16 %v45
    %v59 = vunpack.c.l.b16 %v46
    %v60 = vpack.c.b16 %v57, %v56
    %v61 = vpack.c.b16 %v59, %v58
    %vm64 = vcmask 261120
    %v66 = vsel %vm64, %v51, 0
    %68 = vmatprep.subr.bf16.mxu0 0
    %69 = vmatpush1.bf16.msra.mxu0 0
    %70 = vmatprep.subr.bf16.mxu0 0
    %71 = vmatpush1.bf16.msra.mxu0 0
    %72 = vmatprep.subr.bf16.mxu0 0
    %73 = vmatpush1.bf16.msra.mxu0 0
    %74 = vmatprep.subr.bf16.mxu0 0
    %75 = vmatpush1.bf16.msra.mxu0 0
    %76 = vmatprep.subr.bf16.mxu0 0
    %77 = vmatpush1.bf16.msra.mxu0 0
    %78 = vmatprep.subr.bf16.mxu0 0
    %79 = vmatpush1.bf16.msra.mxu0 0
    %80 = vmatprep.subr.bf16.mxu0 0
    %81 = vmatpush1.bf16.msra.mxu0 %v61
    %82 = vmatprep.subr.bf16.mxu0 0
    %83 = vmatpush1.bf16.msra.mxu0 %v60
    %84 = vmatprep.subr.bf16.mxu0 0
    %85 = vmatpush2.bf16.msra.mxu0 0
    %86 = vmatprep.subr.bf16.mxu0 0
    %87 = vmatpush2.bf16.msra.mxu0 0
    %88 = vmatprep.subr.bf16.mxu0 0
    %89 = vmatpush2.bf16.msra.mxu0 0
    %90 = vmatprep.subr.bf16.mxu0 0
    %91 = vmatpush2.bf16.msra.mxu0 0
    %92 = vmatprep.subr.bf16.mxu0 0
    %93 = vmatpush2.bf16.msra.mxu0 0
    %94 = vmatprep.subr.bf16.mxu0 0
    %95 = vmatpush2.bf16.msra.mxu0 0
    %96 = vmatprep.subr.bf16.mxu0 0
    %97 = vmatpush2.bf16.msra.mxu0 0
    %98 = vmatprep.subr.bf16.mxu0 0
    %99 = vmatpush2.bf16.msra.mxu0 0
    %100 = vmatprep.mubr.bf16.mxu0 0
    %101 = vmatmul.mubr.bf16.gmra.mxu0 %v66
    %v102 = vpop.f32.mrf.mxu0
    %v103 = vadd.f32 0.0, %v102
    %v104 = vpop.f32.mrf.mxu0
    %v105 = vpop.f32.mrf.mxu0
    %v106 = vadd.f32 0.0, %v105
    %v107 = vpop.f32.mrf.mxu0
    %108 = vdwg.mxu0
    %v109 = vadd.f32 %v39, %v103
    %v110 = vadd.f32 %v40, %v106
    %v111 = vld [vmem:[%s3] sm:$0x1]
    %v113 = vlaneseq
    %v114 = vshrl.u32 %v113, 7
    %v115 = vsub.s32 0, %v114
    %v116 = vrot.slane %v111, %v115
    %v118 = vadd.f32 %v109, %v116
    %v119 = vadd.f32 %v110, %v116
    %120 = vst.msk [vmem:[#allocation2] sm:$0xff] %vm64, %v118
    %121 = vst.msk [vmem:[#allocation2 + $0x8] sm:$0xff] %vm64, %v119
    %v122 = vld [vmem:[%s4] sm:$0x1]
    %v123 = vld [vmem:[%s5] sm:$0x1]
    %v124 = vsel %vm64, %v118, 0.0
    %125 = vadd.xlane.f32.xlu0 %v124
    %v126 = vpop.xlane.xlu0 %125
    %v127 = vsel %vm64, %v119, 0.0
    %128 = vadd.xlane.f32.xlu0 %v127
    %v129 = vpop.xlane.xlu0 %128
    %v130 = vrcp.pop 32.0
    %v131 = vmul.f32 %v126, %v130
    %v132 = vmul.f32 %v129, %v130
    %v133 = vsub.f32 %v118, %v131
    %v134 = vsub.f32 %v119, %v132
    %v135 = vmul.f32 %v133, %v133
    %v136 = vmul.f32 %v134, %v134
    %v137 = vsel %vm64, %v135, 0.0
    %138 = vadd.xlane.f32.xlu0 %v137
    %v139 = vpop.xlane.xlu0 %138
    %v140 = vsel %vm64, %v136, 0.0
    %141 = vadd.xlane.f32.xlu0 %v140
    %v142 = vpop.xlane.xlu0 %141
    %v143 = vmul.f32 %v139, %v130
    %v144 = vmul.f32 %v142, %v130
    %v145 = vadd.f32 %v143, 1e-05
    %v146 = vadd.f32 %v144, 1e-05
    %v147 = vrsqrt.pop %v145
    %v148 = vrsqrt.pop %v146
    %v149 = vmul.f32 %v133, %v147
    %v150 = vmul.f32 %v134, %v148
    %v152 = vlaneseq
    %v153 = vshrl.u32 %v152, 7
    %v154 = vsub.s32 0, %v153
    %v155 = vrot.slane %v122, %v154
    %v157 = vmul.f32 %v149, %v155
    %v158 = vmul.f32 %v150, %v155
    %v160 = vlaneseq
    %v161 = vshrl.u32 %v160, 7
    %v162 = vsub.s32 0, %v161
    %v163 = vrot.slane %v123, %v162
    %v165 = vadd.f32 %v157, %v163
    %v166 = vadd.f32 %v158, %v163
    %v167 = vpack.c.bf16 %v166, %v165
    %v168 = vld [vmem:[%s6] sm:$0xf]
    %v169 = vld [vmem:[%s6 + $0x4] sm:$0xf]
    %v170 = vld [vmem:[%s6 + $0x8] sm:$0xf]
    %v171 = vld [vmem:[%s6 + $0xc] sm:$0xf]
    %v172 = vld [vmem:[%s7] sm:$0x1]
    %v174 = vlaneseq
    %v175 = vshrl.u32 %v174, 7
    %v176 = vsub.s32 0, %v175
    %v177 = vrot.slane %v172, %v176
    %v183 = vunpack.c.l.b16 %v168
    %v184 = vunpack.c.l.b16 %v169
    %v185 = vunpack.c.l.b16 %v170
    %v186 = vunpack.c.l.b16 %v171
    %v187 = vpack.c.b16 %v184, %v183
    %v188 = vpack.c.b16 %v186, %v185
    %v192 = vsel %vm64, %v167, 0
    %194 = vmatprep.subr.bf16.mxu0 0
    %195 = vmatpush1.bf16.msra.mxu0 0
    %196 = vmatprep.subr.bf16.mxu0 0
    %197 = vmatpush1.bf16.msra.mxu0 0
    %198 = vmatprep.subr.bf16.mxu0 0
    %199 = vmatpush1.bf16.msra.mxu0 0
    %200 = vmatprep.subr.bf16.mxu0 0
    %201 = vmatpush1.bf16.msra.mxu0 0
    %202 = vmatprep.subr.bf16.mxu0 0
    %203 = vmatpush1.bf16.msra.mxu0 0
    %204 = vmatprep.subr.bf16.mxu0 0
    %205 = vmatpush1.bf16.msra.mxu0 0
    %206 = vmatprep.subr.bf16.mxu0 0
    %207 = vmatpush1.bf16.msra.mxu0 %v188
    %208 = vmatprep.subr.bf16.mxu0 0
    %209 = vmatpush1.bf16.msra.mxu0 %v187
    %210 = vmatprep.subr.bf16.mxu0 0
    %211 = vmatpush2.bf16.msra.mxu0 0
    %212 = vmatprep.subr.bf16.mxu0 0
    %213 = vmatpush2.bf16.msra.mxu0 0
    %214 = vmatprep.subr.bf16.mxu0 0
    %215 = vmatpush2.bf16.msra.mxu0 0
    %216 = vmatprep.subr.bf16.mxu0 0
    %217 = vmatpush2.bf16.msra.mxu0 0
    %218 = vmatprep.subr.bf16.mxu0 0
    %219 = vmatpush2.bf16.msra.mxu0 0
    %220 = vmatprep.subr.bf16.mxu0 0
    %221 = vmatpush2.bf16.msra.mxu0 0
    %222 = vmatprep.subr.bf16.mxu0 0
    %223 = vmatpush2.bf16.msra.mxu0 0
    %224 = vmatprep.subr.bf16.mxu0 0
    %225 = vmatpush2.bf16.msra.mxu0 0
    %226 = vmatprep.mubr.bf16.mxu0 0
    %227 = vmatmul.mubr.bf16.gmra.mxu0 %v192
    %v228 = vpop.f32.mrf.mxu0
    %v229 = vadd.f32 %v177, %v228
    %v230 = vpop.f32.mrf.mxu0
    %v231 = vpop.f32.mrf.mxu0
    %v232 = vadd.f32 %v177, %v231
    %v233 = vpop.f32.mrf.mxu0
    %234 = vdwg.mxu0
    %v235 = vmul.f32 %v229, %v229
    %v236 = vmul.f32 %v232, %v232
    %v237 = vmul.f32 %v229, %v235
    %v238 = vmul.f32 %v232, %v236
    %v239 = vmul.f32 %v237, 0.044715
    %v240 = vmul.f32 %v238, 0.044715
    %v241 = vadd.f32 %v229, %v239
    %v242 = vadd.f32 %v232, %v240
    %v243 = vmul.f32 %v241, 0.7978846
    %v244 = vmul.f32 %v242, 0.7978846
    %v245 = vtanh.pop %v243
    %v246 = vtanh.pop %v244
    %v247 = vadd.f32 %v245, 1.0
    %v248 = vadd.f32 %v246, 1.0
    %v249 = vmul.f32 %v247, 0.5
    %v250 = vmul.f32 %v248, 0.5
    %v251 = vmul.f32 %v229, %v249
    %v252 = vmul.f32 %v232, %v250
    %v253 = vpack.c.bf16 %v252, %v251
    %v254 = vld [vmem:[%s8] sm:$0xf]
    %v255 = vld [vmem:[%s8 + $0x4] sm:$0xf]
    %v256 = vld [vmem:[%s8 + $0x8] sm:$0xf]
    %v257 = vld [vmem:[%s8 + $0xc] sm:$0xf]
    %v258 = vld [vmem:[%s8 + $0x10] sm:$0xf]
    %v259 = vld [vmem:[%s8 + $0x14] sm:$0xf]
    %v260 = vld [vmem:[%s8 + $0x18] sm:$0xf]
    %v261 = vld [vmem:[%s8 + $0x1c] sm:$0xf]
    %v270 = vunpack.c.l.b16 %v254
    %v271 = vunpack.c.l.b16 %v255
    %v272 = vunpack.c.l.b16 %v256
    %v273 = vunpack.c.l.b16 %v257
    %v274 = vunpack.c.l.b16 %v258
    %v275 = vunpack.c.l.b16 %v259
    %v276 = vunpack.c.l.b16 %v260
    %v277 = vunpack.c.l.b16 %v261
    %v278 = vpack.c.b16 %v271, %v270
    %v279 = vpack.c.b16 %v273, %v272
    %v280 = vpack.c.b16 %v275, %v274
    %v281 = vpack.c.b16 %v277, %v276
    %vm286 = vcmask 523264
    %v288 = vsel %vm286, %v253, 0
    %290 = vmatprep.subr.bf16.mxu0 0
    %291 = vmatpush1.bf16.msra.mxu0 0
    %292 = vmatprep.subr.bf16.mxu0 0
    %293 = vmatpush1.bf16.msra.mxu0 0
    %294 = vmatprep.subr.bf16.mxu0 0
    %295 = vmatpush1.bf16.msra.mxu0 0
    %296 = vmatprep.subr.bf16.mxu0 0
    %297 = vmatpush1.bf16.msra.mxu0 0
    %298 = vmatprep.subr.bf16.mxu0 0
    %299 = vmatpush1.bf16.msra.mxu0 %v281
    %300 = vmatprep.subr.bf16.mxu0 0
    %301 = vmatpush1.bf16.msra.mxu0 %v280
    %302 = vmatprep.subr.bf16.mxu0 0
    %303 = vmatpush1.bf16.msra.mxu0 %v279
    %304 = vmatprep.subr.bf16.mxu0 0
    %305 = vmatpush1.bf16.msra.mxu0 %v278
    %306 = vmatprep.subr.bf16.mxu0 0
    %307 = vmatpush2.bf16.msra.mxu0 0
    %308 = vmatprep.subr.bf16.mxu0 0
    %309 = vmatpush2.bf16.msra.mxu0 0
    %310 = vmatprep.subr.bf16.mxu0 0
    %311 = vmatpush2.bf16.msra.mxu0 0
    %312 = vmatprep.subr.bf16.mxu0 0
    %313 = vmatpush2.bf16.msra.mxu0 0
    %314 = vmatprep.subr.bf16.mxu0 0
    %315 = vmatpush2.bf16.msra.mxu0 0
    %316 = vmatprep.subr.bf16.mxu0 0
    %317 = vmatpush2.bf16.msra.mxu0 0
    %318 = vmatprep.subr.bf16.mxu0 0
    %319 = vmatpush2.bf16.msra.mxu0 0
    %320 = vmatprep.subr.bf16.mxu0 0
    %321 = vmatpush2.bf16.msra.mxu0 0
    %322 = vmatprep.mubr.bf16.mxu0 0
    %323 = vmatmul.mubr.bf16.gmra.mxu0 %v288
    %v324 = vpop.f32.mrf.mxu0
    %v325 = vadd.f32 0.0, %v324
    %v326 = vpop.f32.mrf.mxu0
    %v327 = vpop.f32.mrf.mxu0
    %v328 = vadd.f32 0.0, %v327
    %v329 = vpop.f32.mrf.mxu0
    %330 = vdwg.mxu0
    %v331 = vadd.f32 %v118, %v325
    %v332 = vadd.f32 %v119, %v328
    %v333 = vld [vmem:[%s9] sm:$0x1]
    %v335 = vlaneseq
    %v336 = vshrl.u32 %v335, 7
    %v337 = vsub.s32 0, %v336
    %v338 = vrot.slane %v333, %v337
    %v340 = vadd.f32 %v331, %v338
    %v341 = vadd.f32 %v332, %v338
    %342 = vst.msk [vmem:[%s11] sm:$0xff] %vm64, %v340
    %343 = vst.msk [vmem:[%s11 + $0x8] sm:$0xff] %vm64, %v341
    // Predicated region
    $region42: #{transformer_bts_encode.17} parent=1 // pred_check
      _
    $region43: #{transformer_bts_encode.17} parent=1 // pred_check_branch
      %345 = sbr.rel (0) target = $region45
    $region44: #{transformer_bts_encode.17} parent=1 // pred_region
      %s347 = ssub.s32 256, 256
      %348 = vsyncadd [#allocation3], %s347
      %s349 = sshll.u32 [#allocation2], 4
      %s350 = int_to_ptr.vmem [resolvable:$true] %s349
      %355 = dma.vmem_to_hbm [thread:$0]  %s350, 256, %s10, [#allocation3], 128, 128, 8
    $region45: #{transformer_bts_encode.17} parent=1 // pred_fallthru
      _
    // Predicated region
    $region46: #{transformer_bts_encode.17} parent=1 // pred_check
      _
    $region47: #{transformer_bts_encode.17} parent=1 // pred_check_branch
      %357 = sbr.rel (0) target = $region49
    $region48: #{transformer_bts_encode.17} parent=1 // pred_region
      _
    $region49: #{transformer_bts_encode.17} parent=1 // pred_fallthru
      _
    // Predicated region
    $region50: #{transformer_bts_encode.17} parent=1 // pred_check
      _
    $region51: #{transformer_bts_encode.17} parent=1 // pred_check_branch
      %359 = sbr.rel (0) target = $region53
    $region52: #{transformer_bts_encode.17} parent=1 // pred_region
      %360 = dma.done [#allocation3], 256
    $region53: #{transformer_bts_encode.17} parent=1 // pred_fallthru
      _
    // Predicated region
    $region54: #{transformer_bts_encode.17} parent=1 // pred_check
      _
    $region55: #{transformer_bts_encode.17} parent=1 // pred_check_branch
      %362 = sbr.rel (0) target = $region57
    $region56: #{transformer_bts_encode.17} parent=1 // pred_region
      _
    $region57: #{transformer_bts_encode.17} parent=1 // pred_fallthru
      _
    %363 = vsyncpa [#allocation3], 1

// kernel: transformer_bts_encode.14
$region0: #{transformer_bts_encode.14}
  #allocation0 [shape = 'u32[]', space=smem, size = 0x4, offset = 0x4, fixed_abs, tag = 'smem constant byte address 0x4 - core index']
  #allocation1 [shape = 'u32[144,128]{1,0:T(1,128)}', space=vmem, size = 0x12000, scoped, tag = 'internal scratch']
  %s0 = inlined_call_operand.vmem [shape: f32[4,4,128], index: 0, kind: input, shape index: {}]
  %s1 = inlined_call_operand.vmem [shape: f32[1,128], index: 1, kind: input, shape index: {}]
  %s2 = inlined_call_operand.vmem [shape: f32[1,128], index: 2, kind: input, shape index: {}]
  %s3 = inlined_call_operand.vmem [shape: bf16[9,4,4], index: 3, kind: input, shape index: {}]
  %s4 = inlined_call_operand.vmem [shape: bf16[27,128,32], index: 4, kind: input, shape index: {}]
  %s5 = inlined_call_operand.vmem [shape: f32[2,4,32], index: 5, kind: input, shape index: {}]
  %s6 = inlined_call_operand.vmem [shape: f32[2,2,4,32], index: 6, kind: output, shape index: {}]
  %s7 = sld [smem:[#allocation0]]
  $region57: #{transformer_bts_encode.14} parent=0
    _
  %s9 = ssub.s32 1, %s7
  %s10 = scalar_select 0, %s9, %s7
  loop: start=0, step=1, limit=6
  $region2: #{transformer_bts_encode.14} parent=0 // loop_pre_header
    _
  $region3: #{transformer_bts_encode.14} parent=0 // loop_header
    %s12 = sphi 0, %s16
    %p13 = scmp.ge.s32.totalorder %s12, 6
    %s19 = sphi 0, %s31
    %s20 = sphi 0, %s27
    %s21 = sphi 0, %s19
    %s22 = sphi 0, %s20
    %s23 = sphi 0, %s21
    %s24 = sphi 0, %s22
    %s32 = sphi 0, %s32
    %s34 = sphi 0, %s32
    %s35 = sphi 0, %s34
    %s49 = sphi 0, %s35
    %s53 = sphi 0, %s53
    %s55 = sphi 0, %s53
    %s56 = sphi 0, %s55
    %s70 = sphi 0, %s56
    %s74 = sphi 0, %s74
    %s76 = sphi 0, %s74
    %s77 = sphi 0, %s76
    %s91 = sphi 0, %s77
    %s95 = sphi 0, %s95
    %s97 = sphi 0, %s95
    %s98 = sphi 0, %s97
    %s112 = sphi 0, %s98
    %s116 = sphi 0, %s116
    %s118 = sphi 0, %s116
    %s119 = sphi 0, %s118
    %s133 = sphi 0, %s119
    %s139 = sphi 0, %s141
    %s142 = sphi 0, %s139
    %s143 = sphi 0, %s142
    %s159 = sphi 0, %s143
    %s167 = sphi 0, %s169
    %s170 = sphi 0, %s167
    %s171 = sphi 0, %s170
    %s187 = sphi 0, %s171
  $region4: #{transformer_bts_encode.14} parent=0 // loop_header_branch
    %15 = sbr.rel (%p13) target = $region8
  $region5: #{transformer_bts_encode.14} parent=0 // loop_body
    %s17 = ssub.s32 %s12, 1
    %s18 = ssub.s32 %s12, 2
    %s25 = sadd.s32 1, %s20
    %p26 = scmp.ge.s32.totalorder %s25, 2
    %s27 = scalar_select %p26, 0, %s25
    %s28 = sadd.s32 1, %s19
    %s29 = scalar_select %p26, %s28, %s19
    %p30 = scmp.ge.s32.totalorder %s29, 2
    %s31 = scalar_select %p30, 0, %s29
    %s33 = sadd.s32 %s32, 1
    %p36 = scmp.eq.s32.totalorder %s12, 3
    %p37 = scmp.ne.s32.totalorder %s32, %s34
    %p38 = scmp.eq.s32.totalorder %s12, 0
    %p39 = por %p37, %p38
    %p40 = scmp.ne.s32.totalorder %s32, %s34
    %p41 = scmp.eq.s32.totalorder %s17, 3
    %p42 = por %p40, %p41
    %p43 = scmp.ne.s32.totalorder %s34, %s35
    %p44 = scmp.eq.s32.totalorder %s17, 0
    %p45 = por %p43, %p44
    %p46 = scmp.ne.s32.totalorder %s34, %s35
    %p47 = scmp.eq.s32.totalorder %s18, 3
    %p48 = por %p46, %p47
    %p50 = scmp.ne.s32.totalorder %s35, %s49
    %p51 = scmp.eq.s32.totalorder %s18, 0
    %p52 = por %p50, %p51
    %s54 = sadd.s32 %s53, 1
    %p57 = scmp.eq.s32.totalorder %s12, 3
    %p58 = scmp.ne.s32.totalorder %s53, %s55
    %p59 = scmp.eq.s32.totalorder %s12, 0
    %p60 = por %p58, %p59
    %p61 = scmp.ne.s32.totalorder %s53, %s55
    %p62 = scmp.eq.s32.totalorder %s17, 3
    %p63 = por %p61, %p62
    %p64 = scmp.ne.s32.totalorder %s55, %s56
    %p65 = scmp.eq.s32.totalorder %s17, 0
    %p66 = por %p64, %p65
    %p67 = scmp.ne.s32.totalorder %s55, %s56
    %p68 = scmp.eq.s32.totalorder %s18, 3
    %p69 = por %p67, %p68
    %p71 = scmp.ne.s32.totalorder %s56, %s70
    %p72 = scmp.eq.s32.totalorder %s18, 0
    %p73 = por %p71, %p72
    %s75 = sadd.s32 %s74, 1
    %p78 = scmp.eq.s32.totalorder %s12, 3
    %p79 = scmp.ne.s32.totalorder %s74, %s76
    %p80 = scmp.eq.s32.totalorder %s12, 0
    %p81 = por %p79, %p80
    %p82 = scmp.ne.s32.totalorder %s74, %s76
    %p83 = scmp.eq.s32.totalorder %s17, 3
    %p84 = por %p82, %p83
    %p85 = scmp.ne.s32.totalorder %s76, %s77
    %p86 = scmp.eq.s32.totalorder %s17, 0
    %p87 = por %p85, %p86
    %p88 = scmp.ne.s32.totalorder %s76, %s77
    %p89 = scmp.eq.s32.totalorder %s18, 3
    %p90 = por %p88, %p89
    %p92 = scmp.ne.s32.totalorder %s77, %s91
    %p93 = scmp.eq.s32.totalorder %s18, 0
    %p94 = por %p92, %p93
    %s96 = sadd.s32 %s95, 1
    %p99 = scmp.eq.s32.totalorder %s12, 3
    %p100 = scmp.ne.s32.totalorder %s95, %s97
    %p101 = scmp.eq.s32.totalorder %s12, 0
    %p102 = por %p100, %p101
    %p103 = scmp.ne.s32.totalorder %s95, %s97
    %p104 = scmp.eq.s32.totalorder %s17, 3
    %p105 = por %p103, %p104
    %p106 = scmp.ne.s32.totalorder %s97, %s98
    %p107 = scmp.eq.s32.totalorder %s17, 0
    %p108 = por %p106, %p107
    %p109 = scmp.ne.s32.totalorder %s97, %s98
    %p110 = scmp.eq.s32.totalorder %s18, 3
    %p111 = por %p109, %p110
    %p113 = scmp.ne.s32.totalorder %s98, %s112
    %p114 = scmp.eq.s32.totalorder %s18, 0
    %p115 = por %p113, %p114
    %s117 = sadd.s32 %s116, 1
    %p120 = scmp.eq.s32.totalorder %s12, 3
    %p121 = scmp.ne.s32.totalorder %s116, %s118
    %p122 = scmp.eq.s32.totalorder %s12, 0
    %p123 = por %p121, %p122
    %p124 = scmp.ne.s32.totalorder %s116, %s118
    %p125 = scmp.eq.s32.totalorder %s17, 3
    %p126 = por %p124, %p125
    %p127 = scmp.ne.s32.totalorder %s118, %s119
    %p128 = scmp.eq.s32.totalorder %s17, 0
    %p129 = por %p127, %p128
    %p130 = scmp.ne.s32.totalorder %s118, %s119
    %p131 = scmp.eq.s32.totalorder %s18, 3
    %p132 = por %p130, %p131
    %p134 = scmp.ne.s32.totalorder %s119, %s133
    %p135 = scmp.eq.s32.totalorder %s18, 0
    %p136 = por %p134, %p135
    %s137 = ssub.s32 %s20, %s27
    %p138 = scmp.eq.s32.totalorder %s137, 0
    %s140 = sadd.s32 %s139, 1
    %s141 = scalar_select %p138, %s139, %s140
    %p144 = pneg %p138
    %p145 = scmp.eq.s32.totalorder %s12, 3
    %p146 = por %p144, %p145
    %p147 = scmp.ne.s32.totalorder %s139, %s142
    %p148 = scmp.eq.s32.totalorder %s12, 0
    %p149 = por %p147, %p148
    %p150 = scmp.ne.s32.totalorder %s139, %s142
    %p151 = scmp.eq.s32.totalorder %s17, 3
    %p152 = por %p150, %p151
    %p153 = scmp.ne.s32.totalorder %s142, %s143
    %p154 = scmp.eq.s32.totalorder %s17, 0
    %p155 = por %p153, %p154
    %p156 = scmp.ne.s32.totalorder %s142, %s143
    %p157 = scmp.eq.s32.totalorder %s18, 3
    %p158 = por %p156, %p157
    %p160 = scmp.ne.s32.totalorder %s143, %s159
    %p161 = scmp.eq.s32.totalorder %s18, 0
    %p162 = por %p160, %p161
    %s163 = ssub.s32 %s19, %s31
    %s164 = ssub.s32 %s20, %s27
    %s165 = sor.u32 %s163, %s164
    %p166 = scmp.eq.s32.totalorder %s165, 0
    %s168 = sadd.s32 %s167, 1
    %s169 = scalar_select %p166, %s167, %s168
    %p172 = pneg %p166
    %p173 = scmp.eq.s32.totalorder %s12, 3
    %p174 = por %p172, %p173
    %p175 = scmp.ne.s32.totalorder %s167, %s170
    %p176 = scmp.eq.s32.totalorder %s12, 0
    %p177 = por %p175, %p176
    %p178 = scmp.ne.s32.totalorder %s167, %s170
    %p179 = scmp.eq.s32.totalorder %s17, 3
    %p180 = por %p178, %p179
    %p181 = scmp.ne.s32.totalorder %s170, %s171
    %p182 = scmp.eq.s32.totalorder %s17, 0
    %p183 = por %p181, %p182
    %p184 = scmp.ne.s32.totalorder %s170, %s171
    %p185 = scmp.eq.s32.totalorder %s18, 3
    %p186 = por %p184, %p185
    %p188 = scmp.ne.s32.totalorder %s171, %s187
    %p189 = scmp.eq.s32.totalorder %s18, 0
    %p190 = por %p188, %p189
    %p191 = scmp.le.s32.totalorder 1, %s12
    %p192 = scmp.lt.s32.totalorder %s12, 5
    %p193 = pnand %p191, %p192
    %p194 = pneg %p193
    // Predicated region
    $region9: #{transformer_bts_encode.14} parent=5 // pred_check
      _
    $region10: #{transformer_bts_encode.14} parent=5 // pred_check_branch
      %196 = sbr.rel (%p193) target = $region12
    $region11: #{transformer_bts_encode.14} parent=5 // pred_region
      %s197 = ssub.s32 %s12, 1
      // Predicated region
      $region13: #{transformer_bts_encode.14} parent=11 // pred_check
        %p198 = pneg %p45
      $region14: #{transformer_bts_encode.14} parent=11 // pred_check_branch
        %200 = sbr.rel (%p198) target = $region16
      $region15: #{transformer_bts_encode.14} parent=11 // pred_region
        _
      $region16: #{transformer_bts_encode.14} parent=11 // pred_fallthru
        _
      // Predicated region
      $region17: #{transformer_bts_encode.14} parent=11 // pred_check
        %p201 = pneg %p66
      $region18: #{transformer_bts_encode.14} parent=11 // pred_check_branch
        %203 = sbr.rel (%p201) target = $region20
      $region19: #{transformer_bts_encode.14} parent=11 // pred_region
        _
      $region20: #{transformer_bts_encode.14} parent=11 // pred_fallthru
        _
      // Predicated region
      $region21: #{transformer_bts_encode.14} parent=11 // pred_check
        %p204 = pneg %p87
      $region22: #{transformer_bts_encode.14} parent=11 // pred_check_branch
        %206 = sbr.rel (%p204) target = $region24
      $region23: #{transformer_bts_encode.14} parent=11 // pred_region
        _
      $region24: #{transformer_bts_encode.14} parent=11 // pred_fallthru
        _
      // Predicated region
      $region25: #{transformer_bts_encode.14} parent=11 // pred_check
        %p207 = pneg %p108
      $region26: #{transformer_bts_encode.14} parent=11 // pred_check_branch
        %209 = sbr.rel (%p207) target = $region28
      $region27: #{transformer_bts_encode.14} parent=11 // pred_region
        _
      $region28: #{transformer_bts_encode.14} parent=11 // pred_fallthru
        _
      // Predicated region
      $region29: #{transformer_bts_encode.14} parent=11 // pred_check
        %p210 = pneg %p129
      $region30: #{transformer_bts_encode.14} parent=11 // pred_check_branch
        %212 = sbr.rel (%p210) target = $region32
      $region31: #{transformer_bts_encode.14} parent=11 // pred_region
        _
      $region32: #{transformer_bts_encode.14} parent=11 // pred_fallthru
        _
    $region12: #{transformer_bts_encode.14} parent=5 // pred_fallthru
      _
    %p213 = scmp.lt.s32.totalorder %s12, 4
    // Predicated region
    $region33: #{transformer_bts_encode.14} parent=5 // pred_check
      %p214 = pneg %p213
    $region34: #{transformer_bts_encode.14} parent=5 // pred_check_branch
      %216 = sbr.rel (%p214) target = $region36
    $region35: #{transformer_bts_encode.14} parent=5 // pred_region
      // Predicated region
      $region37: #{transformer_bts_encode.14} parent=35 // pred_check
        %p217 = pneg %p149
      $region38: #{transformer_bts_encode.14} parent=35 // pred_check_branch
        %219 = sbr.rel (%p217) target = $region40
      $region39: #{transformer_bts_encode.14} parent=35 // pred_region
        %p220 = scmp.lt.s32.totalorder %s20, 1
        %s221 = scalar_select %p220, %s20, 1
        %s222 = smul.addr %s221, 4
        %s223 = scalar_lea.vmem %s5, %s222
      $region40: #{transformer_bts_encode.14} parent=35 // pred_fallthru
        _
    $region36: #{transformer_bts_encode.14} parent=5 // pred_fallthru
      _
    %p224 = scmp.le.s32.totalorder 1, %s12
    %p225 = scmp.lt.s32.totalorder %s12, 5
    %p226 = pnand %p224, %p225
    %p227 = pneg %p226
    // Predicated region
    $region41: #{transformer_bts_encode.14} parent=5 // pred_check
      _
    $region42: #{transformer_bts_encode.14} parent=5 // pred_check_branch
      %229 = sbr.rel (%p226) target = $region44
    $region43: #{transformer_bts_encode.14} parent=5 // pred_region
      %s230 = ssub.s32 %s12, 1
      %p231 = pneg %p45
      %p232 = pneg %p42
      %p233 = pneg %p66
      %p234 = pneg %p63
      %p235 = pneg %p87
      %p236 = pneg %p84
      %p237 = pneg %p108
      %p238 = pneg %p105
      %p239 = pneg %p129
      %p240 = pneg %p126
      %p241 = scmp.lt.s32.totalorder %s22, 1
      %s242 = scalar_select %p241, %s22, 1
      %s243 = smul.addr %s242, 4
      %s244 = scalar_lea.vmem %s5, %s243
      %p245 = pneg %p155
      %p246 = pneg %p152
      %p247 = pneg %p183
      %p248 = pneg %p180
      %p249 = scmp.lt.s32.totalorder %s21, 1
      %s250 = scalar_select %p249, %s21, 1
      %p251 = scmp.lt.s32.totalorder %s22, 1
      %s252 = scalar_select %p251, %s22, 1
      %s253 = smul.addr %s250, 2
      %s254 = sadd.s32 %s252, %s253
      %s255 = smul.addr %s254, 4
      %s256 = scalar_lea.vmem %s6, %s255
      %p257 = scmp.lt.s32.totalorder %s22, 1
      %s258 = scalar_select %p257, %s22, 1
      %s259 = smul.addr %s258, 4
      %s260 = scalar_lea.vmem %s5, %s259
      %p261 = scmp.lt.s32.totalorder %s21, 1
      %s262 = scalar_select %p261, %s21, 1
      %p263 = scmp.lt.s32.totalorder %s22, 1
      %s264 = scalar_select %p263, %s22, 1
      %s265 = smul.addr %s262, 2
      %s266 = sadd.s32 %s264, %s265
      %s267 = smul.addr %s266, 4
      %s268 = scalar_lea.vmem %s6, %s267
      %v270 = vld [vmem:[%s1] sm:$0x1]
      %v271 = vld [vmem:[%s2] sm:$0x1]
      %s272 = sadd.s32 %s22, 4294967295
      %p273 = scmp.ge.s32.totalorder %s272, 0
      %p274 = scmp.le.s32.totalorder %s272, 1
      %p275 = pnand %p273, %p274
      %p276 = pneg %p275
      %s277 = scalar_select %p276, 1, 0
      %s278 = scvt.s32.f32 %s277
      %p279 = scmp.gt.s32.totalorder %s272, 0
      %s280 = scalar_select %p279, %s272, 0
      %p281 = scmp.lt.s32.totalorder %s280, 1
      %s282 = scalar_select %p281, %s280, 1
      %s283 = smul.u32 %s21, 2
      %s284 = sadd.s32 %s283, %s282
      %s285 = smul.u32 %s284, 4
      %s286 = scalar_lea.vmem %s0, %s285
      %v287 = vld [vmem:[%s286] sm:$0xf]
      %v289 = vlaneseq
      %v290 = vshrl.u32 %v289, 7
      %v291 = vsub.s32 0, %v290
      %v292 = vrot.slane %v270, %v291
      %v294 = vmul.f32 %v287, %v292
      %v296 = vlaneseq
      %v297 = vshrl.u32 %v296, 7
      %v298 = vsub.s32 0, %v297
      %v299 = vrot.slane %v271, %v298
      %v301 = vadd.f32 %v294, %v299
      %v302 = vmax.f32 %v301, 0.0
      %v303 = vstv %s278
      %v304 = vmul.f32 %v302, %v303
      %v305 = vpack.c.bf16 %v304, %v304
      %v306 = vld [vmem:[%s3] sm:$0x3]
      %vm307 = vcmask 31744
      %v309 = vsel %vm307, %v306, 0
      %vm311 = vcmask 1041408
      %v313 = vsel %vm311, %v305, 0
      %315 = vmatprep.subr.bf16.mxu0 0
      %316 = vmatpush1.bf16.msra.mxu0 0
      %317 = vmatprep.subr.bf16.mxu0 0
      %318 = vmatpush1.bf16.msra.mxu0 0
      %319 = vmatprep.subr.bf16.mxu0 0
      %320 = vmatpush1.bf16.msra.mxu0 0
      %321 = vmatprep.subr.bf16.mxu0 0
      %322 = vmatpush1.bf16.msra.mxu0 0
      %323 = vmatprep.subr.bf16.mxu0 0
      %324 = vmatpush1.bf16.msra.mxu0 0
      %325 = vmatprep.subr.bf16.mxu0 0
      %326 = vmatpush1.bf16.msra.mxu0 0
      %327 = vmatprep.subr.bf16.mxu0 0
      %328 = vmatpush1.bf16.msra.mxu0 0
      %329 = vmatprep.subr.bf16.mxu0 0
      %330 = vmatpush1.bf16.msra.mxu0 %v313
      %331 = vmatprep.subr.bf16.mxu0 0
      %332 = vmatpush2.bf16.msra.mxu0 0
      %333 = vmatprep.subr.bf16.mxu0 0
      %334 = vmatpush2.bf16.msra.mxu0 0
      %335 = vmatprep.subr.bf16.mxu0 0
      %336 = vmatpush2.bf16.msra.mxu0 0
      %337 = vmatprep.subr.bf16.mxu0 0
      %338 = vmatpush2.bf16.msra.mxu0 0
      %339 = vmatprep.subr.bf16.mxu0 0
      %340 = vmatpush2.bf16.msra.mxu0 0
      %341 = vmatprep.subr.bf16.mxu0 0
      %342 = vmatpush2.bf16.msra.mxu0 0
      %343 = vmatprep.subr.bf16.mxu0 0
      %344 = vmatpush2.bf16.msra.mxu0 0
      %345 = vmatprep.subr.bf16.mxu0 0
      %346 = vmatpush2.bf16.msra.mxu0 0
      %347 = vmatprep.mubr.bf16.mxu0 0
      %348 = vmatmul.mubr.bf16.gmra.mxu0 %v309
      %v349 = vpop.f32.mrf.mxu0
      %v350 = vadd.f32 0.0, %v349
      %v351 = vpop.f32.mrf.mxu0
      %v352 = vpop.f32.mrf.mxu0
      %v353 = vpop.f32.mrf.mxu0
      %354 = vdwg.mxu0
      %v355 = vpack.c.bf16 %v350, %v350
      %v356 = vld [vmem:[%s4] sm:$0xf]
      %v357 = vld [vmem:[%s4 + $0x4] sm:$0xf]
      %v358 = vld [vmem:[%s4 + $0x8] sm:$0xf]
      %v359 = vld [vmem:[%s4 + $0xc] sm:$0xf]
      %v360 = vld [vmem:[%s4 + $0x10] sm:$0xf]
      %v361 = vld [vmem:[%s4 + $0x14] sm:$0xf]
      %v362 = vld [vmem:[%s4 + $0x18] sm:$0xf]
      %v363 = vld [vmem:[%s4 + $0x1c] sm:$0xf]
      %v364 = vld [vmem:[%s4 + $0x20] sm:$0xf]
      %v365 = vld [vmem:[%s4 + $0x24] sm:$0xf]
      %v366 = vld [vmem:[%s4 + $0x28] sm:$0xf]
      %v367 = vld [vmem:[%s4 + $0x2c] sm:$0xf]
      %v368 = vld [vmem:[%s4 + $0x30] sm:$0xf]
      %v369 = vld [vmem:[%s4 + $0x34] sm:$0xf]
      %v370 = vld [vmem:[%s4 + $0x38] sm:$0xf]
      %v371 = vld [vmem:[%s4 + $0x3c] sm:$0xf]
      %s372 = scalar_lea.vmem %s3, 2
      %v373 = vld [vmem:[%s372] sm:$0x3]
      %v375 = vsel %vm307, %v373, 0
      %377 = vmatprep.subr.bf16.mxu0 0
      %378 = vmatpush1.bf16.msra.mxu0 0
      %379 = vmatprep.subr.bf16.mxu0 0
      %380 = vmatpush1.bf16.msra.mxu0 0
      %381 = vmatprep.subr.bf16.mxu0 0
      %382 = vmatpush1.bf16.msra.mxu0 0
      %383 = vmatprep.subr.bf16.mxu0 0
      %384 = vmatpush1.bf16.msra.mxu0 0
      %385 = vmatprep.subr.bf16.mxu0 0
      %386 = vmatpush1.bf16.msra.mxu0 0
      %387 = vmatprep.subr.bf16.mxu0 0
      %388 = vmatpush1.bf16.msra.mxu0 0
      %389 = vmatprep.subr.bf16.mxu0 0
      %390 = vmatpush1.bf16.msra.mxu0 0
      %391 = vmatprep.subr.bf16.mxu0 0
      %392 = vmatpush1.bf16.msra.mxu0 %v313
      %393 = vmatprep.subr.bf16.mxu0 0
      %394 = vmatpush2.bf16.msra.mxu0 0
      %395 = vmatprep.subr.bf16.mxu0 0
      %396 = vmatpush2.bf16.msra.mxu0 0
      %397 = vmatprep.subr.bf16.mxu0 0
      %398 = vmatpush2.bf16.msra.mxu0 0
      %399 = vmatprep.subr.bf16.mxu0 0
      %400 = vmatpush2.bf16.msra.mxu0 0
      %401 = vmatprep.subr.bf16.mxu0 0
      %402 = vmatpush2.bf16.msra.mxu0 0
      %403 = vmatprep.subr.bf16.mxu0 0
      %404 = vmatpush2.bf16.msra.mxu0 0
      %405 = vmatprep.subr.bf16.mxu0 0
      %406 = vmatpush2.bf16.msra.mxu0 0
      %407 = vmatprep.subr.bf16.mxu0 0
      %408 = vmatpush2.bf16.msra.mxu0 0
      %409 = vmatprep.mubr.bf16.mxu0 0
      %410 = vmatmul.mubr.bf16.gmra.mxu0 %v375
      %v411 = vpop.f32.mrf.mxu0
      %v412 = vadd.f32 0.0, %v411
      %v413 = vpop.f32.mrf.mxu0
      %v414 = vpop.f32.mrf.mxu0
      %v415 = vpop.f32.mrf.mxu0
      %416 = vdwg.mxu0
      %v417 = vpack.c.bf16 %v412, %v412
      %s418 = scalar_lea.vmem %s4, 64
      %v419 = vld [vmem:[%s418] sm:$0xf]
      %v420 = vld [vmem:[%s418 + $0x4] sm:$0xf]
      %v421 = vld [vmem:[%s418 + $0x8] sm:$0xf]
      %v422 = vld [vmem:[%s418 + $0xc] sm:$0xf]
      %v423 = vld [vmem:[%s418 + $0x10] sm:$0xf]
      %v424 = vld [vmem:[%s418 + $0x14] sm:$0xf]
      %v425 = vld [vmem:[%s418 + $0x18] sm:$0xf]
      %v426 = vld [vmem:[%s418 + $0x1c] sm:$0xf]
      %v427 = vld [vmem:[%s418 + $0x20] sm:$0xf]
      %v428 = vld [vmem:[%s418 + $0x24] sm:$0xf]
      %v429 = vld [vmem:[%s418 + $0x28] sm:$0xf]
      %v430 = vld [vmem:[%s418 + $0x2c] sm:$0xf]
      %v431 = vld [vmem:[%s418 + $0x30] sm:$0xf]
      %v432 = vld [vmem:[%s418 + $0x34] sm:$0xf]
      %v433 = vld [vmem:[%s418 + $0x38] sm:$0xf]
      %v434 = vld [vmem:[%s418 + $0x3c] sm:$0xf]
      %v451 = vunpack.c.l.b16 %v419
      %v452 = vunpack.c.l.b16 %v420
      %v453 = vunpack.c.l.b16 %v421
      %v454 = vunpack.c.l.b16 %v422
      %v455 = vunpack.c.l.b16 %v423
      %v456 = vunpack.c.l.b16 %v424
      %v457 = vunpack.c.l.b16 %v425
      %v458 = vunpack.c.l.b16 %v426
      %v459 = vunpack.c.l.b16 %v427
      %v460 = vunpack.c.l.b16 %v428
      %v461 = vunpack.c.l.b16 %v429
      %v462 = vunpack.c.l.b16 %v430
      %v463 = vunpack.c.l.b16 %v431
      %v464 = vunpack.c.l.b16 %v432
      %v465 = vunpack.c.l.b16 %v433
      %v466 = vunpack.c.l.b16 %v434
      %v467 = vpack.c.b16 %v452, %v451
      %v468 = vpack.c.b16 %v454, %v453
      %v469 = vpack.c.b16 %v456, %v455
      %v470 = vpack.c.b16 %v458, %v457
      %v471 = vpack.c.b16 %v460, %v459
      %v472 = vpack.c.b16 %v462, %v461
      %v473 = vpack.c.b16 %v464, %v463
      %v474 = vpack.c.b16 %v466, %v465
      %483 = vmatprep.subr.bf16.mxu0 0
      %484 = vmatpush1.bf16.msra.mxu0 %v474
      %485 = vmatprep.subr.bf16.mxu0 0
      %486 = vmatpush1.bf16.msra.mxu0 %v473
      %487 = vmatprep.subr.bf16.mxu0 0
      %488 = vmatpush1.bf16.msra.mxu0 %v472
      %489 = vmatprep.subr.bf16.mxu0 0
      %490 = vmatpush1.bf16.msra.mxu0 %v471
      %491 = vmatprep.subr.bf16.mxu0 0
      %492 = vmatpush1.bf16.msra.mxu0 %v470
      %493 = vmatprep.subr.bf16.mxu0 0
      %494 = vmatpush1.bf16.msra.mxu0 %v469
      %495 = vmatprep.subr.bf16.mxu0 0
      %496 = vmatpush1.bf16.msra.mxu0 %v468
      %497 = vmatprep.subr.bf16.mxu0 0
      %498 = vmatpush1.bf16.msra.mxu0 %v467
      %499 = vmatprep.subr.bf16.mxu0 0
      %500 = vmatpush2.bf16.msra.mxu0 0
      %501 = vmatprep.subr.bf16.mxu0 0
      %502 = vmatpush2.bf16.msra.mxu0 0
      %503 = vmatprep.subr.bf16.mxu0 0
      %504 = vmatpush2.bf16.msra.mxu0 0
      %505 = vmatprep.subr.bf16.mxu0 0
      %506 = vmatpush2.bf16.msra.mxu0 0
      %507 = vmatprep.subr.bf16.mxu0 0
      %508 = vmatpush2.bf16.msra.mxu0 0
      %509 = vmatprep.subr.bf16.mxu0 0
      %510 = vmatpush2.bf16.msra.mxu0 0
      %511 = vmatprep.subr.bf16.mxu0 0
      %512 = vmatpush2.bf16.msra.mxu0 0
      %513 = vmatprep.subr.bf16.mxu0 0
      %514 = vmatpush2.bf16.msra.mxu0 0
      %515 = vmatprep.mubr.bf16.mxu0 0
      %516 = vmatmul.mubr.bf16.gmra.mxu0 %v417
      %v517 = vpop.f32.mrf.mxu0
      %v518 = vadd.f32 0.0, %v517
      %v519 = vpop.f32.mrf.mxu0
      %v520 = vpop.f32.mrf.mxu0
      %v521 = vpop.f32.mrf.mxu0
      %522 = vdwg.mxu0
      %v539 = vunpack.c.l.b16 %v356
      %v540 = vunpack.c.l.b16 %v357
      %v541 = vunpack.c.l.b16 %v358
      %v542 = vunpack.c.l.b16 %v359
      %v543 = vunpack.c.l.b16 %v360
      %v544 = vunpack.c.l.b16 %v361
      %v545 = vunpack.c.l.b16 %v362
      %v546 = vunpack.c.l.b16 %v363
      %v547 = vunpack.c.l.b16 %v364
      %v548 = vunpack.c.l.b16 %v365
      %v549 = vunpack.c.l.b16 %v366
      %v550 = vunpack.c.l.b16 %v367
      %v551 = vunpack.c.l.b16 %v368
      %v552 = vunpack.c.l.b16 %v369
      %v553 = vunpack.c.l.b16 %v370
      %v554 = vunpack.c.l.b16 %v371
      %v555 = vpack.c.b16 %v540, %v539
      %v556 = vpack.c.b16 %v542, %v541
      %v557 = vpack.c.b16 %v544, %v543
      %v558 = vpack.c.b16 %v546, %v545
      %v559 = vpack.c.b16 %v548, %v547
      %v560 = vpack.c.b16 %v550, %v549
      %v561 = vpack.c.b16 %v552, %v551
      %v562 = vpack.c.b16 %v554, %v553
      %571 = vmatprep.subr.bf16.mxu0 0
      %572 = vmatpush1.bf16.msra.mxu0 %v562
      %573 = vmatprep.subr.bf16.mxu0 0
      %574 = vmatpush1.bf16.msra.mxu0 %v561
      %575 = vmatprep.subr.bf16.mxu0 0
      %576 = vmatpush1.bf16.msra.mxu0 %v560
      %577 = vmatprep.subr.bf16.mxu0 0
      %578 = vmatpush1.bf16.msra.mxu0 %v559
      %579 = vmatprep.subr.bf16.mxu0 0
      %580 = vmatpush1.bf16.msra.mxu0 %v558
      %581 = vmatprep.subr.bf16.mxu0 0
      %582 = vmatpush1.bf16.msra.mxu0 %v557
      %583 = vmatprep.subr.bf16.mxu0 0
      %584 = vmatpush1.bf16.msra.mxu0 %v556
      %585 = vmatprep.subr.bf16.mxu0 0
      %586 = vmatpush1.bf16.msra.mxu0 %v555
      %587 = vmatprep.subr.bf16.mxu0 0
      %588 = vmatpush2.bf16.msra.mxu0 0
      %589 = vmatprep.subr.bf16.mxu0 0
      %590 = vmatpush2.bf16.msra.mxu0 0
      %591 = vmatprep.subr.bf16.mxu0 0
      %592 = vmatpush2.bf16.msra.mxu0 0
      %593 = vmatprep.subr.bf16.mxu0 0
      %594 = vmatpush2.bf16.msra.mxu0 0
      %595 = vmatprep.subr.bf16.mxu0 0
      %596 = vmatpush2.bf16.msra.mxu0 0
      %597 = vmatprep.subr.bf16.mxu0 0
      %598 = vmatpush2.bf16.msra.mxu0 0
      %599 = vmatprep.subr.bf16.mxu0 0
      %600 = vmatpush2.bf16.msra.mxu0 0
      %601 = vmatprep.subr.bf16.mxu0 0
      %602 = vmatpush2.bf16.msra.mxu0 0
      %603 = vmatprep.mubr.bf16.mxu0 0
      %604 = vmatmul.mubr.bf16.gmra.mxu0 %v355
      %v605 = vpop.f32.mrf.mxu0
      %v606 = vadd.f32 %v518, %v605
      %v607 = vpop.f32.mrf.mxu0
      %v608 = vpop.f32.mrf.mxu0
      %v609 = vpop.f32.mrf.mxu0
      %610 = vdwg.mxu0
      %s611 = scalar_lea.vmem %s3, 4
      %v612 = vld [vmem:[%s611] sm:$0x3]
      %v614 = vsel %vm307, %v612, 0
      %616 = vmatprep.subr.bf16.mxu0 0
      %617 = vmatpush1.bf16.msra.mxu0 0
      %618 = vmatprep.subr.bf16.mxu0 0
      %619 = vmatpush1.bf16.msra.mxu0 0
      %620 = vmatprep.subr.bf16.mxu0 0
      %621 = vmatpush1.bf16.msra.mxu0 0
      %622 = vmatprep.subr.bf16.mxu0 0
      %623 = vmatpush1.bf16.msra.mxu0 0
      %624 = vmatprep.subr.bf16.mxu0 0
      %625 = vmatpush1.bf16.msra.mxu0 0
      %626 = vmatprep.subr.bf16.mxu0 0
      %627 = vmatpush1.bf16.msra.mxu0 0
      %628 = vmatprep.subr.bf16.mxu0 0
      %629 = vmatpush1.bf16.msra.mxu0 0
      %630 = vmatprep.subr.bf16.mxu0 0
      %631 = vmatpush1.bf16.msra.mxu0 %v313
      %632 = vmatprep.subr.bf16.mxu0 0
      %633 = vmatpush2.bf16.msra.mxu0 0
      %634 = vmatprep.subr.bf16.mxu0 0
      %635 = vmatpush2.bf16.msra.mxu0 0
      %636 = vmatprep.subr.bf16.mxu0 0
      %637 = vmatpush2.bf16.msra.mxu0 0
      %638 = vmatprep.subr.bf16.mxu0 0
      %639 = vmatpush2.bf16.msra.mxu0 0
      %640 = vmatprep.subr.bf16.mxu0 0
      %641 = vmatpush2.bf16.msra.mxu0 0
      %642 = vmatprep.subr.bf16.mxu0 0
      %643 = vmatpush2.bf16.msra.mxu0 0
      %644 = vmatprep.subr.bf16.mxu0 0
      %645 = vmatpush2.bf16.msra.mxu0 0
      %646 = vmatprep.subr.bf16.mxu0 0
      %647 = vmatpush2.bf16.msra.mxu0 0
      %648 = vmatprep.mubr.bf16.mxu0 0
      %649 = vmatmul.mubr.bf16.gmra.mxu0 %v614
      %v650 = vpop.f32.mrf.mxu0
      %v651 = vadd.f32 0.0, %v650
      %v652 = vpop.f32.mrf.mxu0
      %v653 = vpop.f32.mrf.mxu0
      %v654 = vpop.f32.mrf.mxu0
      %655 = vdwg.mxu0
      %v656 = vpack.c.bf16 %v651, %v651
      %s657 = scalar_lea.vmem %s4, 128
      %v658 = vld [vmem:[%s657] sm:$0xf]
      %v659 = vld [vmem:[%s657 + $0x4] sm:$0xf]
      %v660 = vld [vmem:[%s657 + $0x8] sm:$0xf]
      %v661 = vld [vmem:[%s657 + $0xc] sm:$0xf]
      %v662 = vld [vmem:[%s657 + $0x10] sm:$0xf]
      %v663 = vld [vmem:[%s657 + $0x14] sm:$0xf]
      %v664 = vld [vmem:[%s657 + $0x18] sm:$0xf]
      %v665 = vld [vmem:[%s657 + $0x1c] sm:$0xf]
      %v666 = vld [vmem:[%s657 + $0x20] sm:$0xf]
      %v667 = vld [vmem:[%s657 + $0x24] sm:$0xf]
      %v668 = vld [vmem:[%s657 + $0x28] sm:$0xf]
      %v669 = vld [vmem:[%s657 + $0x2c] sm:$0xf]
      %v670 = vld [vmem:[%s657 + $0x30] sm:$0xf]
      %v671 = vld [vmem:[%s657 + $0x34] sm:$0xf]
      %v672 = vld [vmem:[%s657 + $0x38] sm:$0xf]
      %v673 = vld [vmem:[%s657 + $0x3c] sm:$0xf]
      %v690 = vunpack.c.l.b16 %v658
      %v691 = vunpack.c.l.b16 %v659
      %v692 = vunpack.c.l.b16 %v660
      %v693 = vunpack.c.l.b16 %v661
      %v694 = vunpack.c.l.b16 %v662
      %v695 = vunpack.c.l.b16 %v663
      %v696 = vunpack.c.l.b16 %v664
      %v697 = vunpack.c.l.b16 %v665
      %v698 = vunpack.c.l.b16 %v666
      %v699 = vunpack.c.l.b16 %v667
      %v700 = vunpack.c.l.b16 %v668
      %v701 = vunpack.c.l.b16 %v669
      %v702 = vunpack.c.l.b16 %v670
      %v703 = vunpack.c.l.b16 %v671
      %v704 = vunpack.c.l.b16 %v672
      %v705 = vunpack.c.l.b16 %v673
      %v706 = vpack.c.b16 %v691, %v690
      %v707 = vpack.c.b16 %v693, %v692
      %v708 = vpack.c.b16 %v695, %v694
      %v709 = vpack.c.b16 %v697, %v696
      %v710 = vpack.c.b16 %v699, %v698
      %v711 = vpack.c.b16 %v701, %v700
      %v712 = vpack.c.b16 %v703, %v702
      %v713 = vpack.c.b16 %v705, %v704
      %722 = vmatprep.subr.bf16.mxu0 0
      %723 = vmatpush1.bf16.msra.mxu0 %v713
      %724 = vmatprep.subr.bf16.mxu0 0
      %725 = vmatpush1.bf16.msra.mxu0 %v712
      %726 = vmatprep.subr.bf16.mxu0 0
      %727 = vmatpush1.bf16.msra.mxu0 %v711
      %728 = vmatprep.subr.bf16.mxu0 0
      %729 = vmatpush1.bf16.msra.mxu0 %v710
      %730 = vmatprep.subr.bf16.mxu0 0
      %731 = vmatpush1.bf16.msra.mxu0 %v709
      %732 = vmatprep.subr.bf16.mxu0 0
      %733 = vmatpush1.bf16.msra.mxu0 %v708
      %734 = vmatprep.subr.bf16.mxu0 0
      %735 = vmatpush1.bf16.msra.mxu0 %v707
      %736 = vmatprep.subr.bf16.mxu0 0
      %737 = vmatpush1.bf16.msra.mxu0 %v706
      %738 = vmatprep.subr.bf16.mxu0 0
      %739 = vmatpush2.bf16.msra.mxu0 0
      %740 = vmatprep.subr.bf16.mxu0 0
      %741 = vmatpush2.bf16.msra.mxu0 0
      %742 = vmatprep.subr.bf16.mxu0 0
      %743 = vmatpush2.bf16.msra.mxu0 0
      %744 = vmatprep.subr.bf16.mxu0 0
      %745 = vmatpush2.bf16.msra.mxu0 0
      %746 = vmatprep.subr.bf16.mxu0 0
      %747 = vmatpush2.bf16.msra.mxu0 0
      %748 = vmatprep.subr.bf16.mxu0 0
      %749 = vmatpush2.bf16.msra.mxu0 0
      %750 = vmatprep.subr.bf16.mxu0 0
      %751 = vmatpush2.bf16.msra.mxu0 0
      %752 = vmatprep.subr.bf16.mxu0 0
      %753 = vmatpush2.bf16.msra.mxu0 0
      %754 = vmatprep.mubr.bf16.mxu0 0
      %755 = vmatmul.mubr.bf16.gmra.mxu0 %v656
      %v756 = vpop.f32.mrf.mxu0
      %v757 = vadd.f32 0.0, %v756
      %v758 = vpop.f32.mrf.mxu0
      %v759 = vpop.f32.mrf.mxu0
      %v760 = vpop.f32.mrf.mxu0
      %761 = vdwg.mxu0
      %v762 = vadd.f32 %v606, %v757
      %s763 = scalar_lea.vmem %s3, 6
      %v764 = vld [vmem:[%s763] sm:$0x3]
      %v766 = vsel %vm307, %v764, 0
      %768 = vmatprep.subr.bf16.mxu0 0
      %769 = vmatpush1.bf16.msra.mxu0 0
      %770 = vmatprep.subr.bf16.mxu0 0
      %771 = vmatpush1.bf16.msra.mxu0 0
      %772 = vmatprep.subr.bf16.mxu0 0
      %773 = vmatpush1.bf16.msra.mxu0 0
      %774 = vmatprep.subr.bf16.mxu0 0
      %775 = vmatpush1.bf16.msra.mxu0 0
      %776 = vmatprep.subr.bf16.mxu0 0
      %777 = vmatpush1.bf16.msra.mxu0 0
      %778 = vmatprep.subr.bf16.mxu0 0
      %779 = vmatpush1.bf16.msra.mxu0 0
      %780 = vmatprep.subr.bf16.mxu0 0
      %781 = vmatpush1.bf16.msra.mxu0 0
      %782 = vmatprep.subr.bf16.mxu0 0
      %783 = vmatpush1.bf16.msra.mxu0 %v313
      %784 = vmatprep.subr.bf16.mxu0 0
      %785 = vmatpush2.bf16.msra.mxu0 0
      %786 = vmatprep.subr.bf16.mxu0 0
      %787 = vmatpush2.bf16.msra.mxu0 0
      %788 = vmatprep.subr.bf16.mxu0 0
      %789 = vmatpush2.bf16.msra.mxu0 0
      %790 = vmatprep.subr.bf16.mxu0 0
      %791 = vmatpush2.bf16.msra.mxu0 0
      %792 = vmatprep.subr.bf16.mxu0 0
      %793 = vmatpush2.bf16.msra.mxu0 0
      %794 = vmatprep.subr.bf16.mxu0 0
      %795 = vmatpush2.bf16.msra.mxu0 0
      %796 = vmatprep.subr.bf16.mxu0 0
      %797 = vmatpush2.bf16.msra.mxu0 0
      %798 = vmatprep.subr.bf16.mxu0 0
      %799 = vmatpush2.bf16.msra.mxu0 0
      %800 = vmatprep.mubr.bf16.mxu0 0
      %801 = vmatmul.mubr.bf16.gmra.mxu0 %v766
      %v802 = vpop.f32.mrf.mxu0
      %v803 = vadd.f32 0.0, %v802
      %v804 = vpop.f32.mrf.mxu0
      %v805 = vpop.f32.mrf.mxu0
      %v806 = vpop.f32.mrf.mxu0
      %807 = vdwg.mxu0
      %v808 = vpack.c.bf16 %v803, %v803
      %s809 = scalar_lea.vmem %s4, 192
      %v810 = vld [vmem:[%s809] sm:$0xf]
      %v811 = vld [vmem:[%s809 + $0x4] sm:$0xf]
      %v812 = vld [vmem:[%s809 + $0x8] sm:$0xf]
      %v813 = vld [vmem:[%s809 + $0xc] sm:$0xf]
      %v814 = vld [vmem:[%s809 + $0x10] sm:$0xf]
      %v815 = vld [vmem:[%s809 + $0x14] sm:$0xf]
      %v816 = vld [vmem:[%s809 + $0x18] sm:$0xf]
      %v817 = vld [vmem:[%s809 + $0x1c] sm:$0xf]
      %v818 = vld [vmem:[%s809 + $0x20] sm:$0xf]
      %v819 = vld [vmem:[%s809 + $0x24] sm:$0xf]
      %v820 = vld [vmem:[%s809 + $0x28] sm:$0xf]
      %v821 = vld [vmem:[%s809 + $0x2c] sm:$0xf]
      %v822 = vld [vmem:[%s809 + $0x30] sm:$0xf]
      %v823 = vld [vmem:[%s809 + $0x34] sm:$0xf]
      %v824 = vld [vmem:[%s809 + $0x38] sm:$0xf]
      %v825 = vld [vmem:[%s809 + $0x3c] sm:$0xf]
      %v842 = vunpack.c.l.b16 %v810
      %v843 = vunpack.c.l.b16 %v811
      %v844 = vunpack.c.l.b16 %v812
      %v845 = vunpack.c.l.b16 %v813
      %v846 = vunpack.c.l.b16 %v814
      %v847 = vunpack.c.l.b16 %v815
      %v848 = vunpack.c.l.b16 %v816
      %v849 = vunpack.c.l.b16 %v817
      %v850 = vunpack.c.l.b16 %v818
      %v851 = vunpack.c.l.b16 %v819
      %v852 = vunpack.c.l.b16 %v820
      %v853 = vunpack.c.l.b16 %v821
      %v854 = vunpack.c.l.b16 %v822
      %v855 = vunpack.c.l.b16 %v823
      %v856 = vunpack.c.l.b16 %v824
      %v857 = vunpack.c.l.b16 %v825
      %v858 = vpack.c.b16 %v843, %v842
      %v859 = vpack.c.b16 %v845, %v844
      %v860 = vpack.c.b16 %v847, %v846
      %v861 = vpack.c.b16 %v849, %v848
      %v862 = vpack.c.b16 %v851, %v850
      %v863 = vpack.c.b16 %v853, %v852
      %v864 = vpack.c.b16 %v855, %v854
      %v865 = vpack.c.b16 %v857, %v856
      %874 = vmatprep.subr.bf16.mxu0 0
      %875 = vmatpush1.bf16.msra.mxu0 %v865
      %876 = vmatprep.subr.bf16.mxu0 0
      %877 = vmatpush1.bf16.msra.mxu0 %v864
      %878 = vmatprep.subr.bf16.mxu0 0
      %879 = vmatpush1.bf16.msra.mxu0 %v863
      %880 = vmatprep.subr.bf16.mxu0 0
      %881 = vmatpush1.bf16.msra.mxu0 %v862
      %882 = vmatprep.subr.bf16.mxu0 0
      %883 = vmatpush1.bf16.msra.mxu0 %v861
      %884 = vmatprep.subr.bf16.mxu0 0
      %885 = vmatpush1.bf16.msra.mxu0 %v860
      %886 = vmatprep.subr.bf16.mxu0 0
      %887 = vmatpush1.bf16.msra.mxu0 %v859
      %888 = vmatprep.subr.bf16.mxu0 0
      %889 = vmatpush1.bf16.msra.mxu0 %v858
      %890 = vmatprep.subr.bf16.mxu0 0
      %891 = vmatpush2.bf16.msra.mxu0 0
      %892 = vmatprep.subr.bf16.mxu0 0
      %893 = vmatpush2.bf16.msra.mxu0 0
      %894 = vmatprep.subr.bf16.mxu0 0
      %895 = vmatpush2.bf16.msra.mxu0 0
      %896 = vmatprep.subr.bf16.mxu0 0
      %897 = vmatpush2.bf16.msra.mxu0 0
      %898 = vmatprep.subr.bf16.mxu0 0
      %899 = vmatpush2.bf16.msra.mxu0 0
      %900 = vmatprep.subr.bf16.mxu0 0
      %901 = vmatpush2.bf16.msra.mxu0 0
      %902 = vmatprep.subr.bf16.mxu0 0
      %903 = vmatpush2.bf16.msra.mxu0 0
      %904 = vmatprep.subr.bf16.mxu0 0
      %905 = vmatpush2.bf16.msra.mxu0 0
      %906 = vmatprep.mubr.bf16.mxu0 0
      %907 = vmatmul.mubr.bf16.gmra.mxu0 %v808
      %v908 = vpop.f32.mrf.mxu0
      %v909 = vadd.f32 0.0, %v908
      %v910 = vpop.f32.mrf.mxu0
      %v911 = vpop.f32.mrf.mxu0
      %v912 = vpop.f32.mrf.mxu0
      %913 = vdwg.mxu0
      %v914 = vadd.f32 %v762, %v909
      %s915 = scalar_lea.vmem %s3, 8
      %v916 = vld [vmem:[%s915] sm:$0x3]
      %v918 = vsel %vm307, %v916, 0
      %920 = vmatprep.subr.bf16.mxu0 0
      %921 = vmatpush1.bf16.msra.mxu0 0
      %922 = vmatprep.subr.bf16.mxu0 0
      %923 = vmatpush1.bf16.msra.mxu0 0
      %924 = vmatprep.subr.bf16.mxu0 0
      %925 = vmatpush1.bf16.msra.mxu0 0
      %926 = vmatprep.subr.bf16.mxu0 0
      %927 = vmatpush1.bf16.msra.mxu0 0
      %928 = vmatprep.subr.bf16.mxu0 0
      %929 = vmatpush1.bf16.msra.mxu0 0
      %930 = vmatprep.subr.bf16.mxu0 0
      %931 = vmatpush1.bf16.msra.mxu0 0
      %932 = vmatprep.subr.bf16.mxu0 0
      %933 = vmatpush1.bf16.msra.mxu0 0
      %934 = vmatprep.subr.bf16.mxu0 0
      %935 = vmatpush1.bf16.msra.mxu0 %v313
      %936 = vmatprep.subr.bf16.mxu0 0
      %937 = vmatpush2.bf16.msra.mxu0 0
      %938 = vmatprep.subr.bf16.mxu0 0
      %939 = vmatpush2.bf16.msra.mxu0 0
      %940 = vmatprep.subr.bf16.mxu0 0
      %941 = vmatpush2.bf16.msra.mxu0 0
      %942 = vmatprep.subr.bf16.mxu0 0
      %943 = vmatpush2.bf16.msra.mxu0 0
      %944 = vmatprep.subr.bf16.mxu0 0
      %945 = vmatpush2.bf16.msra.mxu0 0
      %946 = vmatprep.subr.bf16.mxu0 0
      %947 = vmatpush2.bf16.msra.mxu0 0
      %948 = vmatprep.subr.bf16.mxu0 0
      %949 = vmatpush2.bf16.msra.mxu0 0
      %950 = vmatprep.subr.bf16.mxu0 0
      %951 = vmatpush2.bf16.msra.mxu0 0
      %952 = vmatprep.mubr.bf16.mxu0 0
      %953 = vmatmul.mubr.bf16.gmra.mxu0 %v918
      %v954 = vpop.f32.mrf.mxu0
      %v955 = vadd.f32 0.0, %v954
      %v956 = vpop.f32.mrf.mxu0
      %v957 = vpop.f32.mrf.mxu0
      %v958 = vpop.f32.mrf.mxu0
      %959 = vdwg.mxu0
      %v960 = vpack.c.bf16 %v955, %v955
      %s961 = scalar_lea.vmem %s4, 256
      %v962 = vld [vmem:[%s961] sm:$0xf]
      %v963 = vld [vmem:[%s961 + $0x4] sm:$0xf]
      %v964 = vld [vmem:[%s961 + $0x8] sm:$0xf]
      %v965 = vld [vmem:[%s961 + $0xc] sm:$0xf]
      %v966 = vld [vmem:[%s961 + $0x10] sm:$0xf]
      %v967 = vld [vmem:[%s961 + $0x14] sm:$0xf]
      %v968 = vld [vmem:[%s961 + $0x18] sm:$0xf]
      %v969 = vld [vmem:[%s961 + $0x1c] sm:$0xf]
      %v970 = vld [vmem:[%s961 + $0x20] sm:$0xf]
      %v971 = vld [vmem:[%s961 + $0x24] sm:$0xf]
      %v972 = vld [vmem:[%s961 + $0x28] sm:$0xf]
      %v973 = vld [vmem:[%s961 + $0x2c] sm:$0xf]
      %v974 = vld [vmem:[%s961 + $0x30] sm:$0xf]
      %v975 = vld [vmem:[%s961 + $0x34] sm:$0xf]
      %v976 = vld [vmem:[%s961 + $0x38] sm:$0xf]
      %v977 = vld [vmem:[%s961 + $0x3c] sm:$0xf]
      %v994 = vunpack.c.l.b16 %v962
      %v995 = vunpack.c.l.b16 %v963
      %v996 = vunpack.c.l.b16 %v964
      %v997 = vunpack.c.l.b16 %v965
      %v998 = vunpack.c.l.b16 %v966
      %v999 = vunpack.c.l.b16 %v967
      %v1000 = vunpack.c.l.b16 %v968
      %v1001 = vunpack.c.l.b16 %v969
      %v1002 = vunpack.c.l.b16 %v970
      %v1003 = vunpack.c.l.b16 %v971
      %v1004 = vunpack.c.l.b16 %v972
      %v1005 = vunpack.c.l.b16 %v973
      %v1006 = vunpack.c.l.b16 %v974
      %v1007 = vunpack.c.l.b16 %v975
      %v1008 = vunpack.c.l.b16 %v976
      %v1009 = vunpack.c.l.b16 %v977
      %v1010 = vpack.c.b16 %v995, %v994
      %v1011 = vpack.c.b16 %v997, %v996
      %v1012 = vpack.c.b16 %v999, %v998
      %v1013 = vpack.c.b16 %v1001, %v1000
      %v1014 = vpack.c.b16 %v1003, %v1002
      %v1015 = vpack.c.b16 %v1005, %v1004
      %v1016 = vpack.c.b16 %v1007, %v1006
      %v1017 = vpack.c.b16 %v1009, %v1008
      %1026 = vmatprep.subr.bf16.mxu0 0
      %1027 = vmatpush1.bf16.msra.mxu0 %v1017
      %1028 = vmatprep.subr.bf16.mxu0 0
      %1029 = vmatpush1.bf16.msra.mxu0 %v1016
      %1030 = vmatprep.subr.bf16.mxu0 0
      %1031 = vmatpush1.bf16.msra.mxu0 %v1015
      %1032 = vmatprep.subr.bf16.mxu0 0
      %1033 = vmatpush1.bf16.msra.mxu0 %v1014
      %1034 = vmatprep.subr.bf16.mxu0 0
      %1035 = vmatpush1.bf16.msra.mxu0 %v1013
      %1036 = vmatprep.subr.bf16.mxu0 0
      %1037 = vmatpush1.bf16.msra.mxu0 %v1012
      %1038 = vmatprep.subr.bf16.mxu0 0
      %1039 = vmatpush1.bf16.msra.mxu0 %v1011
      %1040 = vmatprep.subr.bf16.mxu0 0
      %1041 = vmatpush1.bf16.msra.mxu0 %v1010
      %1042 = vmatprep.subr.bf16.mxu0 0
      %1043 = vmatpush2.bf16.msra.mxu0 0
      %1044 = vmatprep.subr.bf16.mxu0 0
      %1045 = vmatpush2.bf16.msra.mxu0 0
      %1046 = vmatprep.subr.bf16.mxu0 0
      %1047 = vmatpush2.bf16.msra.mxu0 0
      %1048 = vmatprep.subr.bf16.mxu0 0
      %1049 = vmatpush2.bf16.msra.mxu0 0
      %1050 = vmatprep.subr.bf16.mxu0 0
      %1051 = vmatpush2.bf16.msra.mxu0 0
      %1052 = vmatprep.subr.bf16.mxu0 0
      %1053 = vmatpush2.bf16.msra.mxu0 0
      %1054 = vmatprep.subr.bf16.mxu0 0
      %1055 = vmatpush2.bf16.msra.mxu0 0
      %1056 = vmatprep.subr.bf16.mxu0 0
      %1057 = vmatpush2.bf16.msra.mxu0 0
      %1058 = vmatprep.mubr.bf16.mxu0 0
      %1059 = vmatmul.mubr.bf16.gmra.mxu0 %v960
      %v1060 = vpop.f32.mrf.mxu0
      %v1061 = vadd.f32 0.0, %v1060
      %v1062 = vpop.f32.mrf.mxu0
      %v1063 = vpop.f32.mrf.mxu0
      %v1064 = vpop.f32.mrf.mxu0
      %1065 = vdwg.mxu0
      %v1066 = vadd.f32 %v914, %v1061
      %s1067 = scalar_lea.vmem %s3, 10
      %v1068 = vld [vmem:[%s1067] sm:$0x3]
      %v1070 = vsel %vm307, %v1068, 0
      %1072 = vmatprep.subr.bf16.mxu0 0
      %1073 = vmatpush1.bf16.msra.mxu0 0
      %1074 = vmatprep.subr.bf16.mxu0 0
      %1075 = vmatpush1.bf16.msra.mxu0 0
      %1076 = vmatprep.subr.bf16.mxu0 0
      %1077 = vmatpush1.bf16.msra.mxu0 0
      %1078 = vmatprep.subr.bf16.mxu0 0
      %1079 = vmatpush1.bf16.msra.mxu0 0
      %1080 = vmatprep.subr.bf16.mxu0 0
      %1081 = vmatpush1.bf16.msra.mxu0 0
      %1082 = vmatprep.subr.bf16.mxu0 0
      %1083 = vmatpush1.bf16.msra.mxu0 0
      %1084 = vmatprep.subr.bf16.mxu0 0
      %1085 = vmatpush1.bf16.msra.mxu0 0
      %1086 = vmatprep.subr.bf16.mxu0 0
      %1087 = vmatpush1.bf16.msra.mxu0 %v313
      %1088 = vmatprep.subr.bf16.mxu0 0
      %1089 = vmatpush2.bf16.msra.mxu0 0
      %1090 = vmatprep.subr.bf16.mxu0 0
      %1091 = vmatpush2.bf16.msra.mxu0 0
      %1092 = vmatprep.subr.bf16.mxu0 0
      %1093 = vmatpush2.bf16.msra.mxu0 0
      %1094 = vmatprep.subr.bf16.mxu0 0
      %1095 = vmatpush2.bf16.msra.mxu0 0
      %1096 = vmatprep.subr.bf16.mxu0 0
      %1097 = vmatpush2.bf16.msra.mxu0 0
      %1098 = vmatprep.subr.bf16.mxu0 0
      %1099 = vmatpush2.bf16.msra.mxu0 0
      %1100 = vmatprep.subr.bf16.mxu0 0
      %1101 = vmatpush2.bf16.msra.mxu0 0
      %1102 = vmatprep.subr.bf16.mxu0 0
      %1103 = vmatpush2.bf16.msra.mxu0 0
      %1104 = vmatprep.mubr.bf16.mxu0 0
      %1105 = vmatmul.mubr.bf16.gmra.mxu0 %v1070
      %v1106 = vpop.f32.mrf.mxu0
      %v1107 = vadd.f32 0.0, %v1106
      %v1108 = vpop.f32.mrf.mxu0
      %v1109 = vpop.f32.mrf.mxu0
      %v1110 = vpop.f32.mrf.mxu0
      %1111 = vdwg.mxu0
      %v1112 = vpack.c.bf16 %v1107, %v1107
      %s1113 = scalar_lea.vmem %s4, 320
      %v1114 = vld [vmem:[%s1113] sm:$0xf]
      %v1115 = vld [vmem:[%s1113 + $0x4] sm:$0xf]
      %v1116 = vld [vmem:[%s1113 + $0x8] sm:$0xf]
      %v1117 = vld [vmem:[%s1113 + $0xc] sm:$0xf]
      %v1118 = vld [vmem:[%s1113 + $0x10] sm:$0xf]
      %v1119 = vld [vmem:[%s1113 + $0x14] sm:$0xf]
      %v1120 = vld [vmem:[%s1113 + $0x18] sm:$0xf]
      %v1121 = vld [vmem:[%s1113 + $0x1c] sm:$0xf]
      %v1122 = vld [vmem:[%s1113 + $0x20] sm:$0xf]
      %v1123 = vld [vmem:[%s1113 + $0x24] sm:$0xf]
      %v1124 = vld [vmem:[%s1113 + $0x28] sm:$0xf]
      %v1125 = vld [vmem:[%s1113 + $0x2c] sm:$0xf]
      %v1126 = vld [vmem:[%s1113 + $0x30] sm:$0xf]
      %v1127 = vld [vmem:[%s1113 + $0x34] sm:$0xf]
      %v1128 = vld [vmem:[%s1113 + $0x38] sm:$0xf]
      %v1129 = vld [vmem:[%s1113 + $0x3c] sm:$0xf]
      %v1146 = vunpack.c.l.b16 %v1114
      %v1147 = vunpack.c.l.b16 %v1115
      %v1148 = vunpack.c.l.b16 %v1116
      %v1149 = vunpack.c.l.b16 %v1117
      %v1150 = vunpack.c.l.b16 %v1118
      %v1151 = vunpack.c.l.b16 %v1119
      %v1152 = vunpack.c.l.b16 %v1120
      %v1153 = vunpack.c.l.b16 %v1121
      %v1154 = vunpack.c.l.b16 %v1122
      %v1155 = vunpack.c.l.b16 %v1123
      %v1156 = vunpack.c.l.b16 %v1124
      %v1157 = vunpack.c.l.b16 %v1125
      %v1158 = vunpack.c.l.b16 %v1126
      %v1159 = vunpack.c.l.b16 %v1127
      %v1160 = vunpack.c.l.b16 %v1128
      %v1161 = vunpack.c.l.b16 %v1129
      %v1162 = vpack.c.b16 %v1147, %v1146
      %v1163 = vpack.c.b16 %v1149, %v1148
      %v1164 = vpack.c.b16 %v1151, %v1150
      %v1165 = vpack.c.b16 %v1153, %v1152
      %v1166 = vpack.c.b16 %v1155, %v1154
      %v1167 = vpack.c.b16 %v1157, %v1156
      %v1168 = vpack.c.b16 %v1159, %v1158
      %v1169 = vpack.c.b16 %v1161, %v1160
      %1178 = vmatprep.subr.bf16.mxu0 0
      %1179 = vmatpush1.bf16.msra.mxu0 %v1169
      %1180 = vmatprep.subr.bf16.mxu0 0
      %1181 = vmatpush1.bf16.msra.mxu0 %v1168
      %1182 = vmatprep.subr.bf16.mxu0 0
      %1183 = vmatpush1.bf16.msra.mxu0 %v1167
      %1184 = vmatprep.subr.bf16.mxu0 0
      %1185 = vmatpush1.bf16.msra.mxu0 %v1166
      %1186 = vmatprep.subr.bf16.mxu0 0
      %1187 = vmatpush1.bf16.msra.mxu0 %v1165
      %1188 = vmatprep.subr.bf16.mxu0 0
      %1189 = vmatpush1.bf16.msra.mxu0 %v1164
      %1190 = vmatprep.subr.bf16.mxu0 0
      %1191 = vmatpush1.bf16.msra.mxu0 %v1163
      %1192 = vmatprep.subr.bf16.mxu0 0
      %1193 = vmatpush1.bf16.msra.mxu0 %v1162
      %1194 = vmatprep.subr.bf16.mxu0 0
      %1195 = vmatpush2.bf16.msra.mxu0 0
      %1196 = vmatprep.subr.bf16.mxu0 0
      %1197 = vmatpush2.bf16.msra.mxu0 0
      %1198 = vmatprep.subr.bf16.mxu0 0
      %1199 = vmatpush2.bf16.msra.mxu0 0
      %1200 = vmatprep.subr.bf16.mxu0 0
      %1201 = vmatpush2.bf16.msra.mxu0 0
      %1202 = vmatprep.subr.bf16.mxu0 0
      %1203 = vmatpush2.bf16.msra.mxu0 0
      %1204 = vmatprep.subr.bf16.mxu0 0
      %1205 = vmatpush2.bf16.msra.mxu0 0
      %1206 = vmatprep.subr.bf16.mxu0 0
      %1207 = vmatpush2.bf16.msra.mxu0 0
      %1208 = vmatprep.subr.bf16.mxu0 0
      %1209 = vmatpush2.bf16.msra.mxu0 0
      %1210 = vmatprep.mubr.bf16.mxu0 0
      %1211 = vmatmul.mubr.bf16.gmra.mxu0 %v1112
      %v1212 = vpop.f32.mrf.mxu0
      %v1213 = vadd.f32 0.0, %v1212
      %v1214 = vpop.f32.mrf.mxu0
      %v1215 = vpop.f32.mrf.mxu0
      %v1216 = vpop.f32.mrf.mxu0
      %1217 = vdwg.mxu0
      %v1218 = vadd.f32 %v1066, %v1213
      %s1219 = scalar_lea.vmem %s3, 12
      %v1220 = vld [vmem:[%s1219] sm:$0x3]
      %v1222 = vsel %vm307, %v1220, 0
      %1224 = vmatprep.subr.bf16.mxu0 0
      %1225 = vmatpush1.bf16.msra.mxu0 0
      %1226 = vmatprep.subr.bf16.mxu0 0
      %1227 = vmatpush1.bf16.msra.mxu0 0
      %1228 = vmatprep.subr.bf16.mxu0 0
      %1229 = vmatpush1.bf16.msra.mxu0 0
      %1230 = vmatprep.subr.bf16.mxu0 0
      %1231 = vmatpush1.bf16.msra.mxu0 0
      %1232 = vmatprep.subr.bf16.mxu0 0
      %1233 = vmatpush1.bf16.msra.mxu0 0
      %1234 = vmatprep.subr.bf16.mxu0 0
      %1235 = vmatpush1.bf16.msra.mxu0 0
      %1236 = vmatprep.subr.bf16.mxu0 0
      %1237 = vmatpush1.bf16.msra.mxu0 0
      %1238 = vmatprep.subr.bf16.mxu0 0
      %1239 = vmatpush1.bf16.msra.mxu0 %v313
      %1240 = vmatprep.subr.bf16.mxu0 0
      %1241 = vmatpush2.bf16.msra.mxu0 0
      %1242 = vmatprep.subr.bf16.mxu0 0
      %1243 = vmatpush2.bf16.msra.mxu0 0
      %1244 = vmatprep.subr.bf16.mxu0 0
      %1245 = vmatpush2.bf16.msra.mxu0 0
      %1246 = vmatprep.subr.bf16.mxu0 0
      %1247 = vmatpush2.bf16.msra.mxu0 0
      %1248 = vmatprep.subr.bf16.mxu0 0
      %1249 = vmatpush2.bf16.msra.mxu0 0
      %1250 = vmatprep.subr.bf16.mxu0 0
      %1251 = vmatpush2.bf16.msra.mxu0 0
      %1252 = vmatprep.subr.bf16.mxu0 0
      %1253 = vmatpush2.bf16.msra.mxu0 0
      %1254 = vmatprep.subr.bf16.mxu0 0
      %1255 = vmatpush2.bf16.msra.mxu0 0
      %1256 = vmatprep.mubr.bf16.mxu0 0
      %1257 = vmatmul.mubr.bf16.gmra.mxu0 %v1222
      %v1258 = vpop.f32.mrf.mxu0
      %v1259 = vadd.f32 0.0, %v1258
      %v1260 = vpop.f32.mrf.mxu0
      %v1261 = vpop.f32.mrf.mxu0
      %v1262 = vpop.f32.mrf.mxu0
      %1263 = vdwg.mxu0
      %v1264 = vpack.c.bf16 %v1259, %v1259
      %s1265 = scalar_lea.vmem %s4, 384
      %v1266 = vld [vmem:[%s1265] sm:$0xf]
      %v1267 = vld [vmem:[%s1265 + $0x4] sm:$0xf]
      %v1268 = vld [vmem:[%s1265 + $0x8] sm:$0xf]
      %v1269 = vld [vmem:[%s1265 + $0xc] sm:$0xf]
      %v1270 = vld [vmem:[%s1265 + $0x10] sm:$0xf]
      %v1271 = vld [vmem:[%s1265 + $0x14] sm:$0xf]
      %v1272 = vld [vmem:[%s1265 + $0x18] sm:$0xf]
      %v1273 = vld [vmem:[%s1265 + $0x1c] sm:$0xf]
      %v1274 = vld [vmem:[%s1265 + $0x20] sm:$0xf]
      %v1275 = vld [vmem:[%s1265 + $0x24] sm:$0xf]
      %v1276 = vld [vmem:[%s1265 + $0x28] sm:$0xf]
      %v1277 = vld [vmem:[%s1265 + $0x2c] sm:$0xf]
      %v1278 = vld [vmem:[%s1265 + $0x30] sm:$0xf]
      %v1279 = vld [vmem:[%s1265 + $0x34] sm:$0xf]
      %v1280 = vld [vmem:[%s1265 + $0x38] sm:$0xf]
      %v1281 = vld [vmem:[%s1265 + $0x3c] sm:$0xf]
      %v1298 = vunpack.c.l.b16 %v1266
      %v1299 = vunpack.c.l.b16 %v1267
      %v1300 = vunpack.c.l.b16 %v1268
      %v1301 = vunpack.c.l.b16 %v1269
      %v1302 = vunpack.c.l.b16 %v1270
      %v1303 = vunpack.c.l.b16 %v1271
      %v1304 = vunpack.c.l.b16 %v1272
      %v1305 = vunpack.c.l.b16 %v1273
      %v1306 = vunpack.c.l.b16 %v1274
      %v1307 = vunpack.c.l.b16 %v1275
      %v1308 = vunpack.c.l.b16 %v1276
      %v1309 = vunpack.c.l.b16 %v1277
      %v1310 = vunpack.c.l.b16 %v1278
      %v1311 = vunpack.c.l.b16 %v1279
      %v1312 = vunpack.c.l.b16 %v1280
      %v1313 = vunpack.c.l.b16 %v1281
      %v1314 = vpack.c.b16 %v1299, %v1298
      %v1315 = vpack.c.b16 %v1301, %v1300
      %v1316 = vpack.c.b16 %v1303, %v1302
      %v1317 = vpack.c.b16 %v1305, %v1304
      %v1318 = vpack.c.b16 %v1307, %v1306
      %v1319 = vpack.c.b16 %v1309, %v1308
      %v1320 = vpack.c.b16 %v1311, %v1310
      %v1321 = vpack.c.b16 %v1313, %v1312
      %1330 = vmatprep.subr.bf16.mxu0 0
      %1331 = vmatpush1.bf16.msra.mxu0 %v1321
      %1332 = vmatprep.subr.bf16.mxu0 0
      %1333 = vmatpush1.bf16.msra.mxu0 %v1320
      %1334 = vmatprep.subr.bf16.mxu0 0
      %1335 = vmatpush1.bf16.msra.mxu0 %v1319
      %1336 = vmatprep.subr.bf16.mxu0 0
      %1337 = vmatpush1.bf16.msra.mxu0 %v1318
      %1338 = vmatprep.subr.bf16.mxu0 0
      %1339 = vmatpush1.bf16.msra.mxu0 %v1317
      %1340 = vmatprep.subr.bf16.mxu0 0
      %1341 = vmatpush1.bf16.msra.mxu0 %v1316
      %1342 = vmatprep.subr.bf16.mxu0 0
      %1343 = vmatpush1.bf16.msra.mxu0 %v1315
      %1344 = vmatprep.subr.bf16.mxu0 0
      %1345 = vmatpush1.bf16.msra.mxu0 %v1314
      %1346 = vmatprep.subr.bf16.mxu0 0
      %1347 = vmatpush2.bf16.msra.mxu0 0
      %1348 = vmatprep.subr.bf16.mxu0 0
      %1349 = vmatpush2.bf16.msra.mxu0 0
      %1350 = vmatprep.subr.bf16.mxu0 0
      %1351 = vmatpush2.bf16.msra.mxu0 0
      %1352 = vmatprep.subr.bf16.mxu0 0
      %1353 = vmatpush2.bf16.msra.mxu0 0
      %1354 = vmatprep.subr.bf16.mxu0 0
      %1355 = vmatpush2.bf16.msra.mxu0 0
      %1356 = vmatprep.subr.bf16.mxu0 0
      %1357 = vmatpush2.bf16.msra.mxu0 0
      %1358 = vmatprep.subr.bf16.mxu0 0
      %1359 = vmatpush2.bf16.msra.mxu0 0
      %1360 = vmatprep.subr.bf16.mxu0 0
      %1361 = vmatpush2.bf16.msra.mxu0 0
      %1362 = vmatprep.mubr.bf16.mxu0 0
      %1363 = vmatmul.mubr.bf16.gmra.mxu0 %v1264
      %v1364 = vpop.f32.mrf.mxu0
      %v1365 = vadd.f32 0.0, %v1364
      %v1366 = vpop.f32.mrf.mxu0
      %v1367 = vpop.f32.mrf.mxu0
      %v1368 = vpop.f32.mrf.mxu0
      %1369 = vdwg.mxu0
      %v1370 = vadd.f32 %v1218, %v1365
      %s1371 = scalar_lea.vmem %s3, 14
      %v1372 = vld [vmem:[%s1371] sm:$0x3]
      %v1374 = vsel %vm307, %v1372, 0
      %1376 = vmatprep.subr.bf16.mxu0 0
      %1377 = vmatpush1.bf16.msra.mxu0 0
      %1378 = vmatprep.subr.bf16.mxu0 0
      %1379 = vmatpush1.bf16.msra.mxu0 0
      %1380 = vmatprep.subr.bf16.mxu0 0
      %1381 = vmatpush1.bf16.msra.mxu0 0
      %1382 = vmatprep.subr.bf16.mxu0 0
      %1383 = vmatpush1.bf16.msra.mxu0 0
      %1384 = vmatprep.subr.bf16.mxu0 0
      %1385 = vmatpush1.bf16.msra.mxu0 0
      %1386 = vmatprep.subr.bf16.mxu0 0
      %1387 = vmatpush1.bf16.msra.mxu0 0
      %1388 = vmatprep.subr.bf16.mxu0 0
      %1389 = vmatpush1.bf16.msra.mxu0 0
      %1390 = vmatprep.subr.bf16.mxu0 0
      %1391 = vmatpush1.bf16.msra.mxu0 %v313
      %1392 = vmatprep.subr.bf16.mxu0 0
      %1393 = vmatpush2.bf16.msra.mxu0 0
      %1394 = vmatprep.subr.bf16.mxu0 0
      %1395 = vmatpush2.bf16.msra.mxu0 0
      %1396 = vmatprep.subr.bf16.mxu0 0
      %1397 = vmatpush2.bf16.msra.mxu0 0
      %1398 = vmatprep.subr.bf16.mxu0 0
      %1399 = vmatpush2.bf16.msra.mxu0 0
      %1400 = vmatprep.subr.bf16.mxu0 0
      %1401 = vmatpush2.bf16.msra.mxu0 0
      %1402 = vmatprep.subr.bf16.mxu0 0
      %1403 = vmatpush2.bf16.msra.mxu0 0
      %1404 = vmatprep.subr.bf16.mxu0 0
      %1405 = vmatpush2.bf16.msra.mxu0 0
      %1406 = vmatprep.subr.bf16.mxu0 0
      %1407 = vmatpush2.bf16.msra.mxu0 0
      %1408 = vmatprep.mubr.bf16.mxu0 0
      %1409 = vmatmul.mubr.bf16.gmra.mxu0 %v1374
      %v1410 = vpop.f32.mrf.mxu0
      %v1411 = vadd.f32 0.0, %v1410
      %v1412 = vpop.f32.mrf.mxu0
      %v1413 = vpop.f32.mrf.mxu0
      %v1414 = vpop.f32.mrf.mxu0
      %1415 = vdwg.mxu0
      %v1416 = vpack.c.bf16 %v1411, %v1411
      %s1417 = scalar_lea.vmem %s4, 448
      %v1418 = vld [vmem:[%s1417] sm:$0xf]
      %v1419 = vld [vmem:[%s1417 + $0x4] sm:$0xf]
      %v1420 = vld [vmem:[%s1417 + $0x8] sm:$0xf]
      %v1421 = vld [vmem:[%s1417 + $0xc] sm:$0xf]
      %v1422 = vld [vmem:[%s1417 + $0x10] sm:$0xf]
      %v1423 = vld [vmem:[%s1417 + $0x14] sm:$0xf]
      %v1424 = vld [vmem:[%s1417 + $0x18] sm:$0xf]
      %v1425 = vld [vmem:[%s1417 + $0x1c] sm:$0xf]
      %v1426 = vld [vmem:[%s1417 + $0x20] sm:$0xf]
      %v1427 = vld [vmem:[%s1417 + $0x24] sm:$0xf]
      %v1428 = vld [vmem:[%s1417 + $0x28] sm:$0xf]
      %v1429 = vld [vmem:[%s1417 + $0x2c] sm:$0xf]
      %v1430 = vld [vmem:[%s1417 + $0x30] sm:$0xf]
      %v1431 = vld [vmem:[%s1417 + $0x34] sm:$0xf]
      %v1432 = vld [vmem:[%s1417 + $0x38] sm:$0xf]
      %v1433 = vld [vmem:[%s1417 + $0x3c] sm:$0xf]
      %v1450 = vunpack.c.l.b16 %v1418
      %v1451 = vunpack.c.l.b16 %v1419
      %v1452 = vunpack.c.l.b16 %v1420
      %v1453 = vunpack.c.l.b16 %v1421
      %v1454 = vunpack.c.l.b16 %v1422
      %v1455 = vunpack.c.l.b16 %v1423
      %v1456 = vunpack.c.l.b16 %v1424
      %v1457 = vunpack.c.l.b16 %v1425
      %v1458 = vunpack.c.l.b16 %v1426
      %v1459 = vunpack.c.l.b16 %v1427
      %v1460 = vunpack.c.l.b16 %v1428
      %v1461 = vunpack.c.l.b16 %v1429
      %v1462 = vunpack.c.l.b16 %v1430
      %v1463 = vunpack.c.l.b16 %v1431
      %v1464 = vunpack.c.l.b16 %v1432
      %v1465 = vunpack.c.l.b16 %v1433
      %v1466 = vpack.c.b16 %v1451, %v1450
      %v1467 = vpack.c.b16 %v1453, %v1452
      %v1468 = vpack.c.b16 %v1455, %v1454
      %v1469 = vpack.c.b16 %v1457, %v1456
      %v1470 = vpack.c.b16 %v1459, %v1458
      %v1471 = vpack.c.b16 %v1461, %v1460
      %v1472 = vpack.c.b16 %v1463, %v1462
      %v1473 = vpack.c.b16 %v1465, %v1464
      %1482 = vmatprep.subr.bf16.mxu0 0
      %1483 = vmatpush1.bf16.msra.mxu0 %v1473
      %1484 = vmatprep.subr.bf16.mxu0 0
      %1485 = vmatpush1.bf16.msra.mxu0 %v1472
      %1486 = vmatprep.subr.bf16.mxu0 0
      %1487 = vmatpush1.bf16.msra.mxu0 %v1471
      %1488 = vmatprep.subr.bf16.mxu0 0
      %1489 = vmatpush1.bf16.msra.mxu0 %v1470
      %1490 = vmatprep.subr.bf16.mxu0 0
      %1491 = vmatpush1.bf16.msra.mxu0 %v1469
      %1492 = vmatprep.subr.bf16.mxu0 0
      %1493 = vmatpush1.bf16.msra.mxu0 %v1468
      %1494 = vmatprep.subr.bf16.mxu0 0
      %1495 = vmatpush1.bf16.msra.mxu0 %v1467
      %1496 = vmatprep.subr.bf16.mxu0 0
      %1497 = vmatpush1.bf16.msra.mxu0 %v1466
      %1498 = vmatprep.subr.bf16.mxu0 0
      %1499 = vmatpush2.bf16.msra.mxu0 0
      %1500 = vmatprep.subr.bf16.mxu0 0
      %1501 = vmatpush2.bf16.msra.mxu0 0
      %1502 = vmatprep.subr.bf16.mxu0 0
      %1503 = vmatpush2.bf16.msra.mxu0 0
      %1504 = vmatprep.subr.bf16.mxu0 0
      %1505 = vmatpush2.bf16.msra.mxu0 0
      %1506 = vmatprep.subr.bf16.mxu0 0
      %1507 = vmatpush2.bf16.msra.mxu0 0
      %1508 = vmatprep.subr.bf16.mxu0 0
      %1509 = vmatpush2.bf16.msra.mxu0 0
      %1510 = vmatprep.subr.bf16.mxu0 0
      %1511 = vmatpush2.bf16.msra.mxu0 0
      %1512 = vmatprep.subr.bf16.mxu0 0
      %1513 = vmatpush2.bf16.msra.mxu0 0
      %1514 = vmatprep.mubr.bf16.mxu0 0
      %1515 = vmatmul.mubr.bf16.gmra.mxu0 %v1416
      %v1516 = vpop.f32.mrf.mxu0
      %v1517 = vadd.f32 0.0, %v1516
      %v1518 = vpop.f32.mrf.mxu0
      %v1519 = vpop.f32.mrf.mxu0
      %v1520 = vpop.f32.mrf.mxu0
      %1521 = vdwg.mxu0
      %v1522 = vadd.f32 %v1370, %v1517
      %s1523 = scalar_lea.vmem %s3, 16
      %v1524 = vld [vmem:[%s1523] sm:$0x3]
      %v1526 = vsel %vm307, %v1524, 0
      %1528 = vmatprep.subr.bf16.mxu0 0
      %1529 = vmatpush1.bf16.msra.mxu0 0
      %1530 = vmatprep.subr.bf16.mxu0 0
      %1531 = vmatpush1.bf16.msra.mxu0 0
      %1532 = vmatprep.subr.bf16.mxu0 0
      %1533 = vmatpush1.bf16.msra.mxu0 0
      %1534 = vmatprep.subr.bf16.mxu0 0
      %1535 = vmatpush1.bf16.msra.mxu0 0
      %1536 = vmatprep.subr.bf16.mxu0 0
      %1537 = vmatpush1.bf16.msra.mxu0 0
      %1538 = vmatprep.subr.bf16.mxu0 0
      %1539 = vmatpush1.bf16.msra.mxu0 0
      %1540 = vmatprep.subr.bf16.mxu0 0
      %1541 = vmatpush1.bf16.msra.mxu0 0
      %1542 = vmatprep.subr.bf16.mxu0 0
      %1543 = vmatpush1.bf16.msra.mxu0 %v313
      %1544 = vmatprep.subr.bf16.mxu0 0
      %1545 = vmatpush2.bf16.msra.mxu0 0
      %1546 = vmatprep.subr.bf16.mxu0 0
      %1547 = vmatpush2.bf16.msra.mxu0 0
      %1548 = vmatprep.subr.bf16.mxu0 0
      %1549 = vmatpush2.bf16.msra.mxu0 0
      %1550 = vmatprep.subr.bf16.mxu0 0
      %1551 = vmatpush2.bf16.msra.mxu0 0
      %1552 = vmatprep.subr.bf16.mxu0 0
      %1553 = vmatpush2.bf16.msra.mxu0 0
      %1554 = vmatprep.subr.bf16.mxu0 0
      %1555 = vmatpush2.bf16.msra.mxu0 0
      %1556 = vmatprep.subr.bf16.mxu0 0
      %1557 = vmatpush2.bf16.msra.mxu0 0
      %1558 = vmatprep.subr.bf16.mxu0 0
      %1559 = vmatpush2.bf16.msra.mxu0 0
      %1560 = vmatprep.mubr.bf16.mxu0 0
      %1561 = vmatmul.mubr.bf16.gmra.mxu0 %v1526
      %v1562 = vpop.f32.mrf.mxu0
      %v1563 = vadd.f32 0.0, %v1562
      %v1564 = vpop.f32.mrf.mxu0
      %v1565 = vpop.f32.mrf.mxu0
      %v1566 = vpop.f32.mrf.mxu0
      %1567 = vdwg.mxu0
      %v1568 = vpack.c.bf16 %v1563, %v1563
      %s1569 = scalar_lea.vmem %s4, 512
      %v1570 = vld [vmem:[%s1569] sm:$0xf]
      %v1571 = vld [vmem:[%s1569 + $0x4] sm:$0xf]
      %v1572 = vld [vmem:[%s1569 + $0x8] sm:$0xf]
      %v1573 = vld [vmem:[%s1569 + $0xc] sm:$0xf]
      %v1574 = vld [vmem:[%s1569 + $0x10] sm:$0xf]
      %v1575 = vld [vmem:[%s1569 + $0x14] sm:$0xf]
      %v1576 = vld [vmem:[%s1569 + $0x18] sm:$0xf]
      %v1577 = vld [vmem:[%s1569 + $0x1c] sm:$0xf]
      %v1578 = vld [vmem:[%s1569 + $0x20] sm:$0xf]
      %v1579 = vld [vmem:[%s1569 + $0x24] sm:$0xf]
      %v1580 = vld [vmem:[%s1569 + $0x28] sm:$0xf]
      %v1581 = vld [vmem:[%s1569 + $0x2c] sm:$0xf]
      %v1582 = vld [vmem:[%s1569 + $0x30] sm:$0xf]
      %v1583 = vld [vmem:[%s1569 + $0x34] sm:$0xf]
      %v1584 = vld [vmem:[%s1569 + $0x38] sm:$0xf]
      %v1585 = vld [vmem:[%s1569 + $0x3c] sm:$0xf]
      %v1602 = vunpack.c.l.b16 %v1570
      %v1603 = vunpack.c.l.b16 %v1571
      %v1604 = vunpack.c.l.b16 %v1572
      %v1605 = vunpack.c.l.b16 %v1573
      %v1606 = vunpack.c.l.b16 %v1574
      %v1607 = vunpack.c.l.b16 %v1575
      %v1608 = vunpack.c.l.b16 %v1576
      %v1609 = vunpack.c.l.b16 %v1577
      %v1610 = vunpack.c.l.b16 %v1578
      %v1611 = vunpack.c.l.b16 %v1579
      %v1612 = vunpack.c.l.b16 %v1580
      %v1613 = vunpack.c.l.b16 %v1581
      %v1614 = vunpack.c.l.b16 %v1582
      %v1615 = vunpack.c.l.b16 %v1583
      %v1616 = vunpack.c.l.b16 %v1584
      %v1617 = vunpack.c.l.b16 %v1585
      %v1618 = vpack.c.b16 %v1603, %v1602
      %v1619 = vpack.c.b16 %v1605, %v1604
      %v1620 = vpack.c.b16 %v1607, %v1606
      %v1621 = vpack.c.b16 %v1609, %v1608
      %v1622 = vpack.c.b16 %v1611, %v1610
      %v1623 = vpack.c.b16 %v1613, %v1612
      %v1624 = vpack.c.b16 %v1615, %v1614
      %v1625 = vpack.c.b16 %v1617, %v1616
      %1634 = vmatprep.subr.bf16.mxu0 0
      %1635 = vmatpush1.bf16.msra.mxu0 %v1625
      %1636 = vmatprep.subr.bf16.mxu0 0
      %1637 = vmatpush1.bf16.msra.mxu0 %v1624
      %1638 = vmatprep.subr.bf16.mxu0 0
      %1639 = vmatpush1.bf16.msra.mxu0 %v1623
      %1640 = vmatprep.subr.bf16.mxu0 0
      %1641 = vmatpush1.bf16.msra.mxu0 %v1622
      %1642 = vmatprep.subr.bf16.mxu0 0
      %1643 = vmatpush1.bf16.msra.mxu0 %v1621
      %1644 = vmatprep.subr.bf16.mxu0 0
      %1645 = vmatpush1.bf16.msra.mxu0 %v1620
      %1646 = vmatprep.subr.bf16.mxu0 0
      %1647 = vmatpush1.bf16.msra.mxu0 %v1619
      %1648 = vmatprep.subr.bf16.mxu0 0
      %1649 = vmatpush1.bf16.msra.mxu0 %v1618
      %1650 = vmatprep.subr.bf16.mxu0 0
      %1651 = vmatpush2.bf16.msra.mxu0 0
      %1652 = vmatprep.subr.bf16.mxu0 0
      %1653 = vmatpush2.bf16.msra.mxu0 0
      %1654 = vmatprep.subr.bf16.mxu0 0
      %1655 = vmatpush2.bf16.msra.mxu0 0
      %1656 = vmatprep.subr.bf16.mxu0 0
      %1657 = vmatpush2.bf16.msra.mxu0 0
      %1658 = vmatprep.subr.bf16.mxu0 0
      %1659 = vmatpush2.bf16.msra.mxu0 0
      %1660 = vmatprep.subr.bf16.mxu0 0
      %1661 = vmatpush2.bf16.msra.mxu0 0
      %1662 = vmatprep.subr.bf16.mxu0 0
      %1663 = vmatpush2.bf16.msra.mxu0 0
      %1664 = vmatprep.subr.bf16.mxu0 0
      %1665 = vmatpush2.bf16.msra.mxu0 0
      %1666 = vmatprep.mubr.bf16.mxu0 0
      %1667 = vmatmul.mubr.bf16.gmra.mxu0 %v1568
      %v1668 = vpop.f32.mrf.mxu0
      %v1669 = vadd.f32 0.0, %v1668
      %v1670 = vpop.f32.mrf.mxu0
      %v1671 = vpop.f32.mrf.mxu0
      %v1672 = vpop.f32.mrf.mxu0
      %1673 = vdwg.mxu0
      %v1674 = vadd.f32 %v1522, %v1669
      %p1675 = scmp.ge.s32.totalorder %s22, 0
      %p1676 = scmp.le.s32.totalorder %s22, 1
      %p1677 = pnand %p1675, %p1676
      %p1678 = pneg %p1677
      %s1679 = scalar_select %p1678, 1, 0
      %s1680 = scvt.s32.f32 %s1679
      %p1681 = scmp.gt.s32.totalorder %s22, 0
      %s1682 = scalar_select %p1681, %s22, 0
      %p1683 = scmp.lt.s32.totalorder %s1682, 1
      %s1684 = scalar_select %p1683, %s1682, 1
      %s1685 = sadd.s32 %s283, %s1684
      %s1686 = smul.u32 %s1685, 4
      %s1687 = scalar_lea.vmem %s0, %s1686
      %v1688 = vld [vmem:[%s1687] sm:$0xf]
      %v1689 = vmul.f32 %v1688, %v292
      %v1690 = vadd.f32 %v1689, %v299
      %v1691 = vmax.f32 %v1690, 0.0
      %v1692 = vstv %s1680
      %v1693 = vmul.f32 %v1691, %v1692
      %v1694 = vpack.c.bf16 %v1693, %v1693
      %v1696 = vsel %vm311, %v1694, 0
      %1698 = vmatprep.subr.bf16.mxu0 0
      %1699 = vmatpush1.bf16.msra.mxu0 0
      %1700 = vmatprep.subr.bf16.mxu0 0
      %1701 = vmatpush1.bf16.msra.mxu0 0
      %1702 = vmatprep.subr.bf16.mxu0 0
      %1703 = vmatpush1.bf16.msra.mxu0 0
      %1704 = vmatprep.subr.bf16.mxu0 0
      %1705 = vmatpush1.bf16.msra.mxu0 0
      %1706 = vmatprep.subr.bf16.mxu0 0
      %1707 = vmatpush1.bf16.msra.mxu0 0
      %1708 = vmatprep.subr.bf16.mxu0 0
      %1709 = vmatpush1.bf16.msra.mxu0 0
      %1710 = vmatprep.subr.bf16.mxu0 0
      %1711 = vmatpush1.bf16.msra.mxu0 0
      %1712 = vmatprep.subr.bf16.mxu0 0
      %1713 = vmatpush1.bf16.msra.mxu0 %v1696
      %1714 = vmatprep.subr.bf16.mxu0 0
      %1715 = vmatpush2.bf16.msra.mxu0 0
      %1716 = vmatprep.subr.bf16.mxu0 0
      %1717 = vmatpush2.bf16.msra.mxu0 0
      %1718 = vmatprep.subr.bf16.mxu0 0
      %1719 = vmatpush2.bf16.msra.mxu0 0
      %1720 = vmatprep.subr.bf16.mxu0 0
      %1721 = vmatpush2.bf16.msra.mxu0 0
      %1722 = vmatprep.subr.bf16.mxu0 0
      %1723 = vmatpush2.bf16.msra.mxu0 0
      %1724 = vmatprep.subr.bf16.mxu0 0
      %1725 = vmatpush2.bf16.msra.mxu0 0
      %1726 = vmatprep.subr.bf16.mxu0 0
      %1727 = vmatpush2.bf16.msra.mxu0 0
      %1728 = vmatprep.subr.bf16.mxu0 0
      %1729 = vmatpush2.bf16.msra.mxu0 0
      %1730 = vmatprep.mubr.bf16.mxu0 0
      %1731 = vmatmul.mubr.bf16.gmra.mxu0 %v309
      %v1732 = vpop.f32.mrf.mxu0
      %v1733 = vadd.f32 0.0, %v1732
      %v1734 = vpop.f32.mrf.mxu0
      %v1735 = vpop.f32.mrf.mxu0
      %v1736 = vpop.f32.mrf.mxu0
      %1737 = vdwg.mxu0
      %v1738 = vpack.c.bf16 %v1733, %v1733
      %s1739 = scalar_lea.vmem %s4, 576
      %v1740 = vld [vmem:[%s1739] sm:$0xf]
      %v1741 = vld [vmem:[%s1739 + $0x4] sm:$0xf]
      %v1742 = vld [vmem:[%s1739 + $0x8] sm:$0xf]
      %v1743 = vld [vmem:[%s1739 + $0xc] sm:$0xf]
      %v1744 = vld [vmem:[%s1739 + $0x10] sm:$0xf]
      %v1745 = vld [vmem:[%s1739 + $0x14] sm:$0xf]
      %v1746 = vld [vmem:[%s1739 + $0x18] sm:$0xf]
      %v1747 = vld [vmem:[%s1739 + $0x1c] sm:$0xf]
      %v1748 = vld [vmem:[%s1739 + $0x20] sm:$0xf]
      %v1749 = vld [vmem:[%s1739 + $0x24] sm:$0xf]
      %v1750 = vld [vmem:[%s1739 + $0x28] sm:$0xf]
      %v1751 = vld [vmem:[%s1739 + $0x2c] sm:$0xf]
      %v1752 = vld [vmem:[%s1739 + $0x30] sm:$0xf]
      %v1753 = vld [vmem:[%s1739 + $0x34] sm:$0xf]
      %v1754 = vld [vmem:[%s1739 + $0x38] sm:$0xf]
      %v1755 = vld [vmem:[%s1739 + $0x3c] sm:$0xf]
      %v1772 = vunpack.c.l.b16 %v1740
      %v1773 = vunpack.c.l.b16 %v1741
      %v1774 = vunpack.c.l.b16 %v1742
      %v1775 = vunpack.c.l.b16 %v1743
      %v1776 = vunpack.c.l.b16 %v1744
      %v1777 = vunpack.c.l.b16 %v1745
      %v1778 = vunpack.c.l.b16 %v1746
      %v1779 = vunpack.c.l.b16 %v1747
      %v1780 = vunpack.c.l.b16 %v1748
      %v1781 = vunpack.c.l.b16 %v1749
      %v1782 = vunpack.c.l.b16 %v1750
      %v1783 = vunpack.c.l.b16 %v1751
      %v1784 = vunpack.c.l.b16 %v1752
      %v1785 = vunpack.c.l.b16 %v1753
      %v1786 = vunpack.c.l.b16 %v1754
      %v1787 = vunpack.c.l.b16 %v1755
      %v1788 = vpack.c.b16 %v1773, %v1772
      %v1789 = vpack.c.b16 %v1775, %v1774
      %v1790 = vpack.c.b16 %v1777, %v1776
      %v1791 = vpack.c.b16 %v1779, %v1778
      %v1792 = vpack.c.b16 %v1781, %v1780
      %v1793 = vpack.c.b16 %v1783, %v1782
      %v1794 = vpack.c.b16 %v1785, %v1784
      %v1795 = vpack.c.b16 %v1787, %v1786
      %1804 = vmatprep.subr.bf16.mxu0 0
      %1805 = vmatpush1.bf16.msra.mxu0 %v1795
      %1806 = vmatprep.subr.bf16.mxu0 0
      %1807 = vmatpush1.bf16.msra.mxu0 %v1794
      %1808 = vmatprep.subr.bf16.mxu0 0
      %1809 = vmatpush1.bf16.msra.mxu0 %v1793
      %1810 = vmatprep.subr.bf16.mxu0 0
      %1811 = vmatpush1.bf16.msra.mxu0 %v1792
      %1812 = vmatprep.subr.bf16.mxu0 0
      %1813 = vmatpush1.bf16.msra.mxu0 %v1791
      %1814 = vmatprep.subr.bf16.mxu0 0
      %1815 = vmatpush1.bf16.msra.mxu0 %v1790
      %1816 = vmatprep.subr.bf16.mxu0 0
      %1817 = vmatpush1.bf16.msra.mxu0 %v1789
      %1818 = vmatprep.subr.bf16.mxu0 0
      %1819 = vmatpush1.bf16.msra.mxu0 %v1788
      %1820 = vmatprep.subr.bf16.mxu0 0
      %1821 = vmatpush2.bf16.msra.mxu0 0
      %1822 = vmatprep.subr.bf16.mxu0 0
      %1823 = vmatpush2.bf16.msra.mxu0 0
      %1824 = vmatprep.subr.bf16.mxu0 0
      %1825 = vmatpush2.bf16.msra.mxu0 0
      %1826 = vmatprep.subr.bf16.mxu0 0
      %1827 = vmatpush2.bf16.msra.mxu0 0
      %1828 = vmatprep.subr.bf16.mxu0 0
      %1829 = vmatpush2.bf16.msra.mxu0 0
      %1830 = vmatprep.subr.bf16.mxu0 0
      %1831 = vmatpush2.bf16.msra.mxu0 0
      %1832 = vmatprep.subr.bf16.mxu0 0
      %1833 = vmatpush2.bf16.msra.mxu0 0
      %1834 = vmatprep.subr.bf16.mxu0 0
      %1835 = vmatpush2.bf16.msra.mxu0 0
      %1836 = vmatprep.mubr.bf16.mxu0 0
      %1837 = vmatmul.mubr.bf16.gmra.mxu0 %v1738
      %v1838 = vpop.f32.mrf.mxu0
      %v1839 = vadd.f32 0.0, %v1838
      %v1840 = vpop.f32.mrf.mxu0
      %v1841 = vpop.f32.mrf.mxu0
      %v1842 = vpop.f32.mrf.mxu0
      %1843 = vdwg.mxu0
      %v1844 = vadd.f32 %v1674, %v1839
      %1845 = vmatprep.subr.bf16.mxu0 0
      %1846 = vmatpush1.bf16.msra.mxu0 0
      %1847 = vmatprep.subr.bf16.mxu0 0
      %1848 = vmatpush1.bf16.msra.mxu0 0
      %1849 = vmatprep.subr.bf16.mxu0 0
      %1850 = vmatpush1.bf16.msra.mxu0 0
      %1851 = vmatprep.subr.bf16.mxu0 0
      %1852 = vmatpush1.bf16.msra.mxu0 0
      %1853 = vmatprep.subr.bf16.mxu0 0
      %1854 = vmatpush1.bf16.msra.mxu0 0
      %1855 = vmatprep.subr.bf16.mxu0 0
      %1856 = vmatpush1.bf16.msra.mxu0 0
      %1857 = vmatprep.subr.bf16.mxu0 0
      %1858 = vmatpush1.bf16.msra.mxu0 0
      %1859 = vmatprep.subr.bf16.mxu0 0
      %1860 = vmatpush1.bf16.msra.mxu0 %v1696
      %1861 = vmatprep.subr.bf16.mxu0 0
      %1862 = vmatpush2.bf16.msra.mxu0 0
      %1863 = vmatprep.subr.bf16.mxu0 0
      %1864 = vmatpush2.bf16.msra.mxu0 0
      %1865 = vmatprep.subr.bf16.mxu0 0
      %1866 = vmatpush2.bf16.msra.mxu0 0
      %1867 = vmatprep.subr.bf16.mxu0 0
      %1868 = vmatpush2.bf16.msra.mxu0 0
      %1869 = vmatprep.subr.bf16.mxu0 0
      %1870 = vmatpush2.bf16.msra.mxu0 0
      %1871 = vmatprep.subr.bf16.mxu0 0
      %1872 = vmatpush2.bf16.msra.mxu0 0
      %1873 = vmatprep.subr.bf16.mxu0 0
      %1874 = vmatpush2.bf16.msra.mxu0 0
      %1875 = vmatprep.subr.bf16.mxu0 0
      %1876 = vmatpush2.bf16.msra.mxu0 0
      %1877 = vmatprep.mubr.bf16.mxu0 0
      %1878 = vmatmul.mubr.bf16.gmra.mxu0 %v375
      %v1879 = vpop.f32.mrf.mxu0
      %v1880 = vadd.f32 0.0, %v1879
      %v1881 = vpop.f32.mrf.mxu0
      %v1882 = vpop.f32.mrf.mxu0
      %v1883 = vpop.f32.mrf.mxu0
      %1884 = vdwg.mxu0
      %v1885 = vpack.c.bf16 %v1880, %v1880
      %s1886 = scalar_lea.vmem %s4, 640
      %v1887 = vld [vmem:[%s1886] sm:$0xf]
      %v1888 = vld [vmem:[%s1886 + $0x4] sm:$0xf]
      %v1889 = vld [vmem:[%s1886 + $0x8] sm:$0xf]
      %v1890 = vld [vmem:[%s1886 + $0xc] sm:$0xf]
      %v1891 = vld [vmem:[%s1886 + $0x10] sm:$0xf]
      %v1892 = vld [vmem:[%s1886 + $0x14] sm:$0xf]
      %v1893 = vld [vmem:[%s1886 + $0x18] sm:$0xf]
      %v1894 = vld [vmem:[%s1886 + $0x1c] sm:$0xf]
      %v1895 = vld [vmem:[%s1886 + $0x20] sm:$0xf]
      %v1896 = vld [vmem:[%s1886 + $0x24] sm:$0xf]
      %v1897 = vld [vmem:[%s1886 + $0x28] sm:$0xf]
      %v1898 = vld [vmem:[%s1886 + $0x2c] sm:$0xf]
      %v1899 = vld [vmem:[%s1886 + $0x30] sm:$0xf]
      %v1900 = vld [vmem:[%s1886 + $0x34] sm:$0xf]
      %v1901 = vld [vmem:[%s1886 + $0x38] sm:$0xf]
      %v1902 = vld [vmem:[%s1886 + $0x3c] sm:$0xf]
      %v1919 = vunpack.c.l.b16 %v1887
      %v1920 = vunpack.c.l.b16 %v1888
      %v1921 = vunpack.c.l.b16 %v1889
      %v1922 = vunpack.c.l.b16 %v1890
      %v1923 = vunpack.c.l.b16 %v1891
      %v1924 = vunpack.c.l.b16 %v1892
      %v1925 = vunpack.c.l.b16 %v1893
      %v1926 = vunpack.c.l.b16 %v1894
      %v1927 = vunpack.c.l.b16 %v1895
      %v1928 = vunpack.c.l.b16 %v1896
      %v1929 = vunpack.c.l.b16 %v1897
      %v1930 = vunpack.c.l.b16 %v1898
      %v1931 = vunpack.c.l.b16 %v1899
      %v1932 = vunpack.c.l.b16 %v1900
      %v1933 = vunpack.c.l.b16 %v1901
      %v1934 = vunpack.c.l.b16 %v1902
      %v1935 = vpack.c.b16 %v1920, %v1919
      %v1936 = vpack.c.b16 %v1922, %v1921
      %v1937 = vpack.c.b16 %v1924, %v1923
      %v1938 = vpack.c.b16 %v1926, %v1925
      %v1939 = vpack.c.b16 %v1928, %v1927
      %v1940 = vpack.c.b16 %v1930, %v1929
      %v1941 = vpack.c.b16 %v1932, %v1931
      %v1942 = vpack.c.b16 %v1934, %v1933
      %1951 = vmatprep.subr.bf16.mxu0 0
      %1952 = vmatpush1.bf16.msra.mxu0 %v1942
      %1953 = vmatprep.subr.bf16.mxu0 0
      %1954 = vmatpush1.bf16.msra.mxu0 %v1941
      %1955 = vmatprep.subr.bf16.mxu0 0
      %1956 = vmatpush1.bf16.msra.mxu0 %v1940
      %1957 = vmatprep.subr.bf16.mxu0 0
      %1958 = vmatpush1.bf16.msra.mxu0 %v1939
      %1959 = vmatprep.subr.bf16.mxu0 0
      %1960 = vmatpush1.bf16.msra.mxu0 %v1938
      %1961 = vmatprep.subr.bf16.mxu0 0
      %1962 = vmatpush1.bf16.msra.mxu0 %v1937
      %1963 = vmatprep.subr.bf16.mxu0 0
      %1964 = vmatpush1.bf16.msra.mxu0 %v1936
      %1965 = vmatprep.subr.bf16.mxu0 0
      %1966 = vmatpush1.bf16.msra.mxu0 %v1935
      %1967 = vmatprep.subr.bf16.mxu0 0
      %1968 = vmatpush2.bf16.msra.mxu0 0
      %1969 = vmatprep.subr.bf16.mxu0 0
      %1970 = vmatpush2.bf16.msra.mxu0 0
      %1971 = vmatprep.subr.bf16.mxu0 0
      %1972 = vmatpush2.bf16.msra.mxu0 0
      %1973 = vmatprep.subr.bf16.mxu0 0
      %1974 = vmatpush2.bf16.msra.mxu0 0
      %1975 = vmatprep.subr.bf16.mxu0 0
      %1976 = vmatpush2.bf16.msra.mxu0 0
      %1977 = vmatprep.subr.bf16.mxu0 0
      %1978 = vmatpush2.bf16.msra.mxu0 0
      %1979 = vmatprep.subr.bf16.mxu0 0
      %1980 = vmatpush2.bf16.msra.mxu0 0
      %1981 = vmatprep.subr.bf16.mxu0 0
      %1982 = vmatpush2.bf16.msra.mxu0 0
      %1983 = vmatprep.mubr.bf16.mxu0 0
      %1984 = vmatmul.mubr.bf16.gmra.mxu0 %v1885
      %v1985 = vpop.f32.mrf.mxu0
      %v1986 = vadd.f32 0.0, %v1985
      %v1987 = vpop.f32.mrf.mxu0
      %v1988 = vpop.f32.mrf.mxu0
      %v1989 = vpop.f32.mrf.mxu0
      %1990 = vdwg.mxu0
      %v1991 = vadd.f32 %v1844, %v1986
      %1992 = vmatprep.subr.bf16.mxu0 0
      %1993 = vmatpush1.bf16.msra.mxu0 0
      %1994 = vmatprep.subr.bf16.mxu0 0
      %1995 = vmatpush1.bf16.msra.mxu0 0
      %1996 = vmatprep.subr.bf16.mxu0 0
      %1997 = vmatpush1.bf16.msra.mxu0 0
      %1998 = vmatprep.subr.bf16.mxu0 0
      %1999 = vmatpush1.bf16.msra.mxu0 0
      %2000 = vmatprep.subr.bf16.mxu0 0
      %2001 = vmatpush1.bf16.msra.mxu0 0
      %2002 = vmatprep.subr.bf16.mxu0 0
      %2003 = vmatpush1.bf16.msra.mxu0 0
      %2004 = vmatprep.subr.bf16.mxu0 0
      %2005 = vmatpush1.bf16.msra.mxu0 0
      %2006 = vmatprep.subr.bf16.mxu0 0
      %2007 = vmatpush1.bf16.msra.mxu0 %v1696
      %2008 = vmatprep.subr.bf16.mxu0 0
      %2009 = vmatpush2.bf16.msra.mxu0 0
      %2010 = vmatprep.subr.bf16.mxu0 0
      %2011 = vmatpush2.bf16.msra.mxu0 0
      %2012 = vmatprep.subr.bf16.mxu0 0
      %2013 = vmatpush2.bf16.msra.mxu0 0
      %2014 = vmatprep.subr.bf16.mxu0 0
      %2015 = vmatpush2.bf16.msra.mxu0 0
      %2016 = vmatprep.subr.bf16.mxu0 0
      %2017 = vmatpush2.bf16.msra.mxu0 0
      %2018 = vmatprep.subr.bf16.mxu0 0
      %2019 = vmatpush2.bf16.msra.mxu0 0
      %2020 = vmatprep.subr.bf16.mxu0 0
      %2021 = vmatpush2.bf16.msra.mxu0 0
      %2022 = vmatprep.subr.bf16.mxu0 0
      %2023 = vmatpush2.bf16.msra.mxu0 0
      %2024 = vmatprep.mubr.bf16.mxu0 0
      %2025 = vmatmul.mubr.bf16.gmra.mxu0 %v614
      %v2026 = vpop.f32.mrf.mxu0
      %v2027 = vadd.f32 0.0, %v2026
      %v2028 = vpop.f32.mrf.mxu0
      %v2029 = vpop.f32.mrf.mxu0
      %v2030 = vpop.f32.mrf.mxu0
      %2031 = vdwg.mxu0
      %v2032 = vpack.c.bf16 %v2027, %v2027
      %s2033 = scalar_lea.vmem %s4, 704
      %v2034 = vld [vmem:[%s2033] sm:$0xf]
      %v2035 = vld [vmem:[%s2033 + $0x4] sm:$0xf]
      %v2036 = vld [vmem:[%s2033 + $0x8] sm:$0xf]
      %v2037 = vld [vmem:[%s2033 + $0xc] sm:$0xf]
      %v2038 = vld [vmem:[%s2033 + $0x10] sm:$0xf]
      %v2039 = vld [vmem:[%s2033 + $0x14] sm:$0xf]
      %v2040 = vld [vmem:[%s2033 + $0x18] sm:$0xf]
      %v2041 = vld [vmem:[%s2033 + $0x1c] sm:$0xf]
      %v2042 = vld [vmem:[%s2033 + $0x20] sm:$0xf]
      %v2043 = vld [vmem:[%s2033 + $0x24] sm:$0xf]
      %v2044 = vld [vmem:[%s2033 + $0x28] sm:$0xf]
      %v2045 = vld [vmem:[%s2033 + $0x2c] sm:$0xf]
      %v2046 = vld [vmem:[%s2033 + $0x30] sm:$0xf]
      %v2047 = vld [vmem:[%s2033 + $0x34] sm:$0xf]
      %v2048 = vld [vmem:[%s2033 + $0x38] sm:$0xf]
      %v2049 = vld [vmem:[%s2033 + $0x3c] sm:$0xf]
      %v2066 = vunpack.c.l.b16 %v2034
      %v2067 = vunpack.c.l.b16 %v2035
      %v2068 = vunpack.c.l.b16 %v2036
      %v2069 = vunpack.c.l.b16 %v2037
      %v2070 = vunpack.c.l.b16 %v2038
      %v2071 = vunpack.c.l.b16 %v2039
      %v2072 = vunpack.c.l.b16 %v2040
      %v2073 = vunpack.c.l.b16 %v2041
      %v2074 = vunpack.c.l.b16 %v2042
      %v2075 = vunpack.c.l.b16 %v2043
      %v2076 = vunpack.c.l.b16 %v2044
      %v2077 = vunpack.c.l.b16 %v2045
      %v2078 = vunpack.c.l.b16 %v2046
      %v2079 = vunpack.c.l.b16 %v2047
      %v2080 = vunpack.c.l.b16 %v2048
      %v2081 = vunpack.c.l.b16 %v2049
      %v2082 = vpack.c.b16 %v2067, %v2066
      %v2083 = vpack.c.b16 %v2069, %v2068
      %v2084 = vpack.c.b16 %v2071, %v2070
      %v2085 = vpack.c.b16 %v2073, %v2072
      %v2086 = vpack.c.b16 %v2075, %v2074
      %v2087 = vpack.c.b16 %v2077, %v2076
      %v2088 = vpack.c.b16 %v2079, %v2078
      %v2089 = vpack.c.b16 %v2081, %v2080
      %2098 = vmatprep.subr.bf16.mxu0 0
      %2099 = vmatpush1.bf16.msra.mxu0 %v2089
      %2100 = vmatprep.subr.bf16.mxu0 0
      %2101 = vmatpush1.bf16.msra.mxu0 %v2088
      %2102 = vmatprep.subr.bf16.mxu0 0
      %2103 = vmatpush1.bf16.msra.mxu0 %v2087
      %2104 = vmatprep.subr.bf16.mxu0 0
      %2105 = vmatpush1.bf16.msra.mxu0 %v2086
      %2106 = vmatprep.subr.bf16.mxu0 0
      %2107 = vmatpush1.bf16.msra.mxu0 %v2085
      %2108 = vmatprep.subr.bf16.mxu0 0
      %2109 = vmatpush1.bf16.msra.mxu0 %v2084
      %2110 = vmatprep.subr.bf16.mxu0 0
      %2111 = vmatpush1.bf16.msra.mxu0 %v2083
      %2112 = vmatprep.subr.bf16.mxu0 0
      %2113 = vmatpush1.bf16.msra.mxu0 %v2082
      %2114 = vmatprep.subr.bf16.mxu0 0
      %2115 = vmatpush2.bf16.msra.mxu0 0
      %2116 = vmatprep.subr.bf16.mxu0 0
      %2117 = vmatpush2.bf16.msra.mxu0 0
      %2118 = vmatprep.subr.bf16.mxu0 0
      %2119 = vmatpush2.bf16.msra.mxu0 0
      %2120 = vmatprep.subr.bf16.mxu0 0
      %2121 = vmatpush2.bf16.msra.mxu0 0
      %2122 = vmatprep.subr.bf16.mxu0 0
      %2123 = vmatpush2.bf16.msra.mxu0 0
      %2124 = vmatprep.subr.bf16.mxu0 0
      %2125 = vmatpush2.bf16.msra.mxu0 0
      %2126 = vmatprep.subr.bf16.mxu0 0
      %2127 = vmatpush2.bf16.msra.mxu0 0
      %2128 = vmatprep.subr.bf16.mxu0 0
      %2129 = vmatpush2.bf16.msra.mxu0 0
      %2130 = vmatprep.mubr.bf16.mxu0 0
      %2131 = vmatmul.mubr.bf16.gmra.mxu0 %v2032
      %v2132 = vpop.f32.mrf.mxu0
      %v2133 = vadd.f32 0.0, %v2132
      %v2134 = vpop.f32.mrf.mxu0
      %v2135 = vpop.f32.mrf.mxu0
      %v2136 = vpop.f32.mrf.mxu0
      %2137 = vdwg.mxu0
      %v2138 = vadd.f32 %v1991, %v2133
      %2139 = vmatprep.subr.bf16.mxu0 0
      %2140 = vmatpush1.bf16.msra.mxu0 0
      %2141 = vmatprep.subr.bf16.mxu0 0
      %2142 = vmatpush1.bf16.msra.mxu0 0
      %2143 = vmatprep.subr.bf16.mxu0 0
      %2144 = vmatpush1.bf16.msra.mxu0 0
      %2145 = vmatprep.subr.bf16.mxu0 0
      %2146 = vmatpush1.bf16.msra.mxu0 0
      %2147 = vmatprep.subr.bf16.mxu0 0
      %2148 = vmatpush1.bf16.msra.mxu0 0
      %2149 = vmatprep.subr.bf16.mxu0 0
      %2150 = vmatpush1.bf16.msra.mxu0 0
      %2151 = vmatprep.subr.bf16.mxu0 0
      %2152 = vmatpush1.bf16.msra.mxu0 0
      %2153 = vmatprep.subr.bf16.mxu0 0
      %2154 = vmatpush1.bf16.msra.mxu0 %v1696
      %2155 = vmatprep.subr.bf16.mxu0 0
      %2156 = vmatpush2.bf16.msra.mxu0 0
      %2157 = vmatprep.subr.bf16.mxu0 0
      %2158 = vmatpush2.bf16.msra.mxu0 0
      %2159 = vmatprep.subr.bf16.mxu0 0
      %2160 = vmatpush2.bf16.msra.mxu0 0
      %2161 = vmatprep.subr.bf16.mxu0 0
      %2162 = vmatpush2.bf16.msra.mxu0 0
      %2163 = vmatprep.subr.bf16.mxu0 0
      %2164 = vmatpush2.bf16.msra.mxu0 0
      %2165 = vmatprep.subr.bf16.mxu0 0
      %2166 = vmatpush2.bf16.msra.mxu0 0
      %2167 = vmatprep.subr.bf16.mxu0 0
      %2168 = vmatpush2.bf16.msra.mxu0 0
      %2169 = vmatprep.subr.bf16.mxu0 0
      %2170 = vmatpush2.bf16.msra.mxu0 0
      %2171 = vmatprep.mubr.bf16.mxu0 0
      %2172 = vmatmul.mubr.bf16.gmra.mxu0 %v766
      %v2173 = vpop.f32.mrf.mxu0
      %v2174 = vadd.f32 0.0, %v2173
      %v2175 = vpop.f32.mrf.mxu0
      %v2176 = vpop.f32.mrf.mxu0
      %v2177 = vpop.f32.mrf.mxu0
      %2178 = vdwg.mxu0
      %v2179 = vpack.c.bf16 %v2174, %v2174
      %s2180 = scalar_lea.vmem %s4, 768
      %v2181 = vld [vmem:[%s2180] sm:$0xf]
      %v2182 = vld [vmem:[%s2180 + $0x4] sm:$0xf]
      %v2183 = vld [vmem:[%s2180 + $0x8] sm:$0xf]
      %v2184 = vld [vmem:[%s2180 + $0xc] sm:$0xf]
      %v2185 = vld [vmem:[%s2180 + $0x10] sm:$0xf]
      %v2186 = vld [vmem:[%s2180 + $0x14] sm:$0xf]
      %v2187 = vld [vmem:[%s2180 + $0x18] sm:$0xf]
      %v2188 = vld [vmem:[%s2180 + $0x1c] sm:$0xf]
      %v2189 = vld [vmem:[%s2180 + $0x20] sm:$0xf]
      %v2190 = vld [vmem:[%s2180 + $0x24] sm:$0xf]
      %v2191 = vld [vmem:[%s2180 + $0x28] sm:$0xf]
      %v2192 = vld [vmem:[%s2180 + $0x2c] sm:$0xf]
      %v2193 = vld [vmem:[%s2180 + $0x30] sm:$0xf]
      %v2194 = vld [vmem:[%s2180 + $0x34] sm:$0xf]
      %v2195 = vld [vmem:[%s2180 + $0x38] sm:$0xf]
      %v2196 = vld [vmem:[%s2180 + $0x3c] sm:$0xf]
      %v2213 = vunpack.c.l.b16 %v2181
      %v2214 = vunpack.c.l.b16 %v2182
      %v2215 = vunpack.c.l.b16 %v2183
      %v2216 = vunpack.c.l.b16 %v2184
      %v2217 = vunpack.c.l.b16 %v2185
      %v2218 = vunpack.c.l.b16 %v2186
      %v2219 = vunpack.c.l.b16 %v2187
      %v2220 = vunpack.c.l.b16 %v2188
      %v2221 = vunpack.c.l.b16 %v2189
      %v2222 = vunpack.c.l.b16 %v2190
      %v2223 = vunpack.c.l.b16 %v2191
      %v2224 = vunpack.c.l.b16 %v2192
      %v2225 = vunpack.c.l.b16 %v2193
      %v2226 = vunpack.c.l.b16 %v2194
      %v2227 = vunpack.c.l.b16 %v2195
      %v2228 = vunpack.c.l.b16 %v2196
      %v2229 = vpack.c.b16 %v2214, %v2213
      %v2230 = vpack.c.b16 %v2216, %v2215
      %v2231 = vpack.c.b16 %v2218, %v2217
      %v2232 = vpack.c.b16 %v2220, %v2219
      %v2233 = vpack.c.b16 %v2222, %v2221
      %v2234 = vpack.c.b16 %v2224, %v2223
      %v2235 = vpack.c.b16 %v2226, %v2225
      %v2236 = vpack.c.b16 %v2228, %v2227
      %2245 = vmatprep.subr.bf16.mxu0 0
      %2246 = vmatpush1.bf16.msra.mxu0 %v2236
      %2247 = vmatprep.subr.bf16.mxu0 0
      %2248 = vmatpush1.bf16.msra.mxu0 %v2235
      %2249 = vmatprep.subr.bf16.mxu0 0
      %2250 = vmatpush1.bf16.msra.mxu0 %v2234
      %2251 = vmatprep.subr.bf16.mxu0 0
      %2252 = vmatpush1.bf16.msra.mxu0 %v2233
      %2253 = vmatprep.subr.bf16.mxu0 0
      %2254 = vmatpush1.bf16.msra.mxu0 %v2232
      %2255 = vmatprep.subr.bf16.mxu0 0
      %2256 = vmatpush1.bf16.msra.mxu0 %v2231
      %2257 = vmatprep.subr.bf16.mxu0 0
      %2258 = vmatpush1.bf16.msra.mxu0 %v2230
      %2259 = vmatprep.subr.bf16.mxu0 0
      %2260 = vmatpush1.bf16.msra.mxu0 %v2229
      %2261 = vmatprep.subr.bf16.mxu0 0
      %2262 = vmatpush2.bf16.msra.mxu0 0
      %2263 = vmatprep.subr.bf16.mxu0 0
      %2264 = vmatpush2.bf16.msra.mxu0 0
      %2265 = vmatprep.subr.bf16.mxu0 0
      %2266 = vmatpush2.bf16.msra.mxu0 0
      %2267 = vmatprep.subr.bf16.mxu0 0
      %2268 = vmatpush2.bf16.msra.mxu0 0
      %2269 = vmatprep.subr.bf16.mxu0 0
      %2270 = vmatpush2.bf16.msra.mxu0 0
      %2271 = vmatprep.subr.bf16.mxu0 0
      %2272 = vmatpush2.bf16.msra.mxu0 0
      %2273 = vmatprep.subr.bf16.mxu0 0
      %2274 = vmatpush2.bf16.msra.mxu0 0
      %2275 = vmatprep.subr.bf16.mxu0 0
      %2276 = vmatpush2.bf16.msra.mxu0 0
      %2277 = vmatprep.mubr.bf16.mxu0 0
      %2278 = vmatmul.mubr.bf16.gmra.mxu0 %v2179
      %v2279 = vpop.f32.mrf.mxu0
      %v2280 = vadd.f32 0.0, %v2279
      %v2281 = vpop.f32.mrf.mxu0
      %v2282 = vpop.f32.mrf.mxu0
      %v2283 = vpop.f32.mrf.mxu0
      %2284 = vdwg.mxu0
      %v2285 = vadd.f32 %v2138, %v2280
      %2286 = vmatprep.subr.bf16.mxu0 0
      %2287 = vmatpush1.bf16.msra.mxu0 0
      %2288 = vmatprep.subr.bf16.mxu0 0
      %2289 = vmatpush1.bf16.msra.mxu0 0
      %2290 = vmatprep.subr.bf16.mxu0 0
      %2291 = vmatpush1.bf16.msra.mxu0 0
      %2292 = vmatprep.subr.bf16.mxu0 0
      %2293 = vmatpush1.bf16.msra.mxu0 0
      %2294 = vmatprep.subr.bf16.mxu0 0
      %2295 = vmatpush1.bf16.msra.mxu0 0
      %2296 = vmatprep.subr.bf16.mxu0 0
      %2297 = vmatpush1.bf16.msra.mxu0 0
      %2298 = vmatprep.subr.bf16.mxu0 0
      %2299 = vmatpush1.bf16.msra.mxu0 0
      %2300 = vmatprep.subr.bf16.mxu0 0
      %2301 = vmatpush1.bf16.msra.mxu0 %v1696
      %2302 = vmatprep.subr.bf16.mxu0 0
      %2303 = vmatpush2.bf16.msra.mxu0 0
      %2304 = vmatprep.subr.bf16.mxu0 0
      %2305 = vmatpush2.bf16.msra.mxu0 0
      %2306 = vmatprep.subr.bf16.mxu0 0
      %2307 = vmatpush2.bf16.msra.mxu0 0
      %2308 = vmatprep.subr.bf16.mxu0 0
      %2309 = vmatpush2.bf16.msra.mxu0 0
      %2310 = vmatprep.subr.bf16.mxu0 0
      %2311 = vmatpush2.bf16.msra.mxu0 0
      %2312 = vmatprep.subr.bf16.mxu0 0
      %2313 = vmatpush2.bf16.msra.mxu0 0
      %2314 = vmatprep.subr.bf16.mxu0 0
      %2315 = vmatpush2.bf16.msra.mxu0 0
      %2316 = vmatprep.subr.bf16.mxu0 0
      %2317 = vmatpush2.bf16.msra.mxu0 0
      %2318 = vmatprep.mubr.bf16.mxu0 0
      %2319 = vmatmul.mubr.bf16.gmra.mxu0 %v918
      %v2320 = vpop.f32.mrf.mxu0
      %v2321 = vadd.f32 0.0, %v2320
      %v2322 = vpop.f32.mrf.mxu0
      %v2323 = vpop.f32.mrf.mxu0
      %v2324 = vpop.f32.mrf.mxu0
      %2325 = vdwg.mxu0
      %v2326 = vpack.c.bf16 %v2321, %v2321
      %s2327 = scalar_lea.vmem %s4, 832
      %v2328 = vld [vmem:[%s2327] sm:$0xf]
      %v2329 = vld [vmem:[%s2327 + $0x4] sm:$0xf]
      %v2330 = vld [vmem:[%s2327 + $0x8] sm:$0xf]
      %v2331 = vld [vmem:[%s2327 + $0xc] sm:$0xf]
      %v2332 = vld [vmem:[%s2327 + $0x10] sm:$0xf]
      %v2333 = vld [vmem:[%s2327 + $0x14] sm:$0xf]
      %v2334 = vld [vmem:[%s2327 + $0x18] sm:$0xf]
      %v2335 = vld [vmem:[%s2327 + $0x1c] sm:$0xf]
      %v2336 = vld [vmem:[%s2327 + $0x20] sm:$0xf]
      %v2337 = vld [vmem:[%s2327 + $0x24] sm:$0xf]
      %v2338 = vld [vmem:[%s2327 + $0x28] sm:$0xf]
      %v2339 = vld [vmem:[%s2327 + $0x2c] sm:$0xf]
      %v2340 = vld [vmem:[%s2327 + $0x30] sm:$0xf]
      %v2341 = vld [vmem:[%s2327 + $0x34] sm:$0xf]
      %v2342 = vld [vmem:[%s2327 + $0x38] sm:$0xf]
      %v2343 = vld [vmem:[%s2327 + $0x3c] sm:$0xf]
      %v2360 = vunpack.c.l.b16 %v2328
      %v2361 = vunpack.c.l.b16 %v2329
      %v2362 = vunpack.c.l.b16 %v2330
      %v2363 = vunpack.c.l.b16 %v2331
      %v2364 = vunpack.c.l.b16 %v2332
      %v2365 = vunpack.c.l.b16 %v2333
      %v2366 = vunpack.c.l.b16 %v2334
      %v2367 = vunpack.c.l.b16 %v2335
      %v2368 = vunpack.c.l.b16 %v2336
      %v2369 = vunpack.c.l.b16 %v2337
      %v2370 = vunpack.c.l.b16 %v2338
      %v2371 = vunpack.c.l.b16 %v2339
      %v2372 = vunpack.c.l.b16 %v2340
      %v2373 = vunpack.c.l.b16 %v2341
      %v2374 = vunpack.c.l.b16 %v2342
      %v2375 = vunpack.c.l.b16 %v2343
      %v2376 = vpack.c.b16 %v2361, %v2360
      %v2377 = vpack.c.b16 %v2363, %v2362
      %v2378 = vpack.c.b16 %v2365, %v2364
      %v2379 = vpack.c.b16 %v2367, %v2366
      %v2380 = vpack.c.b16 %v2369, %v2368
      %v2381 = vpack.c.b16 %v2371, %v2370
      %v2382 = vpack.c.b16 %v2373, %v2372
      %v2383 = vpack.c.b16 %v2375, %v2374
      %2392 = vmatprep.subr.bf16.mxu0 0
      %2393 = vmatpush1.bf16.msra.mxu0 %v2383
      %2394 = vmatprep.subr.bf16.mxu0 0
      %2395 = vmatpush1.bf16.msra.mxu0 %v2382
      %2396 = vmatprep.subr.bf16.mxu0 0
      %2397 = vmatpush1.bf16.msra.mxu0 %v2381
      %2398 = vmatprep.subr.bf16.mxu0 0
      %2399 = vmatpush1.bf16.msra.mxu0 %v2380
      %2400 = vmatprep.subr.bf16.mxu0 0
      %2401 = vmatpush1.bf16.msra.mxu0 %v2379
      %2402 = vmatprep.subr.bf16.mxu0 0
      %2403 = vmatpush1.bf16.msra.mxu0 %v2378
      %2404 = vmatprep.subr.bf16.mxu0 0
      %2405 = vmatpush1.bf16.msra.mxu0 %v2377
      %2406 = vmatprep.subr.bf16.mxu0 0
      %2407 = vmatpush1.bf16.msra.mxu0 %v2376
      %2408 = vmatprep.subr.bf16.mxu0 0
      %2409 = vmatpush2.bf16.msra.mxu0 0
      %2410 = vmatprep.subr.bf16.mxu0 0
      %2411 = vmatpush2.bf16.msra.mxu0 0
      %2412 = vmatprep.subr.bf16.mxu0 0
      %2413 = vmatpush2.bf16.msra.mxu0 0
      %2414 = vmatprep.subr.bf16.mxu0 0
      %2415 = vmatpush2.bf16.msra.mxu0 0
      %2416 = vmatprep.subr.bf16.mxu0 0
      %2417 = vmatpush2.bf16.msra.mxu0 0
      %2418 = vmatprep.subr.bf16.mxu0 0
      %2419 = vmatpush2.bf16.msra.mxu0 0
      %2420 = vmatprep.subr.bf16.mxu0 0
      %2421 = vmatpush2.bf16.msra.mxu0 0
      %2422 = vmatprep.subr.bf16.mxu0 0
      %2423 = vmatpush2.bf16.msra.mxu0 0
      %2424 = vmatprep.mubr.bf16.mxu0 0
      %2425 = vmatmul.mubr.bf16.gmra.mxu0 %v2326
      %v2426 = vpop.f32.mrf.mxu0
      %v2427 = vadd.f32 0.0, %v2426
      %v2428 = vpop.f32.mrf.mxu0
      %v2429 = vpop.f32.mrf.mxu0
      %v2430 = vpop.f32.mrf.mxu0
      %2431 = vdwg.mxu0
      %v2432 = vadd.f32 %v2285, %v2427
      %2433 = vmatprep.subr.bf16.mxu0 0
      %2434 = vmatpush1.bf16.msra.mxu0 0
      %2435 = vmatprep.subr.bf16.mxu0 0
      %2436 = vmatpush1.bf16.msra.mxu0 0
      %2437 = vmatprep.subr.bf16.mxu0 0
      %2438 = vmatpush1.bf16.msra.mxu0 0
      %2439 = vmatprep.subr.bf16.mxu0 0
      %2440 = vmatpush1.bf16.msra.mxu0 0
      %2441 = vmatprep.subr.bf16.mxu0 0
      %2442 = vmatpush1.bf16.msra.mxu0 0
      %2443 = vmatprep.subr.bf16.mxu0 0
      %2444 = vmatpush1.bf16.msra.mxu0 0
      %2445 = vmatprep.subr.bf16.mxu0 0
      %2446 = vmatpush1.bf16.msra.mxu0 0
      %2447 = vmatprep.subr.bf16.mxu0 0
      %2448 = vmatpush1.bf16.msra.mxu0 %v1696
      %2449 = vmatprep.subr.bf16.mxu0 0
      %2450 = vmatpush2.bf16.msra.mxu0 0
      %2451 = vmatprep.subr.bf16.mxu0 0
      %2452 = vmatpush2.bf16.msra.mxu0 0
      %2453 = vmatprep.subr.bf16.mxu0 0
      %2454 = vmatpush2.bf16.msra.mxu0 0
      %2455 = vmatprep.subr.bf16.mxu0 0
      %2456 = vmatpush2.bf16.msra.mxu0 0
      %2457 = vmatprep.subr.bf16.mxu0 0
      %2458 = vmatpush2.bf16.msra.mxu0 0
      %2459 = vmatprep.subr.bf16.mxu0 0
      %2460 = vmatpush2.bf16.msra.mxu0 0
      %2461 = vmatprep.subr.bf16.mxu0 0
      %2462 = vmatpush2.bf16.msra.mxu0 0
      %2463 = vmatprep.subr.bf16.mxu0 0
      %2464 = vmatpush2.bf16.msra.mxu0 0
      %2465 = vmatprep.mubr.bf16.mxu0 0
      %2466 = vmatmul.mubr.bf16.gmra.mxu0 %v1070
      %v2467 = vpop.f32.mrf.mxu0
      %v2468 = vadd.f32 0.0, %v2467
      %v2469 = vpop.f32.mrf.mxu0
      %v2470 = vpop.f32.mrf.mxu0
      %v2471 = vpop.f32.mrf.mxu0
      %2472 = vdwg.mxu0
      %v2473 = vpack.c.bf16 %v2468, %v2468
      %s2474 = scalar_lea.vmem %s4, 896
      %v2475 = vld [vmem:[%s2474] sm:$0xf]
      %v2476 = vld [vmem:[%s2474 + $0x4] sm:$0xf]
      %v2477 = vld [vmem:[%s2474 + $0x8] sm:$0xf]
      %v2478 = vld [vmem:[%s2474 + $0xc] sm:$0xf]
      %v2479 = vld [vmem:[%s2474 + $0x10] sm:$0xf]
      %v2480 = vld [vmem:[%s2474 + $0x14] sm:$0xf]
      %v2481 = vld [vmem:[%s2474 + $0x18] sm:$0xf]
      %v2482 = vld [vmem:[%s2474 + $0x1c] sm:$0xf]
      %v2483 = vld [vmem:[%s2474 + $0x20] sm:$0xf]
      %v2484 = vld [vmem:[%s2474 + $0x24] sm:$0xf]
      %v2485 = vld [vmem:[%s2474 + $0x28] sm:$0xf]
      %v2486 = vld [vmem:[%s2474 + $0x2c] sm:$0xf]
      %v2487 = vld [vmem:[%s2474 + $0x30] sm:$0xf]
      %v2488 = vld [vmem:[%s2474 + $0x34] sm:$0xf]
      %v2489 = vld [vmem:[%s2474 + $0x38] sm:$0xf]
      %v2490 = vld [vmem:[%s2474 + $0x3c] sm:$0xf]
      %v2507 = vunpack.c.l.b16 %v2475
      %v2508 = vunpack.c.l.b16 %v2476
      %v2509 = vunpack.c.l.b16 %v2477
      %v2510 = vunpack.c.l.b16 %v2478
      %v2511 = vunpack.c.l.b16 %v2479
      %v2512 = vunpack.c.l.b16 %v2480
      %v2513 = vunpack.c.l.b16 %v2481
      %v2514 = vunpack.c.l.b16 %v2482
      %v2515 = vunpack.c.l.b16 %v2483
      %v2516 = vunpack.c.l.b16 %v2484
      %v2517 = vunpack.c.l.b16 %v2485
      %v2518 = vunpack.c.l.b16 %v2486
      %v2519 = vunpack.c.l.b16 %v2487
      %v2520 = vunpack.c.l.b16 %v2488
      %v2521 = vunpack.c.l.b16 %v2489
      %v2522 = vunpack.c.l.b16 %v2490
      %v2523 = vpack.c.b16 %v2508, %v2507
      %v2524 = vpack.c.b16 %v2510, %v2509
      %v2525 = vpack.c.b16 %v2512, %v2511
      %v2526 = vpack.c.b16 %v2514, %v2513
      %v2527 = vpack.c.b16 %v2516, %v2515
      %v2528 = vpack.c.b16 %v2518, %v2517
      %v2529 = vpack.c.b16 %v2520, %v2519
      %v2530 = vpack.c.b16 %v2522, %v2521
      %2539 = vmatprep.subr.bf16.mxu0 0
      %2540 = vmatpush1.bf16.msra.mxu0 %v2530
      %2541 = vmatprep.subr.bf16.mxu0 0
      %2542 = vmatpush1.bf16.msra.mxu0 %v2529
      %2543 = vmatprep.subr.bf16.mxu0 0
      %2544 = vmatpush1.bf16.msra.mxu0 %v2528
      %2545 = vmatprep.subr.bf16.mxu0 0
      %2546 = vmatpush1.bf16.msra.mxu0 %v2527
      %2547 = vmatprep.subr.bf16.mxu0 0
      %2548 = vmatpush1.bf16.msra.mxu0 %v2526
      %2549 = vmatprep.subr.bf16.mxu0 0
      %2550 = vmatpush1.bf16.msra.mxu0 %v2525
      %2551 = vmatprep.subr.bf16.mxu0 0
      %2552 = vmatpush1.bf16.msra.mxu0 %v2524
      %2553 = vmatprep.subr.bf16.mxu0 0
      %2554 = vmatpush1.bf16.msra.mxu0 %v2523
      %2555 = vmatprep.subr.bf16.mxu0 0
      %2556 = vmatpush2.bf16.msra.mxu0 0
      %2557 = vmatprep.subr.bf16.mxu0 0
      %2558 = vmatpush2.bf16.msra.mxu0 0
      %2559 = vmatprep.subr.bf16.mxu0 0
      %2560 = vmatpush2.bf16.msra.mxu0 0
      %2561 = vmatprep.subr.bf16.mxu0 0
      %2562 = vmatpush2.bf16.msra.mxu0 0
      %2563 = vmatprep.subr.bf16.mxu0 0
      %2564 = vmatpush2.bf16.msra.mxu0 0
      %2565 = vmatprep.subr.bf16.mxu0 0
      %2566 = vmatpush2.bf16.msra.mxu0 0
      %2567 = vmatprep.subr.bf16.mxu0 0
      %2568 = vmatpush2.bf16.msra.mxu0 0
      %2569 = vmatprep.subr.bf16.mxu0 0
      %2570 = vmatpush2.bf16.msra.mxu0 0
      %2571 = vmatprep.mubr.bf16.mxu0 0
      %2572 = vmatmul.mubr.bf16.gmra.mxu0 %v2473
      %v2573 = vpop.f32.mrf.mxu0
      %v2574 = vadd.f32 0.0, %v2573
      %v2575 = vpop.f32.mrf.mxu0
      %v2576 = vpop.f32.mrf.mxu0
      %v2577 = vpop.f32.mrf.mxu0
      %2578 = vdwg.mxu0
      %v2579 = vadd.f32 %v2432, %v2574
      %2580 = vmatprep.subr.bf16.mxu0 0
      %2581 = vmatpush1.bf16.msra.mxu0 0
      %2582 = vmatprep.subr.bf16.mxu0 0
      %2583 = vmatpush1.bf16.msra.mxu0 0
      %2584 = vmatprep.subr.bf16.mxu0 0
      %2585 = vmatpush1.bf16.msra.mxu0 0
      %2586 = vmatprep.subr.bf16.mxu0 0
      %2587 = vmatpush1.bf16.msra.mxu0 0
      %2588 = vmatprep.subr.bf16.mxu0 0
      %2589 = vmatpush1.bf16.msra.mxu0 0
      %2590 = vmatprep.subr.bf16.mxu0 0
      %2591 = vmatpush1.bf16.msra.mxu0 0
      %2592 = vmatprep.subr.bf16.mxu0 0
      %2593 = vmatpush1.bf16.msra.mxu0 0
      %2594 = vmatprep.subr.bf16.mxu0 0
      %2595 = vmatpush1.bf16.msra.mxu0 %v1696
      %2596 = vmatprep.subr.bf16.mxu0 0
      %2597 = vmatpush2.bf16.msra.mxu0 0
      %2598 = vmatprep.subr.bf16.mxu0 0
      %2599 = vmatpush2.bf16.msra.mxu0 0
      %2600 = vmatprep.subr.bf16.mxu0 0
      %2601 = vmatpush2.bf16.msra.mxu0 0
      %2602 = vmatprep.subr.bf16.mxu0 0
      %2603 = vmatpush2.bf16.msra.mxu0 0
      %2604 = vmatprep.subr.bf16.mxu0 0
      %2605 = vmatpush2.bf16.msra.mxu0 0
      %2606 = vmatprep.subr.bf16.mxu0 0
      %2607 = vmatpush2.bf16.msra.mxu0 0
      %2608 = vmatprep.subr.bf16.mxu0 0
      %2609 = vmatpush2.bf16.msra.mxu0 0
      %2610 = vmatprep.subr.bf16.mxu0 0
      %2611 = vmatpush2.bf16.msra.mxu0 0
      %2612 = vmatprep.mubr.bf16.mxu0 0
      %2613 = vmatmul.mubr.bf16.gmra.mxu0 %v1222
      %v2614 = vpop.f32.mrf.mxu0
      %v2615 = vadd.f32 0.0, %v2614
      %v2616 = vpop.f32.mrf.mxu0
      %v2617 = vpop.f32.mrf.mxu0
      %v2618 = vpop.f32.mrf.mxu0
      %2619 = vdwg.mxu0
      %v2620 = vpack.c.bf16 %v2615, %v2615
      %s2621 = scalar_lea.vmem %s4, 960
      %v2622 = vld [vmem:[%s2621] sm:$0xf]
      %v2623 = vld [vmem:[%s2621 + $0x4] sm:$0xf]
      %v2624 = vld [vmem:[%s2621 + $0x8] sm:$0xf]
      %v2625 = vld [vmem:[%s2621 + $0xc] sm:$0xf]
      %v2626 = vld [vmem:[%s2621 + $0x10] sm:$0xf]
      %v2627 = vld [vmem:[%s2621 + $0x14] sm:$0xf]
      %v2628 = vld [vmem:[%s2621 + $0x18] sm:$0xf]
      %v2629 = vld [vmem:[%s2621 + $0x1c] sm:$0xf]
      %v2630 = vld [vmem:[%s2621 + $0x20] sm:$0xf]
      %v2631 = vld [vmem:[%s2621 + $0x24] sm:$0xf]
      %v2632 = vld [vmem:[%s2621 + $0x28] sm:$0xf]
      %v2633 = vld [vmem:[%s2621 + $0x2c] sm:$0xf]
      %v2634 = vld [vmem:[%s2621 + $0x30] sm:$0xf]
      %v2635 = vld [vmem:[%s2621 + $0x34] sm:$0xf]
      %v2636 = vld [vmem:[%s2621 + $0x38] sm:$0xf]
      %v2637 = vld [vmem:[%s2621 + $0x3c] sm:$0xf]
      %v2654 = vunpack.c.l.b16 %v2622
      %v2655 = vunpack.c.l.b16 %v2623
      %v2656 = vunpack.c.l.b16 %v2624
      %v2657 = vunpack.c.l.b16 %v2625
      %v2658 = vunpack.c.l.b16 %v2626
      %v2659 = vunpack.c.l.b16 %v2627
      %v2660 = vunpack.c.l.b16 %v2628
      %v2661 = vunpack.c.l.b16 %v2629
      %v2662 = vunpack.c.l.b16 %v2630
      %v2663 = vunpack.c.l.b16 %v2631
      %v2664 = vunpack.c.l.b16 %v2632
      %v2665 = vunpack.c.l.b16 %v2633
      %v2666 = vunpack.c.l.b16 %v2634
      %v2667 = vunpack.c.l.b16 %v2635
      %v2668 = vunpack.c.l.b16 %v2636
      %v2669 = vunpack.c.l.b16 %v2637
      %v2670 = vpack.c.b16 %v2655, %v2654
      %v2671 = vpack.c.b16 %v2657, %v2656
      %v2672 = vpack.c.b16 %v2659, %v2658
      %v2673 = vpack.c.b16 %v2661, %v2660
      %v2674 = vpack.c.b16 %v2663, %v2662
      %v2675 = vpack.c.b16 %v2665, %v2664
      %v2676 = vpack.c.b16 %v2667, %v2666
      %v2677 = vpack.c.b16 %v2669, %v2668
      %2686 = vmatprep.subr.bf16.mxu0 0
      %2687 = vmatpush1.bf16.msra.mxu0 %v2677
      %2688 = vmatprep.subr.bf16.mxu0 0
      %2689 = vmatpush1.bf16.msra.mxu0 %v2676
      %2690 = vmatprep.subr.bf16.mxu0 0
      %2691 = vmatpush1.bf16.msra.mxu0 %v2675
      %2692 = vmatprep.subr.bf16.mxu0 0
      %2693 = vmatpush1.bf16.msra.mxu0 %v2674
      %2694 = vmatprep.subr.bf16.mxu0 0
      %2695 = vmatpush1.bf16.msra.mxu0 %v2673
      %2696 = vmatprep.subr.bf16.mxu0 0
      %2697 = vmatpush1.bf16.msra.mxu0 %v2672
      %2698 = vmatprep.subr.bf16.mxu0 0
      %2699 = vmatpush1.bf16.msra.mxu0 %v2671
      %2700 = vmatprep.subr.bf16.mxu0 0
      %2701 = vmatpush1.bf16.msra.mxu0 %v2670
      %2702 = vmatprep.subr.bf16.mxu0 0
      %2703 = vmatpush2.bf16.msra.mxu0 0
      %2704 = vmatprep.subr.bf16.mxu0 0
      %2705 = vmatpush2.bf16.msra.mxu0 0
      %2706 = vmatprep.subr.bf16.mxu0 0
      %2707 = vmatpush2.bf16.msra.mxu0 0
      %2708 = vmatprep.subr.bf16.mxu0 0
      %2709 = vmatpush2.bf16.msra.mxu0 0
      %2710 = vmatprep.subr.bf16.mxu0 0
      %2711 = vmatpush2.bf16.msra.mxu0 0
      %2712 = vmatprep.subr.bf16.mxu0 0
      %2713 = vmatpush2.bf16.msra.mxu0 0
      %2714 = vmatprep.subr.bf16.mxu0 0
      %2715 = vmatpush2.bf16.msra.mxu0 0
      %2716 = vmatprep.subr.bf16.mxu0 0
      %2717 = vmatpush2.bf16.msra.mxu0 0
      %2718 = vmatprep.mubr.bf16.mxu0 0
      %2719 = vmatmul.mubr.bf16.gmra.mxu0 %v2620
      %v2720 = vpop.f32.mrf.mxu0
      %v2721 = vadd.f32 0.0, %v2720
      %v2722 = vpop.f32.mrf.mxu0
      %v2723 = vpop.f32.mrf.mxu0
      %v2724 = vpop.f32.mrf.mxu0
      %2725 = vdwg.mxu0
      %v2726 = vadd.f32 %v2579, %v2721
      %2727 = vmatprep.subr.bf16.mxu0 0
      %2728 = vmatpush1.bf16.msra.mxu0 0
      %2729 = vmatprep.subr.bf16.mxu0 0
      %2730 = vmatpush1.bf16.msra.mxu0 0
      %2731 = vmatprep.subr.bf16.mxu0 0
      %2732 = vmatpush1.bf16.msra.mxu0 0
      %2733 = vmatprep.subr.bf16.mxu0 0
      %2734 = vmatpush1.bf16.msra.mxu0 0
      %2735 = vmatprep.subr.bf16.mxu0 0
      %2736 = vmatpush1.bf16.msra.mxu0 0
      %2737 = vmatprep.subr.bf16.mxu0 0
      %2738 = vmatpush1.bf16.msra.mxu0 0
      %2739 = vmatprep.subr.bf16.mxu0 0
      %2740 = vmatpush1.bf16.msra.mxu0 0
      %2741 = vmatprep.subr.bf16.mxu0 0
      %2742 = vmatpush1.bf16.msra.mxu0 %v1696
      %2743 = vmatprep.subr.bf16.mxu0 0
      %2744 = vmatpush2.bf16.msra.mxu0 0
      %2745 = vmatprep.subr.bf16.mxu0 0
      %2746 = vmatpush2.bf16.msra.mxu0 0
      %2747 = vmatprep.subr.bf16.mxu0 0
      %2748 = vmatpush2.bf16.msra.mxu0 0
      %2749 = vmatprep.subr.bf16.mxu0 0
      %2750 = vmatpush2.bf16.msra.mxu0 0
      %2751 = vmatprep.subr.bf16.mxu0 0
      %2752 = vmatpush2.bf16.msra.mxu0 0
      %2753 = vmatprep.subr.bf16.mxu0 0
      %2754 = vmatpush2.bf16.msra.mxu0 0
      %2755 = vmatprep.subr.bf16.mxu0 0
      %2756 = vmatpush2.bf16.msra.mxu0 0
      %2757 = vmatprep.subr.bf16.mxu0 0
      %2758 = vmatpush2.bf16.msra.mxu0 0
      %2759 = vmatprep.mubr.bf16.mxu0 0
      %2760 = vmatmul.mubr.bf16.gmra.mxu0 %v1374
      %v2761 = vpop.f32.mrf.mxu0
      %v2762 = vadd.f32 0.0, %v2761
      %v2763 = vpop.f32.mrf.mxu0
      %v2764 = vpop.f32.mrf.mxu0
      %v2765 = vpop.f32.mrf.mxu0
      %2766 = vdwg.mxu0
      %v2767 = vpack.c.bf16 %v2762, %v2762
      %s2768 = scalar_lea.vmem %s4, 1024
      %v2769 = vld [vmem:[%s2768] sm:$0xf]
      %v2770 = vld [vmem:[%s2768 + $0x4] sm:$0xf]
      %v2771 = vld [vmem:[%s2768 + $0x8] sm:$0xf]
      %v2772 = vld [vmem:[%s2768 + $0xc] sm:$0xf]
      %v2773 = vld [vmem:[%s2768 + $0x10] sm:$0xf]
      %v2774 = vld [vmem:[%s2768 + $0x14] sm:$0xf]
      %v2775 = vld [vmem:[%s2768 + $0x18] sm:$0xf]
      %v2776 = vld [vmem:[%s2768 + $0x1c] sm:$0xf]
      %v2777 = vld [vmem:[%s2768 + $0x20] sm:$0xf]
      %v2778 = vld [vmem:[%s2768 + $0x24] sm:$0xf]
      %v2779 = vld [vmem:[%s2768 + $0x28] sm:$0xf]
      %v2780 = vld [vmem:[%s2768 + $0x2c] sm:$0xf]
      %v2781 = vld [vmem:[%s2768 + $0x30] sm:$0xf]
      %v2782 = vld [vmem:[%s2768 + $0x34] sm:$0xf]
      %v2783 = vld [vmem:[%s2768 + $0x38] sm:$0xf]
      %v2784 = vld [vmem:[%s2768 + $0x3c] sm:$0xf]
      %v2801 = vunpack.c.l.b16 %v2769
      %v2802 = vunpack.c.l.b16 %v2770
      %v2803 = vunpack.c.l.b16 %v2771
      %v2804 = vunpack.c.l.b16 %v2772
      %v2805 = vunpack.c.l.b16 %v2773
      %v2806 = vunpack.c.l.b16 %v2774
      %v2807 = vunpack.c.l.b16 %v2775
      %v2808 = vunpack.c.l.b16 %v2776
      %v2809 = vunpack.c.l.b16 %v2777
      %v2810 = vunpack.c.l.b16 %v2778
      %v2811 = vunpack.c.l.b16 %v2779
      %v2812 = vunpack.c.l.b16 %v2780
      %v2813 = vunpack.c.l.b16 %v2781
      %v2814 = vunpack.c.l.b16 %v2782
      %v2815 = vunpack.c.l.b16 %v2783
      %v2816 = vunpack.c.l.b16 %v2784
      %v2817 = vpack.c.b16 %v2802, %v2801
      %v2818 = vpack.c.b16 %v2804, %v2803
      %v2819 = vpack.c.b16 %v2806, %v2805
      %v2820 = vpack.c.b16 %v2808, %v2807
      %v2821 = vpack.c.b16 %v2810, %v2809
      %v2822 = vpack.c.b16 %v2812, %v2811
      %v2823 = vpack.c.b16 %v2814, %v2813
      %v2824 = vpack.c.b16 %v2816, %v2815
      %2833 = vmatprep.subr.bf16.mxu0 0
      %2834 = vmatpush1.bf16.msra.mxu0 %v2824
      %2835 = vmatprep.subr.bf16.mxu0 0
      %2836 = vmatpush1.bf16.msra.mxu0 %v2823
      %2837 = vmatprep.subr.bf16.mxu0 0
      %2838 = vmatpush1.bf16.msra.mxu0 %v2822
      %2839 = vmatprep.subr.bf16.mxu0 0
      %2840 = vmatpush1.bf16.msra.mxu0 %v2821
      %2841 = vmatprep.subr.bf16.mxu0 0
      %2842 = vmatpush1.bf16.msra.mxu0 %v2820
      %2843 = vmatprep.subr.bf16.mxu0 0
      %2844 = vmatpush1.bf16.msra.mxu0 %v2819
      %2845 = vmatprep.subr.bf16.mxu0 0
      %2846 = vmatpush1.bf16.msra.mxu0 %v2818
      %2847 = vmatprep.subr.bf16.mxu0 0
      %2848 = vmatpush1.bf16.msra.mxu0 %v2817
      %2849 = vmatprep.subr.bf16.mxu0 0
      %2850 = vmatpush2.bf16.msra.mxu0 0
      %2851 = vmatprep.subr.bf16.mxu0 0
      %2852 = vmatpush2.bf16.msra.mxu0 0
      %2853 = vmatprep.subr.bf16.mxu0 0
      %2854 = vmatpush2.bf16.msra.mxu0 0
      %2855 = vmatprep.subr.bf16.mxu0 0
      %2856 = vmatpush2.bf16.msra.mxu0 0
      %2857 = vmatprep.subr.bf16.mxu0 0
      %2858 = vmatpush2.bf16.msra.mxu0 0
      %2859 = vmatprep.subr.bf16.mxu0 0
      %2860 = vmatpush2.bf16.msra.mxu0 0
      %2861 = vmatprep.subr.bf16.mxu0 0
      %2862 = vmatpush2.bf16.msra.mxu0 0
      %2863 = vmatprep.subr.bf16.mxu0 0
      %2864 = vmatpush2.bf16.msra.mxu0 0
      %2865 = vmatprep.mubr.bf16.mxu0 0
      %2866 = vmatmul.mubr.bf16.gmra.mxu0 %v2767
      %v2867 = vpop.f32.mrf.mxu0
      %v2868 = vadd.f32 0.0, %v2867
      %v2869 = vpop.f32.mrf.mxu0
      %v2870 = vpop.f32.mrf.mxu0
      %v2871 = vpop.f32.mrf.mxu0
      %2872 = vdwg.mxu0
      %v2873 = vadd.f32 %v2726, %v2868
      %2874 = vmatprep.subr.bf16.mxu0 0
      %2875 = vmatpush1.bf16.msra.mxu0 0
      %2876 = vmatprep.subr.bf16.mxu0 0
      %2877 = vmatpush1.bf16.msra.mxu0 0
      %2878 = vmatprep.subr.bf16.mxu0 0
      %2879 = vmatpush1.bf16.msra.mxu0 0
      %2880 = vmatprep.subr.bf16.mxu0 0
      %2881 = vmatpush1.bf16.msra.mxu0 0
      %2882 = vmatprep.subr.bf16.mxu0 0
      %2883 = vmatpush1.bf16.msra.mxu0 0
      %2884 = vmatprep.subr.bf16.mxu0 0
      %2885 = vmatpush1.bf16.msra.mxu0 0
      %2886 = vmatprep.subr.bf16.mxu0 0
      %2887 = vmatpush1.bf16.msra.mxu0 0
      %2888 = vmatprep.subr.bf16.mxu0 0
      %2889 = vmatpush1.bf16.msra.mxu0 %v1696
      %2890 = vmatprep.subr.bf16.mxu0 0
      %2891 = vmatpush2.bf16.msra.mxu0 0
      %2892 = vmatprep.subr.bf16.mxu0 0
      %2893 = vmatpush2.bf16.msra.mxu0 0
      %2894 = vmatprep.subr.bf16.mxu0 0
      %2895 = vmatpush2.bf16.msra.mxu0 0
      %2896 = vmatprep.subr.bf16.mxu0 0
      %2897 = vmatpush2.bf16.msra.mxu0 0
      %2898 = vmatprep.subr.bf16.mxu0 0
      %2899 = vmatpush2.bf16.msra.mxu0 0
      %2900 = vmatprep.subr.bf16.mxu0 0
      %2901 = vmatpush2.bf16.msra.mxu0 0
      %2902 = vmatprep.subr.bf16.mxu0 0
      %2903 = vmatpush2.bf16.msra.mxu0 0
      %2904 = vmatprep.subr.bf16.mxu0 0
      %2905 = vmatpush2.bf16.msra.mxu0 0
      %2906 = vmatprep.mubr.bf16.mxu0 0
      %2907 = vmatmul.mubr.bf16.gmra.mxu0 %v1526
      %v2908 = vpop.f32.mrf.mxu0
      %v2909 = vadd.f32 0.0, %v2908
      %v2910 = vpop.f32.mrf.mxu0
      %v2911 = vpop.f32.mrf.mxu0
      %v2912 = vpop.f32.mrf.mxu0
      %2913 = vdwg.mxu0
      %v2914 = vpack.c.bf16 %v2909, %v2909
      %s2915 = scalar_lea.vmem %s4, 1088
      %v2916 = vld [vmem:[%s2915] sm:$0xf]
      %v2917 = vld [vmem:[%s2915 + $0x4] sm:$0xf]
      %v2918 = vld [vmem:[%s2915 + $0x8] sm:$0xf]
      %v2919 = vld [vmem:[%s2915 + $0xc] sm:$0xf]
      %v2920 = vld [vmem:[%s2915 + $0x10] sm:$0xf]
      %v2921 = vld [vmem:[%s2915 + $0x14] sm:$0xf]
      %v2922 = vld [vmem:[%s2915 + $0x18] sm:$0xf]
      %v2923 = vld [vmem:[%s2915 + $0x1c] sm:$0xf]
      %v2924 = vld [vmem:[%s2915 + $0x20] sm:$0xf]
      %v2925 = vld [vmem:[%s2915 + $0x24] sm:$0xf]
      %v2926 = vld [vmem:[%s2915 + $0x28] sm:$0xf]
      %v2927 = vld [vmem:[%s2915 + $0x2c] sm:$0xf]
      %v2928 = vld [vmem:[%s2915 + $0x30] sm:$0xf]
      %v2929 = vld [vmem:[%s2915 + $0x34] sm:$0xf]
      %v2930 = vld [vmem:[%s2915 + $0x38] sm:$0xf]
      %v2931 = vld [vmem:[%s2915 + $0x3c] sm:$0xf]
      %v2948 = vunpack.c.l.b16 %v2916
      %v2949 = vunpack.c.l.b16 %v2917
      %v2950 = vunpack.c.l.b16 %v2918
      %v2951 = vunpack.c.l.b16 %v2919
      %v2952 = vunpack.c.l.b16 %v2920
      %v2953 = vunpack.c.l.b16 %v2921
      %v2954 = vunpack.c.l.b16 %v2922
      %v2955 = vunpack.c.l.b16 %v2923
      %v2956 = vunpack.c.l.b16 %v2924
      %v2957 = vunpack.c.l.b16 %v2925
      %v2958 = vunpack.c.l.b16 %v2926
      %v2959 = vunpack.c.l.b16 %v2927
      %v2960 = vunpack.c.l.b16 %v2928
      %v2961 = vunpack.c.l.b16 %v2929
      %v2962 = vunpack.c.l.b16 %v2930
      %v2963 = vunpack.c.l.b16 %v2931
      %v2964 = vpack.c.b16 %v2949, %v2948
      %v2965 = vpack.c.b16 %v2951, %v2950
      %v2966 = vpack.c.b16 %v2953, %v2952
      %v2967 = vpack.c.b16 %v2955, %v2954
      %v2968 = vpack.c.b16 %v2957, %v2956
      %v2969 = vpack.c.b16 %v2959, %v2958
      %v2970 = vpack.c.b16 %v2961, %v2960
      %v2971 = vpack.c.b16 %v2963, %v2962
      %2980 = vmatprep.subr.bf16.mxu0 0
      %2981 = vmatpush1.bf16.msra.mxu0 %v2971
      %2982 = vmatprep.subr.bf16.mxu0 0
      %2983 = vmatpush1.bf16.msra.mxu0 %v2970
      %2984 = vmatprep.subr.bf16.mxu0 0
      %2985 = vmatpush1.bf16.msra.mxu0 %v2969
      %2986 = vmatprep.subr.bf16.mxu0 0
      %2987 = vmatpush1.bf16.msra.mxu0 %v2968
      %2988 = vmatprep.subr.bf16.mxu0 0
      %2989 = vmatpush1.bf16.msra.mxu0 %v2967
      %2990 = vmatprep.subr.bf16.mxu0 0
      %2991 = vmatpush1.bf16.msra.mxu0 %v2966
      %2992 = vmatprep.subr.bf16.mxu0 0
      %2993 = vmatpush1.bf16.msra.mxu0 %v2965
      %2994 = vmatprep.subr.bf16.mxu0 0
      %2995 = vmatpush1.bf16.msra.mxu0 %v2964
      %2996 = vmatprep.subr.bf16.mxu0 0
      %2997 = vmatpush2.bf16.msra.mxu0 0
      %2998 = vmatprep.subr.bf16.mxu0 0
      %2999 = vmatpush2.bf16.msra.mxu0 0
      %3000 = vmatprep.subr.bf16.mxu0 0
      %3001 = vmatpush2.bf16.msra.mxu0 0
      %3002 = vmatprep.subr.bf16.mxu0 0
      %3003 = vmatpush2.bf16.msra.mxu0 0
      %3004 = vmatprep.subr.bf16.mxu0 0
      %3005 = vmatpush2.bf16.msra.mxu0 0
      %3006 = vmatprep.subr.bf16.mxu0 0
      %3007 = vmatpush2.bf16.msra.mxu0 0
      %3008 = vmatprep.subr.bf16.mxu0 0
      %3009 = vmatpush2.bf16.msra.mxu0 0
      %3010 = vmatprep.subr.bf16.mxu0 0
      %3011 = vmatpush2.bf16.msra.mxu0 0
      %3012 = vmatprep.mubr.bf16.mxu0 0
      %3013 = vmatmul.mubr.bf16.gmra.mxu0 %v2914
      %v3014 = vpop.f32.mrf.mxu0
      %v3015 = vadd.f32 0.0, %v3014
      %v3016 = vpop.f32.mrf.mxu0
      %v3017 = vpop.f32.mrf.mxu0
      %v3018 = vpop.f32.mrf.mxu0
      %3019 = vdwg.mxu0
      %v3020 = vadd.f32 %v2873, %v3015
      %s3021 = sadd.s32 %s22, 1
      %p3022 = scmp.ge.s32.totalorder %s3021, 0
      %p3023 = scmp.le.s32.totalorder %s3021, 1
      %p3024 = pnand %p3022, %p3023
      %p3025 = pneg %p3024
      %s3026 = scalar_select %p3025, 1, 0
      %s3027 = scvt.s32.f32 %s3026
      %p3028 = scmp.gt.s32.totalorder %s3021, 0
      %s3029 = scalar_select %p3028, %s3021, 0
      %p3030 = scmp.lt.s32.totalorder %s3029, 1
      %s3031 = scalar_select %p3030, %s3029, 1
      %s3032 = sadd.s32 %s283, %s3031
      %s3033 = smul.u32 %s3032, 4
      %s3034 = scalar_lea.vmem %s0, %s3033
      %v3035 = vld [vmem:[%s3034] sm:$0xf]
      %v3036 = vmul.f32 %v3035, %v292
      %v3037 = vadd.f32 %v3036, %v299
      %v3038 = vmax.f32 %v3037, 0.0
      %v3039 = vstv %s3027
      %v3040 = vmul.f32 %v3038, %v3039
      %v3041 = vpack.c.bf16 %v3040, %v3040
      %v3043 = vsel %vm311, %v3041, 0
      %3045 = vmatprep.subr.bf16.mxu0 0
      %3046 = vmatpush1.bf16.msra.mxu0 0
      %3047 = vmatprep.subr.bf16.mxu0 0
      %3048 = vmatpush1.bf16.msra.mxu0 0
      %3049 = vmatprep.subr.bf16.mxu0 0
      %3050 = vmatpush1.bf16.msra.mxu0 0
      %3051 = vmatprep.subr.bf16.mxu0 0
      %3052 = vmatpush1.bf16.msra.mxu0 0
      %3053 = vmatprep.subr.bf16.mxu0 0
      %3054 = vmatpush1.bf16.msra.mxu0 0
      %3055 = vmatprep.subr.bf16.mxu0 0
      %3056 = vmatpush1.bf16.msra.mxu0 0
      %3057 = vmatprep.subr.bf16.mxu0 0
      %3058 = vmatpush1.bf16.msra.mxu0 0
      %3059 = vmatprep.subr.bf16.mxu0 0
      %3060 = vmatpush1.bf16.msra.mxu0 %v3043
      %3061 = vmatprep.subr.bf16.mxu0 0
      %3062 = vmatpush2.bf16.msra.mxu0 0
      %3063 = vmatprep.subr.bf16.mxu0 0
      %3064 = vmatpush2.bf16.msra.mxu0 0
      %3065 = vmatprep.subr.bf16.mxu0 0
      %3066 = vmatpush2.bf16.msra.mxu0 0
      %3067 = vmatprep.subr.bf16.mxu0 0
      %3068 = vmatpush2.bf16.msra.mxu0 0
      %3069 = vmatprep.subr.bf16.mxu0 0
      %3070 = vmatpush2.bf16.msra.mxu0 0
      %3071 = vmatprep.subr.bf16.mxu0 0
      %3072 = vmatpush2.bf16.msra.mxu0 0
      %3073 = vmatprep.subr.bf16.mxu0 0
      %3074 = vmatpush2.bf16.msra.mxu0 0
      %3075 = vmatprep.subr.bf16.mxu0 0
      %3076 = vmatpush2.bf16.msra.mxu0 0
      %3077 = vmatprep.mubr.bf16.mxu0 0
      %3078 = vmatmul.mubr.bf16.gmra.mxu0 %v309
      %v3079 = vpop.f32.mrf.mxu0
      %v3080 = vadd.f32 0.0, %v3079
      %v3081 = vpop.f32.mrf.mxu0
      %v3082 = vpop.f32.mrf.mxu0
      %v3083 = vpop.f32.mrf.mxu0
      %3084 = vdwg.mxu0
      %v3085 = vpack.c.bf16 %v3080, %v3080
      %s3086 = scalar_lea.vmem %s4, 1152
      %v3087 = vld [vmem:[%s3086] sm:$0xf]
      %v3088 = vld [vmem:[%s3086 + $0x4] sm:$0xf]
      %v3089 = vld [vmem:[%s3086 + $0x8] sm:$0xf]
      %v3090 = vld [vmem:[%s3086 + $0xc] sm:$0xf]
      %v3091 = vld [vmem:[%s3086 + $0x10] sm:$0xf]
      %v3092 = vld [vmem:[%s3086 + $0x14] sm:$0xf]
      %v3093 = vld [vmem:[%s3086 + $0x18] sm:$0xf]
      %v3094 = vld [vmem:[%s3086 + $0x1c] sm:$0xf]
      %v3095 = vld [vmem:[%s3086 + $0x20] sm:$0xf]
      %v3096 = vld [vmem:[%s3086 + $0x24] sm:$0xf]
      %v3097 = vld [vmem:[%s3086 + $0x28] sm:$0xf]
      %v3098 = vld [vmem:[%s3086 + $0x2c] sm:$0xf]
      %v3099 = vld [vmem:[%s3086 + $0x30] sm:$0xf]
      %v3100 = vld [vmem:[%s3086 + $0x34] sm:$0xf]
      %v3101 = vld [vmem:[%s3086 + $0x38] sm:$0xf]
      %v3102 = vld [vmem:[%s3086 + $0x3c] sm:$0xf]
      %v3119 = vunpack.c.l.b16 %v3087
      %v3120 = vunpack.c.l.b16 %v3088
      %v3121 = vunpack.c.l.b16 %v3089
      %v3122 = vunpack.c.l.b16 %v3090
      %v3123 = vunpack.c.l.b16 %v3091
      %v3124 = vunpack.c.l.b16 %v3092
      %v3125 = vunpack.c.l.b16 %v3093
      %v3126 = vunpack.c.l.b16 %v3094
      %v3127 = vunpack.c.l.b16 %v3095
      %v3128 = vunpack.c.l.b16 %v3096
      %v3129 = vunpack.c.l.b16 %v3097
      %v3130 = vunpack.c.l.b16 %v3098
      %v3131 = vunpack.c.l.b16 %v3099
      %v3132 = vunpack.c.l.b16 %v3100
      %v3133 = vunpack.c.l.b16 %v3101
      %v3134 = vunpack.c.l.b16 %v3102
      %v3135 = vpack.c.b16 %v3120, %v3119
      %v3136 = vpack.c.b16 %v3122, %v3121
      %v3137 = vpack.c.b16 %v3124, %v3123
      %v3138 = vpack.c.b16 %v3126, %v3125
      %v3139 = vpack.c.b16 %v3128, %v3127
      %v3140 = vpack.c.b16 %v3130, %v3129
      %v3141 = vpack.c.b16 %v3132, %v3131
      %v3142 = vpack.c.b16 %v3134, %v3133
      %3151 = vmatprep.subr.bf16.mxu0 0
      %3152 = vmatpush1.bf16.msra.mxu0 %v3142
      %3153 = vmatprep.subr.bf16.mxu0 0
      %3154 = vmatpush1.bf16.msra.mxu0 %v3141
      %3155 = vmatprep.subr.bf16.mxu0 0
      %3156 = vmatpush1.bf16.msra.mxu0 %v3140
      %3157 = vmatprep.subr.bf16.mxu0 0
      %3158 = vmatpush1.bf16.msra.mxu0 %v3139
      %3159 = vmatprep.subr.bf16.mxu0 0
      %3160 = vmatpush1.bf16.msra.mxu0 %v3138
      %3161 = vmatprep.subr.bf16.mxu0 0
      %3162 = vmatpush1.bf16.msra.mxu0 %v3137
      %3163 = vmatprep.subr.bf16.mxu0 0
      %3164 = vmatpush1.bf16.msra.mxu0 %v3136
      %3165 = vmatprep.subr.bf16.mxu0 0
      %3166 = vmatpush1.bf16.msra.mxu0 %v3135
      %3167 = vmatprep.subr.bf16.mxu0 0
      %3168 = vmatpush2.bf16.msra.mxu0 0
      %3169 = vmatprep.subr.bf16.mxu0 0
      %3170 = vmatpush2.bf16.msra.mxu0 0
      %3171 = vmatprep.subr.bf16.mxu0 0
      %3172 = vmatpush2.bf16.msra.mxu0 0
      %3173 = vmatprep.subr.bf16.mxu0 0
      %3174 = vmatpush2.bf16.msra.mxu0 0
      %3175 = vmatprep.subr.bf16.mxu0 0
      %3176 = vmatpush2.bf16.msra.mxu0 0
      %3177 = vmatprep.subr.bf16.mxu0 0
      %3178 = vmatpush2.bf16.msra.mxu0 0
      %3179 = vmatprep.subr.bf16.mxu0 0
      %3180 = vmatpush2.bf16.msra.mxu0 0
      %3181 = vmatprep.subr.bf16.mxu0 0
      %3182 = vmatpush2.bf16.msra.mxu0 0
      %3183 = vmatprep.mubr.bf16.mxu0 0
      %3184 = vmatmul.mubr.bf16.gmra.mxu0 %v3085
      %v3185 = vpop.f32.mrf.mxu0
      %v3186 = vadd.f32 0.0, %v3185
      %v3187 = vpop.f32.mrf.mxu0
      %v3188 = vpop.f32.mrf.mxu0
      %v3189 = vpop.f32.mrf.mxu0
      %3190 = vdwg.mxu0
      %v3191 = vadd.f32 %v3020, %v3186
      %3192 = vmatprep.subr.bf16.mxu0 0
      %3193 = vmatpush1.bf16.msra.mxu0 0
      %3194 = vmatprep.subr.bf16.mxu0 0
      %3195 = vmatpush1.bf16.msra.mxu0 0
      %3196 = vmatprep.subr.bf16.mxu0 0
      %3197 = vmatpush1.bf16.msra.mxu0 0
      %3198 = vmatprep.subr.bf16.mxu0 0
      %3199 = vmatpush1.bf16.msra.mxu0 0
      %3200 = vmatprep.subr.bf16.mxu0 0
      %3201 = vmatpush1.bf16.msra.mxu0 0
      %3202 = vmatprep.subr.bf16.mxu0 0
      %3203 = vmatpush1.bf16.msra.mxu0 0
      %3204 = vmatprep.subr.bf16.mxu0 0
      %3205 = vmatpush1.bf16.msra.mxu0 0
      %3206 = vmatprep.subr.bf16.mxu0 0
      %3207 = vmatpush1.bf16.msra.mxu0 %v3043
      %3208 = vmatprep.subr.bf16.mxu0 0
      %3209 = vmatpush2.bf16.msra.mxu0 0
      %3210 = vmatprep.subr.bf16.mxu0 0
      %3211 = vmatpush2.bf16.msra.mxu0 0
      %3212 = vmatprep.subr.bf16.mxu0 0
      %3213 = vmatpush2.bf16.msra.mxu0 0
      %3214 = vmatprep.subr.bf16.mxu0 0
      %3215 = vmatpush2.bf16.msra.mxu0 0
      %3216 = vmatprep.subr.bf16.mxu0 0
      %3217 = vmatpush2.bf16.msra.mxu0 0
      %3218 = vmatprep.subr.bf16.mxu0 0
      %3219 = vmatpush2.bf16.msra.mxu0 0
      %3220 = vmatprep.subr.bf16.mxu0 0
      %3221 = vmatpush2.bf16.msra.mxu0 0
      %3222 = vmatprep.subr.bf16.mxu0 0
      %3223 = vmatpush2.bf16.msra.mxu0 0
      %3224 = vmatprep.mubr.bf16.mxu0 0
      %3225 = vmatmul.mubr.bf16.gmra.mxu0 %v375
      %v3226 = vpop.f32.mrf.mxu0
      %v3227 = vadd.f32 0.0, %v3226
      %v3228 = vpop.f32.mrf.mxu0
      %v3229 = vpop.f32.mrf.mxu0
      %v3230 = vpop.f32.mrf.mxu0
      %3231 = vdwg.mxu0
      %v3232 = vpack.c.bf16 %v3227, %v3227
      %s3233 = scalar_lea.vmem %s4, 1216
      %v3234 = vld [vmem:[%s3233] sm:$0xf]
      %v3235 = vld [vmem:[%s3233 + $0x4] sm:$0xf]
      %v3236 = vld [vmem:[%s3233 + $0x8] sm:$0xf]
      %v3237 = vld [vmem:[%s3233 + $0xc] sm:$0xf]
      %v3238 = vld [vmem:[%s3233 + $0x10] sm:$0xf]
      %v3239 = vld [vmem:[%s3233 + $0x14] sm:$0xf]
      %v3240 = vld [vmem:[%s3233 + $0x18] sm:$0xf]
      %v3241 = vld [vmem:[%s3233 + $0x1c] sm:$0xf]
      %v3242 = vld [vmem:[%s3233 + $0x20] sm:$0xf]
      %v3243 = vld [vmem:[%s3233 + $0x24] sm:$0xf]
      %v3244 = vld [vmem:[%s3233 + $0x28] sm:$0xf]
      %v3245 = vld [vmem:[%s3233 + $0x2c] sm:$0xf]
      %v3246 = vld [vmem:[%s3233 + $0x30] sm:$0xf]
      %v3247 = vld [vmem:[%s3233 + $0x34] sm:$0xf]
      %v3248 = vld [vmem:[%s3233 + $0x38] sm:$0xf]
      %v3249 = vld [vmem:[%s3233 + $0x3c] sm:$0xf]
      %v3266 = vunpack.c.l.b16 %v3234
      %v3267 = vunpack.c.l.b16 %v3235
      %v3268 = vunpack.c.l.b16 %v3236
      %v3269 = vunpack.c.l.b16 %v3237
      %v3270 = vunpack.c.l.b16 %v3238
      %v3271 = vunpack.c.l.b16 %v3239
      %v3272 = vunpack.c.l.b16 %v3240
      %v3273 = vunpack.c.l.b16 %v3241
      %v3274 = vunpack.c.l.b16 %v3242
      %v3275 = vunpack.c.l.b16 %v3243
      %v3276 = vunpack.c.l.b16 %v3244
      %v3277 = vunpack.c.l.b16 %v3245
      %v3278 = vunpack.c.l.b16 %v3246
      %v3279 = vunpack.c.l.b16 %v3247
      %v3280 = vunpack.c.l.b16 %v3248
      %v3281 = vunpack.c.l.b16 %v3249
      %v3282 = vpack.c.b16 %v3267, %v3266
      %v3283 = vpack.c.b16 %v3269, %v3268
      %v3284 = vpack.c.b16 %v3271, %v3270
      %v3285 = vpack.c.b16 %v3273, %v3272
      %v3286 = vpack.c.b16 %v3275, %v3274
      %v3287 = vpack.c.b16 %v3277, %v3276
      %v3288 = vpack.c.b16 %v3279, %v3278
      %v3289 = vpack.c.b16 %v3281, %v3280
      %3298 = vmatprep.subr.bf16.mxu0 0
      %3299 = vmatpush1.bf16.msra.mxu0 %v3289
      %3300 = vmatprep.subr.bf16.mxu0 0
      %3301 = vmatpush1.bf16.msra.mxu0 %v3288
      %3302 = vmatprep.subr.bf16.mxu0 0
      %3303 = vmatpush1.bf16.msra.mxu0 %v3287
      %3304 = vmatprep.subr.bf16.mxu0 0
      %3305 = vmatpush1.bf16.msra.mxu0 %v3286
      %3306 = vmatprep.subr.bf16.mxu0 0
      %3307 = vmatpush1.bf16.msra.mxu0 %v3285
      %3308 = vmatprep.subr.bf16.mxu0 0
      %3309 = vmatpush1.bf16.msra.mxu0 %v3284
      %3310 = vmatprep.subr.bf16.mxu0 0
      %3311 = vmatpush1.bf16.msra.mxu0 %v3283
      %3312 = vmatprep.subr.bf16.mxu0 0
      %3313 = vmatpush1.bf16.msra.mxu0 %v3282
      %3314 = vmatprep.subr.bf16.mxu0 0
      %3315 = vmatpush2.bf16.msra.mxu0 0
      %3316 = vmatprep.subr.bf16.mxu0 0
      %3317 = vmatpush2.bf16.msra.mxu0 0
      %3318 = vmatprep.subr.bf16.mxu0 0
      %3319 = vmatpush2.bf16.msra.mxu0 0
      %3320 = vmatprep.subr.bf16.mxu0 0
      %3321 = vmatpush2.bf16.msra.mxu0 0
      %3322 = vmatprep.subr.bf16.mxu0 0
      %3323 = vmatpush2.bf16.msra.mxu0 0
      %3324 = vmatprep.subr.bf16.mxu0 0
      %3325 = vmatpush2.bf16.msra.mxu0 0
      %3326 = vmatprep.subr.bf16.mxu0 0
      %3327 = vmatpush2.bf16.msra.mxu0 0
      %3328 = vmatprep.subr.bf16.mxu0 0
      %3329 = vmatpush2.bf16.msra.mxu0 0
      %3330 = vmatprep.mubr.bf16.mxu0 0
      %3331 = vmatmul.mubr.bf16.gmra.mxu0 %v3232
      %v3332 = vpop.f32.mrf.mxu0
      %v3333 = vadd.f32 0.0, %v3332
      %v3334 = vpop.f32.mrf.mxu0
      %v3335 = vpop.f32.mrf.mxu0
      %v3336 = vpop.f32.mrf.mxu0
      %3337 = vdwg.mxu0
      %v3338 = vadd.f32 %v3191, %v3333
      %3339 = vmatprep.subr.bf16.mxu0 0
      %3340 = vmatpush1.bf16.msra.mxu0 0
      %3341 = vmatprep.subr.bf16.mxu0 0
      %3342 = vmatpush1.bf16.msra.mxu0 0
      %3343 = vmatprep.subr.bf16.mxu0 0
      %3344 = vmatpush1.bf16.msra.mxu0 0
      %3345 = vmatprep.subr.bf16.mxu0 0
      %3346 = vmatpush1.bf16.msra.mxu0 0
      %3347 = vmatprep.subr.bf16.mxu0 0
      %3348 = vmatpush1.bf16.msra.mxu0 0
      %3349 = vmatprep.subr.bf16.mxu0 0
      %3350 = vmatpush1.bf16.msra.mxu0 0
      %3351 = vmatprep.subr.bf16.mxu0 0
      %3352 = vmatpush1.bf16.msra.mxu0 0
      %3353 = vmatprep.subr.bf16.mxu0 0
      %3354 = vmatpush1.bf16.msra.mxu0 %v3043
      %3355 = vmatprep.subr.bf16.mxu0 0
      %3356 = vmatpush2.bf16.msra.mxu0 0
      %3357 = vmatprep.subr.bf16.mxu0 0
      %3358 = vmatpush2.bf16.msra.mxu0 0
      %3359 = vmatprep.subr.bf16.mxu0 0
      %3360 = vmatpush2.bf16.msra.mxu0 0
      %3361 = vmatprep.subr.bf16.mxu0 0
      %3362 = vmatpush2.bf16.msra.mxu0 0
      %3363 = vmatprep.subr.bf16.mxu0 0
      %3364 = vmatpush2.bf16.msra.mxu0 0
      %3365 = vmatprep.subr.bf16.mxu0 0
      %3366 = vmatpush2.bf16.msra.mxu0 0
      %3367 = vmatprep.subr.bf16.mxu0 0
      %3368 = vmatpush2.bf16.msra.mxu0 0
      %3369 = vmatprep.subr.bf16.mxu0 0
      %3370 = vmatpush2.bf16.msra.mxu0 0
      %3371 = vmatprep.mubr.bf16.mxu0 0
      %3372 = vmatmul.mubr.bf16.gmra.mxu0 %v614
      %v3373 = vpop.f32.mrf.mxu0
      %v3374 = vadd.f32 0.0, %v3373
      %v3375 = vpop.f32.mrf.mxu0
      %v3376 = vpop.f32.mrf.mxu0
      %v3377 = vpop.f32.mrf.mxu0
      %3378 = vdwg.mxu0
      %v3379 = vpack.c.bf16 %v3374, %v3374
      %s3380 = scalar_lea.vmem %s4, 1280
      %v3381 = vld [vmem:[%s3380] sm:$0xf]
      %v3382 = vld [vmem:[%s3380 + $0x4] sm:$0xf]
      %v3383 = vld [vmem:[%s3380 + $0x8] sm:$0xf]
      %v3384 = vld [vmem:[%s3380 + $0xc] sm:$0xf]
      %v3385 = vld [vmem:[%s3380 + $0x10] sm:$0xf]
      %v3386 = vld [vmem:[%s3380 + $0x14] sm:$0xf]
      %v3387 = vld [vmem:[%s3380 + $0x18] sm:$0xf]
      %v3388 = vld [vmem:[%s3380 + $0x1c] sm:$0xf]
      %v3389 = vld [vmem:[%s3380 + $0x20] sm:$0xf]
      %v3390 = vld [vmem:[%s3380 + $0x24] sm:$0xf]
      %v3391 = vld [vmem:[%s3380 + $0x28] sm:$0xf]
      %v3392 = vld [vmem:[%s3380 + $0x2c] sm:$0xf]
      %v3393 = vld [vmem:[%s3380 + $0x30] sm:$0xf]
      %v3394 = vld [vmem:[%s3380 + $0x34] sm:$0xf]
      %v3395 = vld [vmem:[%s3380 + $0x38] sm:$0xf]
      %v3396 = vld [vmem:[%s3380 + $0x3c] sm:$0xf]
      %v3413 = vunpack.c.l.b16 %v3381
      %v3414 = vunpack.c.l.b16 %v3382
      %v3415 = vunpack.c.l.b16 %v3383
      %v3416 = vunpack.c.l.b16 %v3384
      %v3417 = vunpack.c.l.b16 %v3385
      %v3418 = vunpack.c.l.b16 %v3386
      %v3419 = vunpack.c.l.b16 %v3387
      %v3420 = vunpack.c.l.b16 %v3388
      %v3421 = vunpack.c.l.b16 %v3389
      %v3422 = vunpack.c.l.b16 %v3390
      %v3423 = vunpack.c.l.b16 %v3391
      %v3424 = vunpack.c.l.b16 %v3392
      %v3425 = vunpack.c.l.b16 %v3393
      %v3426 = vunpack.c.l.b16 %v3394
      %v3427 = vunpack.c.l.b16 %v3395
      %v3428 = vunpack.c.l.b16 %v3396
      %v3429 = vpack.c.b16 %v3414, %v3413
      %v3430 = vpack.c.b16 %v3416, %v3415
      %v3431 = vpack.c.b16 %v3418, %v3417
      %v3432 = vpack.c.b16 %v3420, %v3419
      %v3433 = vpack.c.b16 %v3422, %v3421
      %v3434 = vpack.c.b16 %v3424, %v3423
      %v3435 = vpack.c.b16 %v3426, %v3425
      %v3436 = vpack.c.b16 %v3428, %v3427
      %3445 = vmatprep.subr.bf16.mxu0 0
      %3446 = vmatpush1.bf16.msra.mxu0 %v3436
      %3447 = vmatprep.subr.bf16.mxu0 0
      %3448 = vmatpush1.bf16.msra.mxu0 %v3435
      %3449 = vmatprep.subr.bf16.mxu0 0
      %3450 = vmatpush1.bf16.msra.mxu0 %v3434
      %3451 = vmatprep.subr.bf16.mxu0 0
      %3452 = vmatpush1.bf16.msra.mxu0 %v3433
      %3453 = vmatprep.subr.bf16.mxu0 0
      %3454 = vmatpush1.bf16.msra.mxu0 %v3432
      %3455 = vmatprep.subr.bf16.mxu0 0
      %3456 = vmatpush1.bf16.msra.mxu0 %v3431
      %3457 = vmatprep.subr.bf16.mxu0 0
      %3458 = vmatpush1.bf16.msra.mxu0 %v3430
      %3459 = vmatprep.subr.bf16.mxu0 0
      %3460 = vmatpush1.bf16.msra.mxu0 %v3429
      %3461 = vmatprep.subr.bf16.mxu0 0
      %3462 = vmatpush2.bf16.msra.mxu0 0
      %3463 = vmatprep.subr.bf16.mxu0 0
      %3464 = vmatpush2.bf16.msra.mxu0 0
      %3465 = vmatprep.subr.bf16.mxu0 0
      %3466 = vmatpush2.bf16.msra.mxu0 0
      %3467 = vmatprep.subr.bf16.mxu0 0
      %3468 = vmatpush2.bf16.msra.mxu0 0
      %3469 = vmatprep.subr.bf16.mxu0 0
      %3470 = vmatpush2.bf16.msra.mxu0 0
      %3471 = vmatprep.subr.bf16.mxu0 0
      %3472 = vmatpush2.bf16.msra.mxu0 0
      %3473 = vmatprep.subr.bf16.mxu0 0
      %3474 = vmatpush2.bf16.msra.mxu0 0
      %3475 = vmatprep.subr.bf16.mxu0 0
      %3476 = vmatpush2.bf16.msra.mxu0 0
      %3477 = vmatprep.mubr.bf16.mxu0 0
      %3478 = vmatmul.mubr.bf16.gmra.mxu0 %v3379
      %v3479 = vpop.f32.mrf.mxu0
      %v3480 = vadd.f32 0.0, %v3479
      %v3481 = vpop.f32.mrf.mxu0
      %v3482 = vpop.f32.mrf.mxu0
      %v3483 = vpop.f32.mrf.mxu0
      %3484 = vdwg.mxu0
      %v3485 = vadd.f32 %v3338, %v3480
      %3486 = vmatprep.subr.bf16.mxu0 0
      %3487 = vmatpush1.bf16.msra.mxu0 0
      %3488 = vmatprep.subr.bf16.mxu0 0
      %3489 = vmatpush1.bf16.msra.mxu0 0
      %3490 = vmatprep.subr.bf16.mxu0 0
      %3491 = vmatpush1.bf16.msra.mxu0 0
      %3492 = vmatprep.subr.bf16.mxu0 0
      %3493 = vmatpush1.bf16.msra.mxu0 0
      %3494 = vmatprep.subr.bf16.mxu0 0
      %3495 = vmatpush1.bf16.msra.mxu0 0
      %3496 = vmatprep.subr.bf16.mxu0 0
      %3497 = vmatpush1.bf16.msra.mxu0 0
      %3498 = vmatprep.subr.bf16.mxu0 0
      %3499 = vmatpush1.bf16.msra.mxu0 0
      %3500 = vmatprep.subr.bf16.mxu0 0
      %3501 = vmatpush1.bf16.msra.mxu0 %v3043
      %3502 = vmatprep.subr.bf16.mxu0 0
      %3503 = vmatpush2.bf16.msra.mxu0 0
      %3504 = vmatprep.subr.bf16.mxu0 0
      %3505 = vmatpush2.bf16.msra.mxu0 0
      %3506 = vmatprep.subr.bf16.mxu0 0
      %3507 = vmatpush2.bf16.msra.mxu0 0
      %3508 = vmatprep.subr.bf16.mxu0 0
      %3509 = vmatpush2.bf16.msra.mxu0 0
      %3510 = vmatprep.subr.bf16.mxu0 0
      %3511 = vmatpush2.bf16.msra.mxu0 0
      %3512 = vmatprep.subr.bf16.mxu0 0
      %3513 = vmatpush2.bf16.msra.mxu0 0
      %3514 = vmatprep.subr.bf16.mxu0 0
      %3515 = vmatpush2.bf16.msra.mxu0 0
      %3516 = vmatprep.subr.bf16.mxu0 0
      %3517 = vmatpush2.bf16.msra.mxu0 0
      %3518 = vmatprep.mubr.bf16.mxu0 0
      %3519 = vmatmul.mubr.bf16.gmra.mxu0 %v766
      %v3520 = vpop.f32.mrf.mxu0
      %v3521 = vadd.f32 0.0, %v3520
      %v3522 = vpop.f32.mrf.mxu0
      %v3523 = vpop.f32.mrf.mxu0
      %v3524 = vpop.f32.mrf.mxu0
      %3525 = vdwg.mxu0
      %v3526 = vpack.c.bf16 %v3521, %v3521
      %s3527 = scalar_lea.vmem %s4, 1344
      %v3528 = vld [vmem:[%s3527] sm:$0xf]
      %v3529 = vld [vmem:[%s3527 + $0x4] sm:$0xf]
      %v3530 = vld [vmem:[%s3527 + $0x8] sm:$0xf]
      %v3531 = vld [vmem:[%s3527 + $0xc] sm:$0xf]
      %v3532 = vld [vmem:[%s3527 + $0x10] sm:$0xf]
      %v3533 = vld [vmem:[%s3527 + $0x14] sm:$0xf]
      %v3534 = vld [vmem:[%s3527 + $0x18] sm:$0xf]
      %v3535 = vld [vmem:[%s3527 + $0x1c] sm:$0xf]
      %v3536 = vld [vmem:[%s3527 + $0x20] sm:$0xf]
      %v3537 = vld [vmem:[%s3527 + $0x24] sm:$0xf]
      %v3538 = vld [vmem:[%s3527 + $0x28] sm:$0xf]
      %v3539 = vld [vmem:[%s3527 + $0x2c] sm:$0xf]
      %v3540 = vld [vmem:[%s3527 + $0x30] sm:$0xf]
      %v3541 = vld [vmem:[%s3527 + $0x34] sm:$0xf]
      %v3542 = vld [vmem:[%s3527 + $0x38] sm:$0xf]
      %v3543 = vld [vmem:[%s3527 + $0x3c] sm:$0xf]
      %v3560 = vunpack.c.l.b16 %v3528
      %v3561 = vunpack.c.l.b16 %v3529
      %v3562 = vunpack.c.l.b16 %v3530
      %v3563 = vunpack.c.l.b16 %v3531
      %v3564 = vunpack.c.l.b16 %v3532
      %v3565 = vunpack.c.l.b16 %v3533
      %v3566 = vunpack.c.l.b16 %v3534
      %v3567 = vunpack.c.l.b16 %v3535
      %v3568 = vunpack.c.l.b16 %v3536
      %v3569 = vunpack.c.l.b16 %v3537
      %v3570 = vunpack.c.l.b16 %v3538
      %v3571 = vunpack.c.l.b16 %v3539
      %v3572 = vunpack.c.l.b16 %v3540
      %v3573 = vunpack.c.l.b16 %v3541
      %v3574 = vunpack.c.l.b16 %v3542
      %v3575 = vunpack.c.l.b16 %v3543
      %v3576 = vpack.c.b16 %v3561, %v3560
      %v3577 = vpack.c.b16 %v3563, %v3562
      %v3578 = vpack.c.b16 %v3565, %v3564
      %v3579 = vpack.c.b16 %v3567, %v3566
      %v3580 = vpack.c.b16 %v3569, %v3568
      %v3581 = vpack.c.b16 %v3571, %v3570
      %v3582 = vpack.c.b16 %v3573, %v3572
      %v3583 = vpack.c.b16 %v3575, %v3574
      %3592 = vmatprep.subr.bf16.mxu0 0
      %3593 = vmatpush1.bf16.msra.mxu0 %v3583
      %3594 = vmatprep.subr.bf16.mxu0 0
      %3595 = vmatpush1.bf16.msra.mxu0 %v3582
      %3596 = vmatprep.subr.bf16.mxu0 0
      %3597 = vmatpush1.bf16.msra.mxu0 %v3581
      %3598 = vmatprep.subr.bf16.mxu0 0
      %3599 = vmatpush1.bf16.msra.mxu0 %v3580
      %3600 = vmatprep.subr.bf16.mxu0 0
      %3601 = vmatpush1.bf16.msra.mxu0 %v3579
      %3602 = vmatprep.subr.bf16.mxu0 0
      %3603 = vmatpush1.bf16.msra.mxu0 %v3578
      %3604 = vmatprep.subr.bf16.mxu0 0
      %3605 = vmatpush1.bf16.msra.mxu0 %v3577
      %3606 = vmatprep.subr.bf16.mxu0 0
      %3607 = vmatpush1.bf16.msra.mxu0 %v3576
      %3608 = vmatprep.subr.bf16.mxu0 0
      %3609 = vmatpush2.bf16.msra.mxu0 0
      %3610 = vmatprep.subr.bf16.mxu0 0
      %3611 = vmatpush2.bf16.msra.mxu0 0
      %3612 = vmatprep.subr.bf16.mxu0 0
      %3613 = vmatpush2.bf16.msra.mxu0 0
      %3614 = vmatprep.subr.bf16.mxu0 0
      %3615 = vmatpush2.bf16.msra.mxu0 0
      %3616 = vmatprep.subr.bf16.mxu0 0
      %3617 = vmatpush2.bf16.msra.mxu0 0
      %3618 = vmatprep.subr.bf16.mxu0 0
      %3619 = vmatpush2.bf16.msra.mxu0 0
      %3620 = vmatprep.subr.bf16.mxu0 0
      %3621 = vmatpush2.bf16.msra.mxu0 0
      %3622 = vmatprep.subr.bf16.mxu0 0
      %3623 = vmatpush2.bf16.msra.mxu0 0
      %3624 = vmatprep.mubr.bf16.mxu0 0
      %3625 = vmatmul.mubr.bf16.gmra.mxu0 %v3526
      %v3626 = vpop.f32.mrf.mxu0
      %v3627 = vadd.f32 0.0, %v3626
      %v3628 = vpop.f32.mrf.mxu0
      %v3629 = vpop.f32.mrf.mxu0
      %v3630 = vpop.f32.mrf.mxu0
      %3631 = vdwg.mxu0
      %v3632 = vadd.f32 %v3485, %v3627
      %3633 = vmatprep.subr.bf16.mxu0 0
      %3634 = vmatpush1.bf16.msra.mxu0 0
      %3635 = vmatprep.subr.bf16.mxu0 0
      %3636 = vmatpush1.bf16.msra.mxu0 0
      %3637 = vmatprep.subr.bf16.mxu0 0
      %3638 = vmatpush1.bf16.msra.mxu0 0
      %3639 = vmatprep.subr.bf16.mxu0 0
      %3640 = vmatpush1.bf16.msra.mxu0 0
      %3641 = vmatprep.subr.bf16.mxu0 0
      %3642 = vmatpush1.bf16.msra.mxu0 0
      %3643 = vmatprep.subr.bf16.mxu0 0
      %3644 = vmatpush1.bf16.msra.mxu0 0
      %3645 = vmatprep.subr.bf16.mxu0 0
      %3646 = vmatpush1.bf16.msra.mxu0 0
      %3647 = vmatprep.subr.bf16.mxu0 0
      %3648 = vmatpush1.bf16.msra.mxu0 %v3043
      %3649 = vmatprep.subr.bf16.mxu0 0
      %3650 = vmatpush2.bf16.msra.mxu0 0
      %3651 = vmatprep.subr.bf16.mxu0 0
      %3652 = vmatpush2.bf16.msra.mxu0 0
      %3653 = vmatprep.subr.bf16.mxu0 0
      %3654 = vmatpush2.bf16.msra.mxu0 0
      %3655 = vmatprep.subr.bf16.mxu0 0
      %3656 = vmatpush2.bf16.msra.mxu0 0
      %3657 = vmatprep.subr.bf16.mxu0 0
      %3658 = vmatpush2.bf16.msra.mxu0 0
      %3659 = vmatprep.subr.bf16.mxu0 0
      %3660 = vmatpush2.bf16.msra.mxu0 0
      %3661 = vmatprep.subr.bf16.mxu0 0
      %3662 = vmatpush2.bf16.msra.mxu0 0
      %3663 = vmatprep.subr.bf16.mxu0 0
      %3664 = vmatpush2.bf16.msra.mxu0 0
      %3665 = vmatprep.mubr.bf16.mxu0 0
      %3666 = vmatmul.mubr.bf16.gmra.mxu0 %v918
      %v3667 = vpop.f32.mrf.mxu0
      %v3668 = vadd.f32 0.0, %v3667
      %v3669 = vpop.f32.mrf.mxu0
      %v3670 = vpop.f32.mrf.mxu0
      %v3671 = vpop.f32.mrf.mxu0
      %3672 = vdwg.mxu0
      %v3673 = vpack.c.bf16 %v3668, %v3668
      %s3674 = scalar_lea.vmem %s4, 1408
      %v3675 = vld [vmem:[%s3674] sm:$0xf]
      %v3676 = vld [vmem:[%s3674 + $0x4] sm:$0xf]
      %v3677 = vld [vmem:[%s3674 + $0x8] sm:$0xf]
      %v3678 = vld [vmem:[%s3674 + $0xc] sm:$0xf]
      %v3679 = vld [vmem:[%s3674 + $0x10] sm:$0xf]
      %v3680 = vld [vmem:[%s3674 + $0x14] sm:$0xf]
      %v3681 = vld [vmem:[%s3674 + $0x18] sm:$0xf]
      %v3682 = vld [vmem:[%s3674 + $0x1c] sm:$0xf]
      %v3683 = vld [vmem:[%s3674 + $0x20] sm:$0xf]
      %v3684 = vld [vmem:[%s3674 + $0x24] sm:$0xf]
      %v3685 = vld [vmem:[%s3674 + $0x28] sm:$0xf]
      %v3686 = vld [vmem:[%s3674 + $0x2c] sm:$0xf]
      %v3687 = vld [vmem:[%s3674 + $0x30] sm:$0xf]
      %v3688 = vld [vmem:[%s3674 + $0x34] sm:$0xf]
      %v3689 = vld [vmem:[%s3674 + $0x38] sm:$0xf]
      %v3690 = vld [vmem:[%s3674 + $0x3c] sm:$0xf]
      %v3707 = vunpack.c.l.b16 %v3675
      %v3708 = vunpack.c.l.b16 %v3676
      %v3709 = vunpack.c.l.b16 %v3677
      %v3710 = vunpack.c.l.b16 %v3678
      %v3711 = vunpack.c.l.b16 %v3679
      %v3712 = vunpack.c.l.b16 %v3680
      %v3713 = vunpack.c.l.b16 %v3681
      %v3714 = vunpack.c.l.b16 %v3682
      %v3715 = vunpack.c.l.b16 %v3683
      %v3716 = vunpack.c.l.b16 %v3684
      %v3717 = vunpack.c.l.b16 %v3685
      %v3718 = vunpack.c.l.b16 %v3686
      %v3719 = vunpack.c.l.b16 %v3687
      %v3720 = vunpack.c.l.b16 %v3688
      %v3721 = vunpack.c.l.b16 %v3689
      %v3722 = vunpack.c.l.b16 %v3690
      %v3723 = vpack.c.b16 %v3708, %v3707
      %v3724 = vpack.c.b16 %v3710, %v3709
      %v3725 = vpack.c.b16 %v3712, %v3711
      %v3726 = vpack.c.b16 %v3714, %v3713
      %v3727 = vpack.c.b16 %v3716, %v3715
      %v3728 = vpack.c.b16 %v3718, %v3717
      %v3729 = vpack.c.b16 %v3720, %v3719
      %v3730 = vpack.c.b16 %v3722, %v3721
      %3739 = vmatprep.subr.bf16.mxu0 0
      %3740 = vmatpush1.bf16.msra.mxu0 %v3730
      %3741 = vmatprep.subr.bf16.mxu0 0
      %3742 = vmatpush1.bf16.msra.mxu0 %v3729
      %3743 = vmatprep.subr.bf16.mxu0 0
      %3744 = vmatpush1.bf16.msra.mxu0 %v3728
      %3745 = vmatprep.subr.bf16.mxu0 0
      %3746 = vmatpush1.bf16.msra.mxu0 %v3727
      %3747 = vmatprep.subr.bf16.mxu0 0
      %3748 = vmatpush1.bf16.msra.mxu0 %v3726
      %3749 = vmatprep.subr.bf16.mxu0 0
      %3750 = vmatpush1.bf16.msra.mxu0 %v3725
      %3751 = vmatprep.subr.bf16.mxu0 0
      %3752 = vmatpush1.bf16.msra.mxu0 %v3724
      %3753 = vmatprep.subr.bf16.mxu0 0
      %3754 = vmatpush1.bf16.msra.mxu0 %v3723
      %3755 = vmatprep.subr.bf16.mxu0 0
      %3756 = vmatpush2.bf16.msra.mxu0 0
      %3757 = vmatprep.subr.bf16.mxu0 0
      %3758 = vmatpush2.bf16.msra.mxu0 0
      %3759 = vmatprep.subr.bf16.mxu0 0
      %3760 = vmatpush2.bf16.msra.mxu0 0
      %3761 = vmatprep.subr.bf16.mxu0 0
      %3762 = vmatpush2.bf16.msra.mxu0 0
      %3763 = vmatprep.subr.bf16.mxu0 0
      %3764 = vmatpush2.bf16.msra.mxu0 0
      %3765 = vmatprep.subr.bf16.mxu0 0
      %3766 = vmatpush2.bf16.msra.mxu0 0
      %3767 = vmatprep.subr.bf16.mxu0 0
      %3768 = vmatpush2.bf16.msra.mxu0 0
      %3769 = vmatprep.subr.bf16.mxu0 0
      %3770 = vmatpush2.bf16.msra.mxu0 0
      %3771 = vmatprep.mubr.bf16.mxu0 0
      %3772 = vmatmul.mubr.bf16.gmra.mxu0 %v3673
      %v3773 = vpop.f32.mrf.mxu0
      %v3774 = vadd.f32 0.0, %v3773
      %v3775 = vpop.f32.mrf.mxu0
      %v3776 = vpop.f32.mrf.mxu0
      %v3777 = vpop.f32.mrf.mxu0
      %3778 = vdwg.mxu0
      %v3779 = vadd.f32 %v3632, %v3774
      %3780 = vmatprep.subr.bf16.mxu0 0
      %3781 = vmatpush1.bf16.msra.mxu0 0
      %3782 = vmatprep.subr.bf16.mxu0 0
      %3783 = vmatpush1.bf16.msra.mxu0 0
      %3784 = vmatprep.subr.bf16.mxu0 0
      %3785 = vmatpush1.bf16.msra.mxu0 0
      %3786 = vmatprep.subr.bf16.mxu0 0
      %3787 = vmatpush1.bf16.msra.mxu0 0
      %3788 = vmatprep.subr.bf16.mxu0 0
      %3789 = vmatpush1.bf16.msra.mxu0 0
      %3790 = vmatprep.subr.bf16.mxu0 0
      %3791 = vmatpush1.bf16.msra.mxu0 0
      %3792 = vmatprep.subr.bf16.mxu0 0
      %3793 = vmatpush1.bf16.msra.mxu0 0
      %3794 = vmatprep.subr.bf16.mxu0 0
      %3795 = vmatpush1.bf16.msra.mxu0 %v3043
      %3796 = vmatprep.subr.bf16.mxu0 0
      %3797 = vmatpush2.bf16.msra.mxu0 0
      %3798 = vmatprep.subr.bf16.mxu0 0
      %3799 = vmatpush2.bf16.msra.mxu0 0
      %3800 = vmatprep.subr.bf16.mxu0 0
      %3801 = vmatpush2.bf16.msra.mxu0 0
      %3802 = vmatprep.subr.bf16.mxu0 0
      %3803 = vmatpush2.bf16.msra.mxu0 0
      %3804 = vmatprep.subr.bf16.mxu0 0
      %3805 = vmatpush2.bf16.msra.mxu0 0
      %3806 = vmatprep.subr.bf16.mxu0 0
      %3807 = vmatpush2.bf16.msra.mxu0 0
      %3808 = vmatprep.subr.bf16.mxu0 0
      %3809 = vmatpush2.bf16.msra.mxu0 0
      %3810 = vmatprep.subr.bf16.mxu0 0
      %3811 = vmatpush2.bf16.msra.mxu0 0
      %3812 = vmatprep.mubr.bf16.mxu0 0
      %3813 = vmatmul.mubr.bf16.gmra.mxu0 %v1070
      %v3814 = vpop.f32.mrf.mxu0
      %v3815 = vadd.f32 0.0, %v3814
      %v3816 = vpop.f32.mrf.mxu0
      %v3817 = vpop.f32.mrf.mxu0
      %v3818 = vpop.f32.mrf.mxu0
      %3819 = vdwg.mxu0
      %v3820 = vpack.c.bf16 %v3815, %v3815
      %s3821 = scalar_lea.vmem %s4, 1472
      %v3822 = vld [vmem:[%s3821] sm:$0xf]
      %v3823 = vld [vmem:[%s3821 + $0x4] sm:$0xf]
      %v3824 = vld [vmem:[%s3821 + $0x8] sm:$0xf]
      %v3825 = vld [vmem:[%s3821 + $0xc] sm:$0xf]
      %v3826 = vld [vmem:[%s3821 + $0x10] sm:$0xf]
      %v3827 = vld [vmem:[%s3821 + $0x14] sm:$0xf]
      %v3828 = vld [vmem:[%s3821 + $0x18] sm:$0xf]
      %v3829 = vld [vmem:[%s3821 + $0x1c] sm:$0xf]
      %v3830 = vld [vmem:[%s3821 + $0x20] sm:$0xf]
      %v3831 = vld [vmem:[%s3821 + $0x24] sm:$0xf]
      %v3832 = vld [vmem:[%s3821 + $0x28] sm:$0xf]
      %v3833 = vld [vmem:[%s3821 + $0x2c] sm:$0xf]
      %v3834 = vld [vmem:[%s3821 + $0x30] sm:$0xf]
      %v3835 = vld [vmem:[%s3821 + $0x34] sm:$0xf]
      %v3836 = vld [vmem:[%s3821 + $0x38] sm:$0xf]
      %v3837 = vld [vmem:[%s3821 + $0x3c] sm:$0xf]
      %v3854 = vunpack.c.l.b16 %v3822
      %v3855 = vunpack.c.l.b16 %v3823
      %v3856 = vunpack.c.l.b16 %v3824
      %v3857 = vunpack.c.l.b16 %v3825
      %v3858 = vunpack.c.l.b16 %v3826
      %v3859 = vunpack.c.l.b16 %v3827
      %v3860 = vunpack.c.l.b16 %v3828
      %v3861 = vunpack.c.l.b16 %v3829
      %v3862 = vunpack.c.l.b16 %v3830
      %v3863 = vunpack.c.l.b16 %v3831
      %v3864 = vunpack.c.l.b16 %v3832
      %v3865 = vunpack.c.l.b16 %v3833
      %v3866 = vunpack.c.l.b16 %v3834
      %v3867 = vunpack.c.l.b16 %v3835
      %v3868 = vunpack.c.l.b16 %v3836
      %v3869 = vunpack.c.l.b16 %v3837
      %v3870 = vpack.c.b16 %v3855, %v3854
      %v3871 = vpack.c.b16 %v3857, %v3856
      %v3872 = vpack.c.b16 %v3859, %v3858
      %v3873 = vpack.c.b16 %v3861, %v3860
      %v3874 = vpack.c.b16 %v3863, %v3862
      %v3875 = vpack.c.b16 %v3865, %v3864
      %v3876 = vpack.c.b16 %v3867, %v3866
      %v3877 = vpack.c.b16 %v3869, %v3868
      %3886 = vmatprep.subr.bf16.mxu0 0
      %3887 = vmatpush1.bf16.msra.mxu0 %v3877
      %3888 = vmatprep.subr.bf16.mxu0 0
      %3889 = vmatpush1.bf16.msra.mxu0 %v3876
      %3890 = vmatprep.subr.bf16.mxu0 0
      %3891 = vmatpush1.bf16.msra.mxu0 %v3875
      %3892 = vmatprep.subr.bf16.mxu0 0
      %3893 = vmatpush1.bf16.msra.mxu0 %v3874
      %3894 = vmatprep.subr.bf16.mxu0 0
      %3895 = vmatpush1.bf16.msra.mxu0 %v3873
      %3896 = vmatprep.subr.bf16.mxu0 0
      %3897 = vmatpush1.bf16.msra.mxu0 %v3872
      %3898 = vmatprep.subr.bf16.mxu0 0
      %3899 = vmatpush1.bf16.msra.mxu0 %v3871
      %3900 = vmatprep.subr.bf16.mxu0 0
      %3901 = vmatpush1.bf16.msra.mxu0 %v3870
      %3902 = vmatprep.subr.bf16.mxu0 0
      %3903 = vmatpush2.bf16.msra.mxu0 0
      %3904 = vmatprep.subr.bf16.mxu0 0
      %3905 = vmatpush2.bf16.msra.mxu0 0
      %3906 = vmatprep.subr.bf16.mxu0 0
      %3907 = vmatpush2.bf16.msra.mxu0 0
      %3908 = vmatprep.subr.bf16.mxu0 0
      %3909 = vmatpush2.bf16.msra.mxu0 0
      %3910 = vmatprep.subr.bf16.mxu0 0
      %3911 = vmatpush2.bf16.msra.mxu0 0
      %3912 = vmatprep.subr.bf16.mxu0 0
      %3913 = vmatpush2.bf16.msra.mxu0 0
      %3914 = vmatprep.subr.bf16.mxu0 0
      %3915 = vmatpush2.bf16.msra.mxu0 0
      %3916 = vmatprep.subr.bf16.mxu0 0
      %3917 = vmatpush2.bf16.msra.mxu0 0
      %3918 = vmatprep.mubr.bf16.mxu0 0
      %3919 = vmatmul.mubr.bf16.gmra.mxu0 %v3820
      %v3920 = vpop.f32.mrf.mxu0
      %v3921 = vadd.f32 0.0, %v3920
      %v3922 = vpop.f32.mrf.mxu0
      %v3923 = vpop.f32.mrf.mxu0
      %v3924 = vpop.f32.mrf.mxu0
      %3925 = vdwg.mxu0
      %v3926 = vadd.f32 %v3779, %v3921
      %3927 = vmatprep.subr.bf16.mxu0 0
      %3928 = vmatpush1.bf16.msra.mxu0 0
      %3929 = vmatprep.subr.bf16.mxu0 0
      %3930 = vmatpush1.bf16.msra.mxu0 0
      %3931 = vmatprep.subr.bf16.mxu0 0
      %3932 = vmatpush1.bf16.msra.mxu0 0
      %3933 = vmatprep.subr.bf16.mxu0 0
      %3934 = vmatpush1.bf16.msra.mxu0 0
      %3935 = vmatprep.subr.bf16.mxu0 0
      %3936 = vmatpush1.bf16.msra.mxu0 0
      %3937 = vmatprep.subr.bf16.mxu0 0
      %3938 = vmatpush1.bf16.msra.mxu0 0
      %3939 = vmatprep.subr.bf16.mxu0 0
      %3940 = vmatpush1.bf16.msra.mxu0 0
      %3941 = vmatprep.subr.bf16.mxu0 0
      %3942 = vmatpush1.bf16.msra.mxu0 %v3043
      %3943 = vmatprep.subr.bf16.mxu0 0
      %3944 = vmatpush2.bf16.msra.mxu0 0
      %3945 = vmatprep.subr.bf16.mxu0 0
      %3946 = vmatpush2.bf16.msra.mxu0 0
      %3947 = vmatprep.subr.bf16.mxu0 0
      %3948 = vmatpush2.bf16.msra.mxu0 0
      %3949 = vmatprep.subr.bf16.mxu0 0
      %3950 = vmatpush2.bf16.msra.mxu0 0
      %3951 = vmatprep.subr.bf16.mxu0 0
      %3952 = vmatpush2.bf16.msra.mxu0 0
      %3953 = vmatprep.subr.bf16.mxu0 0
      %3954 = vmatpush2.bf16.msra.mxu0 0
      %3955 = vmatprep.subr.bf16.mxu0 0
      %3956 = vmatpush2.bf16.msra.mxu0 0
      %3957 = vmatprep.subr.bf16.mxu0 0
      %3958 = vmatpush2.bf16.msra.mxu0 0
      %3959 = vmatprep.mubr.bf16.mxu0 0
      %3960 = vmatmul.mubr.bf16.gmra.mxu0 %v1222
      %v3961 = vpop.f32.mrf.mxu0
      %v3962 = vadd.f32 0.0, %v3961
      %v3963 = vpop.f32.mrf.mxu0
      %v3964 = vpop.f32.mrf.mxu0
      %v3965 = vpop.f32.mrf.mxu0
      %3966 = vdwg.mxu0
      %v3967 = vpack.c.bf16 %v3962, %v3962
      %s3968 = scalar_lea.vmem %s4, 1536
      %v3969 = vld [vmem:[%s3968] sm:$0xf]
      %v3970 = vld [vmem:[%s3968 + $0x4] sm:$0xf]
      %v3971 = vld [vmem:[%s3968 + $0x8] sm:$0xf]
      %v3972 = vld [vmem:[%s3968 + $0xc] sm:$0xf]
      %v3973 = vld [vmem:[%s3968 + $0x10] sm:$0xf]
      %v3974 = vld [vmem:[%s3968 + $0x14] sm:$0xf]
      %v3975 = vld [vmem:[%s3968 + $0x18] sm:$0xf]
      %v3976 = vld [vmem:[%s3968 + $0x1c] sm:$0xf]
      %v3977 = vld [vmem:[%s3968 + $0x20] sm:$0xf]
      %v3978 = vld [vmem:[%s3968 + $0x24] sm:$0xf]
      %v3979 = vld [vmem:[%s3968 + $0x28] sm:$0xf]
      %v3980 = vld [vmem:[%s3968 + $0x2c] sm:$0xf]
      %v3981 = vld [vmem:[%s3968 + $0x30] sm:$0xf]
      %v3982 = vld [vmem:[%s3968 + $0x34] sm:$0xf]
      %v3983 = vld [vmem:[%s3968 + $0x38] sm:$0xf]
      %v3984 = vld [vmem:[%s3968 + $0x3c] sm:$0xf]
      %v4001 = vunpack.c.l.b16 %v3969
      %v4002 = vunpack.c.l.b16 %v3970
      %v4003 = vunpack.c.l.b16 %v3971
      %v4004 = vunpack.c.l.b16 %v3972
      %v4005 = vunpack.c.l.b16 %v3973
      %v4006 = vunpack.c.l.b16 %v3974
      %v4007 = vunpack.c.l.b16 %v3975
      %v4008 = vunpack.c.l.b16 %v3976
      %v4009 = vunpack.c.l.b16 %v3977
      %v4010 = vunpack.c.l.b16 %v3978
      %v4011 = vunpack.c.l.b16 %v3979
      %v4012 = vunpack.c.l.b16 %v3980
      %v4013 = vunpack.c.l.b16 %v3981
      %v4014 = vunpack.c.l.b16 %v3982
      %v4015 = vunpack.c.l.b16 %v3983
      %v4016 = vunpack.c.l.b16 %v3984
      %v4017 = vpack.c.b16 %v4002, %v4001
      %v4018 = vpack.c.b16 %v4004, %v4003
      %v4019 = vpack.c.b16 %v4006, %v4005
      %v4020 = vpack.c.b16 %v4008, %v4007
      %v4021 = vpack.c.b16 %v4010, %v4009
      %v4022 = vpack.c.b16 %v4012, %v4011
      %v4023 = vpack.c.b16 %v4014, %v4013
      %v4024 = vpack.c.b16 %v4016, %v4015
      %4033 = vmatprep.subr.bf16.mxu0 0
      %4034 = vmatpush1.bf16.msra.mxu0 %v4024
      %4035 = vmatprep.subr.bf16.mxu0 0
      %4036 = vmatpush1.bf16.msra.mxu0 %v4023
      %4037 = vmatprep.subr.bf16.mxu0 0
      %4038 = vmatpush1.bf16.msra.mxu0 %v4022
      %4039 = vmatprep.subr.bf16.mxu0 0
      %4040 = vmatpush1.bf16.msra.mxu0 %v4021
      %4041 = vmatprep.subr.bf16.mxu0 0
      %4042 = vmatpush1.bf16.msra.mxu0 %v4020
      %4043 = vmatprep.subr.bf16.mxu0 0
      %4044 = vmatpush1.bf16.msra.mxu0 %v4019
      %4045 = vmatprep.subr.bf16.mxu0 0
      %4046 = vmatpush1.bf16.msra.mxu0 %v4018
      %4047 = vmatprep.subr.bf16.mxu0 0
      %4048 = vmatpush1.bf16.msra.mxu0 %v4017
      %4049 = vmatprep.subr.bf16.mxu0 0
      %4050 = vmatpush2.bf16.msra.mxu0 0
      %4051 = vmatprep.subr.bf16.mxu0 0
      %4052 = vmatpush2.bf16.msra.mxu0 0
      %4053 = vmatprep.subr.bf16.mxu0 0
      %4054 = vmatpush2.bf16.msra.mxu0 0
      %4055 = vmatprep.subr.bf16.mxu0 0
      %4056 = vmatpush2.bf16.msra.mxu0 0
      %4057 = vmatprep.subr.bf16.mxu0 0
      %4058 = vmatpush2.bf16.msra.mxu0 0
      %4059 = vmatprep.subr.bf16.mxu0 0
      %4060 = vmatpush2.bf16.msra.mxu0 0
      %4061 = vmatprep.subr.bf16.mxu0 0
      %4062 = vmatpush2.bf16.msra.mxu0 0
      %4063 = vmatprep.subr.bf16.mxu0 0
      %4064 = vmatpush2.bf16.msra.mxu0 0
      %4065 = vmatprep.mubr.bf16.mxu0 0
      %4066 = vmatmul.mubr.bf16.gmra.mxu0 %v3967
      %v4067 = vpop.f32.mrf.mxu0
      %v4068 = vadd.f32 0.0, %v4067
      %v4069 = vpop.f32.mrf.mxu0
      %v4070 = vpop.f32.mrf.mxu0
      %v4071 = vpop.f32.mrf.mxu0
      %4072 = vdwg.mxu0
      %v4073 = vadd.f32 %v3926, %v4068
      %4074 = vmatprep.subr.bf16.mxu0 0
      %4075 = vmatpush1.bf16.msra.mxu0 0
      %4076 = vmatprep.subr.bf16.mxu0 0
      %4077 = vmatpush1.bf16.msra.mxu0 0
      %4078 = vmatprep.subr.bf16.mxu0 0
      %4079 = vmatpush1.bf16.msra.mxu0 0
      %4080 = vmatprep.subr.bf16.mxu0 0
      %4081 = vmatpush1.bf16.msra.mxu0 0
      %4082 = vmatprep.subr.bf16.mxu0 0
      %4083 = vmatpush1.bf16.msra.mxu0 0
      %4084 = vmatprep.subr.bf16.mxu0 0
      %4085 = vmatpush1.bf16.msra.mxu0 0
      %4086 = vmatprep.subr.bf16.mxu0 0
      %4087 = vmatpush1.bf16.msra.mxu0 0
      %4088 = vmatprep.subr.bf16.mxu0 0
      %4089 = vmatpush1.bf16.msra.mxu0 %v3043
      %4090 = vmatprep.subr.bf16.mxu0 0
      %4091 = vmatpush2.bf16.msra.mxu0 0
      %4092 = vmatprep.subr.bf16.mxu0 0
      %4093 = vmatpush2.bf16.msra.mxu0 0
      %4094 = vmatprep.subr.bf16.mxu0 0
      %4095 = vmatpush2.bf16.msra.mxu0 0
      %4096 = vmatprep.subr.bf16.mxu0 0
      %4097 = vmatpush2.bf16.msra.mxu0 0
      %4098 = vmatprep.subr.bf16.mxu0 0
      %4099 = vmatpush2.bf16.msra.mxu0 0
      %4100 = vmatprep.subr.bf16.mxu0 0
      %4101 = vmatpush2.bf16.msra.mxu0 0
      %4102 = vmatprep.subr.bf16.mxu0 0
      %4103 = vmatpush2.bf16.msra.mxu0 0
      %4104 = vmatprep.subr.bf16.mxu0 0
      %4105 = vmatpush2.bf16.msra.mxu0 0
      %4106 = vmatprep.mubr.bf16.mxu0 0
      %4107 = vmatmul.mubr.bf16.gmra.mxu0 %v1374
      %v4108 = vpop.f32.mrf.mxu0
      %v4109 = vadd.f32 0.0, %v4108
      %v4110 = vpop.f32.mrf.mxu0
      %v4111 = vpop.f32.mrf.mxu0
      %v4112 = vpop.f32.mrf.mxu0
      %4113 = vdwg.mxu0
      %v4114 = vpack.c.bf16 %v4109, %v4109
      %s4115 = scalar_lea.vmem %s4, 1600
      %v4116 = vld [vmem:[%s4115] sm:$0xf]
      %v4117 = vld [vmem:[%s4115 + $0x4] sm:$0xf]
      %v4118 = vld [vmem:[%s4115 + $0x8] sm:$0xf]
      %v4119 = vld [vmem:[%s4115 + $0xc] sm:$0xf]
      %v4120 = vld [vmem:[%s4115 + $0x10] sm:$0xf]
      %v4121 = vld [vmem:[%s4115 + $0x14] sm:$0xf]
      %v4122 = vld [vmem:[%s4115 + $0x18] sm:$0xf]
      %v4123 = vld [vmem:[%s4115 + $0x1c] sm:$0xf]
      %v4124 = vld [vmem:[%s4115 + $0x20] sm:$0xf]
      %v4125 = vld [vmem:[%s4115 + $0x24] sm:$0xf]
      %v4126 = vld [vmem:[%s4115 + $0x28] sm:$0xf]
      %v4127 = vld [vmem:[%s4115 + $0x2c] sm:$0xf]
      %v4128 = vld [vmem:[%s4115 + $0x30] sm:$0xf]
      %v4129 = vld [vmem:[%s4115 + $0x34] sm:$0xf]
      %v4130 = vld [vmem:[%s4115 + $0x38] sm:$0xf]
      %v4131 = vld [vmem:[%s4115 + $0x3c] sm:$0xf]
      %v4148 = vunpack.c.l.b16 %v4116
      %v4149 = vunpack.c.l.b16 %v4117
      %v4150 = vunpack.c.l.b16 %v4118
      %v4151 = vunpack.c.l.b16 %v4119
      %v4152 = vunpack.c.l.b16 %v4120
      %v4153 = vunpack.c.l.b16 %v4121
      %v4154 = vunpack.c.l.b16 %v4122
      %v4155 = vunpack.c.l.b16 %v4123
      %v4156 = vunpack.c.l.b16 %v4124
      %v4157 = vunpack.c.l.b16 %v4125
      %v4158 = vunpack.c.l.b16 %v4126
      %v4159 = vunpack.c.l.b16 %v4127
      %v4160 = vunpack.c.l.b16 %v4128
      %v4161 = vunpack.c.l.b16 %v4129
      %v4162 = vunpack.c.l.b16 %v4130
      %v4163 = vunpack.c.l.b16 %v4131
      %v4164 = vpack.c.b16 %v4149, %v4148
      %v4165 = vpack.c.b16 %v4151, %v4150
      %v4166 = vpack.c.b16 %v4153, %v4152
      %v4167 = vpack.c.b16 %v4155, %v4154
      %v4168 = vpack.c.b16 %v4157, %v4156
      %v4169 = vpack.c.b16 %v4159, %v4158
      %v4170 = vpack.c.b16 %v4161, %v4160
      %v4171 = vpack.c.b16 %v4163, %v4162
      %4180 = vmatprep.subr.bf16.mxu0 0
      %4181 = vmatpush1.bf16.msra.mxu0 %v4171
      %4182 = vmatprep.subr.bf16.mxu0 0
      %4183 = vmatpush1.bf16.msra.mxu0 %v4170
      %4184 = vmatprep.subr.bf16.mxu0 0
      %4185 = vmatpush1.bf16.msra.mxu0 %v4169
      %4186 = vmatprep.subr.bf16.mxu0 0
      %4187 = vmatpush1.bf16.msra.mxu0 %v4168
      %4188 = vmatprep.subr.bf16.mxu0 0
      %4189 = vmatpush1.bf16.msra.mxu0 %v4167
      %4190 = vmatprep.subr.bf16.mxu0 0
      %4191 = vmatpush1.bf16.msra.mxu0 %v4166
      %4192 = vmatprep.subr.bf16.mxu0 0
      %4193 = vmatpush1.bf16.msra.mxu0 %v4165
      %4194 = vmatprep.subr.bf16.mxu0 0
      %4195 = vmatpush1.bf16.msra.mxu0 %v4164
      %4196 = vmatprep.subr.bf16.mxu0 0
      %4197 = vmatpush2.bf16.msra.mxu0 0
      %4198 = vmatprep.subr.bf16.mxu0 0
      %4199 = vmatpush2.bf16.msra.mxu0 0
      %4200 = vmatprep.subr.bf16.mxu0 0
      %4201 = vmatpush2.bf16.msra.mxu0 0
      %4202 = vmatprep.subr.bf16.mxu0 0
      %4203 = vmatpush2.bf16.msra.mxu0 0
      %4204 = vmatprep.subr.bf16.mxu0 0
      %4205 = vmatpush2.bf16.msra.mxu0 0
      %4206 = vmatprep.subr.bf16.mxu0 0
      %4207 = vmatpush2.bf16.msra.mxu0 0
      %4208 = vmatprep.subr.bf16.mxu0 0
      %4209 = vmatpush2.bf16.msra.mxu0 0
      %4210 = vmatprep.subr.bf16.mxu0 0
      %4211 = vmatpush2.bf16.msra.mxu0 0
      %4212 = vmatprep.mubr.bf16.mxu0 0
      %4213 = vmatmul.mubr.bf16.gmra.mxu0 %v4114
      %v4214 = vpop.f32.mrf.mxu0
      %v4215 = vadd.f32 0.0, %v4214
      %v4216 = vpop.f32.mrf.mxu0
      %v4217 = vpop.f32.mrf.mxu0
      %v4218 = vpop.f32.mrf.mxu0
      %4219 = vdwg.mxu0
      %v4220 = vadd.f32 %v4073, %v4215
      %4221 = vmatprep.subr.bf16.mxu0 0
      %4222 = vmatpush1.bf16.msra.mxu0 0
      %4223 = vmatprep.subr.bf16.mxu0 0
      %4224 = vmatpush1.bf16.msra.mxu0 0
      %4225 = vmatprep.subr.bf16.mxu0 0
      %4226 = vmatpush1.bf16.msra.mxu0 0
      %4227 = vmatprep.subr.bf16.mxu0 0
      %4228 = vmatpush1.bf16.msra.mxu0 0
      %4229 = vmatprep.subr.bf16.mxu0 0
      %4230 = vmatpush1.bf16.msra.mxu0 0
      %4231 = vmatprep.subr.bf16.mxu0 0
      %4232 = vmatpush1.bf16.msra.mxu0 0
      %4233 = vmatprep.subr.bf16.mxu0 0
      %4234 = vmatpush1.bf16.msra.mxu0 0
      %4235 = vmatprep.subr.bf16.mxu0 0
      %4236 = vmatpush1.bf16.msra.mxu0 %v3043
      %4237 = vmatprep.subr.bf16.mxu0 0
      %4238 = vmatpush2.bf16.msra.mxu0 0
      %4239 = vmatprep.subr.bf16.mxu0 0
      %4240 = vmatpush2.bf16.msra.mxu0 0
      %4241 = vmatprep.subr.bf16.mxu0 0
      %4242 = vmatpush2.bf16.msra.mxu0 0
      %4243 = vmatprep.subr.bf16.mxu0 0
      %4244 = vmatpush2.bf16.msra.mxu0 0
      %4245 = vmatprep.subr.bf16.mxu0 0
      %4246 = vmatpush2.bf16.msra.mxu0 0
      %4247 = vmatprep.subr.bf16.mxu0 0
      %4248 = vmatpush2.bf16.msra.mxu0 0
      %4249 = vmatprep.subr.bf16.mxu0 0
      %4250 = vmatpush2.bf16.msra.mxu0 0
      %4251 = vmatprep.subr.bf16.mxu0 0
      %4252 = vmatpush2.bf16.msra.mxu0 0
      %4253 = vmatprep.mubr.bf16.mxu0 0
      %4254 = vmatmul.mubr.bf16.gmra.mxu0 %v1526
      %v4255 = vpop.f32.mrf.mxu0
      %v4256 = vadd.f32 0.0, %v4255
      %v4257 = vpop.f32.mrf.mxu0
      %v4258 = vpop.f32.mrf.mxu0
      %v4259 = vpop.f32.mrf.mxu0
      %4260 = vdwg.mxu0
      %v4261 = vpack.c.bf16 %v4256, %v4256
      %s4262 = scalar_lea.vmem %s4, 1664
      %v4263 = vld [vmem:[%s4262] sm:$0xf]
      %v4264 = vld [vmem:[%s4262 + $0x4] sm:$0xf]
      %v4265 = vld [vmem:[%s4262 + $0x8] sm:$0xf]
      %v4266 = vld [vmem:[%s4262 + $0xc] sm:$0xf]
      %v4267 = vld [vmem:[%s4262 + $0x10] sm:$0xf]
      %v4268 = vld [vmem:[%s4262 + $0x14] sm:$0xf]
      %v4269 = vld [vmem:[%s4262 + $0x18] sm:$0xf]
      %v4270 = vld [vmem:[%s4262 + $0x1c] sm:$0xf]
      %v4271 = vld [vmem:[%s4262 + $0x20] sm:$0xf]
      %v4272 = vld [vmem:[%s4262 + $0x24] sm:$0xf]
      %v4273 = vld [vmem:[%s4262 + $0x28] sm:$0xf]
      %v4274 = vld [vmem:[%s4262 + $0x2c] sm:$0xf]
      %v4275 = vld [vmem:[%s4262 + $0x30] sm:$0xf]
      %v4276 = vld [vmem:[%s4262 + $0x34] sm:$0xf]
      %v4277 = vld [vmem:[%s4262 + $0x38] sm:$0xf]
      %v4278 = vld [vmem:[%s4262 + $0x3c] sm:$0xf]
      %v4295 = vunpack.c.l.b16 %v4263
      %v4296 = vunpack.c.l.b16 %v4264
      %v4297 = vunpack.c.l.b16 %v4265
      %v4298 = vunpack.c.l.b16 %v4266
      %v4299 = vunpack.c.l.b16 %v4267
      %v4300 = vunpack.c.l.b16 %v4268
      %v4301 = vunpack.c.l.b16 %v4269
      %v4302 = vunpack.c.l.b16 %v4270
      %v4303 = vunpack.c.l.b16 %v4271
      %v4304 = vunpack.c.l.b16 %v4272
      %v4305 = vunpack.c.l.b16 %v4273
      %v4306 = vunpack.c.l.b16 %v4274
      %v4307 = vunpack.c.l.b16 %v4275
      %v4308 = vunpack.c.l.b16 %v4276
      %v4309 = vunpack.c.l.b16 %v4277
      %v4310 = vunpack.c.l.b16 %v4278
      %v4311 = vpack.c.b16 %v4296, %v4295
      %v4312 = vpack.c.b16 %v4298, %v4297
      %v4313 = vpack.c.b16 %v4300, %v4299
      %v4314 = vpack.c.b16 %v4302, %v4301
      %v4315 = vpack.c.b16 %v4304, %v4303
      %v4316 = vpack.c.b16 %v4306, %v4305
      %v4317 = vpack.c.b16 %v4308, %v4307
      %v4318 = vpack.c.b16 %v4310, %v4309
      %4327 = vmatprep.subr.bf16.mxu0 0
      %4328 = vmatpush1.bf16.msra.mxu0 %v4318
      %4329 = vmatprep.subr.bf16.mxu0 0
      %4330 = vmatpush1.bf16.msra.mxu0 %v4317
      %4331 = vmatprep.subr.bf16.mxu0 0
      %4332 = vmatpush1.bf16.msra.mxu0 %v4316
      %4333 = vmatprep.subr.bf16.mxu0 0
      %4334 = vmatpush1.bf16.msra.mxu0 %v4315
      %4335 = vmatprep.subr.bf16.mxu0 0
      %4336 = vmatpush1.bf16.msra.mxu0 %v4314
      %4337 = vmatprep.subr.bf16.mxu0 0
      %4338 = vmatpush1.bf16.msra.mxu0 %v4313
      %4339 = vmatprep.subr.bf16.mxu0 0
      %4340 = vmatpush1.bf16.msra.mxu0 %v4312
      %4341 = vmatprep.subr.bf16.mxu0 0
      %4342 = vmatpush1.bf16.msra.mxu0 %v4311
      %4343 = vmatprep.subr.bf16.mxu0 0
      %4344 = vmatpush2.bf16.msra.mxu0 0
      %4345 = vmatprep.subr.bf16.mxu0 0
      %4346 = vmatpush2.bf16.msra.mxu0 0
      %4347 = vmatprep.subr.bf16.mxu0 0
      %4348 = vmatpush2.bf16.msra.mxu0 0
      %4349 = vmatprep.subr.bf16.mxu0 0
      %4350 = vmatpush2.bf16.msra.mxu0 0
      %4351 = vmatprep.subr.bf16.mxu0 0
      %4352 = vmatpush2.bf16.msra.mxu0 0
      %4353 = vmatprep.subr.bf16.mxu0 0
      %4354 = vmatpush2.bf16.msra.mxu0 0
      %4355 = vmatprep.subr.bf16.mxu0 0
      %4356 = vmatpush2.bf16.msra.mxu0 0
      %4357 = vmatprep.subr.bf16.mxu0 0
      %4358 = vmatpush2.bf16.msra.mxu0 0
      %4359 = vmatprep.mubr.bf16.mxu0 0
      %4360 = vmatmul.mubr.bf16.gmra.mxu0 %v4261
      %v4361 = vpop.f32.mrf.mxu0
      %v4362 = vadd.f32 0.0, %v4361
      %v4363 = vpop.f32.mrf.mxu0
      %v4364 = vpop.f32.mrf.mxu0
      %v4365 = vpop.f32.mrf.mxu0
      %4366 = vdwg.mxu0
      %v4367 = vadd.f32 %v4220, %v4362
      %v4368 = vld [vmem:[%s260] sm:$0xf]
      %v4369 = vadd.f32 %v4367, %v4368
      %vm4370 = vcmask 257024
      %4371 = vst.msk [vmem:[%s268] sm:$0xf] %vm4370, %v4369
      %p4372 = scmp.lt.s32.totalorder %s21, 1
      %s4373 = scalar_select %p4372, %s21, 1
      %p4374 = scmp.lt.s32.totalorder %s22, 1
      %s4375 = scalar_select %p4374, %s22, 1
      %s4376 = smul.addr %s4373, 2
      %s4377 = sadd.s32 %s4375, %s4376
      %s4378 = smul.addr %s4377, 4
      %s4379 = scalar_lea.vmem %s6, %s4378
      // Predicated region
      $region45: #{transformer_bts_encode.14} parent=43 // pred_check
        %p4380 = pneg %p180
      $region46: #{transformer_bts_encode.14} parent=43 // pred_check_branch
        %4382 = sbr.rel (%p4380) target = $region48
      $region47: #{transformer_bts_encode.14} parent=43 // pred_region
        _
      $region48: #{transformer_bts_encode.14} parent=43 // pred_fallthru
        _
    $region44: #{transformer_bts_encode.14} parent=5 // pred_fallthru
      _
    %p4383 = scmp.le.s32.totalorder 2, %s12
    // Predicated region
    $region49: #{transformer_bts_encode.14} parent=5 // pred_check
      %p4384 = pneg %p4383
    $region50: #{transformer_bts_encode.14} parent=5 // pred_check_branch
      %4386 = sbr.rel (%p4384) target = $region52
    $region51: #{transformer_bts_encode.14} parent=5 // pred_region
      %s4387 = ssub.s32 %s12, 2
      // Predicated region
      $region53: #{transformer_bts_encode.14} parent=51 // pred_check
        %p4388 = pneg %p186
      $region54: #{transformer_bts_encode.14} parent=51 // pred_check_branch
        %4390 = sbr.rel (%p4388) target = $region56
      $region55: #{transformer_bts_encode.14} parent=51 // pred_region
        %p4391 = scmp.lt.s32.totalorder %s23, 1
        %s4392 = scalar_select %p4391, %s23, 1
        %p4393 = scmp.lt.s32.totalorder %s24, 1
        %s4394 = scalar_select %p4393, %s24, 1
        %s4395 = smul.addr %s4392, 2
        %s4396 = sadd.s32 %s4394, %s4395
        %s4397 = smul.addr %s4396, 4
        %s4398 = scalar_lea.vmem %s6, %s4397
      $region56: #{transformer_bts_encode.14} parent=51 // pred_fallthru
        _
    $region52: #{transformer_bts_encode.14} parent=5 // pred_fallthru
      _
  $region6: #{transformer_bts_encode.14} parent=0 // loop_footer
    %s16 = sadd.s32 1, %s12
  $region7: #{transformer_bts_encode.14} parent=0 // loop_footer_branch
    %11 = sbr.rel target = $region3
  $region8: #{transformer_bts_encode.14} parent=0 // loop_exit
    _

</llo_original>
